<compile_context>
chip_gen: v7x
topology: tpu7x:2x2x1
jax: 0.10.0
libtpu: 0.0.40
codegen_flags: <defaults>
</compile_context>

<pallas_src>
import jax
import jax.numpy as jnp
from jax import lax
from jax.experimental import pallas as pl
from jax.experimental.pallas import tpu as pltpu


# Layout constants for the parity-reordered conv1 output ("h1").
#   conv1 output is 25x25.  Positions are grouped into 4 parity classes
#   (row%2, col%2); each class is stored as a 13x13 grid (row i*13+j), and each
#   class block is padded to 176 rows so the blocks are 8-aligned in VMEM.
GRID_W = 13            # width of one parity-class grid
CLS_ROWS = 176         # 13*13 = 169, padded up to a multiple of 8
H1_ROWS = 4 * CLS_ROWS # 704
CPAD = 128             # channel padding (lane width)


# ----------------------------------------------------------------------------
# Fused Pallas kernel: conv1 -> relu -> conv2 -> relu -> maxpool -> fc1 -> relu -> fc2
# ----------------------------------------------------------------------------
def _cnn1_kernel(p1_ref, w1_ref, b1_ref, w2_ref, b2_ref,
                 wf1_ref, bf1_ref, wf2_ref, bf2_ref,
                 out_ref,
                 h1_ref, taps_ref, h2_ref, pooled_ref):
    f32 = jnp.float32

    # ---- conv1 + ReLU: one MXU matmul over the parity-ordered im2col patches.
    # p1_ref: (1, 704, 16), w1_ref: (16, 128)  ->  h1: (704, 128)
    h1 = jnp.dot(p1_ref[0], w1_ref[...], preferred_element_type=f32)
    h1_ref[...] = jnp.maximum(h1 + b1_ref[...], 0.0)

    # ---- conv2 phase A: one matmul per (kh,kw) tap over its whole parity-class
    # block of h1 (contiguous, 8-aligned static slice).  Results are partial
    # (un-shifted) contributions kept in VMEM.
    for t in range(16):
        kh, kw = t // 4, t % 4
        cls = (kh % 2) * 2 + (kw % 2)
        lhs = h1_ref[pl.ds(cls * CLS_ROWS, CLS_ROWS), :]          # (176, 128)
        taps_ref[t] = jnp.dot(lhs, w2_ref[t], preferred_element_type=f32)

    # ---- conv2 phase B + ReLU: shifted accumulation of the 16 tap partials.
    # h2 row layout: row = oh*11 + ow.  Row oh = 10 is dropped by the pool,
    # so only oh = 0..9 are produced.
    b2 = b2_ref[...]                                              # (1, 128)
    for oh in range(10):
        acc = jnp.zeros((11, CPAD), f32)
        for t in range(16):
            kh, kw = t // 4, t % 4
            r0 = (oh + kh // 2) * GRID_W + (kw // 2)
            acc = acc + taps_ref[t, pl.ds(r0, 11), :]             # (11, 128)
        h2_ref[pl.ds(oh * 11, 11), :] = jnp.maximum(acc + b2, 0.0)

    # ---- 2x2 / stride-2 maxpool, written as the flattened (h, w, c128) row
    # that fc1 consumes directly (fc1 weights were reordered offline).
    for ph in range(5):
        for pw in range(5):
            r = (2 * ph) * 11 + 2 * pw
            tl = h2_ref[pl.ds(r, 1), :]
            tr = h2_ref[pl.ds(r + 1, 1), :]
            bl = h2_ref[pl.ds(r + 11, 1), :]
            br = h2_ref[pl.ds(r + 12, 1), :]
            m = jnp.maximum(jnp.maximum(tl, tr), jnp.maximum(bl, br))   # (1, 128)
            pooled_ref[:, pl.ds((ph * 5 + pw) * CPAD, CPAD)] = m

    # ---- fc1 + ReLU, fc2 (all lane-dense, padded widths 256 / 128).
    flat = pooled_ref[...]                                        # (1, 3200)
    z1 = jnp.dot(flat, wf1_ref[...], preferred_element_type=f32) + bf1_ref[...]
    z1 = jnp.maximum(z1, 0.0)                                     # (1, 256)
    z2 = jnp.dot(z1, wf2_ref[...], preferred_element_type=f32) + bf2_ref[...]
    out_ref[...] = jnp.broadcast_to(z2[:, None, :], (1, 8, CPAD))


# ----------------------------------------------------------------------------
# Wrapper-side patch extraction for conv1 (tiny: input is only B*28*28 floats).
# Rows are ordered (parity class, i, j) so conv2's taps are contiguous slices.
# ----------------------------------------------------------------------------
def _build_p1(x_img):
    B = x_img.shape[0]
    blocks = []
    for ph in range(2):
        ni = 13 if ph == 0 else 12
        for pw in range(2):
            nj = 13 if pw == 0 else 12
            taps = []
            for kh in range(4):
                for kw in range(4):
                    r0, c0 = ph + kh, pw + kw
                    taps.append(x_img[:, r0:r0 + 2 * ni - 1:2,
                                      c0:c0 + 2 * nj - 1:2])       # (B, ni, nj)
            t = jnp.stack(taps, axis=-1)                            # (B, ni, nj, 16)
            t = jnp.pad(t, ((0, 0), (0, 13 - ni), (0, 13 - nj), (0, 0)))
            t = t.reshape(B, 169, 16)
            t = jnp.pad(t, ((0, 0), (0, CLS_ROWS - 169), (0, 0)))   # 8-align class block
            blocks.append(t)
    return jnp.concatenate(blocks, axis=1)                          # (B, 704, 16)


def cnn1_forward(x_nchw, kp):
    B = x_nchw.shape[0]
    x_img = x_nchw.reshape(B, 28, 28)        # C == 1: pure relabeling, no transpose
    p1 = _build_p1(x_img)                    # (B, 704, 16)

    flops = B * (2 * H1_ROWS * 16 * CPAD          # conv1
                 + 16 * 2 * CLS_ROWS * CPAD * CPAD  # conv2 taps
                 + 2 * 3200 * 256                   # fc1
                 + 2 * 256 * 128)                   # fc2
    bytes_accessed = 4 * (p1.size + kp["w1"].size + kp["b1"].size + kp["w2"].size
                          + kp["b2"].size + kp["wf1"].size + kp["bf1"].size
                          + kp["wf2"].size + kp["bf2"].size + B * 8 * CPAD)

    grid_spec = pltpu.PrefetchScalarGridSpec(
        num_scalar_prefetch=0,
        grid=(B,),
        in_specs=[
            pl.BlockSpec((1, H1_ROWS, 16), lambda b: (b, 0, 0)),   # p1 (per sample)
            pl.BlockSpec((16, CPAD), lambda b: (0, 0)),            # w1
            pl.BlockSpec((1, CPAD), lambda b: (0, 0)),             # b1
            pl.BlockSpec((16, CPAD, CPAD), lambda b: (0, 0, 0)),   # w2
            pl.BlockSpec((1, CPAD), lambda b: (0, 0)),             # b2
            pl.BlockSpec((3200, 256), lambda b: (0, 0)),           # wf1
            pl.BlockSpec((1, 256), lambda b: (0, 0)),              # bf1
            pl.BlockSpec((256, CPAD), lambda b: (0, 0)),           # wf2
            pl.BlockSpec((1, CPAD), lambda b: (0, 0)),             # bf2
        ],
        out_specs=pl.BlockSpec((1, 8, CPAD), lambda b: (b, 0, 0)),
        scratch_shapes=[
            pltpu.VMEM((H1_ROWS, CPAD), jnp.float32),      # h1 (parity-ordered)
            pltpu.VMEM((16, CLS_ROWS, CPAD), jnp.float32), # conv2 per-tap partials
            pltpu.VMEM((110, CPAD), jnp.float32),          # h2 rows used by the pool
            pltpu.VMEM((1, 25 * CPAD), jnp.float32),       # pooled, flattened
        ],
    )
    out = pl.pallas_call(
        _cnn1_kernel,
        out_shape=jax.ShapeDtypeStruct((B, 8, CPAD), jnp.float32),
        grid_spec=grid_spec,
        compiler_params=pltpu.CompilerParams(
            dimension_semantics=("parallel",),
            vmem_limit_bytes=32 * 1024 * 1024,
        ),
        cost_estimate=pl.CostEstimate(
            flops=flops, transcendentals=0, bytes_accessed=bytes_accessed),
    )(p1, kp["w1"], kp["b1"], kp["w2"], kp["b2"],
      kp["wf1"], kp["bf1"], kp["wf2"], kp["bf2"])
    return out[:, 0, :10]


# ----------------------------------------------------------------------------
# Offline weight preparation: pad channels to 128/256 lanes and fold all layout
# permutations (im2col order, PyTorch (C,H,W) flatten order, Linear transpose)
# into the stored weights so the runtime path has zero transposes.
# ----------------------------------------------------------------------------
def prepare_kernel_params(p):
    f32 = jnp.float32
    w1k = jnp.zeros((16, CPAD), f32).at[:, :20].set(
        jnp.transpose(p["w1"][:, 0], (1, 2, 0)).reshape(16, 20))
    b1k = jnp.zeros((1, CPAD), f32).at[0, :20].set(p["b1"])
    w2k = jnp.zeros((16, CPAD, CPAD), f32).at[:, :20, :20].set(
        jnp.transpose(p["w2"], (2, 3, 1, 0)).reshape(16, 20, 20))
    b2k = jnp.zeros((1, CPAD), f32).at[0, :20].set(p["b2"])
    # fc1: PyTorch flatten is (c, h, w); kernel flatten is (h, w, c_pad128).
    wf1_chw = jnp.transpose(p["wf1"], (1, 0)).reshape(20, 5, 5, 250)   # [c,h,w,out]
    wf1_hwc = jnp.transpose(wf1_chw, (1, 2, 0, 3)).reshape(25, 20, 250)
    wf1k = jnp.zeros((25, CPAD, 256), f32).at[:, :20, :250].set(wf1_hwc)
    wf1k = wf1k.reshape(25 * CPAD, 256)
    bf1k = jnp.zeros((1, 256), f32).at[0, :250].set(p["bf1"])
    wf2k = jnp.zeros((256, CPAD), f32).at[:250, :10].set(jnp.transpose(p["wf2"]))
    bf2k = jnp.zeros((1, CPAD), f32).at[0, :10].set(p["bf2"])
    return dict(w1=w1k, b1=b1k, w2=w2k, b2=b2k,
                wf1=wf1k, bf1=bf1k, wf2=wf2k, bf2=bf2k)


# ----------------------------------------------------------------------------
# Pure-JAX reference (PyTorch-layout parameters) for a correctness sanity check
# ----------------------------------------------------------------------------
def reference_forward(x_nchw, p):
    dn = ("NCHW", "OIHW", "NCHW")
    y = lax.conv_general_dilated(x_nchw, p["w1"], (1, 1), "VALID",
                                 dimension_numbers=dn,
                                 precision=lax.Precision.HIGHEST)
    y = jax.nn.relu(y + p["b1"].reshape(1, -1, 1, 1))
    y = lax.conv_general_dilated(y, p["w2"], (2, 2), "VALID",
                                 dimension_numbers=dn,
                                 precision=lax.Precision.HIGHEST)
    y = jax.nn.relu(y + p["b2"].reshape(1, -1, 1, 1))
    y = lax.reduce_window(y, -jnp.inf, lax.max, (1, 1, 2, 2), (1, 1, 2, 2), "VALID")
    y = y.reshape(y.shape[0], -1)                       # PyTorch (C,H,W) flatten
    y = jax.nn.relu(y @ p["wf1"].T + p["bf1"])
    y = y @ p["wf2"].T + p["bf2"]
    return y


# ----------------------------------------------------------------------------
# Deterministic synthetic parameters (PyTorch shapes from CNN_1.__init__)
# ----------------------------------------------------------------------------
def init_params(key):
    ks = jax.random.split(key, 8)
    f32 = jnp.float32
    return dict(
        w1=jax.random.normal(ks[0], (20, 1, 4, 4), f32) * 0.1,
        b1=jax.random.normal(ks[1], (20,), f32) * 0.1,
        w2=jax.random.normal(ks[2], (20, 20, 4, 4), f32) * 0.05,
        b2=jax.random.normal(ks[3], (20,), f32) * 0.1,
        wf1=jax.random.normal(ks[4], (250, 500), f32) * 0.04,
        bf1=jax.random.normal(ks[5], (250,), f32) * 0.1,
        wf2=jax.random.normal(ks[6], (10, 250), f32) * 0.06,
        bf2=jax.random.normal(ks[7], (10,), f32) * 0.1,
    )


if __name__ == "__main__":
    key = jax.random.PRNGKey(0)
    k_x, k_p = jax.random.split(key)
    params = init_params(k_p)
    kparams = prepare_kernel_params(params)

    # Module implies 28x28 single-channel input (fc1 expects 20*5*5 features).
    x = jax.random.normal(k_x, (2, 1, 28, 28), jnp.float32)

    fwd = jax.jit(cnn1_forward)
    out = jax.block_until_ready(fwd(x, kparams))
    assert out.shape == (2, 10)

    ref = reference_forward(x, params)
    assert jnp.allclose(out, ref, rtol=1e-2, atol=1e-2), "mismatch vs reference"

    print("KERNEL_OK")
</pallas_src>

<mosaic_0001>
module attributes {stable_mosaic.version = 11 : i64} {
  func.func @_cnn1_kernel(%arg0: i32, %arg1: memref<1x704x16xf32, #tpu.memory_space<vmem>>, %arg2: memref<16x128xf32, #tpu.memory_space<vmem>>, %arg3: memref<1x128xf32, #tpu.memory_space<vmem>>, %arg4: memref<16x128x128xf32, #tpu.memory_space<vmem>>, %arg5: memref<1x128xf32, #tpu.memory_space<vmem>>, %arg6: memref<3200x256xf32, #tpu.memory_space<vmem>>, %arg7: memref<1x256xf32, #tpu.memory_space<vmem>>, %arg8: memref<256x128xf32, #tpu.memory_space<vmem>>, %arg9: memref<1x128xf32, #tpu.memory_space<vmem>>, %arg10: memref<1x8x128xf32, #tpu.memory_space<vmem>>, %arg11: memref<704x128xf32, #tpu.memory_space<vmem>>, %arg12: memref<16x176x128xf32, #tpu.memory_space<vmem>>, %arg13: memref<110x128xf32, #tpu.memory_space<vmem>>, %arg14: memref<1x3200xf32, #tpu.memory_space<vmem>>) attributes {dimension_semantics = [#tpu.dimension_semantics<parallel>], iteration_bounds = array<i64: 2>, scalar_prefetch = 0 : i64, scratch_operands = 4 : i64, tpu.core_type = #tpu.core_type<tc>, window_params = [{transform_indices = @transform_0, window_bounds = array<i64: 1, 704, 16>}, {pipeline_mode = #tpu.pipeline_mode<synchronous>, transform_indices = @transform_1, window_bounds = array<i64: 16, 128>}, {pipeline_mode = #tpu.pipeline_mode<synchronous>, transform_indices = @transform_2, window_bounds = array<i64: 1, 128>}, {pipeline_mode = #tpu.pipeline_mode<synchronous>, transform_indices = @transform_3, window_bounds = array<i64: 16, 128, 128>}, {pipeline_mode = #tpu.pipeline_mode<synchronous>, transform_indices = @transform_4, window_bounds = array<i64: 1, 128>}, {pipeline_mode = #tpu.pipeline_mode<synchronous>, transform_indices = @transform_5, window_bounds = array<i64: 3200, 256>}, {pipeline_mode = #tpu.pipeline_mode<synchronous>, transform_indices = @transform_6, window_bounds = array<i64: 1, 256>}, {pipeline_mode = #tpu.pipeline_mode<synchronous>, transform_indices = @transform_7, window_bounds = array<i64: 256, 128>}, {pipeline_mode = #tpu.pipeline_mode<synchronous>, transform_indices = @transform_8, window_bounds = array<i64: 1, 128>}, {transform_indices = @transform_9, window_bounds = array<i64: 1, 8, 128>}]} {
    %c0 = arith.constant 0 : index
    %c0_0 = arith.constant 0 : index
    %c0_1 = arith.constant 0 : index
    %0 = vector.load %arg1[%c0, %c0_0, %c0_1] : memref<1x704x16xf32, #tpu.memory_space<vmem>>, vector<1x704x16xf32>
    %1 = vector.shape_cast %0 : vector<1x704x16xf32> to vector<704x16xf32>
    %c0_2 = arith.constant 0 : index
    %c0_3 = arith.constant 0 : index
    %2 = vector.load %arg2[%c0_2, %c0_3] : memref<16x128xf32, #tpu.memory_space<vmem>>, vector<16x128xf32>
    %cst = arith.constant dense<0.000000e+00> : vector<704x128xf32>
    %3 = tpu.matmul %1, %2, %cst {dimension_numbers = #tpu.dot_dimension_numbers<[1], [0], [0], [1], [0, 0, 1, 1], [], []>} : vector<704x16xf32>, vector<16x128xf32>, vector<704x128xf32> -> vector<704x128xf32>
    %c0_4 = arith.constant 0 : index
    %c0_5 = arith.constant 0 : index
    %4 = vector.load %arg3[%c0_4, %c0_5] : memref<1x128xf32, #tpu.memory_space<vmem>>, vector<1x128xf32>
    %5 = vector.broadcast %4 : vector<1x128xf32> to vector<704x128xf32>
    %6 = arith.addf %3, %5 : vector<704x128xf32>
    %cst_6 = arith.constant 0.000000e+00 : f32
    %7 = vector.broadcast %cst_6 : f32 to vector<704x128xf32>
    %8 = arith.maximumf %6, %7 : vector<704x128xf32>
    %c0_7 = arith.constant 0 : index
    %c0_8 = arith.constant 0 : index
    %9 = vector.load %arg11[%c0_7, %c0_8] : memref<704x128xf32, #tpu.memory_space<vmem>>, vector<704x128xf32>
    tpu.vector_store %arg11[%c0_7, %c0_8], %8 {strides = array<i32>} : memref<704x128xf32, #tpu.memory_space<vmem>>, vector<704x128xf32>,
    %c0_9 = arith.constant 0 : index
    %c0_10 = arith.constant 0 : index
    %10 = vector.load %arg11[%c0_9, %c0_10] : memref<704x128xf32, #tpu.memory_space<vmem>>, vector<176x128xf32>
    %c0_11 = arith.constant 0 : index
    %c0_12 = arith.constant 0 : index
    %c0_13 = arith.constant 0 : index
    %11 = vector.load %arg4[%c0_11, %c0_12, %c0_13] : memref<16x128x128xf32, #tpu.memory_space<vmem>>, vector<1x128x128xf32>
    %12 = vector.shape_cast %11 : vector<1x128x128xf32> to vector<128x128xf32>
    %cst_14 = arith.constant dense<0.000000e+00> : vector<176x128xf32>
    %13 = tpu.matmul %10, %12, %cst_14 {dimension_numbers = #tpu.dot_dimension_numbers<[1], [0], [0], [1], [0, 0, 1, 1], [], []>} : vector<176x128xf32>, vector<128x128xf32>, vector<176x128xf32> -> vector<176x128xf32>
    %c0_15 = arith.constant 0 : index
    %c0_16 = arith.constant 0 : index
    %c0_17 = arith.constant 0 : index
    %14 = vector.load %arg12[%c0_15, %c0_16, %c0_17] : memref<16x176x128xf32, #tpu.memory_space<vmem>>, vector<1x176x128xf32>
    %15 = vector.shape_cast %14 : vector<1x176x128xf32> to vector<176x128xf32>
    %16 = vector.shape_cast %13 : vector<176x128xf32> to vector<1x176x128xf32>
    tpu.vector_store %arg12[%c0_15, %c0_16, %c0_17], %16 {strides = array<i32>} : memref<16x176x128xf32, #tpu.memory_space<vmem>>, vector<1x176x128xf32>,
    %c176 = arith.constant 176 : index
    %c0_18 = arith.constant 0 : index
    %17 = vector.load %arg11[%c176, %c0_18] : memref<704x128xf32, #tpu.memory_space<vmem>>, vector<176x128xf32>
    %c1 = arith.constant 1 : index
    %c0_19 = arith.constant 0 : index
    %c0_20 = arith.constant 0 : index
    %18 = vector.load %arg4[%c1, %c0_19, %c0_20] : memref<16x128x128xf32, #tpu.memory_space<vmem>>, vector<1x128x128xf32>
    %19 = vector.shape_cast %18 : vector<1x128x128xf32> to vector<128x128xf32>
    %cst_21 = arith.constant dense<0.000000e+00> : vector<176x128xf32>
    %20 = tpu.matmul %17, %19, %cst_21 {dimension_numbers = #tpu.dot_dimension_numbers<[1], [0], [0], [1], [0, 0, 1, 1], [], []>} : vector<176x128xf32>, vector<128x128xf32>, vector<176x128xf32> -> vector<176x128xf32>
    %c1_22 = arith.constant 1 : index
    %c0_23 = arith.constant 0 : index
    %c0_24 = arith.constant 0 : index
    %21 = vector.load %arg12[%c1_22, %c0_23, %c0_24] : memref<16x176x128xf32, #tpu.memory_space<vmem>>, vector<1x176x128xf32>
    %22 = vector.shape_cast %21 : vector<1x176x128xf32> to vector<176x128xf32>
    %23 = vector.shape_cast %20 : vector<176x128xf32> to vector<1x176x128xf32>
    tpu.vector_store %arg12[%c1_22, %c0_23, %c0_24], %23 {strides = array<i32>} : memref<16x176x128xf32, #tpu.memory_space<vmem>>, vector<1x176x128xf32>,
    %c0_25 = arith.constant 0 : index
    %c0_26 = arith.constant 0 : index
    %24 = vector.load %arg11[%c0_25, %c0_26] : memref<704x128xf32, #tpu.memory_space<vmem>>, vector<176x128xf32>
    %c2 = arith.constant 2 : index
    %c0_27 = arith.constant 0 : index
    %c0_28 = arith.constant 0 : index
    %25 = vector.load %arg4[%c2, %c0_27, %c0_28] : memref<16x128x128xf32, #tpu.memory_space<vmem>>, vector<1x128x128xf32>
    %26 = vector.shape_cast %25 : vector<1x128x128xf32> to vector<128x128xf32>
    %cst_29 = arith.constant dense<0.000000e+00> : vector<176x128xf32>
    %27 = tpu.matmul %24, %26, %cst_29 {dimension_numbers = #tpu.dot_dimension_numbers<[1], [0], [0], [1], [0, 0, 1, 1], [], []>} : vector<176x128xf32>, vector<128x128xf32>, vector<176x128xf32> -> vector<176x128xf32>
    %c2_30 = arith.constant 2 : index
    %c0_31 = arith.constant 0 : index
    %c0_32 = arith.constant 0 : index
    %28 = vector.load %arg12[%c2_30, %c0_31, %c0_32] : memref<16x176x128xf32, #tpu.memory_space<vmem>>, vector<1x176x128xf32>
    %29 = vector.shape_cast %28 : vector<1x176x128xf32> to vector<176x128xf32>
    %30 = vector.shape_cast %27 : vector<176x128xf32> to vector<1x176x128xf32>
    tpu.vector_store %arg12[%c2_30, %c0_31, %c0_32], %30 {strides = array<i32>} : memref<16x176x128xf32, #tpu.memory_space<vmem>>, vector<1x176x128xf32>,
    %c176_33 = arith.constant 176 : index
    %c0_34 = arith.constant 0 : index
    %31 = vector.load %arg11[%c176_33, %c0_34] : memref<704x128xf32, #tpu.memory_space<vmem>>, vector<176x128xf32>
    %c3 = arith.constant 3 : index
    %c0_35 = arith.constant 0 : index
    %c0_36 = arith.constant 0 : index
    %32 = vector.load %arg4[%c3, %c0_35, %c0_36] : memref<16x128x128xf32, #tpu.memory_space<vmem>>, vector<1x128x128xf32>
    %33 = vector.shape_cast %32 : vector<1x128x128xf32> to vector<128x128xf32>
    %cst_37 = arith.constant dense<0.000000e+00> : vector<176x128xf32>
    %34 = tpu.matmul %31, %33, %cst_37 {dimension_numbers = #tpu.dot_dimension_numbers<[1], [0], [0], [1], [0, 0, 1, 1], [], []>} : vector<176x128xf32>, vector<128x128xf32>, vector<176x128xf32> -> vector<176x128xf32>
    %c3_38 = arith.constant 3 : index
    %c0_39 = arith.constant 0 : index
    %c0_40 = arith.constant 0 : index
    %35 = vector.load %arg12[%c3_38, %c0_39, %c0_40] : memref<16x176x128xf32, #tpu.memory_space<vmem>>, vector<1x176x128xf32>
    %36 = vector.shape_cast %35 : vector<1x176x128xf32> to vector<176x128xf32>
    %37 = vector.shape_cast %34 : vector<176x128xf32> to vector<1x176x128xf32>
    tpu.vector_store %arg12[%c3_38, %c0_39, %c0_40], %37 {strides = array<i32>} : memref<16x176x128xf32, #tpu.memory_space<vmem>>, vector<1x176x128xf32>,
    %c352 = arith.constant 352 : index
    %c0_41 = arith.constant 0 : index
    %38 = vector.load %arg11[%c352, %c0_41] : memref<704x128xf32, #tpu.memory_space<vmem>>, vector<176x128xf32>
    %c4 = arith.constant 4 : index
    %c0_42 = arith.constant 0 : index
    %c0_43 = arith.constant 0 : index
    %39 = vector.load %arg4[%c4, %c0_42, %c0_43] : memref<16x128x128xf32, #tpu.memory_space<vmem>>, vector<1x128x128xf32>
    %40 = vector.shape_cast %39 : vector<1x128x128xf32> to vector<128x128xf32>
    %cst_44 = arith.constant dense<0.000000e+00> : vector<176x128xf32>
    %41 = tpu.matmul %38, %40, %cst_44 {dimension_numbers = #tpu.dot_dimension_numbers<[1], [0], [0], [1], [0, 0, 1, 1], [], []>} : vector<176x128xf32>, vector<128x128xf32>, vector<176x128xf32> -> vector<176x128xf32>
    %c4_45 = arith.constant 4 : index
    %c0_46 = arith.constant 0 : index
    %c0_47 = arith.constant 0 : index
    %42 = vector.load %arg12[%c4_45, %c0_46, %c0_47] : memref<16x176x128xf32, #tpu.memory_space<vmem>>, vector<1x176x128xf32>
    %43 = vector.shape_cast %42 : vector<1x176x128xf32> to vector<176x128xf32>
    %44 = vector.shape_cast %41 : vector<176x128xf32> to vector<1x176x128xf32>
    tpu.vector_store %arg12[%c4_45, %c0_46, %c0_47], %44 {strides = array<i32>} : memref<16x176x128xf32, #tpu.memory_space<vmem>>, vector<1x176x128xf32>,
    %c528 = arith.constant 528 : index
    %c0_48 = arith.constant 0 : index
    %45 = vector.load %arg11[%c528, %c0_48] : memref<704x128xf32, #tpu.memory_space<vmem>>, vector<176x128xf32>
    %c5 = arith.constant 5 : index
    %c0_49 = arith.constant 0 : index
    %c0_50 = arith.constant 0 : index
    %46 = vector.load %arg4[%c5, %c0_49, %c0_50] : memref<16x128x128xf32, #tpu.memory_space<vmem>>, vector<1x128x128xf32>
    %47 = vector.shape_cast %46 : vector<1x128x128xf32> to vector<128x128xf32>
    %cst_51 = arith.constant dense<0.000000e+00> : vector<176x128xf32>
    %48 = tpu.matmul %45, %47, %cst_51 {dimension_numbers = #tpu.dot_dimension_numbers<[1], [0], [0], [1], [0, 0, 1, 1], [], []>} : vector<176x128xf32>, vector<128x128xf32>, vector<176x128xf32> -> vector<176x128xf32>
    %c5_52 = arith.constant 5 : index
    %c0_53 = arith.constant 0 : index
    %c0_54 = arith.constant 0 : index
    %49 = vector.load %arg12[%c5_52, %c0_53, %c0_54] : memref<16x176x128xf32, #tpu.memory_space<vmem>>, vector<1x176x128xf32>
    %50 = vector.shape_cast %49 : vector<1x176x128xf32> to vector<176x128xf32>
    %51 = vector.shape_cast %48 : vector<176x128xf32> to vector<1x176x128xf32>
    tpu.vector_store %arg12[%c5_52, %c0_53, %c0_54], %51 {strides = array<i32>} : memref<16x176x128xf32, #tpu.memory_space<vmem>>, vector<1x176x128xf32>,
    %c352_55 = arith.constant 352 : index
    %c0_56 = arith.constant 0 : index
    %52 = vector.load %arg11[%c352_55, %c0_56] : memref<704x128xf32, #tpu.memory_space<vmem>>, vector<176x128xf32>
    %c6 = arith.constant 6 : index
    %c0_57 = arith.constant 0 : index
    %c0_58 = arith.constant 0 : index
    %53 = vector.load %arg4[%c6, %c0_57, %c0_58] : memref<16x128x128xf32, #tpu.memory_space<vmem>>, vector<1x128x128xf32>
    %54 = vector.shape_cast %53 : vector<1x128x128xf32> to vector<128x128xf32>
    %cst_59 = arith.constant dense<0.000000e+00> : vector<176x128xf32>
    %55 = tpu.matmul %52, %54, %cst_59 {dimension_numbers = #tpu.dot_dimension_numbers<[1], [0], [0], [1], [0, 0, 1, 1], [], []>} : vector<176x128xf32>, vector<128x128xf32>, vector<176x128xf32> -> vector<176x128xf32>
    %c6_60 = arith.constant 6 : index
    %c0_61 = arith.constant 0 : index
    %c0_62 = arith.constant 0 : index
    %56 = vector.load %arg12[%c6_60, %c0_61, %c0_62] : memref<16x176x128xf32, #tpu.memory_space<vmem>>, vector<1x176x128xf32>
    %57 = vector.shape_cast %56 : vector<1x176x128xf32> to vector<176x128xf32>
    %58 = vector.shape_cast %55 : vector<176x128xf32> to vector<1x176x128xf32>
    tpu.vector_store %arg12[%c6_60, %c0_61, %c0_62], %58 {strides = array<i32>} : memref<16x176x128xf32, #tpu.memory_space<vmem>>, vector<1x176x128xf32>,
    %c528_63 = arith.constant 528 : index
    %c0_64 = arith.constant 0 : index
    %59 = vector.load %arg11[%c528_63, %c0_64] : memref<704x128xf32, #tpu.memory_space<vmem>>, vector<176x128xf32>
    %c7 = arith.constant 7 : index
    %c0_65 = arith.constant 0 : index
    %c0_66 = arith.constant 0 : index
    %60 = vector.load %arg4[%c7, %c0_65, %c0_66] : memref<16x128x128xf32, #tpu.memory_space<vmem>>, vector<1x128x128xf32>
    %61 = vector.shape_cast %60 : vector<1x128x128xf32> to vector<128x128xf32>
    %cst_67 = arith.constant dense<0.000000e+00> : vector<176x128xf32>
    %62 = tpu.matmul %59, %61, %cst_67 {dimension_numbers = #tpu.dot_dimension_numbers<[1], [0], [0], [1], [0, 0, 1, 1], [], []>} : vector<176x128xf32>, vector<128x128xf32>, vector<176x128xf32> -> vector<176x128xf32>
    %c7_68 = arith.constant 7 : index
    %c0_69 = arith.constant 0 : index
    %c0_70 = arith.constant 0 : index
    %63 = vector.load %arg12[%c7_68, %c0_69, %c0_70] : memref<16x176x128xf32, #tpu.memory_space<vmem>>, vector<1x176x128xf32>
    %64 = vector.shape_cast %63 : vector<1x176x128xf32> to vector<176x128xf32>
    %65 = vector.shape_cast %62 : vector<176x128xf32> to vector<1x176x128xf32>
    tpu.vector_store %arg12[%c7_68, %c0_69, %c0_70], %65 {strides = array<i32>} : memref<16x176x128xf32, #tpu.memory_space<vmem>>, vector<1x176x128xf32>,
    %c0_71 = arith.constant 0 : index
    %c0_72 = arith.constant 0 : index
    %66 = vector.load %arg11[%c0_71, %c0_72] : memref<704x128xf32, #tpu.memory_space<vmem>>, vector<176x128xf32>
    %c8 = arith.constant 8 : index
    %c0_73 = arith.constant 0 : index
    %c0_74 = arith.constant 0 : index
    %67 = vector.load %arg4[%c8, %c0_73, %c0_74] : memref<16x128x128xf32, #tpu.memory_space<vmem>>, vector<1x128x128xf32>
    %68 = vector.shape_cast %67 : vector<1x128x128xf32> to vector<128x128xf32>
    %cst_75 = arith.constant dense<0.000000e+00> : vector<176x128xf32>
    %69 = tpu.matmul %66, %68, %cst_75 {dimension_numbers = #tpu.dot_dimension_numbers<[1], [0], [0], [1], [0, 0, 1, 1], [], []>} : vector<176x128xf32>, vector<128x128xf32>, vector<176x128xf32> -> vector<176x128xf32>
    %c8_76 = arith.constant 8 : index
    %c0_77 = arith.constant 0 : index
    %c0_78 = arith.constant 0 : index
    %70 = vector.load %arg12[%c8_76, %c0_77, %c0_78] : memref<16x176x128xf32, #tpu.memory_space<vmem>>, vector<1x176x128xf32>
    %71 = vector.shape_cast %70 : vector<1x176x128xf32> to vector<176x128xf32>
    %72 = vector.shape_cast %69 : vector<176x128xf32> to vector<1x176x128xf32>
    tpu.vector_store %arg12[%c8_76, %c0_77, %c0_78], %72 {strides = array<i32>} : memref<16x176x128xf32, #tpu.memory_space<vmem>>, vector<1x176x128xf32>,
    %c176_79 = arith.constant 176 : index
    %c0_80 = arith.constant 0 : index
    %73 = vector.load %arg11[%c176_79, %c0_80] : memref<704x128xf32, #tpu.memory_space<vmem>>, vector<176x128xf32>
    %c9 = arith.constant 9 : index
    %c0_81 = arith.constant 0 : index
    %c0_82 = arith.constant 0 : index
    %74 = vector.load %arg4[%c9, %c0_81, %c0_82] : memref<16x128x128xf32, #tpu.memory_space<vmem>>, vector<1x128x128xf32>
    %75 = vector.shape_cast %74 : vector<1x128x128xf32> to vector<128x128xf32>
    %cst_83 = arith.constant dense<0.000000e+00> : vector<176x128xf32>
    %76 = tpu.matmul %73, %75, %cst_83 {dimension_numbers = #tpu.dot_dimension_numbers<[1], [0], [0], [1], [0, 0, 1, 1], [], []>} : vector<176x128xf32>, vector<128x128xf32>, vector<176x128xf32> -> vector<176x128xf32>
    %c9_84 = arith.constant 9 : index
    %c0_85 = arith.constant 0 : index
    %c0_86 = arith.constant 0 : index
    %77 = vector.load %arg12[%c9_84, %c0_85, %c0_86] : memref<16x176x128xf32, #tpu.memory_space<vmem>>, vector<1x176x128xf32>
    %78 = vector.shape_cast %77 : vector<1x176x128xf32> to vector<176x128xf32>
    %79 = vector.shape_cast %76 : vector<176x128xf32> to vector<1x176x128xf32>
    tpu.vector_store %arg12[%c9_84, %c0_85, %c0_86], %79 {strides = array<i32>} : memref<16x176x128xf32, #tpu.memory_space<vmem>>, vector<1x176x128xf32>,
    %c0_87 = arith.constant 0 : index
    %c0_88 = arith.constant 0 : index
    %80 = vector.load %arg11[%c0_87, %c0_88] : memref<704x128xf32, #tpu.memory_space<vmem>>, vector<176x128xf32>
    %c10 = arith.constant 10 : index
    %c0_89 = arith.constant 0 : index
    %c0_90 = arith.constant 0 : index
    %81 = vector.load %arg4[%c10, %c0_89, %c0_90] : memref<16x128x128xf32, #tpu.memory_space<vmem>>, vector<1x128x128xf32>
    %82 = vector.shape_cast %81 : vector<1x128x128xf32> to vector<128x128xf32>
    %cst_91 = arith.constant dense<0.000000e+00> : vector<176x128xf32>
    %83 = tpu.matmul %80, %82, %cst_91 {dimension_numbers = #tpu.dot_dimension_numbers<[1], [0], [0], [1], [0, 0, 1, 1], [], []>} : vector<176x128xf32>, vector<128x128xf32>, vector<176x128xf32> -> vector<176x128xf32>
    %c10_92 = arith.constant 10 : index
    %c0_93 = arith.constant 0 : index
    %c0_94 = arith.constant 0 : index
    %84 = vector.load %arg12[%c10_92, %c0_93, %c0_94] : memref<16x176x128xf32, #tpu.memory_space<vmem>>, vector<1x176x128xf32>
    %85 = vector.shape_cast %84 : vector<1x176x128xf32> to vector<176x128xf32>
    %86 = vector.shape_cast %83 : vector<176x128xf32> to vector<1x176x128xf32>
    tpu.vector_store %arg12[%c10_92, %c0_93, %c0_94], %86 {strides = array<i32>} : memref<16x176x128xf32, #tpu.memory_space<vmem>>, vector<1x176x128xf32>,
    %c176_95 = arith.constant 176 : index
    %c0_96 = arith.constant 0 : index
    %87 = vector.load %arg11[%c176_95, %c0_96] : memref<704x128xf32, #tpu.memory_space<vmem>>, vector<176x128xf32>
    %c11 = arith.constant 11 : index
    %c0_97 = arith.constant 0 : index
    %c0_98 = arith.constant 0 : index
    %88 = vector.load %arg4[%c11, %c0_97, %c0_98] : memref<16x128x128xf32, #tpu.memory_space<vmem>>, vector<1x128x128xf32>
    %89 = vector.shape_cast %88 : vector<1x128x128xf32> to vector<128x128xf32>
    %cst_99 = arith.constant dense<0.000000e+00> : vector<176x128xf32>
    %90 = tpu.matmul %87, %89, %cst_99 {dimension_numbers = #tpu.dot_dimension_numbers<[1], [0], [0], [1], [0, 0, 1, 1], [], []>} : vector<176x128xf32>, vector<128x128xf32>, vector<176x128xf32> -> vector<176x128xf32>
    %c11_100 = arith.constant 11 : index
    %c0_101 = arith.constant 0 : index
    %c0_102 = arith.constant 0 : index
    %91 = vector.load %arg12[%c11_100, %c0_101, %c0_102] : memref<16x176x128xf32, #tpu.memory_space<vmem>>, vector<1x176x128xf32>
    %92 = vector.shape_cast %91 : vector<1x176x128xf32> to vector<176x128xf32>
    %93 = vector.shape_cast %90 : vector<176x128xf32> to vector<1x176x128xf32>
    tpu.vector_store %arg12[%c11_100, %c0_101, %c0_102], %93 {strides = array<i32>} : memref<16x176x128xf32, #tpu.memory_space<vmem>>, vector<1x176x128xf32>,
    %c352_103 = arith.constant 352 : index
    %c0_104 = arith.constant 0 : index
    %94 = vector.load %arg11[%c352_103, %c0_104] : memref<704x128xf32, #tpu.memory_space<vmem>>, vector<176x128xf32>
    %c12 = arith.constant 12 : index
    %c0_105 = arith.constant 0 : index
    %c0_106 = arith.constant 0 : index
    %95 = vector.load %arg4[%c12, %c0_105, %c0_106] : memref<16x128x128xf32, #tpu.memory_space<vmem>>, vector<1x128x128xf32>
    %96 = vector.shape_cast %95 : vector<1x128x128xf32> to vector<128x128xf32>
    %cst_107 = arith.constant dense<0.000000e+00> : vector<176x128xf32>
    %97 = tpu.matmul %94, %96, %cst_107 {dimension_numbers = #tpu.dot_dimension_numbers<[1], [0], [0], [1], [0, 0, 1, 1], [], []>} : vector<176x128xf32>, vector<128x128xf32>, vector<176x128xf32> -> vector<176x128xf32>
    %c12_108 = arith.constant 12 : index
    %c0_109 = arith.constant 0 : index
    %c0_110 = arith.constant 0 : index
    %98 = vector.load %arg12[%c12_108, %c0_109, %c0_110] : memref<16x176x128xf32, #tpu.memory_space<vmem>>, vector<1x176x128xf32>
    %99 = vector.shape_cast %98 : vector<1x176x128xf32> to vector<176x128xf32>
    %100 = vector.shape_cast %97 : vector<176x128xf32> to vector<1x176x128xf32>
    tpu.vector_store %arg12[%c12_108, %c0_109, %c0_110], %100 {strides = array<i32>} : memref<16x176x128xf32, #tpu.memory_space<vmem>>, vector<1x176x128xf32>,
    %c528_111 = arith.constant 528 : index
    %c0_112 = arith.constant 0 : index
    %101 = vector.load %arg11[%c528_111, %c0_112] : memref<704x128xf32, #tpu.memory_space<vmem>>, vector<176x128xf32>
    %c13 = arith.constant 13 : index
    %c0_113 = arith.constant 0 : index
    %c0_114 = arith.constant 0 : index
    %102 = vector.load %arg4[%c13, %c0_113, %c0_114] : memref<16x128x128xf32, #tpu.memory_space<vmem>>, vector<1x128x128xf32>
    %103 = vector.shape_cast %102 : vector<1x128x128xf32> to vector<128x128xf32>
    %cst_115 = arith.constant dense<0.000000e+00> : vector<176x128xf32>
    %104 = tpu.matmul %101, %103, %cst_115 {dimension_numbers = #tpu.dot_dimension_numbers<[1], [0], [0], [1], [0, 0, 1, 1], [], []>} : vector<176x128xf32>, vector<128x128xf32>, vector<176x128xf32> -> vector<176x128xf32>
    %c13_116 = arith.constant 13 : index
    %c0_117 = arith.constant 0 : index
    %c0_118 = arith.constant 0 : index
    %105 = vector.load %arg12[%c13_116, %c0_117, %c0_118] : memref<16x176x128xf32, #tpu.memory_space<vmem>>, vector<1x176x128xf32>
    %106 = vector.shape_cast %105 : vector<1x176x128xf32> to vector<176x128xf32>
    %107 = vector.shape_cast %104 : vector<176x128xf32> to vector<1x176x128xf32>
    tpu.vector_store %arg12[%c13_116, %c0_117, %c0_118], %107 {strides = array<i32>} : memref<16x176x128xf32, #tpu.memory_space<vmem>>, vector<1x176x128xf32>,
    %c352_119 = arith.constant 352 : index
    %c0_120 = arith.constant 0 : index
    %108 = vector.load %arg11[%c352_119, %c0_120] : memref<704x128xf32, #tpu.memory_space<vmem>>, vector<176x128xf32>
    %c14 = arith.constant 14 : index
    %c0_121 = arith.constant 0 : index
    %c0_122 = arith.constant 0 : index
    %109 = vector.load %arg4[%c14, %c0_121, %c0_122] : memref<16x128x128xf32, #tpu.memory_space<vmem>>, vector<1x128x128xf32>
    %110 = vector.shape_cast %109 : vector<1x128x128xf32> to vector<128x128xf32>
    %cst_123 = arith.constant dense<0.000000e+00> : vector<176x128xf32>
    %111 = tpu.matmul %108, %110, %cst_123 {dimension_numbers = #tpu.dot_dimension_numbers<[1], [0], [0], [1], [0, 0, 1, 1], [], []>} : vector<176x128xf32>, vector<128x128xf32>, vector<176x128xf32> -> vector<176x128xf32>
    %c14_124 = arith.constant 14 : index
    %c0_125 = arith.constant 0 : index
    %c0_126 = arith.constant 0 : index
    %112 = vector.load %arg12[%c14_124, %c0_125, %c0_126] : memref<16x176x128xf32, #tpu.memory_space<vmem>>, vector<1x176x128xf32>
    %113 = vector.shape_cast %112 : vector<1x176x128xf32> to vector<176x128xf32>
    %114 = vector.shape_cast %111 : vector<176x128xf32> to vector<1x176x128xf32>
    tpu.vector_store %arg12[%c14_124, %c0_125, %c0_126], %114 {strides = array<i32>} : memref<16x176x128xf32, #tpu.memory_space<vmem>>, vector<1x176x128xf32>,
    %c528_127 = arith.constant 528 : index
    %c0_128 = arith.constant 0 : index
    %115 = vector.load %arg11[%c528_127, %c0_128] : memref<704x128xf32, #tpu.memory_space<vmem>>, vector<176x128xf32>
    %c15 = arith.constant 15 : index
    %c0_129 = arith.constant 0 : index
    %c0_130 = arith.constant 0 : index
    %116 = vector.load %arg4[%c15, %c0_129, %c0_130] : memref<16x128x128xf32, #tpu.memory_space<vmem>>, vector<1x128x128xf32>
    %117 = vector.shape_cast %116 : vector<1x128x128xf32> to vector<128x128xf32>
    %cst_131 = arith.constant dense<0.000000e+00> : vector<176x128xf32>
    %118 = tpu.matmul %115, %117, %cst_131 {dimension_numbers = #tpu.dot_dimension_numbers<[1], [0], [0], [1], [0, 0, 1, 1], [], []>} : vector<176x128xf32>, vector<128x128xf32>, vector<176x128xf32> -> vector<176x128xf32>
    %c15_132 = arith.constant 15 : index
    %c0_133 = arith.constant 0 : index
    %c0_134 = arith.constant 0 : index
    %119 = vector.load %arg12[%c15_132, %c0_133, %c0_134] : memref<16x176x128xf32, #tpu.memory_space<vmem>>, vector<1x176x128xf32>
    %120 = vector.shape_cast %119 : vector<1x176x128xf32> to vector<176x128xf32>
    %121 = vector.shape_cast %118 : vector<176x128xf32> to vector<1x176x128xf32>
    tpu.vector_store %arg12[%c15_132, %c0_133, %c0_134], %121 {strides = array<i32>} : memref<16x176x128xf32, #tpu.memory_space<vmem>>, vector<1x176x128xf32>,
    %c0_135 = arith.constant 0 : index
    %c0_136 = arith.constant 0 : index
    %122 = vector.load %arg5[%c0_135, %c0_136] : memref<1x128xf32, #tpu.memory_space<vmem>>, vector<1x128xf32>
    %cst_137 = arith.constant 0.000000e+00 : f32
    %123 = vector.broadcast %cst_137 : f32 to vector<11x128xf32>
    %c0_138 = arith.constant 0 : index
    %c0_139 = arith.constant 0 : index
    %c0_140 = arith.constant 0 : index
    %124 = vector.load %arg12[%c0_138, %c0_139, %c0_140] : memref<16x176x128xf32, #tpu.memory_space<vmem>>, vector<1x11x128xf32>
    %125 = vector.shape_cast %124 : vector<1x11x128xf32> to vector<11x128xf32>
    %126 = arith.addf %123, %125 : vector<11x128xf32>
    %c1_141 = arith.constant 1 : index
    %c0_142 = arith.constant 0 : index
    %c0_143 = arith.constant 0 : index
    %127 = vector.load %arg12[%c1_141, %c0_142, %c0_143] : memref<16x176x128xf32, #tpu.memory_space<vmem>>, vector<1x11x128xf32>
    %128 = vector.shape_cast %127 : vector<1x11x128xf32> to vector<11x128xf32>
    %129 = arith.addf %126, %128 : vector<11x128xf32>
    %c2_144 = arith.constant 2 : index
    %c1_145 = arith.constant 1 : index
    %c0_146 = arith.constant 0 : index
    %130 = vector.load %arg12[%c2_144, %c1_145, %c0_146] : memref<16x176x128xf32, #tpu.memory_space<vmem>>, vector<1x11x128xf32>
    %131 = vector.shape_cast %130 : vector<1x11x128xf32> to vector<11x128xf32>
    %132 = arith.addf %129, %131 : vector<11x128xf32>
    %c3_147 = arith.constant 3 : index
    %c1_148 = arith.constant 1 : index
    %c0_149 = arith.constant 0 : index
    %133 = vector.load %arg12[%c3_147, %c1_148, %c0_149] : memref<16x176x128xf32, #tpu.memory_space<vmem>>, vector<1x11x128xf32>
    %134 = vector.shape_cast %133 : vector<1x11x128xf32> to vector<11x128xf32>
    %135 = arith.addf %132, %134 : vector<11x128xf32>
    %c4_150 = arith.constant 4 : index
    %c0_151 = arith.constant 0 : index
    %c0_152 = arith.constant 0 : index
    %136 = vector.load %arg12[%c4_150, %c0_151, %c0_152] : memref<16x176x128xf32, #tpu.memory_space<vmem>>, vector<1x11x128xf32>
    %137 = vector.shape_cast %136 : vector<1x11x128xf32> to vector<11x128xf32>
    %138 = arith.addf %135, %137 : vector<11x128xf32>
    %c5_153 = arith.constant 5 : index
    %c0_154 = arith.constant 0 : index
    %c0_155 = arith.constant 0 : index
    %139 = vector.load %arg12[%c5_153, %c0_154, %c0_155] : memref<16x176x128xf32, #tpu.memory_space<vmem>>, vector<1x11x128xf32>
    %140 = vector.shape_cast %139 : vector<1x11x128xf32> to vector<11x128xf32>
    %141 = arith.addf %138, %140 : vector<11x128xf32>
    %c6_156 = arith.constant 6 : index
    %c1_157 = arith.constant 1 : index
    %c0_158 = arith.constant 0 : index
    %142 = vector.load %arg12[%c6_156, %c1_157, %c0_158] : memref<16x176x128xf32, #tpu.memory_space<vmem>>, vector<1x11x128xf32>
    %143 = vector.shape_cast %142 : vector<1x11x128xf32> to vector<11x128xf32>
    %144 = arith.addf %141, %143 : vector<11x128xf32>
    %c7_159 = arith.constant 7 : index
    %c1_160 = arith.constant 1 : index
    %c0_161 = arith.constant 0 : index
    %145 = vector.load %arg12[%c7_159, %c1_160, %c0_161] : memref<16x176x128xf32, #tpu.memory_space<vmem>>, vector<1x11x128xf32>
    %146 = vector.shape_cast %145 : vector<1x11x128xf32> to vector<11x128xf32>
    %147 = arith.addf %144, %146 : vector<11x128xf32>
    %c8_162 = arith.constant 8 : index
    %c13_163 = arith.constant 13 : index
    %c0_164 = arith.constant 0 : index
    %148 = vector.load %arg12[%c8_162, %c13_163, %c0_164] : memref<16x176x128xf32, #tpu.memory_space<vmem>>, vector<1x11x128xf32>
    %149 = vector.shape_cast %148 : vector<1x11x128xf32> to vector<11x128xf32>
    %150 = arith.addf %147, %149 : vector<11x128xf32>
    %c9_165 = arith.constant 9 : index
    %c13_166 = arith.constant 13 : index
    %c0_167 = arith.constant 0 : index
    %151 = vector.load %arg12[%c9_165, %c13_166, %c0_167] : memref<16x176x128xf32, #tpu.memory_space<vmem>>, vector<1x11x128xf32>
    %152 = vector.shape_cast %151 : vector<1x11x128xf32> to vector<11x128xf32>
    %153 = arith.addf %150, %152 : vector<11x128xf32>
    %c10_168 = arith.constant 10 : index
    %c14_169 = arith.constant 14 : index
    %c0_170 = arith.constant 0 : index
    %154 = vector.load %arg12[%c10_168, %c14_169, %c0_170] : memref<16x176x128xf32, #tpu.memory_space<vmem>>, vector<1x11x128xf32>
    %155 = vector.shape_cast %154 : vector<1x11x128xf32> to vector<11x128xf32>
    %156 = arith.addf %153, %155 : vector<11x128xf32>
    %c11_171 = arith.constant 11 : index
    %c14_172 = arith.constant 14 : index
    %c0_173 = arith.constant 0 : index
    %157 = vector.load %arg12[%c11_171, %c14_172, %c0_173] : memref<16x176x128xf32, #tpu.memory_space<vmem>>, vector<1x11x128xf32>
    %158 = vector.shape_cast %157 : vector<1x11x128xf32> to vector<11x128xf32>
    %159 = arith.addf %156, %158 : vector<11x128xf32>
    %c12_174 = arith.constant 12 : index
    %c13_175 = arith.constant 13 : index
    %c0_176 = arith.constant 0 : index
    %160 = vector.load %arg12[%c12_174, %c13_175, %c0_176] : memref<16x176x128xf32, #tpu.memory_space<vmem>>, vector<1x11x128xf32>
    %161 = vector.shape_cast %160 : vector<1x11x128xf32> to vector<11x128xf32>
    %162 = arith.addf %159, %161 : vector<11x128xf32>
    %c13_177 = arith.constant 13 : index
    %c13_178 = arith.constant 13 : index
    %c0_179 = arith.constant 0 : index
    %163 = vector.load %arg12[%c13_177, %c13_178, %c0_179] : memref<16x176x128xf32, #tpu.memory_space<vmem>>, vector<1x11x128xf32>
    %164 = vector.shape_cast %163 : vector<1x11x128xf32> to vector<11x128xf32>
    %165 = arith.addf %162, %164 : vector<11x128xf32>
    %c14_180 = arith.constant 14 : index
    %c14_181 = arith.constant 14 : index
    %c0_182 = arith.constant 0 : index
    %166 = vector.load %arg12[%c14_180, %c14_181, %c0_182] : memref<16x176x128xf32, #tpu.memory_space<vmem>>, vector<1x11x128xf32>
    %167 = vector.shape_cast %166 : vector<1x11x128xf32> to vector<11x128xf32>
    %168 = arith.addf %165, %167 : vector<11x128xf32>
    %c15_183 = arith.constant 15 : index
    %c14_184 = arith.constant 14 : index
    %c0_185 = arith.constant 0 : index
    %169 = vector.load %arg12[%c15_183, %c14_184, %c0_185] : memref<16x176x128xf32, #tpu.memory_space<vmem>>, vector<1x11x128xf32>
    %170 = vector.shape_cast %169 : vector<1x11x128xf32> to vector<11x128xf32>
    %171 = arith.addf %168, %170 : vector<11x128xf32>
    %172 = vector.broadcast %122 : vector<1x128xf32> to vector<11x128xf32>
    %173 = arith.addf %171, %172 : vector<11x128xf32>
    %cst_186 = arith.constant 0.000000e+00 : f32
    %174 = vector.broadcast %cst_186 : f32 to vector<11x128xf32>
    %175 = arith.maximumf %173, %174 : vector<11x128xf32>
    %c0_187 = arith.constant 0 : index
    %c0_188 = arith.constant 0 : index
    %176 = vector.load %arg13[%c0_187, %c0_188] : memref<110x128xf32, #tpu.memory_space<vmem>>, vector<11x128xf32>
    tpu.vector_store %arg13[%c0_187, %c0_188], %175 {strides = array<i32>} : memref<110x128xf32, #tpu.memory_space<vmem>>, vector<11x128xf32>,
    %cst_189 = arith.constant 0.000000e+00 : f32
    %177 = vector.broadcast %cst_189 : f32 to vector<11x128xf32>
    %c0_190 = arith.constant 0 : index
    %c13_191 = arith.constant 13 : index
    %c0_192 = arith.constant 0 : index
    %178 = vector.load %arg12[%c0_190, %c13_191, %c0_192] : memref<16x176x128xf32, #tpu.memory_space<vmem>>, vector<1x11x128xf32>
    %179 = vector.shape_cast %178 : vector<1x11x128xf32> to vector<11x128xf32>
    %180 = arith.addf %177, %179 : vector<11x128xf32>
    %c1_193 = arith.constant 1 : index
    %c13_194 = arith.constant 13 : index
    %c0_195 = arith.constant 0 : index
    %181 = vector.load %arg12[%c1_193, %c13_194, %c0_195] : memref<16x176x128xf32, #tpu.memory_space<vmem>>, vector<1x11x128xf32>
    %182 = vector.shape_cast %181 : vector<1x11x128xf32> to vector<11x128xf32>
    %183 = arith.addf %180, %182 : vector<11x128xf32>
    %c2_196 = arith.constant 2 : index
    %c14_197 = arith.constant 14 : index
    %c0_198 = arith.constant 0 : index
    %184 = vector.load %arg12[%c2_196, %c14_197, %c0_198] : memref<16x176x128xf32, #tpu.memory_space<vmem>>, vector<1x11x128xf32>
    %185 = vector.shape_cast %184 : vector<1x11x128xf32> to vector<11x128xf32>
    %186 = arith.addf %183, %185 : vector<11x128xf32>
    %c3_199 = arith.constant 3 : index
    %c14_200 = arith.constant 14 : index
    %c0_201 = arith.constant 0 : index
    %187 = vector.load %arg12[%c3_199, %c14_200, %c0_201] : memref<16x176x128xf32, #tpu.memory_space<vmem>>, vector<1x11x128xf32>
    %188 = vector.shape_cast %187 : vector<1x11x128xf32> to vector<11x128xf32>
    %189 = arith.addf %186, %188 : vector<11x128xf32>
    %c4_202 = arith.constant 4 : index
    %c13_203 = arith.constant 13 : index
    %c0_204 = arith.constant 0 : index
    %190 = vector.load %arg12[%c4_202, %c13_203, %c0_204] : memref<16x176x128xf32, #tpu.memory_space<vmem>>, vector<1x11x128xf32>
    %191 = vector.shape_cast %190 : vector<1x11x128xf32> to vector<11x128xf32>
    %192 = arith.addf %189, %191 : vector<11x128xf32>
    %c5_205 = arith.constant 5 : index
    %c13_206 = arith.constant 13 : index
    %c0_207 = arith.constant 0 : index
    %193 = vector.load %arg12[%c5_205, %c13_206, %c0_207] : memref<16x176x128xf32, #tpu.memory_space<vmem>>, vector<1x11x128xf32>
    %194 = vector.shape_cast %193 : vector<1x11x128xf32> to vector<11x128xf32>
    %195 = arith.addf %192, %194 : vector<11x128xf32>
    %c6_208 = arith.constant 6 : index
    %c14_209 = arith.constant 14 : index
    %c0_210 = arith.constant 0 : index
    %196 = vector.load %arg12[%c6_208, %c14_209, %c0_210] : memref<16x176x128xf32, #tpu.memory_space<vmem>>, vector<1x11x128xf32>
    %197 = vector.shape_cast %196 : vector<1x11x128xf32> to vector<11x128xf32>
    %198 = arith.addf %195, %197 : vector<11x128xf32>
    %c7_211 = arith.constant 7 : index
    %c14_212 = arith.constant 14 : index
    %c0_213 = arith.constant 0 : index
    %199 = vector.load %arg12[%c7_211, %c14_212, %c0_213] : memref<16x176x128xf32, #tpu.memory_space<vmem>>, vector<1x11x128xf32>
    %200 = vector.shape_cast %199 : vector<1x11x128xf32> to vector<11x128xf32>
    %201 = arith.addf %198, %200 : vector<11x128xf32>
    %c8_214 = arith.constant 8 : index
    %c26 = arith.constant 26 : index
    %c0_215 = arith.constant 0 : index
    %202 = vector.load %arg12[%c8_214, %c26, %c0_215] : memref<16x176x128xf32, #tpu.memory_space<vmem>>, vector<1x11x128xf32>
    %203 = vector.shape_cast %202 : vector<1x11x128xf32> to vector<11x128xf32>
    %204 = arith.addf %201, %203 : vector<11x128xf32>
    %c9_216 = arith.constant 9 : index
    %c26_217 = arith.constant 26 : index
    %c0_218 = arith.constant 0 : index
    %205 = vector.load %arg12[%c9_216, %c26_217, %c0_218] : memref<16x176x128xf32, #tpu.memory_space<vmem>>, vector<1x11x128xf32>
    %206 = vector.shape_cast %205 : vector<1x11x128xf32> to vector<11x128xf32>
    %207 = arith.addf %204, %206 : vector<11x128xf32>
    %c10_219 = arith.constant 10 : index
    %c27 = arith.constant 27 : index
    %c0_220 = arith.constant 0 : index
    %208 = vector.load %arg12[%c10_219, %c27, %c0_220] : memref<16x176x128xf32, #tpu.memory_space<vmem>>, vector<1x11x128xf32>
    %209 = vector.shape_cast %208 : vector<1x11x128xf32> to vector<11x128xf32>
    %210 = arith.addf %207, %209 : vector<11x128xf32>
    %c11_221 = arith.constant 11 : index
    %c27_222 = arith.constant 27 : index
    %c0_223 = arith.constant 0 : index
    %211 = vector.load %arg12[%c11_221, %c27_222, %c0_223] : memref<16x176x128xf32, #tpu.memory_space<vmem>>, vector<1x11x128xf32>
    %212 = vector.shape_cast %211 : vector<1x11x128xf32> to vector<11x128xf32>
    %213 = arith.addf %210, %212 : vector<11x128xf32>
    %c12_224 = arith.constant 12 : index
    %c26_225 = arith.constant 26 : index
    %c0_226 = arith.constant 0 : index
    %214 = vector.load %arg12[%c12_224, %c26_225, %c0_226] : memref<16x176x128xf32, #tpu.memory_space<vmem>>, vector<1x11x128xf32>
    %215 = vector.shape_cast %214 : vector<1x11x128xf32> to vector<11x128xf32>
    %216 = arith.addf %213, %215 : vector<11x128xf32>
    %c13_227 = arith.constant 13 : index
    %c26_228 = arith.constant 26 : index
    %c0_229 = arith.constant 0 : index
    %217 = vector.load %arg12[%c13_227, %c26_228, %c0_229] : memref<16x176x128xf32, #tpu.memory_space<vmem>>, vector<1x11x128xf32>
    %218 = vector.shape_cast %217 : vector<1x11x128xf32> to vector<11x128xf32>
    %219 = arith.addf %216, %218 : vector<11x128xf32>
    %c14_230 = arith.constant 14 : index
    %c27_231 = arith.constant 27 : index
    %c0_232 = arith.constant 0 : index
    %220 = vector.load %arg12[%c14_230, %c27_231, %c0_232] : memref<16x176x128xf32, #tpu.memory_space<vmem>>, vector<1x11x128xf32>
    %221 = vector.shape_cast %220 : vector<1x11x128xf32> to vector<11x128xf32>
    %222 = arith.addf %219, %221 : vector<11x128xf32>
    %c15_233 = arith.constant 15 : index
    %c27_234 = arith.constant 27 : index
    %c0_235 = arith.constant 0 : index
    %223 = vector.load %arg12[%c15_233, %c27_234, %c0_235] : memref<16x176x128xf32, #tpu.memory_space<vmem>>, vector<1x11x128xf32>
    %224 = vector.shape_cast %223 : vector<1x11x128xf32> to vector<11x128xf32>
    %225 = arith.addf %222, %224 : vector<11x128xf32>
    %226 = vector.broadcast %122 : vector<1x128xf32> to vector<11x128xf32>
    %227 = arith.addf %225, %226 : vector<11x128xf32>
    %cst_236 = arith.constant 0.000000e+00 : f32
    %228 = vector.broadcast %cst_236 : f32 to vector<11x128xf32>
    %229 = arith.maximumf %227, %228 : vector<11x128xf32>
    %c11_237 = arith.constant 11 : index
    %c0_238 = arith.constant 0 : index
    %230 = vector.load %arg13[%c11_237, %c0_238] : memref<110x128xf32, #tpu.memory_space<vmem>>, vector<11x128xf32>
    tpu.vector_store %arg13[%c11_237, %c0_238], %229 {strides = array<i32>} : memref<110x128xf32, #tpu.memory_space<vmem>>, vector<11x128xf32>,
    %cst_239 = arith.constant 0.000000e+00 : f32
    %231 = vector.broadcast %cst_239 : f32 to vector<11x128xf32>
    %c0_240 = arith.constant 0 : index
    %c26_241 = arith.constant 26 : index
    %c0_242 = arith.constant 0 : index
    %232 = vector.load %arg12[%c0_240, %c26_241, %c0_242] : memref<16x176x128xf32, #tpu.memory_space<vmem>>, vector<1x11x128xf32>
    %233 = vector.shape_cast %232 : vector<1x11x128xf32> to vector<11x128xf32>
    %234 = arith.addf %231, %233 : vector<11x128xf32>
    %c1_243 = arith.constant 1 : index
    %c26_244 = arith.constant 26 : index
    %c0_245 = arith.constant 0 : index
    %235 = vector.load %arg12[%c1_243, %c26_244, %c0_245] : memref<16x176x128xf32, #tpu.memory_space<vmem>>, vector<1x11x128xf32>
    %236 = vector.shape_cast %235 : vector<1x11x128xf32> to vector<11x128xf32>
    %237 = arith.addf %234, %236 : vector<11x128xf32>
    %c2_246 = arith.constant 2 : index
    %c27_247 = arith.constant 27 : index
    %c0_248 = arith.constant 0 : index
    %238 = vector.load %arg12[%c2_246, %c27_247, %c0_248] : memref<16x176x128xf32, #tpu.memory_space<vmem>>, vector<1x11x128xf32>
    %239 = vector.shape_cast %238 : vector<1x11x128xf32> to vector<11x128xf32>
    %240 = arith.addf %237, %239 : vector<11x128xf32>
    %c3_249 = arith.constant 3 : index
    %c27_250 = arith.constant 27 : index
    %c0_251 = arith.constant 0 : index
    %241 = vector.load %arg12[%c3_249, %c27_250, %c0_251] : memref<16x176x128xf32, #tpu.memory_space<vmem>>, vector<1x11x128xf32>
    %242 = vector.shape_cast %241 : vector<1x11x128xf32> to vector<11x128xf32>
    %243 = arith.addf %240, %242 : vector<11x128xf32>
    %c4_252 = arith.constant 4 : index
    %c26_253 = arith.constant 26 : index
    %c0_254 = arith.constant 0 : index
    %244 = vector.load %arg12[%c4_252, %c26_253, %c0_254] : memref<16x176x128xf32, #tpu.memory_space<vmem>>, vector<1x11x128xf32>
    %245 = vector.shape_cast %244 : vector<1x11x128xf32> to vector<11x128xf32>
    %246 = arith.addf %243, %245 : vector<11x128xf32>
    %c5_255 = arith.constant 5 : index
    %c26_256 = arith.constant 26 : index
    %c0_257 = arith.constant 0 : index
    %247 = vector.load %arg12[%c5_255, %c26_256, %c0_257] : memref<16x176x128xf32, #tpu.memory_space<vmem>>, vector<1x11x128xf32>
    %248 = vector.shape_cast %247 : vector<1x11x128xf32> to vector<11x128xf32>
    %249 = arith.addf %246, %248 : vector<11x128xf32>
    %c6_258 = arith.constant 6 : index
    %c27_259 = arith.constant 27 : index
    %c0_260 = arith.constant 0 : index
    %250 = vector.load %arg12[%c6_258, %c27_259, %c0_260] : memref<16x176x128xf32, #tpu.memory_space<vmem>>, vector<1x11x128xf32>
    %251 = vector.shape_cast %250 : vector<1x11x128xf32> to vector<11x128xf32>
    %252 = arith.addf %249, %251 : vector<11x128xf32>
    %c7_261 = arith.constant 7 : index
    %c27_262 = arith.constant 27 : index
    %c0_263 = arith.constant 0 : index
    %253 = vector.load %arg12[%c7_261, %c27_262, %c0_263] : memref<16x176x128xf32, #tpu.memory_space<vmem>>, vector<1x11x128xf32>
    %254 = vector.shape_cast %253 : vector<1x11x128xf32> to vector<11x128xf32>
    %255 = arith.addf %252, %254 : vector<11x128xf32>
    %c8_264 = arith.constant 8 : index
    %c39 = arith.constant 39 : index
    %c0_265 = arith.constant 0 : index
    %256 = vector.load %arg12[%c8_264, %c39, %c0_265] : memref<16x176x128xf32, #tpu.memory_space<vmem>>, vector<1x11x128xf32>
    %257 = vector.shape_cast %256 : vector<1x11x128xf32> to vector<11x128xf32>
    %258 = arith.addf %255, %257 : vector<11x128xf32>
    %c9_266 = arith.constant 9 : index
    %c39_267 = arith.constant 39 : index
    %c0_268 = arith.constant 0 : index
    %259 = vector.load %arg12[%c9_266, %c39_267, %c0_268] : memref<16x176x128xf32, #tpu.memory_space<vmem>>, vector<1x11x128xf32>
    %260 = vector.shape_cast %259 : vector<1x11x128xf32> to vector<11x128xf32>
    %261 = arith.addf %258, %260 : vector<11x128xf32>
    %c10_269 = arith.constant 10 : index
    %c40 = arith.constant 40 : index
    %c0_270 = arith.constant 0 : index
    %262 = vector.load %arg12[%c10_269, %c40, %c0_270] : memref<16x176x128xf32, #tpu.memory_space<vmem>>, vector<1x11x128xf32>
    %263 = vector.shape_cast %262 : vector<1x11x128xf32> to vector<11x128xf32>
    %264 = arith.addf %261, %263 : vector<11x128xf32>
    %c11_271 = arith.constant 11 : index
    %c40_272 = arith.constant 40 : index
    %c0_273 = arith.constant 0 : index
    %265 = vector.load %arg12[%c11_271, %c40_272, %c0_273] : memref<16x176x128xf32, #tpu.memory_space<vmem>>, vector<1x11x128xf32>
    %266 = vector.shape_cast %265 : vector<1x11x128xf32> to vector<11x128xf32>
    %267 = arith.addf %264, %266 : vector<11x128xf32>
    %c12_274 = arith.constant 12 : index
    %c39_275 = arith.constant 39 : index
    %c0_276 = arith.constant 0 : index
    %268 = vector.load %arg12[%c12_274, %c39_275, %c0_276] : memref<16x176x128xf32, #tpu.memory_space<vmem>>, vector<1x11x128xf32>
    %269 = vector.shape_cast %268 : vector<1x11x128xf32> to vector<11x128xf32>
    %270 = arith.addf %267, %269 : vector<11x128xf32>
    %c13_277 = arith.constant 13 : index
    %c39_278 = arith.constant 39 : index
    %c0_279 = arith.constant 0 : index
    %271 = vector.load %arg12[%c13_277, %c39_278, %c0_279] : memref<16x176x128xf32, #tpu.memory_space<vmem>>, vector<1x11x128xf32>
    %272 = vector.shape_cast %271 : vector<1x11x128xf32> to vector<11x128xf32>
    %273 = arith.addf %270, %272 : vector<11x128xf32>
    %c14_280 = arith.constant 14 : index
    %c40_281 = arith.constant 40 : index
    %c0_282 = arith.constant 0 : index
    %274 = vector.load %arg12[%c14_280, %c40_281, %c0_282] : memref<16x176x128xf32, #tpu.memory_space<vmem>>, vector<1x11x128xf32>
    %275 = vector.shape_cast %274 : vector<1x11x128xf32> to vector<11x128xf32>
    %276 = arith.addf %273, %275 : vector<11x128xf32>
    %c15_283 = arith.constant 15 : index
    %c40_284 = arith.constant 40 : index
    %c0_285 = arith.constant 0 : index
    %277 = vector.load %arg12[%c15_283, %c40_284, %c0_285] : memref<16x176x128xf32, #tpu.memory_space<vmem>>, vector<1x11x128xf32>
    %278 = vector.shape_cast %277 : vector<1x11x128xf32> to vector<11x128xf32>
    %279 = arith.addf %276, %278 : vector<11x128xf32>
    %280 = vector.broadcast %122 : vector<1x128xf32> to vector<11x128xf32>
    %281 = arith.addf %279, %280 : vector<11x128xf32>
    %cst_286 = arith.constant 0.000000e+00 : f32
    %282 = vector.broadcast %cst_286 : f32 to vector<11x128xf32>
    %283 = arith.maximumf %281, %282 : vector<11x128xf32>
    %c22 = arith.constant 22 : index
    %c0_287 = arith.constant 0 : index
    %284 = vector.load %arg13[%c22, %c0_287] : memref<110x128xf32, #tpu.memory_space<vmem>>, vector<11x128xf32>
    tpu.vector_store %arg13[%c22, %c0_287], %283 {strides = array<i32>} : memref<110x128xf32, #tpu.memory_space<vmem>>, vector<11x128xf32>,
    %cst_288 = arith.constant 0.000000e+00 : f32
    %285 = vector.broadcast %cst_288 : f32 to vector<11x128xf32>
    %c0_289 = arith.constant 0 : index
    %c39_290 = arith.constant 39 : index
    %c0_291 = arith.constant 0 : index
    %286 = vector.load %arg12[%c0_289, %c39_290, %c0_291] : memref<16x176x128xf32, #tpu.memory_space<vmem>>, vector<1x11x128xf32>
    %287 = vector.shape_cast %286 : vector<1x11x128xf32> to vector<11x128xf32>
    %288 = arith.addf %285, %287 : vector<11x128xf32>
    %c1_292 = arith.constant 1 : index
    %c39_293 = arith.constant 39 : index
    %c0_294 = arith.constant 0 : index
    %289 = vector.load %arg12[%c1_292, %c39_293, %c0_294] : memref<16x176x128xf32, #tpu.memory_space<vmem>>, vector<1x11x128xf32>
    %290 = vector.shape_cast %289 : vector<1x11x128xf32> to vector<11x128xf32>
    %291 = arith.addf %288, %290 : vector<11x128xf32>
    %c2_295 = arith.constant 2 : index
    %c40_296 = arith.constant 40 : index
    %c0_297 = arith.constant 0 : index
    %292 = vector.load %arg12[%c2_295, %c40_296, %c0_297] : memref<16x176x128xf32, #tpu.memory_space<vmem>>, vector<1x11x128xf32>
    %293 = vector.shape_cast %292 : vector<1x11x128xf32> to vector<11x128xf32>
    %294 = arith.addf %291, %293 : vector<11x128xf32>
    %c3_298 = arith.constant 3 : index
    %c40_299 = arith.constant 40 : index
    %c0_300 = arith.constant 0 : index
    %295 = vector.load %arg12[%c3_298, %c40_299, %c0_300] : memref<16x176x128xf32, #tpu.memory_space<vmem>>, vector<1x11x128xf32>
    %296 = vector.shape_cast %295 : vector<1x11x128xf32> to vector<11x128xf32>
    %297 = arith.addf %294, %296 : vector<11x128xf32>
    %c4_301 = arith.constant 4 : index
    %c39_302 = arith.constant 39 : index
    %c0_303 = arith.constant 0 : index
    %298 = vector.load %arg12[%c4_301, %c39_302, %c0_303] : memref<16x176x128xf32, #tpu.memory_space<vmem>>, vector<1x11x128xf32>
    %299 = vector.shape_cast %298 : vector<1x11x128xf32> to vector<11x128xf32>
    %300 = arith.addf %297, %299 : vector<11x128xf32>
    %c5_304 = arith.constant 5 : index
    %c39_305 = arith.constant 39 : index
    %c0_306 = arith.constant 0 : index
    %301 = vector.load %arg12[%c5_304, %c39_305, %c0_306] : memref<16x176x128xf32, #tpu.memory_space<vmem>>, vector<1x11x128xf32>
    %302 = vector.shape_cast %301 : vector<1x11x128xf32> to vector<11x128xf32>
    %303 = arith.addf %300, %302 : vector<11x128xf32>
    %c6_307 = arith.constant 6 : index
    %c40_308 = arith.constant 40 : index
    %c0_309 = arith.constant 0 : index
    %304 = vector.load %arg12[%c6_307, %c40_308, %c0_309] : memref<16x176x128xf32, #tpu.memory_space<vmem>>, vector<1x11x128xf32>
    %305 = vector.shape_cast %304 : vector<1x11x128xf32> to vector<11x128xf32>
    %306 = arith.addf %303, %305 : vector<11x128xf32>
    %c7_310 = arith.constant 7 : index
    %c40_311 = arith.constant 40 : index
    %c0_312 = arith.constant 0 : index
    %307 = vector.load %arg12[%c7_310, %c40_311, %c0_312] : memref<16x176x128xf32, #tpu.memory_space<vmem>>, vector<1x11x128xf32>
    %308 = vector.shape_cast %307 : vector<1x11x128xf32> to vector<11x128xf32>
    %309 = arith.addf %306, %308 : vector<11x128xf32>
    %c8_313 = arith.constant 8 : index
    %c52 = arith.constant 52 : index
    %c0_314 = arith.constant 0 : index
    %310 = vector.load %arg12[%c8_313, %c52, %c0_314] : memref<16x176x128xf32, #tpu.memory_space<vmem>>, vector<1x11x128xf32>
    %311 = vector.shape_cast %310 : vector<1x11x128xf32> to vector<11x128xf32>
    %312 = arith.addf %309, %311 : vector<11x128xf32>
    %c9_315 = arith.constant 9 : index
    %c52_316 = arith.constant 52 : index
    %c0_317 = arith.constant 0 : index
    %313 = vector.load %arg12[%c9_315, %c52_316, %c0_317] : memref<16x176x128xf32, #tpu.memory_space<vmem>>, vector<1x11x128xf32>
    %314 = vector.shape_cast %313 : vector<1x11x128xf32> to vector<11x128xf32>
    %315 = arith.addf %312, %314 : vector<11x128xf32>
    %c10_318 = arith.constant 10 : index
    %c53 = arith.constant 53 : index
    %c0_319 = arith.constant 0 : index
    %316 = vector.load %arg12[%c10_318, %c53, %c0_319] : memref<16x176x128xf32, #tpu.memory_space<vmem>>, vector<1x11x128xf32>
    %317 = vector.shape_cast %316 : vector<1x11x128xf32> to vector<11x128xf32>
    %318 = arith.addf %315, %317 : vector<11x128xf32>
    %c11_320 = arith.constant 11 : index
    %c53_321 = arith.constant 53 : index
    %c0_322 = arith.constant 0 : index
    %319 = vector.load %arg12[%c11_320, %c53_321, %c0_322] : memref<16x176x128xf32, #tpu.memory_space<vmem>>, vector<1x11x128xf32>
    %320 = vector.shape_cast %319 : vector<1x11x128xf32> to vector<11x128xf32>
    %321 = arith.addf %318, %320 : vector<11x128xf32>
    %c12_323 = arith.constant 12 : index
    %c52_324 = arith.constant 52 : index
    %c0_325 = arith.constant 0 : index
    %322 = vector.load %arg12[%c12_323, %c52_324, %c0_325] : memref<16x176x128xf32, #tpu.memory_space<vmem>>, vector<1x11x128xf32>
    %323 = vector.shape_cast %322 : vector<1x11x128xf32> to vector<11x128xf32>
    %324 = arith.addf %321, %323 : vector<11x128xf32>
    %c13_326 = arith.constant 13 : index
    %c52_327 = arith.constant 52 : index
    %c0_328 = arith.constant 0 : index
    %325 = vector.load %arg12[%c13_326, %c52_327, %c0_328] : memref<16x176x128xf32, #tpu.memory_space<vmem>>, vector<1x11x128xf32>
    %326 = vector.shape_cast %325 : vector<1x11x128xf32> to vector<11x128xf32>
    %327 = arith.addf %324, %326 : vector<11x128xf32>
    %c14_329 = arith.constant 14 : index
    %c53_330 = arith.constant 53 : index
    %c0_331 = arith.constant 0 : index
    %328 = vector.load %arg12[%c14_329, %c53_330, %c0_331] : memref<16x176x128xf32, #tpu.memory_space<vmem>>, vector<1x11x128xf32>
    %329 = vector.shape_cast %328 : vector<1x11x128xf32> to vector<11x128xf32>
    %330 = arith.addf %327, %329 : vector<11x128xf32>
    %c15_332 = arith.constant 15 : index
    %c53_333 = arith.constant 53 : index
    %c0_334 = arith.constant 0 : index
    %331 = vector.load %arg12[%c15_332, %c53_333, %c0_334] : memref<16x176x128xf32, #tpu.memory_space<vmem>>, vector<1x11x128xf32>
    %332 = vector.shape_cast %331 : vector<1x11x128xf32> to vector<11x128xf32>
    %333 = arith.addf %330, %332 : vector<11x128xf32>
    %334 = vector.broadcast %122 : vector<1x128xf32> to vector<11x128xf32>
    %335 = arith.addf %333, %334 : vector<11x128xf32>
    %cst_335 = arith.constant 0.000000e+00 : f32
    %336 = vector.broadcast %cst_335 : f32 to vector<11x128xf32>
    %337 = arith.maximumf %335, %336 : vector<11x128xf32>
    %c33 = arith.constant 33 : index
    %c0_336 = arith.constant 0 : index
    %338 = vector.load %arg13[%c33, %c0_336] : memref<110x128xf32, #tpu.memory_space<vmem>>, vector<11x128xf32>
    tpu.vector_store %arg13[%c33, %c0_336], %337 {strides = array<i32>} : memref<110x128xf32, #tpu.memory_space<vmem>>, vector<11x128xf32>,
    %cst_337 = arith.constant 0.000000e+00 : f32
    %339 = vector.broadcast %cst_337 : f32 to vector<11x128xf32>
    %c0_338 = arith.constant 0 : index
    %c52_339 = arith.constant 52 : index
    %c0_340 = arith.constant 0 : index
    %340 = vector.load %arg12[%c0_338, %c52_339, %c0_340] : memref<16x176x128xf32, #tpu.memory_space<vmem>>, vector<1x11x128xf32>
    %341 = vector.shape_cast %340 : vector<1x11x128xf32> to vector<11x128xf32>
    %342 = arith.addf %339, %341 : vector<11x128xf32>
    %c1_341 = arith.constant 1 : index
    %c52_342 = arith.constant 52 : index
    %c0_343 = arith.constant 0 : index
    %343 = vector.load %arg12[%c1_341, %c52_342, %c0_343] : memref<16x176x128xf32, #tpu.memory_space<vmem>>, vector<1x11x128xf32>
    %344 = vector.shape_cast %343 : vector<1x11x128xf32> to vector<11x128xf32>
    %345 = arith.addf %342, %344 : vector<11x128xf32>
    %c2_344 = arith.constant 2 : index
    %c53_345 = arith.constant 53 : index
    %c0_346 = arith.constant 0 : index
    %346 = vector.load %arg12[%c2_344, %c53_345, %c0_346] : memref<16x176x128xf32, #tpu.memory_space<vmem>>, vector<1x11x128xf32>
    %347 = vector.shape_cast %346 : vector<1x11x128xf32> to vector<11x128xf32>
    %348 = arith.addf %345, %347 : vector<11x128xf32>
    %c3_347 = arith.constant 3 : index
    %c53_348 = arith.constant 53 : index
    %c0_349 = arith.constant 0 : index
    %349 = vector.load %arg12[%c3_347, %c53_348, %c0_349] : memref<16x176x128xf32, #tpu.memory_space<vmem>>, vector<1x11x128xf32>
    %350 = vector.shape_cast %349 : vector<1x11x128xf32> to vector<11x128xf32>
    %351 = arith.addf %348, %350 : vector<11x128xf32>
    %c4_350 = arith.constant 4 : index
    %c52_351 = arith.constant 52 : index
    %c0_352 = arith.constant 0 : index
    %352 = vector.load %arg12[%c4_350, %c52_351, %c0_352] : memref<16x176x128xf32, #tpu.memory_space<vmem>>, vector<1x11x128xf32>
    %353 = vector.shape_cast %352 : vector<1x11x128xf32> to vector<11x128xf32>
    %354 = arith.addf %351, %353 : vector<11x128xf32>
    %c5_353 = arith.constant 5 : index
    %c52_354 = arith.constant 52 : index
    %c0_355 = arith.constant 0 : index
    %355 = vector.load %arg12[%c5_353, %c52_354, %c0_355] : memref<16x176x128xf32, #tpu.memory_space<vmem>>, vector<1x11x128xf32>
    %356 = vector.shape_cast %355 : vector<1x11x128xf32> to vector<11x128xf32>
    %357 = arith.addf %354, %356 : vector<11x128xf32>
    %c6_356 = arith.constant 6 : index
    %c53_357 = arith.constant 53 : index
    %c0_358 = arith.constant 0 : index
    %358 = vector.load %arg12[%c6_356, %c53_357, %c0_358] : memref<16x176x128xf32, #tpu.memory_space<vmem>>, vector<1x11x128xf32>
    %359 = vector.shape_cast %358 : vector<1x11x128xf32> to vector<11x128xf32>
    %360 = arith.addf %357, %359 : vector<11x128xf32>
    %c7_359 = arith.constant 7 : index
    %c53_360 = arith.constant 53 : index
    %c0_361 = arith.constant 0 : index
    %361 = vector.load %arg12[%c7_359, %c53_360, %c0_361] : memref<16x176x128xf32, #tpu.memory_space<vmem>>, vector<1x11x128xf32>
    %362 = vector.shape_cast %361 : vector<1x11x128xf32> to vector<11x128xf32>
    %363 = arith.addf %360, %362 : vector<11x128xf32>
    %c8_362 = arith.constant 8 : index
    %c65 = arith.constant 65 : index
    %c0_363 = arith.constant 0 : index
    %364 = vector.load %arg12[%c8_362, %c65, %c0_363] : memref<16x176x128xf32, #tpu.memory_space<vmem>>, vector<1x11x128xf32>
    %365 = vector.shape_cast %364 : vector<1x11x128xf32> to vector<11x128xf32>
    %366 = arith.addf %363, %365 : vector<11x128xf32>
    %c9_364 = arith.constant 9 : index
    %c65_365 = arith.constant 65 : index
    %c0_366 = arith.constant 0 : index
    %367 = vector.load %arg12[%c9_364, %c65_365, %c0_366] : memref<16x176x128xf32, #tpu.memory_space<vmem>>, vector<1x11x128xf32>
    %368 = vector.shape_cast %367 : vector<1x11x128xf32> to vector<11x128xf32>
    %369 = arith.addf %366, %368 : vector<11x128xf32>
    %c10_367 = arith.constant 10 : index
    %c66 = arith.constant 66 : index
    %c0_368 = arith.constant 0 : index
    %370 = vector.load %arg12[%c10_367, %c66, %c0_368] : memref<16x176x128xf32, #tpu.memory_space<vmem>>, vector<1x11x128xf32>
    %371 = vector.shape_cast %370 : vector<1x11x128xf32> to vector<11x128xf32>
    %372 = arith.addf %369, %371 : vector<11x128xf32>
    %c11_369 = arith.constant 11 : index
    %c66_370 = arith.constant 66 : index
    %c0_371 = arith.constant 0 : index
    %373 = vector.load %arg12[%c11_369, %c66_370, %c0_371] : memref<16x176x128xf32, #tpu.memory_space<vmem>>, vector<1x11x128xf32>
    %374 = vector.shape_cast %373 : vector<1x11x128xf32> to vector<11x128xf32>
    %375 = arith.addf %372, %374 : vector<11x128xf32>
    %c12_372 = arith.constant 12 : index
    %c65_373 = arith.constant 65 : index
    %c0_374 = arith.constant 0 : index
    %376 = vector.load %arg12[%c12_372, %c65_373, %c0_374] : memref<16x176x128xf32, #tpu.memory_space<vmem>>, vector<1x11x128xf32>
    %377 = vector.shape_cast %376 : vector<1x11x128xf32> to vector<11x128xf32>
    %378 = arith.addf %375, %377 : vector<11x128xf32>
    %c13_375 = arith.constant 13 : index
    %c65_376 = arith.constant 65 : index
    %c0_377 = arith.constant 0 : index
    %379 = vector.load %arg12[%c13_375, %c65_376, %c0_377] : memref<16x176x128xf32, #tpu.memory_space<vmem>>, vector<1x11x128xf32>
    %380 = vector.shape_cast %379 : vector<1x11x128xf32> to vector<11x128xf32>
    %381 = arith.addf %378, %380 : vector<11x128xf32>
    %c14_378 = arith.constant 14 : index
    %c66_379 = arith.constant 66 : index
    %c0_380 = arith.constant 0 : index
    %382 = vector.load %arg12[%c14_378, %c66_379, %c0_380] : memref<16x176x128xf32, #tpu.memory_space<vmem>>, vector<1x11x128xf32>
    %383 = vector.shape_cast %382 : vector<1x11x128xf32> to vector<11x128xf32>
    %384 = arith.addf %381, %383 : vector<11x128xf32>
    %c15_381 = arith.constant 15 : index
    %c66_382 = arith.constant 66 : index
    %c0_383 = arith.constant 0 : index
    %385 = vector.load %arg12[%c15_381, %c66_382, %c0_383] : memref<16x176x128xf32, #tpu.memory_space<vmem>>, vector<1x11x128xf32>
    %386 = vector.shape_cast %385 : vector<1x11x128xf32> to vector<11x128xf32>
    %387 = arith.addf %384, %386 : vector<11x128xf32>
    %388 = vector.broadcast %122 : vector<1x128xf32> to vector<11x128xf32>
    %389 = arith.addf %387, %388 : vector<11x128xf32>
    %cst_384 = arith.constant 0.000000e+00 : f32
    %390 = vector.broadcast %cst_384 : f32 to vector<11x128xf32>
    %391 = arith.maximumf %389, %390 : vector<11x128xf32>
    %c44 = arith.constant 44 : index
    %c0_385 = arith.constant 0 : index
    %392 = vector.load %arg13[%c44, %c0_385] : memref<110x128xf32, #tpu.memory_space<vmem>>, vector<11x128xf32>
    tpu.vector_store %arg13[%c44, %c0_385], %391 {strides = array<i32>} : memref<110x128xf32, #tpu.memory_space<vmem>>, vector<11x128xf32>,
    %cst_386 = arith.constant 0.000000e+00 : f32
    %393 = vector.broadcast %cst_386 : f32 to vector<11x128xf32>
    %c0_387 = arith.constant 0 : index
    %c65_388 = arith.constant 65 : index
    %c0_389 = arith.constant 0 : index
    %394 = vector.load %arg12[%c0_387, %c65_388, %c0_389] : memref<16x176x128xf32, #tpu.memory_space<vmem>>, vector<1x11x128xf32>
    %395 = vector.shape_cast %394 : vector<1x11x128xf32> to vector<11x128xf32>
    %396 = arith.addf %393, %395 : vector<11x128xf32>
    %c1_390 = arith.constant 1 : index
    %c65_391 = arith.constant 65 : index
    %c0_392 = arith.constant 0 : index
    %397 = vector.load %arg12[%c1_390, %c65_391, %c0_392] : memref<16x176x128xf32, #tpu.memory_space<vmem>>, vector<1x11x128xf32>
    %398 = vector.shape_cast %397 : vector<1x11x128xf32> to vector<11x128xf32>
    %399 = arith.addf %396, %398 : vector<11x128xf32>
    %c2_393 = arith.constant 2 : index
    %c66_394 = arith.constant 66 : index
    %c0_395 = arith.constant 0 : index
    %400 = vector.load %arg12[%c2_393, %c66_394, %c0_395] : memref<16x176x128xf32, #tpu.memory_space<vmem>>, vector<1x11x128xf32>
    %401 = vector.shape_cast %400 : vector<1x11x128xf32> to vector<11x128xf32>
    %402 = arith.addf %399, %401 : vector<11x128xf32>
    %c3_396 = arith.constant 3 : index
    %c66_397 = arith.constant 66 : index
    %c0_398 = arith.constant 0 : index
    %403 = vector.load %arg12[%c3_396, %c66_397, %c0_398] : memref<16x176x128xf32, #tpu.memory_space<vmem>>, vector<1x11x128xf32>
    %404 = vector.shape_cast %403 : vector<1x11x128xf32> to vector<11x128xf32>
    %405 = arith.addf %402, %404 : vector<11x128xf32>
    %c4_399 = arith.constant 4 : index
    %c65_400 = arith.constant 65 : index
    %c0_401 = arith.constant 0 : index
    %406 = vector.load %arg12[%c4_399, %c65_400, %c0_401] : memref<16x176x128xf32, #tpu.memory_space<vmem>>, vector<1x11x128xf32>
    %407 = vector.shape_cast %406 : vector<1x11x128xf32> to vector<11x128xf32>
    %408 = arith.addf %405, %407 : vector<11x128xf32>
    %c5_402 = arith.constant 5 : index
    %c65_403 = arith.constant 65 : index
    %c0_404 = arith.constant 0 : index
    %409 = vector.load %arg12[%c5_402, %c65_403, %c0_404] : memref<16x176x128xf32, #tpu.memory_space<vmem>>, vector<1x11x128xf32>
    %410 = vector.shape_cast %409 : vector<1x11x128xf32> to vector<11x128xf32>
    %411 = arith.addf %408, %410 : vector<11x128xf32>
    %c6_405 = arith.constant 6 : index
    %c66_406 = arith.constant 66 : index
    %c0_407 = arith.constant 0 : index
    %412 = vector.load %arg12[%c6_405, %c66_406, %c0_407] : memref<16x176x128xf32, #tpu.memory_space<vmem>>, vector<1x11x128xf32>
    %413 = vector.shape_cast %412 : vector<1x11x128xf32> to vector<11x128xf32>
    %414 = arith.addf %411, %413 : vector<11x128xf32>
    %c7_408 = arith.constant 7 : index
    %c66_409 = arith.constant 66 : index
    %c0_410 = arith.constant 0 : index
    %415 = vector.load %arg12[%c7_408, %c66_409, %c0_410] : memref<16x176x128xf32, #tpu.memory_space<vmem>>, vector<1x11x128xf32>
    %416 = vector.shape_cast %415 : vector<1x11x128xf32> to vector<11x128xf32>
    %417 = arith.addf %414, %416 : vector<11x128xf32>
    %c8_411 = arith.constant 8 : index
    %c78 = arith.constant 78 : index
    %c0_412 = arith.constant 0 : index
    %418 = vector.load %arg12[%c8_411, %c78, %c0_412] : memref<16x176x128xf32, #tpu.memory_space<vmem>>, vector<1x11x128xf32>
    %419 = vector.shape_cast %418 : vector<1x11x128xf32> to vector<11x128xf32>
    %420 = arith.addf %417, %419 : vector<11x128xf32>
    %c9_413 = arith.constant 9 : index
    %c78_414 = arith.constant 78 : index
    %c0_415 = arith.constant 0 : index
    %421 = vector.load %arg12[%c9_413, %c78_414, %c0_415] : memref<16x176x128xf32, #tpu.memory_space<vmem>>, vector<1x11x128xf32>
    %422 = vector.shape_cast %421 : vector<1x11x128xf32> to vector<11x128xf32>
    %423 = arith.addf %420, %422 : vector<11x128xf32>
    %c10_416 = arith.constant 10 : index
    %c79 = arith.constant 79 : index
    %c0_417 = arith.constant 0 : index
    %424 = vector.load %arg12[%c10_416, %c79, %c0_417] : memref<16x176x128xf32, #tpu.memory_space<vmem>>, vector<1x11x128xf32>
    %425 = vector.shape_cast %424 : vector<1x11x128xf32> to vector<11x128xf32>
    %426 = arith.addf %423, %425 : vector<11x128xf32>
    %c11_418 = arith.constant 11 : index
    %c79_419 = arith.constant 79 : index
    %c0_420 = arith.constant 0 : index
    %427 = vector.load %arg12[%c11_418, %c79_419, %c0_420] : memref<16x176x128xf32, #tpu.memory_space<vmem>>, vector<1x11x128xf32>
    %428 = vector.shape_cast %427 : vector<1x11x128xf32> to vector<11x128xf32>
    %429 = arith.addf %426, %428 : vector<11x128xf32>
    %c12_421 = arith.constant 12 : index
    %c78_422 = arith.constant 78 : index
    %c0_423 = arith.constant 0 : index
    %430 = vector.load %arg12[%c12_421, %c78_422, %c0_423] : memref<16x176x128xf32, #tpu.memory_space<vmem>>, vector<1x11x128xf32>
    %431 = vector.shape_cast %430 : vector<1x11x128xf32> to vector<11x128xf32>
    %432 = arith.addf %429, %431 : vector<11x128xf32>
    %c13_424 = arith.constant 13 : index
    %c78_425 = arith.constant 78 : index
    %c0_426 = arith.constant 0 : index
    %433 = vector.load %arg12[%c13_424, %c78_425, %c0_426] : memref<16x176x128xf32, #tpu.memory_space<vmem>>, vector<1x11x128xf32>
    %434 = vector.shape_cast %433 : vector<1x11x128xf32> to vector<11x128xf32>
    %435 = arith.addf %432, %434 : vector<11x128xf32>
    %c14_427 = arith.constant 14 : index
    %c79_428 = arith.constant 79 : index
    %c0_429 = arith.constant 0 : index
    %436 = vector.load %arg12[%c14_427, %c79_428, %c0_429] : memref<16x176x128xf32, #tpu.memory_space<vmem>>, vector<1x11x128xf32>
    %437 = vector.shape_cast %436 : vector<1x11x128xf32> to vector<11x128xf32>
    %438 = arith.addf %435, %437 : vector<11x128xf32>
    %c15_430 = arith.constant 15 : index
    %c79_431 = arith.constant 79 : index
    %c0_432 = arith.constant 0 : index
    %439 = vector.load %arg12[%c15_430, %c79_431, %c0_432] : memref<16x176x128xf32, #tpu.memory_space<vmem>>, vector<1x11x128xf32>
    %440 = vector.shape_cast %439 : vector<1x11x128xf32> to vector<11x128xf32>
    %441 = arith.addf %438, %440 : vector<11x128xf32>
    %442 = vector.broadcast %122 : vector<1x128xf32> to vector<11x128xf32>
    %443 = arith.addf %441, %442 : vector<11x128xf32>
    %cst_433 = arith.constant 0.000000e+00 : f32
    %444 = vector.broadcast %cst_433 : f32 to vector<11x128xf32>
    %445 = arith.maximumf %443, %444 : vector<11x128xf32>
    %c55 = arith.constant 55 : index
    %c0_434 = arith.constant 0 : index
    %446 = vector.load %arg13[%c55, %c0_434] : memref<110x128xf32, #tpu.memory_space<vmem>>, vector<11x128xf32>
    tpu.vector_store %arg13[%c55, %c0_434], %445 {strides = array<i32>} : memref<110x128xf32, #tpu.memory_space<vmem>>, vector<11x128xf32>,
    %cst_435 = arith.constant 0.000000e+00 : f32
    %447 = vector.broadcast %cst_435 : f32 to vector<11x128xf32>
    %c0_436 = arith.constant 0 : index
    %c78_437 = arith.constant 78 : index
    %c0_438 = arith.constant 0 : index
    %448 = vector.load %arg12[%c0_436, %c78_437, %c0_438] : memref<16x176x128xf32, #tpu.memory_space<vmem>>, vector<1x11x128xf32>
    %449 = vector.shape_cast %448 : vector<1x11x128xf32> to vector<11x128xf32>
    %450 = arith.addf %447, %449 : vector<11x128xf32>
    %c1_439 = arith.constant 1 : index
    %c78_440 = arith.constant 78 : index
    %c0_441 = arith.constant 0 : index
    %451 = vector.load %arg12[%c1_439, %c78_440, %c0_441] : memref<16x176x128xf32, #tpu.memory_space<vmem>>, vector<1x11x128xf32>
    %452 = vector.shape_cast %451 : vector<1x11x128xf32> to vector<11x128xf32>
    %453 = arith.addf %450, %452 : vector<11x128xf32>
    %c2_442 = arith.constant 2 : index
    %c79_443 = arith.constant 79 : index
    %c0_444 = arith.constant 0 : index
    %454 = vector.load %arg12[%c2_442, %c79_443, %c0_444] : memref<16x176x128xf32, #tpu.memory_space<vmem>>, vector<1x11x128xf32>
    %455 = vector.shape_cast %454 : vector<1x11x128xf32> to vector<11x128xf32>
    %456 = arith.addf %453, %455 : vector<11x128xf32>
    %c3_445 = arith.constant 3 : index
    %c79_446 = arith.constant 79 : index
    %c0_447 = arith.constant 0 : index
    %457 = vector.load %arg12[%c3_445, %c79_446, %c0_447] : memref<16x176x128xf32, #tpu.memory_space<vmem>>, vector<1x11x128xf32>
    %458 = vector.shape_cast %457 : vector<1x11x128xf32> to vector<11x128xf32>
    %459 = arith.addf %456, %458 : vector<11x128xf32>
    %c4_448 = arith.constant 4 : index
    %c78_449 = arith.constant 78 : index
    %c0_450 = arith.constant 0 : index
    %460 = vector.load %arg12[%c4_448, %c78_449, %c0_450] : memref<16x176x128xf32, #tpu.memory_space<vmem>>, vector<1x11x128xf32>
    %461 = vector.shape_cast %460 : vector<1x11x128xf32> to vector<11x128xf32>
    %462 = arith.addf %459, %461 : vector<11x128xf32>
    %c5_451 = arith.constant 5 : index
    %c78_452 = arith.constant 78 : index
    %c0_453 = arith.constant 0 : index
    %463 = vector.load %arg12[%c5_451, %c78_452, %c0_453] : memref<16x176x128xf32, #tpu.memory_space<vmem>>, vector<1x11x128xf32>
    %464 = vector.shape_cast %463 : vector<1x11x128xf32> to vector<11x128xf32>
    %465 = arith.addf %462, %464 : vector<11x128xf32>
    %c6_454 = arith.constant 6 : index
    %c79_455 = arith.constant 79 : index
    %c0_456 = arith.constant 0 : index
    %466 = vector.load %arg12[%c6_454, %c79_455, %c0_456] : memref<16x176x128xf32, #tpu.memory_space<vmem>>, vector<1x11x128xf32>
    %467 = vector.shape_cast %466 : vector<1x11x128xf32> to vector<11x128xf32>
    %468 = arith.addf %465, %467 : vector<11x128xf32>
    %c7_457 = arith.constant 7 : index
    %c79_458 = arith.constant 79 : index
    %c0_459 = arith.constant 0 : index
    %469 = vector.load %arg12[%c7_457, %c79_458, %c0_459] : memref<16x176x128xf32, #tpu.memory_space<vmem>>, vector<1x11x128xf32>
    %470 = vector.shape_cast %469 : vector<1x11x128xf32> to vector<11x128xf32>
    %471 = arith.addf %468, %470 : vector<11x128xf32>
    %c8_460 = arith.constant 8 : index
    %c91 = arith.constant 91 : index
    %c0_461 = arith.constant 0 : index
    %472 = vector.load %arg12[%c8_460, %c91, %c0_461] : memref<16x176x128xf32, #tpu.memory_space<vmem>>, vector<1x11x128xf32>
    %473 = vector.shape_cast %472 : vector<1x11x128xf32> to vector<11x128xf32>
    %474 = arith.addf %471, %473 : vector<11x128xf32>
    %c9_462 = arith.constant 9 : index
    %c91_463 = arith.constant 91 : index
    %c0_464 = arith.constant 0 : index
    %475 = vector.load %arg12[%c9_462, %c91_463, %c0_464] : memref<16x176x128xf32, #tpu.memory_space<vmem>>, vector<1x11x128xf32>
    %476 = vector.shape_cast %475 : vector<1x11x128xf32> to vector<11x128xf32>
    %477 = arith.addf %474, %476 : vector<11x128xf32>
    %c10_465 = arith.constant 10 : index
    %c92 = arith.constant 92 : index
    %c0_466 = arith.constant 0 : index
    %478 = vector.load %arg12[%c10_465, %c92, %c0_466] : memref<16x176x128xf32, #tpu.memory_space<vmem>>, vector<1x11x128xf32>
    %479 = vector.shape_cast %478 : vector<1x11x128xf32> to vector<11x128xf32>
    %480 = arith.addf %477, %479 : vector<11x128xf32>
    %c11_467 = arith.constant 11 : index
    %c92_468 = arith.constant 92 : index
    %c0_469 = arith.constant 0 : index
    %481 = vector.load %arg12[%c11_467, %c92_468, %c0_469] : memref<16x176x128xf32, #tpu.memory_space<vmem>>, vector<1x11x128xf32>
    %482 = vector.shape_cast %481 : vector<1x11x128xf32> to vector<11x128xf32>
    %483 = arith.addf %480, %482 : vector<11x128xf32>
    %c12_470 = arith.constant 12 : index
    %c91_471 = arith.constant 91 : index
    %c0_472 = arith.constant 0 : index
    %484 = vector.load %arg12[%c12_470, %c91_471, %c0_472] : memref<16x176x128xf32, #tpu.memory_space<vmem>>, vector<1x11x128xf32>
    %485 = vector.shape_cast %484 : vector<1x11x128xf32> to vector<11x128xf32>
    %486 = arith.addf %483, %485 : vector<11x128xf32>
    %c13_473 = arith.constant 13 : index
    %c91_474 = arith.constant 91 : index
    %c0_475 = arith.constant 0 : index
    %487 = vector.load %arg12[%c13_473, %c91_474, %c0_475] : memref<16x176x128xf32, #tpu.memory_space<vmem>>, vector<1x11x128xf32>
    %488 = vector.shape_cast %487 : vector<1x11x128xf32> to vector<11x128xf32>
    %489 = arith.addf %486, %488 : vector<11x128xf32>
    %c14_476 = arith.constant 14 : index
    %c92_477 = arith.constant 92 : index
    %c0_478 = arith.constant 0 : index
    %490 = vector.load %arg12[%c14_476, %c92_477, %c0_478] : memref<16x176x128xf32, #tpu.memory_space<vmem>>, vector<1x11x128xf32>
    %491 = vector.shape_cast %490 : vector<1x11x128xf32> to vector<11x128xf32>
    %492 = arith.addf %489, %491 : vector<11x128xf32>
    %c15_479 = arith.constant 15 : index
    %c92_480 = arith.constant 92 : index
    %c0_481 = arith.constant 0 : index
    %493 = vector.load %arg12[%c15_479, %c92_480, %c0_481] : memref<16x176x128xf32, #tpu.memory_space<vmem>>, vector<1x11x128xf32>
    %494 = vector.shape_cast %493 : vector<1x11x128xf32> to vector<11x128xf32>
    %495 = arith.addf %492, %494 : vector<11x128xf32>
    %496 = vector.broadcast %122 : vector<1x128xf32> to vector<11x128xf32>
    %497 = arith.addf %495, %496 : vector<11x128xf32>
    %cst_482 = arith.constant 0.000000e+00 : f32
    %498 = vector.broadcast %cst_482 : f32 to vector<11x128xf32>
    %499 = arith.maximumf %497, %498 : vector<11x128xf32>
    %c66_483 = arith.constant 66 : index
    %c0_484 = arith.constant 0 : index
    %500 = vector.load %arg13[%c66_483, %c0_484] : memref<110x128xf32, #tpu.memory_space<vmem>>, vector<11x128xf32>
    tpu.vector_store %arg13[%c66_483, %c0_484], %499 {strides = array<i32>} : memref<110x128xf32, #tpu.memory_space<vmem>>, vector<11x128xf32>,
    %cst_485 = arith.constant 0.000000e+00 : f32
    %501 = vector.broadcast %cst_485 : f32 to vector<11x128xf32>
    %c0_486 = arith.constant 0 : index
    %c91_487 = arith.constant 91 : index
    %c0_488 = arith.constant 0 : index
    %502 = vector.load %arg12[%c0_486, %c91_487, %c0_488] : memref<16x176x128xf32, #tpu.memory_space<vmem>>, vector<1x11x128xf32>
    %503 = vector.shape_cast %502 : vector<1x11x128xf32> to vector<11x128xf32>
    %504 = arith.addf %501, %503 : vector<11x128xf32>
    %c1_489 = arith.constant 1 : index
    %c91_490 = arith.constant 91 : index
    %c0_491 = arith.constant 0 : index
    %505 = vector.load %arg12[%c1_489, %c91_490, %c0_491] : memref<16x176x128xf32, #tpu.memory_space<vmem>>, vector<1x11x128xf32>
    %506 = vector.shape_cast %505 : vector<1x11x128xf32> to vector<11x128xf32>
    %507 = arith.addf %504, %506 : vector<11x128xf32>
    %c2_492 = arith.constant 2 : index
    %c92_493 = arith.constant 92 : index
    %c0_494 = arith.constant 0 : index
    %508 = vector.load %arg12[%c2_492, %c92_493, %c0_494] : memref<16x176x128xf32, #tpu.memory_space<vmem>>, vector<1x11x128xf32>
    %509 = vector.shape_cast %508 : vector<1x11x128xf32> to vector<11x128xf32>
    %510 = arith.addf %507, %509 : vector<11x128xf32>
    %c3_495 = arith.constant 3 : index
    %c92_496 = arith.constant 92 : index
    %c0_497 = arith.constant 0 : index
    %511 = vector.load %arg12[%c3_495, %c92_496, %c0_497] : memref<16x176x128xf32, #tpu.memory_space<vmem>>, vector<1x11x128xf32>
    %512 = vector.shape_cast %511 : vector<1x11x128xf32> to vector<11x128xf32>
    %513 = arith.addf %510, %512 : vector<11x128xf32>
    %c4_498 = arith.constant 4 : index
    %c91_499 = arith.constant 91 : index
    %c0_500 = arith.constant 0 : index
    %514 = vector.load %arg12[%c4_498, %c91_499, %c0_500] : memref<16x176x128xf32, #tpu.memory_space<vmem>>, vector<1x11x128xf32>
    %515 = vector.shape_cast %514 : vector<1x11x128xf32> to vector<11x128xf32>
    %516 = arith.addf %513, %515 : vector<11x128xf32>
    %c5_501 = arith.constant 5 : index
    %c91_502 = arith.constant 91 : index
    %c0_503 = arith.constant 0 : index
    %517 = vector.load %arg12[%c5_501, %c91_502, %c0_503] : memref<16x176x128xf32, #tpu.memory_space<vmem>>, vector<1x11x128xf32>
    %518 = vector.shape_cast %517 : vector<1x11x128xf32> to vector<11x128xf32>
    %519 = arith.addf %516, %518 : vector<11x128xf32>
    %c6_504 = arith.constant 6 : index
    %c92_505 = arith.constant 92 : index
    %c0_506 = arith.constant 0 : index
    %520 = vector.load %arg12[%c6_504, %c92_505, %c0_506] : memref<16x176x128xf32, #tpu.memory_space<vmem>>, vector<1x11x128xf32>
    %521 = vector.shape_cast %520 : vector<1x11x128xf32> to vector<11x128xf32>
    %522 = arith.addf %519, %521 : vector<11x128xf32>
    %c7_507 = arith.constant 7 : index
    %c92_508 = arith.constant 92 : index
    %c0_509 = arith.constant 0 : index
    %523 = vector.load %arg12[%c7_507, %c92_508, %c0_509] : memref<16x176x128xf32, #tpu.memory_space<vmem>>, vector<1x11x128xf32>
    %524 = vector.shape_cast %523 : vector<1x11x128xf32> to vector<11x128xf32>
    %525 = arith.addf %522, %524 : vector<11x128xf32>
    %c8_510 = arith.constant 8 : index
    %c104 = arith.constant 104 : index
    %c0_511 = arith.constant 0 : index
    %526 = vector.load %arg12[%c8_510, %c104, %c0_511] : memref<16x176x128xf32, #tpu.memory_space<vmem>>, vector<1x11x128xf32>
    %527 = vector.shape_cast %526 : vector<1x11x128xf32> to vector<11x128xf32>
    %528 = arith.addf %525, %527 : vector<11x128xf32>
    %c9_512 = arith.constant 9 : index
    %c104_513 = arith.constant 104 : index
    %c0_514 = arith.constant 0 : index
    %529 = vector.load %arg12[%c9_512, %c104_513, %c0_514] : memref<16x176x128xf32, #tpu.memory_space<vmem>>, vector<1x11x128xf32>
    %530 = vector.shape_cast %529 : vector<1x11x128xf32> to vector<11x128xf32>
    %531 = arith.addf %528, %530 : vector<11x128xf32>
    %c10_515 = arith.constant 10 : index
    %c105 = arith.constant 105 : index
    %c0_516 = arith.constant 0 : index
    %532 = vector.load %arg12[%c10_515, %c105, %c0_516] : memref<16x176x128xf32, #tpu.memory_space<vmem>>, vector<1x11x128xf32>
    %533 = vector.shape_cast %532 : vector<1x11x128xf32> to vector<11x128xf32>
    %534 = arith.addf %531, %533 : vector<11x128xf32>
    %c11_517 = arith.constant 11 : index
    %c105_518 = arith.constant 105 : index
    %c0_519 = arith.constant 0 : index
    %535 = vector.load %arg12[%c11_517, %c105_518, %c0_519] : memref<16x176x128xf32, #tpu.memory_space<vmem>>, vector<1x11x128xf32>
    %536 = vector.shape_cast %535 : vector<1x11x128xf32> to vector<11x128xf32>
    %537 = arith.addf %534, %536 : vector<11x128xf32>
    %c12_520 = arith.constant 12 : index
    %c104_521 = arith.constant 104 : index
    %c0_522 = arith.constant 0 : index
    %538 = vector.load %arg12[%c12_520, %c104_521, %c0_522] : memref<16x176x128xf32, #tpu.memory_space<vmem>>, vector<1x11x128xf32>
    %539 = vector.shape_cast %538 : vector<1x11x128xf32> to vector<11x128xf32>
    %540 = arith.addf %537, %539 : vector<11x128xf32>
    %c13_523 = arith.constant 13 : index
    %c104_524 = arith.constant 104 : index
    %c0_525 = arith.constant 0 : index
    %541 = vector.load %arg12[%c13_523, %c104_524, %c0_525] : memref<16x176x128xf32, #tpu.memory_space<vmem>>, vector<1x11x128xf32>
    %542 = vector.shape_cast %541 : vector<1x11x128xf32> to vector<11x128xf32>
    %543 = arith.addf %540, %542 : vector<11x128xf32>
    %c14_526 = arith.constant 14 : index
    %c105_527 = arith.constant 105 : index
    %c0_528 = arith.constant 0 : index
    %544 = vector.load %arg12[%c14_526, %c105_527, %c0_528] : memref<16x176x128xf32, #tpu.memory_space<vmem>>, vector<1x11x128xf32>
    %545 = vector.shape_cast %544 : vector<1x11x128xf32> to vector<11x128xf32>
    %546 = arith.addf %543, %545 : vector<11x128xf32>
    %c15_529 = arith.constant 15 : index
    %c105_530 = arith.constant 105 : index
    %c0_531 = arith.constant 0 : index
    %547 = vector.load %arg12[%c15_529, %c105_530, %c0_531] : memref<16x176x128xf32, #tpu.memory_space<vmem>>, vector<1x11x128xf32>
    %548 = vector.shape_cast %547 : vector<1x11x128xf32> to vector<11x128xf32>
    %549 = arith.addf %546, %548 : vector<11x128xf32>
    %550 = vector.broadcast %122 : vector<1x128xf32> to vector<11x128xf32>
    %551 = arith.addf %549, %550 : vector<11x128xf32>
    %cst_532 = arith.constant 0.000000e+00 : f32
    %552 = vector.broadcast %cst_532 : f32 to vector<11x128xf32>
    %553 = arith.maximumf %551, %552 : vector<11x128xf32>
    %c77 = arith.constant 77 : index
    %c0_533 = arith.constant 0 : index
    %554 = vector.load %arg13[%c77, %c0_533] : memref<110x128xf32, #tpu.memory_space<vmem>>, vector<11x128xf32>
    tpu.vector_store %arg13[%c77, %c0_533], %553 {strides = array<i32>} : memref<110x128xf32, #tpu.memory_space<vmem>>, vector<11x128xf32>,
    %cst_534 = arith.constant 0.000000e+00 : f32
    %555 = vector.broadcast %cst_534 : f32 to vector<11x128xf32>
    %c0_535 = arith.constant 0 : index
    %c104_536 = arith.constant 104 : index
    %c0_537 = arith.constant 0 : index
    %556 = vector.load %arg12[%c0_535, %c104_536, %c0_537] : memref<16x176x128xf32, #tpu.memory_space<vmem>>, vector<1x11x128xf32>
    %557 = vector.shape_cast %556 : vector<1x11x128xf32> to vector<11x128xf32>
    %558 = arith.addf %555, %557 : vector<11x128xf32>
    %c1_538 = arith.constant 1 : index
    %c104_539 = arith.constant 104 : index
    %c0_540 = arith.constant 0 : index
    %559 = vector.load %arg12[%c1_538, %c104_539, %c0_540] : memref<16x176x128xf32, #tpu.memory_space<vmem>>, vector<1x11x128xf32>
    %560 = vector.shape_cast %559 : vector<1x11x128xf32> to vector<11x128xf32>
    %561 = arith.addf %558, %560 : vector<11x128xf32>
    %c2_541 = arith.constant 2 : index
    %c105_542 = arith.constant 105 : index
    %c0_543 = arith.constant 0 : index
    %562 = vector.load %arg12[%c2_541, %c105_542, %c0_543] : memref<16x176x128xf32, #tpu.memory_space<vmem>>, vector<1x11x128xf32>
    %563 = vector.shape_cast %562 : vector<1x11x128xf32> to vector<11x128xf32>
    %564 = arith.addf %561, %563 : vector<11x128xf32>
    %c3_544 = arith.constant 3 : index
    %c105_545 = arith.constant 105 : index
    %c0_546 = arith.constant 0 : index
    %565 = vector.load %arg12[%c3_544, %c105_545, %c0_546] : memref<16x176x128xf32, #tpu.memory_space<vmem>>, vector<1x11x128xf32>
    %566 = vector.shape_cast %565 : vector<1x11x128xf32> to vector<11x128xf32>
    %567 = arith.addf %564, %566 : vector<11x128xf32>
    %c4_547 = arith.constant 4 : index
    %c104_548 = arith.constant 104 : index
    %c0_549 = arith.constant 0 : index
    %568 = vector.load %arg12[%c4_547, %c104_548, %c0_549] : memref<16x176x128xf32, #tpu.memory_space<vmem>>, vector<1x11x128xf32>
    %569 = vector.shape_cast %568 : vector<1x11x128xf32> to vector<11x128xf32>
    %570 = arith.addf %567, %569 : vector<11x128xf32>
    %c5_550 = arith.constant 5 : index
    %c104_551 = arith.constant 104 : index
    %c0_552 = arith.constant 0 : index
    %571 = vector.load %arg12[%c5_550, %c104_551, %c0_552] : memref<16x176x128xf32, #tpu.memory_space<vmem>>, vector<1x11x128xf32>
    %572 = vector.shape_cast %571 : vector<1x11x128xf32> to vector<11x128xf32>
    %573 = arith.addf %570, %572 : vector<11x128xf32>
    %c6_553 = arith.constant 6 : index
    %c105_554 = arith.constant 105 : index
    %c0_555 = arith.constant 0 : index
    %574 = vector.load %arg12[%c6_553, %c105_554, %c0_555] : memref<16x176x128xf32, #tpu.memory_space<vmem>>, vector<1x11x128xf32>
    %575 = vector.shape_cast %574 : vector<1x11x128xf32> to vector<11x128xf32>
    %576 = arith.addf %573, %575 : vector<11x128xf32>
    %c7_556 = arith.constant 7 : index
    %c105_557 = arith.constant 105 : index
    %c0_558 = arith.constant 0 : index
    %577 = vector.load %arg12[%c7_556, %c105_557, %c0_558] : memref<16x176x128xf32, #tpu.memory_space<vmem>>, vector<1x11x128xf32>
    %578 = vector.shape_cast %577 : vector<1x11x128xf32> to vector<11x128xf32>
    %579 = arith.addf %576, %578 : vector<11x128xf32>
    %c8_559 = arith.constant 8 : index
    %c117 = arith.constant 117 : index
    %c0_560 = arith.constant 0 : index
    %580 = vector.load %arg12[%c8_559, %c117, %c0_560] : memref<16x176x128xf32, #tpu.memory_space<vmem>>, vector<1x11x128xf32>
    %581 = vector.shape_cast %580 : vector<1x11x128xf32> to vector<11x128xf32>
    %582 = arith.addf %579, %581 : vector<11x128xf32>
    %c9_561 = arith.constant 9 : index
    %c117_562 = arith.constant 117 : index
    %c0_563 = arith.constant 0 : index
    %583 = vector.load %arg12[%c9_561, %c117_562, %c0_563] : memref<16x176x128xf32, #tpu.memory_space<vmem>>, vector<1x11x128xf32>
    %584 = vector.shape_cast %583 : vector<1x11x128xf32> to vector<11x128xf32>
    %585 = arith.addf %582, %584 : vector<11x128xf32>
    %c10_564 = arith.constant 10 : index
    %c118 = arith.constant 118 : index
    %c0_565 = arith.constant 0 : index
    %586 = vector.load %arg12[%c10_564, %c118, %c0_565] : memref<16x176x128xf32, #tpu.memory_space<vmem>>, vector<1x11x128xf32>
    %587 = vector.shape_cast %586 : vector<1x11x128xf32> to vector<11x128xf32>
    %588 = arith.addf %585, %587 : vector<11x128xf32>
    %c11_566 = arith.constant 11 : index
    %c118_567 = arith.constant 118 : index
    %c0_568 = arith.constant 0 : index
    %589 = vector.load %arg12[%c11_566, %c118_567, %c0_568] : memref<16x176x128xf32, #tpu.memory_space<vmem>>, vector<1x11x128xf32>
    %590 = vector.shape_cast %589 : vector<1x11x128xf32> to vector<11x128xf32>
    %591 = arith.addf %588, %590 : vector<11x128xf32>
    %c12_569 = arith.constant 12 : index
    %c117_570 = arith.constant 117 : index
    %c0_571 = arith.constant 0 : index
    %592 = vector.load %arg12[%c12_569, %c117_570, %c0_571] : memref<16x176x128xf32, #tpu.memory_space<vmem>>, vector<1x11x128xf32>
    %593 = vector.shape_cast %592 : vector<1x11x128xf32> to vector<11x128xf32>
    %594 = arith.addf %591, %593 : vector<11x128xf32>
    %c13_572 = arith.constant 13 : index
    %c117_573 = arith.constant 117 : index
    %c0_574 = arith.constant 0 : index
    %595 = vector.load %arg12[%c13_572, %c117_573, %c0_574] : memref<16x176x128xf32, #tpu.memory_space<vmem>>, vector<1x11x128xf32>
    %596 = vector.shape_cast %595 : vector<1x11x128xf32> to vector<11x128xf32>
    %597 = arith.addf %594, %596 : vector<11x128xf32>
    %c14_575 = arith.constant 14 : index
    %c118_576 = arith.constant 118 : index
    %c0_577 = arith.constant 0 : index
    %598 = vector.load %arg12[%c14_575, %c118_576, %c0_577] : memref<16x176x128xf32, #tpu.memory_space<vmem>>, vector<1x11x128xf32>
    %599 = vector.shape_cast %598 : vector<1x11x128xf32> to vector<11x128xf32>
    %600 = arith.addf %597, %599 : vector<11x128xf32>
    %c15_578 = arith.constant 15 : index
    %c118_579 = arith.constant 118 : index
    %c0_580 = arith.constant 0 : index
    %601 = vector.load %arg12[%c15_578, %c118_579, %c0_580] : memref<16x176x128xf32, #tpu.memory_space<vmem>>, vector<1x11x128xf32>
    %602 = vector.shape_cast %601 : vector<1x11x128xf32> to vector<11x128xf32>
    %603 = arith.addf %600, %602 : vector<11x128xf32>
    %604 = vector.broadcast %122 : vector<1x128xf32> to vector<11x128xf32>
    %605 = arith.addf %603, %604 : vector<11x128xf32>
    %cst_581 = arith.constant 0.000000e+00 : f32
    %606 = vector.broadcast %cst_581 : f32 to vector<11x128xf32>
    %607 = arith.maximumf %605, %606 : vector<11x128xf32>
    %c88 = arith.constant 88 : index
    %c0_582 = arith.constant 0 : index
    %608 = vector.load %arg13[%c88, %c0_582] : memref<110x128xf32, #tpu.memory_space<vmem>>, vector<11x128xf32>
    tpu.vector_store %arg13[%c88, %c0_582], %607 {strides = array<i32>} : memref<110x128xf32, #tpu.memory_space<vmem>>, vector<11x128xf32>,
    %cst_583 = arith.constant 0.000000e+00 : f32
    %609 = vector.broadcast %cst_583 : f32 to vector<11x128xf32>
    %c0_584 = arith.constant 0 : index
    %c117_585 = arith.constant 117 : index
    %c0_586 = arith.constant 0 : index
    %610 = vector.load %arg12[%c0_584, %c117_585, %c0_586] : memref<16x176x128xf32, #tpu.memory_space<vmem>>, vector<1x11x128xf32>
    %611 = vector.shape_cast %610 : vector<1x11x128xf32> to vector<11x128xf32>
    %612 = arith.addf %609, %611 : vector<11x128xf32>
    %c1_587 = arith.constant 1 : index
    %c117_588 = arith.constant 117 : index
    %c0_589 = arith.constant 0 : index
    %613 = vector.load %arg12[%c1_587, %c117_588, %c0_589] : memref<16x176x128xf32, #tpu.memory_space<vmem>>, vector<1x11x128xf32>
    %614 = vector.shape_cast %613 : vector<1x11x128xf32> to vector<11x128xf32>
    %615 = arith.addf %612, %614 : vector<11x128xf32>
    %c2_590 = arith.constant 2 : index
    %c118_591 = arith.constant 118 : index
    %c0_592 = arith.constant 0 : index
    %616 = vector.load %arg12[%c2_590, %c118_591, %c0_592] : memref<16x176x128xf32, #tpu.memory_space<vmem>>, vector<1x11x128xf32>
    %617 = vector.shape_cast %616 : vector<1x11x128xf32> to vector<11x128xf32>
    %618 = arith.addf %615, %617 : vector<11x128xf32>
    %c3_593 = arith.constant 3 : index
    %c118_594 = arith.constant 118 : index
    %c0_595 = arith.constant 0 : index
    %619 = vector.load %arg12[%c3_593, %c118_594, %c0_595] : memref<16x176x128xf32, #tpu.memory_space<vmem>>, vector<1x11x128xf32>
    %620 = vector.shape_cast %619 : vector<1x11x128xf32> to vector<11x128xf32>
    %621 = arith.addf %618, %620 : vector<11x128xf32>
    %c4_596 = arith.constant 4 : index
    %c117_597 = arith.constant 117 : index
    %c0_598 = arith.constant 0 : index
    %622 = vector.load %arg12[%c4_596, %c117_597, %c0_598] : memref<16x176x128xf32, #tpu.memory_space<vmem>>, vector<1x11x128xf32>
    %623 = vector.shape_cast %622 : vector<1x11x128xf32> to vector<11x128xf32>
    %624 = arith.addf %621, %623 : vector<11x128xf32>
    %c5_599 = arith.constant 5 : index
    %c117_600 = arith.constant 117 : index
    %c0_601 = arith.constant 0 : index
    %625 = vector.load %arg12[%c5_599, %c117_600, %c0_601] : memref<16x176x128xf32, #tpu.memory_space<vmem>>, vector<1x11x128xf32>
    %626 = vector.shape_cast %625 : vector<1x11x128xf32> to vector<11x128xf32>
    %627 = arith.addf %624, %626 : vector<11x128xf32>
    %c6_602 = arith.constant 6 : index
    %c118_603 = arith.constant 118 : index
    %c0_604 = arith.constant 0 : index
    %628 = vector.load %arg12[%c6_602, %c118_603, %c0_604] : memref<16x176x128xf32, #tpu.memory_space<vmem>>, vector<1x11x128xf32>
    %629 = vector.shape_cast %628 : vector<1x11x128xf32> to vector<11x128xf32>
    %630 = arith.addf %627, %629 : vector<11x128xf32>
    %c7_605 = arith.constant 7 : index
    %c118_606 = arith.constant 118 : index
    %c0_607 = arith.constant 0 : index
    %631 = vector.load %arg12[%c7_605, %c118_606, %c0_607] : memref<16x176x128xf32, #tpu.memory_space<vmem>>, vector<1x11x128xf32>
    %632 = vector.shape_cast %631 : vector<1x11x128xf32> to vector<11x128xf32>
    %633 = arith.addf %630, %632 : vector<11x128xf32>
    %c8_608 = arith.constant 8 : index
    %c130 = arith.constant 130 : index
    %c0_609 = arith.constant 0 : index
    %634 = vector.load %arg12[%c8_608, %c130, %c0_609] : memref<16x176x128xf32, #tpu.memory_space<vmem>>, vector<1x11x128xf32>
    %635 = vector.shape_cast %634 : vector<1x11x128xf32> to vector<11x128xf32>
    %636 = arith.addf %633, %635 : vector<11x128xf32>
    %c9_610 = arith.constant 9 : index
    %c130_611 = arith.constant 130 : index
    %c0_612 = arith.constant 0 : index
    %637 = vector.load %arg12[%c9_610, %c130_611, %c0_612] : memref<16x176x128xf32, #tpu.memory_space<vmem>>, vector<1x11x128xf32>
    %638 = vector.shape_cast %637 : vector<1x11x128xf32> to vector<11x128xf32>
    %639 = arith.addf %636, %638 : vector<11x128xf32>
    %c10_613 = arith.constant 10 : index
    %c131 = arith.constant 131 : index
    %c0_614 = arith.constant 0 : index
    %640 = vector.load %arg12[%c10_613, %c131, %c0_614] : memref<16x176x128xf32, #tpu.memory_space<vmem>>, vector<1x11x128xf32>
    %641 = vector.shape_cast %640 : vector<1x11x128xf32> to vector<11x128xf32>
    %642 = arith.addf %639, %641 : vector<11x128xf32>
    %c11_615 = arith.constant 11 : index
    %c131_616 = arith.constant 131 : index
    %c0_617 = arith.constant 0 : index
    %643 = vector.load %arg12[%c11_615, %c131_616, %c0_617] : memref<16x176x128xf32, #tpu.memory_space<vmem>>, vector<1x11x128xf32>
    %644 = vector.shape_cast %643 : vector<1x11x128xf32> to vector<11x128xf32>
    %645 = arith.addf %642, %644 : vector<11x128xf32>
    %c12_618 = arith.constant 12 : index
    %c130_619 = arith.constant 130 : index
    %c0_620 = arith.constant 0 : index
    %646 = vector.load %arg12[%c12_618, %c130_619, %c0_620] : memref<16x176x128xf32, #tpu.memory_space<vmem>>, vector<1x11x128xf32>
    %647 = vector.shape_cast %646 : vector<1x11x128xf32> to vector<11x128xf32>
    %648 = arith.addf %645, %647 : vector<11x128xf32>
    %c13_621 = arith.constant 13 : index
    %c130_622 = arith.constant 130 : index
    %c0_623 = arith.constant 0 : index
    %649 = vector.load %arg12[%c13_621, %c130_622, %c0_623] : memref<16x176x128xf32, #tpu.memory_space<vmem>>, vector<1x11x128xf32>
    %650 = vector.shape_cast %649 : vector<1x11x128xf32> to vector<11x128xf32>
    %651 = arith.addf %648, %650 : vector<11x128xf32>
    %c14_624 = arith.constant 14 : index
    %c131_625 = arith.constant 131 : index
    %c0_626 = arith.constant 0 : index
    %652 = vector.load %arg12[%c14_624, %c131_625, %c0_626] : memref<16x176x128xf32, #tpu.memory_space<vmem>>, vector<1x11x128xf32>
    %653 = vector.shape_cast %652 : vector<1x11x128xf32> to vector<11x128xf32>
    %654 = arith.addf %651, %653 : vector<11x128xf32>
    %c15_627 = arith.constant 15 : index
    %c131_628 = arith.constant 131 : index
    %c0_629 = arith.constant 0 : index
    %655 = vector.load %arg12[%c15_627, %c131_628, %c0_629] : memref<16x176x128xf32, #tpu.memory_space<vmem>>, vector<1x11x128xf32>
    %656 = vector.shape_cast %655 : vector<1x11x128xf32> to vector<11x128xf32>
    %657 = arith.addf %654, %656 : vector<11x128xf32>
    %658 = vector.broadcast %122 : vector<1x128xf32> to vector<11x128xf32>
    %659 = arith.addf %657, %658 : vector<11x128xf32>
    %cst_630 = arith.constant 0.000000e+00 : f32
    %660 = vector.broadcast %cst_630 : f32 to vector<11x128xf32>
    %661 = arith.maximumf %659, %660 : vector<11x128xf32>
    %c99 = arith.constant 99 : index
    %c0_631 = arith.constant 0 : index
    %662 = vector.load %arg13[%c99, %c0_631] : memref<110x128xf32, #tpu.memory_space<vmem>>, vector<11x128xf32>
    tpu.vector_store %arg13[%c99, %c0_631], %661 {strides = array<i32>} : memref<110x128xf32, #tpu.memory_space<vmem>>, vector<11x128xf32>,
    %c0_632 = arith.constant 0 : index
    %c0_633 = arith.constant 0 : index
    %663 = vector.load %arg13[%c0_632, %c0_633] : memref<110x128xf32, #tpu.memory_space<vmem>>, vector<1x128xf32>
    %c1_634 = arith.constant 1 : index
    %c0_635 = arith.constant 0 : index
    %664 = vector.load %arg13[%c1_634, %c0_635] : memref<110x128xf32, #tpu.memory_space<vmem>>, vector<1x128xf32>
    %c11_636 = arith.constant 11 : index
    %c0_637 = arith.constant 0 : index
    %665 = vector.load %arg13[%c11_636, %c0_637] : memref<110x128xf32, #tpu.memory_space<vmem>>, vector<1x128xf32>
    %c12_638 = arith.constant 12 : index
    %c0_639 = arith.constant 0 : index
    %666 = vector.load %arg13[%c12_638, %c0_639] : memref<110x128xf32, #tpu.memory_space<vmem>>, vector<1x128xf32>
    %667 = arith.maximumf %663, %664 : vector<1x128xf32>
    %668 = arith.maximumf %665, %666 : vector<1x128xf32>
    %669 = arith.maximumf %667, %668 : vector<1x128xf32>
    %c0_640 = arith.constant 0 : index
    %c0_641 = arith.constant 0 : index
    %670 = vector.load %arg14[%c0_640, %c0_641] : memref<1x3200xf32, #tpu.memory_space<vmem>>, vector<1x128xf32>
    tpu.vector_store %arg14[%c0_640, %c0_641], %669 {strides = array<i32>} : memref<1x3200xf32, #tpu.memory_space<vmem>>, vector<1x128xf32>,
    %c2_642 = arith.constant 2 : index
    %c0_643 = arith.constant 0 : index
    %671 = vector.load %arg13[%c2_642, %c0_643] : memref<110x128xf32, #tpu.memory_space<vmem>>, vector<1x128xf32>
    %c3_644 = arith.constant 3 : index
    %c0_645 = arith.constant 0 : index
    %672 = vector.load %arg13[%c3_644, %c0_645] : memref<110x128xf32, #tpu.memory_space<vmem>>, vector<1x128xf32>
    %c13_646 = arith.constant 13 : index
    %c0_647 = arith.constant 0 : index
    %673 = vector.load %arg13[%c13_646, %c0_647] : memref<110x128xf32, #tpu.memory_space<vmem>>, vector<1x128xf32>
    %c14_648 = arith.constant 14 : index
    %c0_649 = arith.constant 0 : index
    %674 = vector.load %arg13[%c14_648, %c0_649] : memref<110x128xf32, #tpu.memory_space<vmem>>, vector<1x128xf32>
    %675 = arith.maximumf %671, %672 : vector<1x128xf32>
    %676 = arith.maximumf %673, %674 : vector<1x128xf32>
    %677 = arith.maximumf %675, %676 : vector<1x128xf32>
    %c0_650 = arith.constant 0 : index
    %c128 = arith.constant 128 : index
    %678 = vector.load %arg14[%c0_650, %c128] : memref<1x3200xf32, #tpu.memory_space<vmem>>, vector<1x128xf32>
    tpu.vector_store %arg14[%c0_650, %c128], %677 {strides = array<i32>} : memref<1x3200xf32, #tpu.memory_space<vmem>>, vector<1x128xf32>,
    %c4_651 = arith.constant 4 : index
    %c0_652 = arith.constant 0 : index
    %679 = vector.load %arg13[%c4_651, %c0_652] : memref<110x128xf32, #tpu.memory_space<vmem>>, vector<1x128xf32>
    %c5_653 = arith.constant 5 : index
    %c0_654 = arith.constant 0 : index
    %680 = vector.load %arg13[%c5_653, %c0_654] : memref<110x128xf32, #tpu.memory_space<vmem>>, vector<1x128xf32>
    %c15_655 = arith.constant 15 : index
    %c0_656 = arith.constant 0 : index
    %681 = vector.load %arg13[%c15_655, %c0_656] : memref<110x128xf32, #tpu.memory_space<vmem>>, vector<1x128xf32>
    %c16 = arith.constant 16 : index
    %c0_657 = arith.constant 0 : index
    %682 = vector.load %arg13[%c16, %c0_657] : memref<110x128xf32, #tpu.memory_space<vmem>>, vector<1x128xf32>
    %683 = arith.maximumf %679, %680 : vector<1x128xf32>
    %684 = arith.maximumf %681, %682 : vector<1x128xf32>
    %685 = arith.maximumf %683, %684 : vector<1x128xf32>
    %c0_658 = arith.constant 0 : index
    %c256 = arith.constant 256 : index
    %686 = vector.load %arg14[%c0_658, %c256] : memref<1x3200xf32, #tpu.memory_space<vmem>>, vector<1x128xf32>
    tpu.vector_store %arg14[%c0_658, %c256], %685 {strides = array<i32>} : memref<1x3200xf32, #tpu.memory_space<vmem>>, vector<1x128xf32>,
    %c6_659 = arith.constant 6 : index
    %c0_660 = arith.constant 0 : index
    %687 = vector.load %arg13[%c6_659, %c0_660] : memref<110x128xf32, #tpu.memory_space<vmem>>, vector<1x128xf32>
    %c7_661 = arith.constant 7 : index
    %c0_662 = arith.constant 0 : index
    %688 = vector.load %arg13[%c7_661, %c0_662] : memref<110x128xf32, #tpu.memory_space<vmem>>, vector<1x128xf32>
    %c17 = arith.constant 17 : index
    %c0_663 = arith.constant 0 : index
    %689 = vector.load %arg13[%c17, %c0_663] : memref<110x128xf32, #tpu.memory_space<vmem>>, vector<1x128xf32>
    %c18 = arith.constant 18 : index
    %c0_664 = arith.constant 0 : index
    %690 = vector.load %arg13[%c18, %c0_664] : memref<110x128xf32, #tpu.memory_space<vmem>>, vector<1x128xf32>
    %691 = arith.maximumf %687, %688 : vector<1x128xf32>
    %692 = arith.maximumf %689, %690 : vector<1x128xf32>
    %693 = arith.maximumf %691, %692 : vector<1x128xf32>
    %c0_665 = arith.constant 0 : index
    %c384 = arith.constant 384 : index
    %694 = vector.load %arg14[%c0_665, %c384] : memref<1x3200xf32, #tpu.memory_space<vmem>>, vector<1x128xf32>
    tpu.vector_store %arg14[%c0_665, %c384], %693 {strides = array<i32>} : memref<1x3200xf32, #tpu.memory_space<vmem>>, vector<1x128xf32>,
    %c8_666 = arith.constant 8 : index
    %c0_667 = arith.constant 0 : index
    %695 = vector.load %arg13[%c8_666, %c0_667] : memref<110x128xf32, #tpu.memory_space<vmem>>, vector<1x128xf32>
    %c9_668 = arith.constant 9 : index
    %c0_669 = arith.constant 0 : index
    %696 = vector.load %arg13[%c9_668, %c0_669] : memref<110x128xf32, #tpu.memory_space<vmem>>, vector<1x128xf32>
    %c19 = arith.constant 19 : index
    %c0_670 = arith.constant 0 : index
    %697 = vector.load %arg13[%c19, %c0_670] : memref<110x128xf32, #tpu.memory_space<vmem>>, vector<1x128xf32>
    %c20 = arith.constant 20 : index
    %c0_671 = arith.constant 0 : index
    %698 = vector.load %arg13[%c20, %c0_671] : memref<110x128xf32, #tpu.memory_space<vmem>>, vector<1x128xf32>
    %699 = arith.maximumf %695, %696 : vector<1x128xf32>
    %700 = arith.maximumf %697, %698 : vector<1x128xf32>
    %701 = arith.maximumf %699, %700 : vector<1x128xf32>
    %c0_672 = arith.constant 0 : index
    %c512 = arith.constant 512 : index
    %702 = vector.load %arg14[%c0_672, %c512] : memref<1x3200xf32, #tpu.memory_space<vmem>>, vector<1x128xf32>
    tpu.vector_store %arg14[%c0_672, %c512], %701 {strides = array<i32>} : memref<1x3200xf32, #tpu.memory_space<vmem>>, vector<1x128xf32>,
    %c22_673 = arith.constant 22 : index
    %c0_674 = arith.constant 0 : index
    %703 = vector.load %arg13[%c22_673, %c0_674] : memref<110x128xf32, #tpu.memory_space<vmem>>, vector<1x128xf32>
    %c23 = arith.constant 23 : index
    %c0_675 = arith.constant 0 : index
    %704 = vector.load %arg13[%c23, %c0_675] : memref<110x128xf32, #tpu.memory_space<vmem>>, vector<1x128xf32>
    %c33_676 = arith.constant 33 : index
    %c0_677 = arith.constant 0 : index
    %705 = vector.load %arg13[%c33_676, %c0_677] : memref<110x128xf32, #tpu.memory_space<vmem>>, vector<1x128xf32>
    %c34 = arith.constant 34 : index
    %c0_678 = arith.constant 0 : index
    %706 = vector.load %arg13[%c34, %c0_678] : memref<110x128xf32, #tpu.memory_space<vmem>>, vector<1x128xf32>
    %707 = arith.maximumf %703, %704 : vector<1x128xf32>
    %708 = arith.maximumf %705, %706 : vector<1x128xf32>
    %709 = arith.maximumf %707, %708 : vector<1x128xf32>
    %c0_679 = arith.constant 0 : index
    %c640 = arith.constant 640 : index
    %710 = vector.load %arg14[%c0_679, %c640] : memref<1x3200xf32, #tpu.memory_space<vmem>>, vector<1x128xf32>
    tpu.vector_store %arg14[%c0_679, %c640], %709 {strides = array<i32>} : memref<1x3200xf32, #tpu.memory_space<vmem>>, vector<1x128xf32>,
    %c24 = arith.constant 24 : index
    %c0_680 = arith.constant 0 : index
    %711 = vector.load %arg13[%c24, %c0_680] : memref<110x128xf32, #tpu.memory_space<vmem>>, vector<1x128xf32>
    %c25 = arith.constant 25 : index
    %c0_681 = arith.constant 0 : index
    %712 = vector.load %arg13[%c25, %c0_681] : memref<110x128xf32, #tpu.memory_space<vmem>>, vector<1x128xf32>
    %c35 = arith.constant 35 : index
    %c0_682 = arith.constant 0 : index
    %713 = vector.load %arg13[%c35, %c0_682] : memref<110x128xf32, #tpu.memory_space<vmem>>, vector<1x128xf32>
    %c36 = arith.constant 36 : index
    %c0_683 = arith.constant 0 : index
    %714 = vector.load %arg13[%c36, %c0_683] : memref<110x128xf32, #tpu.memory_space<vmem>>, vector<1x128xf32>
    %715 = arith.maximumf %711, %712 : vector<1x128xf32>
    %716 = arith.maximumf %713, %714 : vector<1x128xf32>
    %717 = arith.maximumf %715, %716 : vector<1x128xf32>
    %c0_684 = arith.constant 0 : index
    %c768 = arith.constant 768 : index
    %718 = vector.load %arg14[%c0_684, %c768] : memref<1x3200xf32, #tpu.memory_space<vmem>>, vector<1x128xf32>
    tpu.vector_store %arg14[%c0_684, %c768], %717 {strides = array<i32>} : memref<1x3200xf32, #tpu.memory_space<vmem>>, vector<1x128xf32>,
    %c26_685 = arith.constant 26 : index
    %c0_686 = arith.constant 0 : index
    %719 = vector.load %arg13[%c26_685, %c0_686] : memref<110x128xf32, #tpu.memory_space<vmem>>, vector<1x128xf32>
    %c27_687 = arith.constant 27 : index
    %c0_688 = arith.constant 0 : index
    %720 = vector.load %arg13[%c27_687, %c0_688] : memref<110x128xf32, #tpu.memory_space<vmem>>, vector<1x128xf32>
    %c37 = arith.constant 37 : index
    %c0_689 = arith.constant 0 : index
    %721 = vector.load %arg13[%c37, %c0_689] : memref<110x128xf32, #tpu.memory_space<vmem>>, vector<1x128xf32>
    %c38 = arith.constant 38 : index
    %c0_690 = arith.constant 0 : index
    %722 = vector.load %arg13[%c38, %c0_690] : memref<110x128xf32, #tpu.memory_space<vmem>>, vector<1x128xf32>
    %723 = arith.maximumf %719, %720 : vector<1x128xf32>
    %724 = arith.maximumf %721, %722 : vector<1x128xf32>
    %725 = arith.maximumf %723, %724 : vector<1x128xf32>
    %c0_691 = arith.constant 0 : index
    %c896 = arith.constant 896 : index
    %726 = vector.load %arg14[%c0_691, %c896] : memref<1x3200xf32, #tpu.memory_space<vmem>>, vector<1x128xf32>
    tpu.vector_store %arg14[%c0_691, %c896], %725 {strides = array<i32>} : memref<1x3200xf32, #tpu.memory_space<vmem>>, vector<1x128xf32>,
    %c28 = arith.constant 28 : index
    %c0_692 = arith.constant 0 : index
    %727 = vector.load %arg13[%c28, %c0_692] : memref<110x128xf32, #tpu.memory_space<vmem>>, vector<1x128xf32>
    %c29 = arith.constant 29 : index
    %c0_693 = arith.constant 0 : index
    %728 = vector.load %arg13[%c29, %c0_693] : memref<110x128xf32, #tpu.memory_space<vmem>>, vector<1x128xf32>
    %c39_694 = arith.constant 39 : index
    %c0_695 = arith.constant 0 : index
    %729 = vector.load %arg13[%c39_694, %c0_695] : memref<110x128xf32, #tpu.memory_space<vmem>>, vector<1x128xf32>
    %c40_696 = arith.constant 40 : index
    %c0_697 = arith.constant 0 : index
    %730 = vector.load %arg13[%c40_696, %c0_697] : memref<110x128xf32, #tpu.memory_space<vmem>>, vector<1x128xf32>
    %731 = arith.maximumf %727, %728 : vector<1x128xf32>
    %732 = arith.maximumf %729, %730 : vector<1x128xf32>
    %733 = arith.maximumf %731, %732 : vector<1x128xf32>
    %c0_698 = arith.constant 0 : index
    %c1024 = arith.constant 1024 : index
    %734 = vector.load %arg14[%c0_698, %c1024] : memref<1x3200xf32, #tpu.memory_space<vmem>>, vector<1x128xf32>
    tpu.vector_store %arg14[%c0_698, %c1024], %733 {strides = array<i32>} : memref<1x3200xf32, #tpu.memory_space<vmem>>, vector<1x128xf32>,
    %c30 = arith.constant 30 : index
    %c0_699 = arith.constant 0 : index
    %735 = vector.load %arg13[%c30, %c0_699] : memref<110x128xf32, #tpu.memory_space<vmem>>, vector<1x128xf32>
    %c31 = arith.constant 31 : index
    %c0_700 = arith.constant 0 : index
    %736 = vector.load %arg13[%c31, %c0_700] : memref<110x128xf32, #tpu.memory_space<vmem>>, vector<1x128xf32>
    %c41 = arith.constant 41 : index
    %c0_701 = arith.constant 0 : index
    %737 = vector.load %arg13[%c41, %c0_701] : memref<110x128xf32, #tpu.memory_space<vmem>>, vector<1x128xf32>
    %c42 = arith.constant 42 : index
    %c0_702 = arith.constant 0 : index
    %738 = vector.load %arg13[%c42, %c0_702] : memref<110x128xf32, #tpu.memory_space<vmem>>, vector<1x128xf32>
    %739 = arith.maximumf %735, %736 : vector<1x128xf32>
    %740 = arith.maximumf %737, %738 : vector<1x128xf32>
    %741 = arith.maximumf %739, %740 : vector<1x128xf32>
    %c0_703 = arith.constant 0 : index
    %c1152 = arith.constant 1152 : index
    %742 = vector.load %arg14[%c0_703, %c1152] : memref<1x3200xf32, #tpu.memory_space<vmem>>, vector<1x128xf32>
    tpu.vector_store %arg14[%c0_703, %c1152], %741 {strides = array<i32>} : memref<1x3200xf32, #tpu.memory_space<vmem>>, vector<1x128xf32>,
    %c44_704 = arith.constant 44 : index
    %c0_705 = arith.constant 0 : index
    %743 = vector.load %arg13[%c44_704, %c0_705] : memref<110x128xf32, #tpu.memory_space<vmem>>, vector<1x128xf32>
    %c45 = arith.constant 45 : index
    %c0_706 = arith.constant 0 : index
    %744 = vector.load %arg13[%c45, %c0_706] : memref<110x128xf32, #tpu.memory_space<vmem>>, vector<1x128xf32>
    %c55_707 = arith.constant 55 : index
    %c0_708 = arith.constant 0 : index
    %745 = vector.load %arg13[%c55_707, %c0_708] : memref<110x128xf32, #tpu.memory_space<vmem>>, vector<1x128xf32>
    %c56 = arith.constant 56 : index
    %c0_709 = arith.constant 0 : index
    %746 = vector.load %arg13[%c56, %c0_709] : memref<110x128xf32, #tpu.memory_space<vmem>>, vector<1x128xf32>
    %747 = arith.maximumf %743, %744 : vector<1x128xf32>
    %748 = arith.maximumf %745, %746 : vector<1x128xf32>
    %749 = arith.maximumf %747, %748 : vector<1x128xf32>
    %c0_710 = arith.constant 0 : index
    %c1280 = arith.constant 1280 : index
    %750 = vector.load %arg14[%c0_710, %c1280] : memref<1x3200xf32, #tpu.memory_space<vmem>>, vector<1x128xf32>
    tpu.vector_store %arg14[%c0_710, %c1280], %749 {strides = array<i32>} : memref<1x3200xf32, #tpu.memory_space<vmem>>, vector<1x128xf32>,
    %c46 = arith.constant 46 : index
    %c0_711 = arith.constant 0 : index
    %751 = vector.load %arg13[%c46, %c0_711] : memref<110x128xf32, #tpu.memory_space<vmem>>, vector<1x128xf32>
    %c47 = arith.constant 47 : index
    %c0_712 = arith.constant 0 : index
    %752 = vector.load %arg13[%c47, %c0_712] : memref<110x128xf32, #tpu.memory_space<vmem>>, vector<1x128xf32>
    %c57 = arith.constant 57 : index
    %c0_713 = arith.constant 0 : index
    %753 = vector.load %arg13[%c57, %c0_713] : memref<110x128xf32, #tpu.memory_space<vmem>>, vector<1x128xf32>
    %c58 = arith.constant 58 : index
    %c0_714 = arith.constant 0 : index
    %754 = vector.load %arg13[%c58, %c0_714] : memref<110x128xf32, #tpu.memory_space<vmem>>, vector<1x128xf32>
    %755 = arith.maximumf %751, %752 : vector<1x128xf32>
    %756 = arith.maximumf %753, %754 : vector<1x128xf32>
    %757 = arith.maximumf %755, %756 : vector<1x128xf32>
    %c0_715 = arith.constant 0 : index
    %c1408 = arith.constant 1408 : index
    %758 = vector.load %arg14[%c0_715, %c1408] : memref<1x3200xf32, #tpu.memory_space<vmem>>, vector<1x128xf32>
    tpu.vector_store %arg14[%c0_715, %c1408], %757 {strides = array<i32>} : memref<1x3200xf32, #tpu.memory_space<vmem>>, vector<1x128xf32>,
    %c48 = arith.constant 48 : index
    %c0_716 = arith.constant 0 : index
    %759 = vector.load %arg13[%c48, %c0_716] : memref<110x128xf32, #tpu.memory_space<vmem>>, vector<1x128xf32>
    %c49 = arith.constant 49 : index
    %c0_717 = arith.constant 0 : index
    %760 = vector.load %arg13[%c49, %c0_717] : memref<110x128xf32, #tpu.memory_space<vmem>>, vector<1x128xf32>
    %c59 = arith.constant 59 : index
    %c0_718 = arith.constant 0 : index
    %761 = vector.load %arg13[%c59, %c0_718] : memref<110x128xf32, #tpu.memory_space<vmem>>, vector<1x128xf32>
    %c60 = arith.constant 60 : index
    %c0_719 = arith.constant 0 : index
    %762 = vector.load %arg13[%c60, %c0_719] : memref<110x128xf32, #tpu.memory_space<vmem>>, vector<1x128xf32>
    %763 = arith.maximumf %759, %760 : vector<1x128xf32>
    %764 = arith.maximumf %761, %762 : vector<1x128xf32>
    %765 = arith.maximumf %763, %764 : vector<1x128xf32>
    %c0_720 = arith.constant 0 : index
    %c1536 = arith.constant 1536 : index
    %766 = vector.load %arg14[%c0_720, %c1536] : memref<1x3200xf32, #tpu.memory_space<vmem>>, vector<1x128xf32>
    tpu.vector_store %arg14[%c0_720, %c1536], %765 {strides = array<i32>} : memref<1x3200xf32, #tpu.memory_space<vmem>>, vector<1x128xf32>,
    %c50 = arith.constant 50 : index
    %c0_721 = arith.constant 0 : index
    %767 = vector.load %arg13[%c50, %c0_721] : memref<110x128xf32, #tpu.memory_space<vmem>>, vector<1x128xf32>
    %c51 = arith.constant 51 : index
    %c0_722 = arith.constant 0 : index
    %768 = vector.load %arg13[%c51, %c0_722] : memref<110x128xf32, #tpu.memory_space<vmem>>, vector<1x128xf32>
    %c61 = arith.constant 61 : index
    %c0_723 = arith.constant 0 : index
    %769 = vector.load %arg13[%c61, %c0_723] : memref<110x128xf32, #tpu.memory_space<vmem>>, vector<1x128xf32>
    %c62 = arith.constant 62 : index
    %c0_724 = arith.constant 0 : index
    %770 = vector.load %arg13[%c62, %c0_724] : memref<110x128xf32, #tpu.memory_space<vmem>>, vector<1x128xf32>
    %771 = arith.maximumf %767, %768 : vector<1x128xf32>
    %772 = arith.maximumf %769, %770 : vector<1x128xf32>
    %773 = arith.maximumf %771, %772 : vector<1x128xf32>
    %c0_725 = arith.constant 0 : index
    %c1664 = arith.constant 1664 : index
    %774 = vector.load %arg14[%c0_725, %c1664] : memref<1x3200xf32, #tpu.memory_space<vmem>>, vector<1x128xf32>
    tpu.vector_store %arg14[%c0_725, %c1664], %773 {strides = array<i32>} : memref<1x3200xf32, #tpu.memory_space<vmem>>, vector<1x128xf32>,
    %c52_726 = arith.constant 52 : index
    %c0_727 = arith.constant 0 : index
    %775 = vector.load %arg13[%c52_726, %c0_727] : memref<110x128xf32, #tpu.memory_space<vmem>>, vector<1x128xf32>
    %c53_728 = arith.constant 53 : index
    %c0_729 = arith.constant 0 : index
    %776 = vector.load %arg13[%c53_728, %c0_729] : memref<110x128xf32, #tpu.memory_space<vmem>>, vector<1x128xf32>
    %c63 = arith.constant 63 : index
    %c0_730 = arith.constant 0 : index
    %777 = vector.load %arg13[%c63, %c0_730] : memref<110x128xf32, #tpu.memory_space<vmem>>, vector<1x128xf32>
    %c64 = arith.constant 64 : index
    %c0_731 = arith.constant 0 : index
    %778 = vector.load %arg13[%c64, %c0_731] : memref<110x128xf32, #tpu.memory_space<vmem>>, vector<1x128xf32>
    %779 = arith.maximumf %775, %776 : vector<1x128xf32>
    %780 = arith.maximumf %777, %778 : vector<1x128xf32>
    %781 = arith.maximumf %779, %780 : vector<1x128xf32>
    %c0_732 = arith.constant 0 : index
    %c1792 = arith.constant 1792 : index
    %782 = vector.load %arg14[%c0_732, %c1792] : memref<1x3200xf32, #tpu.memory_space<vmem>>, vector<1x128xf32>
    tpu.vector_store %arg14[%c0_732, %c1792], %781 {strides = array<i32>} : memref<1x3200xf32, #tpu.memory_space<vmem>>, vector<1x128xf32>,
    %c66_733 = arith.constant 66 : index
    %c0_734 = arith.constant 0 : index
    %783 = vector.load %arg13[%c66_733, %c0_734] : memref<110x128xf32, #tpu.memory_space<vmem>>, vector<1x128xf32>
    %c67 = arith.constant 67 : index
    %c0_735 = arith.constant 0 : index
    %784 = vector.load %arg13[%c67, %c0_735] : memref<110x128xf32, #tpu.memory_space<vmem>>, vector<1x128xf32>
    %c77_736 = arith.constant 77 : index
    %c0_737 = arith.constant 0 : index
    %785 = vector.load %arg13[%c77_736, %c0_737] : memref<110x128xf32, #tpu.memory_space<vmem>>, vector<1x128xf32>
    %c78_738 = arith.constant 78 : index
    %c0_739 = arith.constant 0 : index
    %786 = vector.load %arg13[%c78_738, %c0_739] : memref<110x128xf32, #tpu.memory_space<vmem>>, vector<1x128xf32>
    %787 = arith.maximumf %783, %784 : vector<1x128xf32>
    %788 = arith.maximumf %785, %786 : vector<1x128xf32>
    %789 = arith.maximumf %787, %788 : vector<1x128xf32>
    %c0_740 = arith.constant 0 : index
    %c1920 = arith.constant 1920 : index
    %790 = vector.load %arg14[%c0_740, %c1920] : memref<1x3200xf32, #tpu.memory_space<vmem>>, vector<1x128xf32>
    tpu.vector_store %arg14[%c0_740, %c1920], %789 {strides = array<i32>} : memref<1x3200xf32, #tpu.memory_space<vmem>>, vector<1x128xf32>,
    %c68 = arith.constant 68 : index
    %c0_741 = arith.constant 0 : index
    %791 = vector.load %arg13[%c68, %c0_741] : memref<110x128xf32, #tpu.memory_space<vmem>>, vector<1x128xf32>
    %c69 = arith.constant 69 : index
    %c0_742 = arith.constant 0 : index
    %792 = vector.load %arg13[%c69, %c0_742] : memref<110x128xf32, #tpu.memory_space<vmem>>, vector<1x128xf32>
    %c79_743 = arith.constant 79 : index
    %c0_744 = arith.constant 0 : index
    %793 = vector.load %arg13[%c79_743, %c0_744] : memref<110x128xf32, #tpu.memory_space<vmem>>, vector<1x128xf32>
    %c80 = arith.constant 80 : index
    %c0_745 = arith.constant 0 : index
    %794 = vector.load %arg13[%c80, %c0_745] : memref<110x128xf32, #tpu.memory_space<vmem>>, vector<1x128xf32>
    %795 = arith.maximumf %791, %792 : vector<1x128xf32>
    %796 = arith.maximumf %793, %794 : vector<1x128xf32>
    %797 = arith.maximumf %795, %796 : vector<1x128xf32>
    %c0_746 = arith.constant 0 : index
    %c2048 = arith.constant 2048 : index
    %798 = vector.load %arg14[%c0_746, %c2048] : memref<1x3200xf32, #tpu.memory_space<vmem>>, vector<1x128xf32>
    tpu.vector_store %arg14[%c0_746, %c2048], %797 {strides = array<i32>} : memref<1x3200xf32, #tpu.memory_space<vmem>>, vector<1x128xf32>,
    %c70 = arith.constant 70 : index
    %c0_747 = arith.constant 0 : index
    %799 = vector.load %arg13[%c70, %c0_747] : memref<110x128xf32, #tpu.memory_space<vmem>>, vector<1x128xf32>
    %c71 = arith.constant 71 : index
    %c0_748 = arith.constant 0 : index
    %800 = vector.load %arg13[%c71, %c0_748] : memref<110x128xf32, #tpu.memory_space<vmem>>, vector<1x128xf32>
    %c81 = arith.constant 81 : index
    %c0_749 = arith.constant 0 : index
    %801 = vector.load %arg13[%c81, %c0_749] : memref<110x128xf32, #tpu.memory_space<vmem>>, vector<1x128xf32>
    %c82 = arith.constant 82 : index
    %c0_750 = arith.constant 0 : index
    %802 = vector.load %arg13[%c82, %c0_750] : memref<110x128xf32, #tpu.memory_space<vmem>>, vector<1x128xf32>
    %803 = arith.maximumf %799, %800 : vector<1x128xf32>
    %804 = arith.maximumf %801, %802 : vector<1x128xf32>
    %805 = arith.maximumf %803, %804 : vector<1x128xf32>
    %c0_751 = arith.constant 0 : index
    %c2176 = arith.constant 2176 : index
    %806 = vector.load %arg14[%c0_751, %c2176] : memref<1x3200xf32, #tpu.memory_space<vmem>>, vector<1x128xf32>
    tpu.vector_store %arg14[%c0_751, %c2176], %805 {strides = array<i32>} : memref<1x3200xf32, #tpu.memory_space<vmem>>, vector<1x128xf32>,
    %c72 = arith.constant 72 : index
    %c0_752 = arith.constant 0 : index
    %807 = vector.load %arg13[%c72, %c0_752] : memref<110x128xf32, #tpu.memory_space<vmem>>, vector<1x128xf32>
    %c73 = arith.constant 73 : index
    %c0_753 = arith.constant 0 : index
    %808 = vector.load %arg13[%c73, %c0_753] : memref<110x128xf32, #tpu.memory_space<vmem>>, vector<1x128xf32>
    %c83 = arith.constant 83 : index
    %c0_754 = arith.constant 0 : index
    %809 = vector.load %arg13[%c83, %c0_754] : memref<110x128xf32, #tpu.memory_space<vmem>>, vector<1x128xf32>
    %c84 = arith.constant 84 : index
    %c0_755 = arith.constant 0 : index
    %810 = vector.load %arg13[%c84, %c0_755] : memref<110x128xf32, #tpu.memory_space<vmem>>, vector<1x128xf32>
    %811 = arith.maximumf %807, %808 : vector<1x128xf32>
    %812 = arith.maximumf %809, %810 : vector<1x128xf32>
    %813 = arith.maximumf %811, %812 : vector<1x128xf32>
    %c0_756 = arith.constant 0 : index
    %c2304 = arith.constant 2304 : index
    %814 = vector.load %arg14[%c0_756, %c2304] : memref<1x3200xf32, #tpu.memory_space<vmem>>, vector<1x128xf32>
    tpu.vector_store %arg14[%c0_756, %c2304], %813 {strides = array<i32>} : memref<1x3200xf32, #tpu.memory_space<vmem>>, vector<1x128xf32>,
    %c74 = arith.constant 74 : index
    %c0_757 = arith.constant 0 : index
    %815 = vector.load %arg13[%c74, %c0_757] : memref<110x128xf32, #tpu.memory_space<vmem>>, vector<1x128xf32>
    %c75 = arith.constant 75 : index
    %c0_758 = arith.constant 0 : index
    %816 = vector.load %arg13[%c75, %c0_758] : memref<110x128xf32, #tpu.memory_space<vmem>>, vector<1x128xf32>
    %c85 = arith.constant 85 : index
    %c0_759 = arith.constant 0 : index
    %817 = vector.load %arg13[%c85, %c0_759] : memref<110x128xf32, #tpu.memory_space<vmem>>, vector<1x128xf32>
    %c86 = arith.constant 86 : index
    %c0_760 = arith.constant 0 : index
    %818 = vector.load %arg13[%c86, %c0_760] : memref<110x128xf32, #tpu.memory_space<vmem>>, vector<1x128xf32>
    %819 = arith.maximumf %815, %816 : vector<1x128xf32>
    %820 = arith.maximumf %817, %818 : vector<1x128xf32>
    %821 = arith.maximumf %819, %820 : vector<1x128xf32>
    %c0_761 = arith.constant 0 : index
    %c2432 = arith.constant 2432 : index
    %822 = vector.load %arg14[%c0_761, %c2432] : memref<1x3200xf32, #tpu.memory_space<vmem>>, vector<1x128xf32>
    tpu.vector_store %arg14[%c0_761, %c2432], %821 {strides = array<i32>} : memref<1x3200xf32, #tpu.memory_space<vmem>>, vector<1x128xf32>,
    %c88_762 = arith.constant 88 : index
    %c0_763 = arith.constant 0 : index
    %823 = vector.load %arg13[%c88_762, %c0_763] : memref<110x128xf32, #tpu.memory_space<vmem>>, vector<1x128xf32>
    %c89 = arith.constant 89 : index
    %c0_764 = arith.constant 0 : index
    %824 = vector.load %arg13[%c89, %c0_764] : memref<110x128xf32, #tpu.memory_space<vmem>>, vector<1x128xf32>
    %c99_765 = arith.constant 99 : index
    %c0_766 = arith.constant 0 : index
    %825 = vector.load %arg13[%c99_765, %c0_766] : memref<110x128xf32, #tpu.memory_space<vmem>>, vector<1x128xf32>
    %c100 = arith.constant 100 : index
    %c0_767 = arith.constant 0 : index
    %826 = vector.load %arg13[%c100, %c0_767] : memref<110x128xf32, #tpu.memory_space<vmem>>, vector<1x128xf32>
    %827 = arith.maximumf %823, %824 : vector<1x128xf32>
    %828 = arith.maximumf %825, %826 : vector<1x128xf32>
    %829 = arith.maximumf %827, %828 : vector<1x128xf32>
    %c0_768 = arith.constant 0 : index
    %c2560 = arith.constant 2560 : index
    %830 = vector.load %arg14[%c0_768, %c2560] : memref<1x3200xf32, #tpu.memory_space<vmem>>, vector<1x128xf32>
    tpu.vector_store %arg14[%c0_768, %c2560], %829 {strides = array<i32>} : memref<1x3200xf32, #tpu.memory_space<vmem>>, vector<1x128xf32>,
    %c90 = arith.constant 90 : index
    %c0_769 = arith.constant 0 : index
    %831 = vector.load %arg13[%c90, %c0_769] : memref<110x128xf32, #tpu.memory_space<vmem>>, vector<1x128xf32>
    %c91_770 = arith.constant 91 : index
    %c0_771 = arith.constant 0 : index
    %832 = vector.load %arg13[%c91_770, %c0_771] : memref<110x128xf32, #tpu.memory_space<vmem>>, vector<1x128xf32>
    %c101 = arith.constant 101 : index
    %c0_772 = arith.constant 0 : index
    %833 = vector.load %arg13[%c101, %c0_772] : memref<110x128xf32, #tpu.memory_space<vmem>>, vector<1x128xf32>
    %c102 = arith.constant 102 : index
    %c0_773 = arith.constant 0 : index
    %834 = vector.load %arg13[%c102, %c0_773] : memref<110x128xf32, #tpu.memory_space<vmem>>, vector<1x128xf32>
    %835 = arith.maximumf %831, %832 : vector<1x128xf32>
    %836 = arith.maximumf %833, %834 : vector<1x128xf32>
    %837 = arith.maximumf %835, %836 : vector<1x128xf32>
    %c0_774 = arith.constant 0 : index
    %c2688 = arith.constant 2688 : index
    %838 = vector.load %arg14[%c0_774, %c2688] : memref<1x3200xf32, #tpu.memory_space<vmem>>, vector<1x128xf32>
    tpu.vector_store %arg14[%c0_774, %c2688], %837 {strides = array<i32>} : memref<1x3200xf32, #tpu.memory_space<vmem>>, vector<1x128xf32>,
    %c92_775 = arith.constant 92 : index
    %c0_776 = arith.constant 0 : index
    %839 = vector.load %arg13[%c92_775, %c0_776] : memref<110x128xf32, #tpu.memory_space<vmem>>, vector<1x128xf32>
    %c93 = arith.constant 93 : index
    %c0_777 = arith.constant 0 : index
    %840 = vector.load %arg13[%c93, %c0_777] : memref<110x128xf32, #tpu.memory_space<vmem>>, vector<1x128xf32>
    %c103 = arith.constant 103 : index
    %c0_778 = arith.constant 0 : index
    %841 = vector.load %arg13[%c103, %c0_778] : memref<110x128xf32, #tpu.memory_space<vmem>>, vector<1x128xf32>
    %c104_779 = arith.constant 104 : index
    %c0_780 = arith.constant 0 : index
    %842 = vector.load %arg13[%c104_779, %c0_780] : memref<110x128xf32, #tpu.memory_space<vmem>>, vector<1x128xf32>
    %843 = arith.maximumf %839, %840 : vector<1x128xf32>
    %844 = arith.maximumf %841, %842 : vector<1x128xf32>
    %845 = arith.maximumf %843, %844 : vector<1x128xf32>
    %c0_781 = arith.constant 0 : index
    %c2816 = arith.constant 2816 : index
    %846 = vector.load %arg14[%c0_781, %c2816] : memref<1x3200xf32, #tpu.memory_space<vmem>>, vector<1x128xf32>
    tpu.vector_store %arg14[%c0_781, %c2816], %845 {strides = array<i32>} : memref<1x3200xf32, #tpu.memory_space<vmem>>, vector<1x128xf32>,
    %c94 = arith.constant 94 : index
    %c0_782 = arith.constant 0 : index
    %847 = vector.load %arg13[%c94, %c0_782] : memref<110x128xf32, #tpu.memory_space<vmem>>, vector<1x128xf32>
    %c95 = arith.constant 95 : index
    %c0_783 = arith.constant 0 : index
    %848 = vector.load %arg13[%c95, %c0_783] : memref<110x128xf32, #tpu.memory_space<vmem>>, vector<1x128xf32>
    %c105_784 = arith.constant 105 : index
    %c0_785 = arith.constant 0 : index
    %849 = vector.load %arg13[%c105_784, %c0_785] : memref<110x128xf32, #tpu.memory_space<vmem>>, vector<1x128xf32>
    %c106 = arith.constant 106 : index
    %c0_786 = arith.constant 0 : index
    %850 = vector.load %arg13[%c106, %c0_786] : memref<110x128xf32, #tpu.memory_space<vmem>>, vector<1x128xf32>
    %851 = arith.maximumf %847, %848 : vector<1x128xf32>
    %852 = arith.maximumf %849, %850 : vector<1x128xf32>
    %853 = arith.maximumf %851, %852 : vector<1x128xf32>
    %c0_787 = arith.constant 0 : index
    %c2944 = arith.constant 2944 : index
    %854 = vector.load %arg14[%c0_787, %c2944] : memref<1x3200xf32, #tpu.memory_space<vmem>>, vector<1x128xf32>
    tpu.vector_store %arg14[%c0_787, %c2944], %853 {strides = array<i32>} : memref<1x3200xf32, #tpu.memory_space<vmem>>, vector<1x128xf32>,
    %c96 = arith.constant 96 : index
    %c0_788 = arith.constant 0 : index
    %855 = vector.load %arg13[%c96, %c0_788] : memref<110x128xf32, #tpu.memory_space<vmem>>, vector<1x128xf32>
    %c97 = arith.constant 97 : index
    %c0_789 = arith.constant 0 : index
    %856 = vector.load %arg13[%c97, %c0_789] : memref<110x128xf32, #tpu.memory_space<vmem>>, vector<1x128xf32>
    %c107 = arith.constant 107 : index
    %c0_790 = arith.constant 0 : index
    %857 = vector.load %arg13[%c107, %c0_790] : memref<110x128xf32, #tpu.memory_space<vmem>>, vector<1x128xf32>
    %c108 = arith.constant 108 : index
    %c0_791 = arith.constant 0 : index
    %858 = vector.load %arg13[%c108, %c0_791] : memref<110x128xf32, #tpu.memory_space<vmem>>, vector<1x128xf32>
    %859 = arith.maximumf %855, %856 : vector<1x128xf32>
    %860 = arith.maximumf %857, %858 : vector<1x128xf32>
    %861 = arith.maximumf %859, %860 : vector<1x128xf32>
    %c0_792 = arith.constant 0 : index
    %c3072 = arith.constant 3072 : index
    %862 = vector.load %arg14[%c0_792, %c3072] : memref<1x3200xf32, #tpu.memory_space<vmem>>, vector<1x128xf32>
    tpu.vector_store %arg14[%c0_792, %c3072], %861 {strides = array<i32>} : memref<1x3200xf32, #tpu.memory_space<vmem>>, vector<1x128xf32>,
    %c0_793 = arith.constant 0 : index
    %c0_794 = arith.constant 0 : index
    %863 = vector.load %arg14[%c0_793, %c0_794] : memref<1x3200xf32, #tpu.memory_space<vmem>>, vector<1x3200xf32>
    %c0_795 = arith.constant 0 : index
    %c0_796 = arith.constant 0 : index
    %864 = vector.load %arg6[%c0_795, %c0_796] : memref<3200x256xf32, #tpu.memory_space<vmem>>, vector<3200x256xf32>
    %cst_797 = arith.constant dense<0.000000e+00> : vector<1x256xf32>
    %865 = tpu.matmul %863, %864, %cst_797 {dimension_numbers = #tpu.dot_dimension_numbers<[1], [0], [0], [1], [0, 0, 1, 1], [], []>} : vector<1x3200xf32>, vector<3200x256xf32>, vector<1x256xf32> -> vector<1x256xf32>
    %c0_798 = arith.constant 0 : index
    %c0_799 = arith.constant 0 : index
    %866 = vector.load %arg7[%c0_798, %c0_799] : memref<1x256xf32, #tpu.memory_space<vmem>>, vector<1x256xf32>
    %867 = arith.addf %865, %866 : vector<1x256xf32>
    %cst_800 = arith.constant 0.000000e+00 : f32
    %868 = vector.broadcast %cst_800 : f32 to vector<1x256xf32>
    %869 = arith.maximumf %867, %868 : vector<1x256xf32>
    %c0_801 = arith.constant 0 : index
    %c0_802 = arith.constant 0 : index
    %870 = vector.load %arg8[%c0_801, %c0_802] : memref<256x128xf32, #tpu.memory_space<vmem>>, vector<256x128xf32>
    %cst_803 = arith.constant dense<0.000000e+00> : vector<1x128xf32>
    %871 = tpu.matmul %869, %870, %cst_803 {dimension_numbers = #tpu.dot_dimension_numbers<[1], [0], [0], [1], [0, 0, 1, 1], [], []>} : vector<1x256xf32>, vector<256x128xf32>, vector<1x128xf32> -> vector<1x128xf32>
    %c0_804 = arith.constant 0 : index
    %c0_805 = arith.constant 0 : index
    %872 = vector.load %arg9[%c0_804, %c0_805] : memref<1x128xf32, #tpu.memory_space<vmem>>, vector<1x128xf32>
    %873 = arith.addf %871, %872 : vector<1x128xf32>
    %874 = vector.shape_cast %873 : vector<1x128xf32> to vector<1x1x128xf32>
    %875 = vector.shape_cast %874 : vector<1x1x128xf32> to vector<1x1x128xf32>
    %876 = vector.broadcast %875 : vector<1x1x128xf32> to vector<1x8x128xf32>
    %c0_806 = arith.constant 0 : index
    %c0_807 = arith.constant 0 : index
    %c0_808 = arith.constant 0 : index
    %877 = vector.load %arg10[%c0_806, %c0_807, %c0_808] : memref<1x8x128xf32, #tpu.memory_space<vmem>>, vector<1x8x128xf32>
    tpu.vector_store %arg10[%c0_806, %c0_807, %c0_808], %876 {strides = array<i32>} : memref<1x8x128xf32, #tpu.memory_space<vmem>>, vector<1x8x128xf32>,
    return
  }
  func.func @transform_0(%arg0: i32) -> (i32, i32, i32) {
    %c0_i32 = arith.constant 0 : i32
    %c0_i32_0 = arith.constant 0 : i32
    %c0_i32_1 = arith.constant 0 : i32
    return %arg0, %c0_i32, %c0_i32_0 : i32, i32, i32
  }
  func.func @transform_1(%arg0: i32) -> (i32, i32) {
    %c0_i32 = arith.constant 0 : i32
    %c0_i32_0 = arith.constant 0 : i32
    %c0_i32_1 = arith.constant 0 : i32
    return %c0_i32, %c0_i32_0 : i32, i32
  }
  func.func @transform_2(%arg0: i32) -> (i32, i32) {
    %c0_i32 = arith.constant 0 : i32
    %c0_i32_0 = arith.constant 0 : i32
    %c0_i32_1 = arith.constant 0 : i32
    return %c0_i32, %c0_i32_0 : i32, i32
  }
  func.func @transform_3(%arg0: i32) -> (i32, i32, i32) {
    %c0_i32 = arith.constant 0 : i32
    %c0_i32_0 = arith.constant 0 : i32
    %c0_i32_1 = arith.constant 0 : i32
    %c0_i32_2 = arith.constant 0 : i32
    return %c0_i32, %c0_i32_0, %c0_i32_1 : i32, i32, i32
  }
  func.func @transform_4(%arg0: i32) -> (i32, i32) {
    %c0_i32 = arith.constant 0 : i32
    %c0_i32_0 = arith.constant 0 : i32
    %c0_i32_1 = arith.constant 0 : i32
    return %c0_i32, %c0_i32_0 : i32, i32
  }
  func.func @transform_5(%arg0: i32) -> (i32, i32) {
    %c0_i32 = arith.constant 0 : i32
    %c0_i32_0 = arith.constant 0 : i32
    %c0_i32_1 = arith.constant 0 : i32
    return %c0_i32, %c0_i32_0 : i32, i32
  }
  func.func @transform_6(%arg0: i32) -> (i32, i32) {
    %c0_i32 = arith.constant 0 : i32
    %c0_i32_0 = arith.constant 0 : i32
    %c0_i32_1 = arith.constant 0 : i32
    return %c0_i32, %c0_i32_0 : i32, i32
  }
  func.func @transform_7(%arg0: i32) -> (i32, i32) {
    %c0_i32 = arith.constant 0 : i32
    %c0_i32_0 = arith.constant 0 : i32
    %c0_i32_1 = arith.constant 0 : i32
    return %c0_i32, %c0_i32_0 : i32, i32
  }
  func.func @transform_8(%arg0: i32) -> (i32, i32) {
    %c0_i32 = arith.constant 0 : i32
    %c0_i32_0 = arith.constant 0 : i32
    %c0_i32_1 = arith.constant 0 : i32
    return %c0_i32, %c0_i32_0 : i32, i32
  }
  func.func @transform_9(%arg0: i32) -> (i32, i32, i32) {
    %c0_i32 = arith.constant 0 : i32
    %c0_i32_0 = arith.constant 0 : i32
    %c0_i32_1 = arith.constant 0 : i32
    return %arg0, %c0_i32, %c0_i32_0 : i32, i32, i32
  }
}

</mosaic_0001>

<llo_original>
// kernel: cnn1_forward.1
$region0: #{cnn1_forward.1}
  #allocation0 [shape = 'u32[]', space=smem, size = 0x4, offset = 0x4, fixed_abs, tag = 'smem constant byte address 0x4 - core index']
  #allocation1 [shape = 'u32[144,128]{1,0:T(1,128)}', space=vmem, size = 0x12000, scoped, tag = 'internal scratch']
  #allocation2 [shape = 'f32[704,128]{1,0:T(8,128)}', space=vmem, size = 0x58000, scoped, tag = 'scratch operand']
  #allocation3 [shape = 'f32[16,176,128]{2,1,0:T(8,128)}', space=vmem, size = 0x160000, scoped, tag = 'scratch operand']
  #allocation4 [shape = 'f32[110,128]{1,0:T(8,128)}', space=vmem, size = 0xe000, scoped, tag = 'scratch operand']
  #allocation5 [shape = 'f32[1,3200]{1,0:T(1,128)}', space=vmem, size = 0x3200, scoped, tag = 'scratch operand']
  %s0 = inlined_call_operand.vmem [shape: f32[2,704,16], index: 0, kind: input, shape index: {}]
  %s1 = inlined_call_operand.vmem [shape: f32[16,128], index: 1, kind: input, shape index: {}]
  %s2 = inlined_call_operand.vmem [shape: f32[1,128], index: 2, kind: input, shape index: {}]
  %s3 = inlined_call_operand.vmem [shape: f32[16,128,128], index: 3, kind: input, shape index: {}]
  %s4 = inlined_call_operand.vmem [shape: f32[1,128], index: 4, kind: input, shape index: {}]
  %s5 = inlined_call_operand.vmem [shape: f32[3200,256], index: 5, kind: input, shape index: {}]
  %s6 = inlined_call_operand.vmem [shape: f32[1,256], index: 6, kind: input, shape index: {}]
  %s7 = inlined_call_operand.vmem [shape: f32[256,128], index: 7, kind: input, shape index: {}]
  %s8 = inlined_call_operand.vmem [shape: f32[1,128], index: 8, kind: input, shape index: {}]
  %s9 = inlined_call_operand.vmem [shape: f32[2,8,128], index: 9, kind: output, shape index: {}]
  %s10 = sld [smem:[#allocation0]]
  $region69: #{cnn1_forward.1} parent=0
    _
  %s12 = ssub.s32 1, %s10
  %s13 = scalar_select 0, %s12, %s10
  loop: start=0, step=1, limit=4
  $region2: #{cnn1_forward.1} parent=0 // loop_pre_header
    _
  $region3: #{cnn1_forward.1} parent=0 // loop_header
    %s15 = sphi 0, %s19
    %p16 = scmp.ge.s32.totalorder %s15, 4
    %s25 = sphi 0, %s27
    %s28 = sphi 0, %s25
    %s29 = sphi 0, %s28
    %s45 = sphi 0, %s29
    %s49 = sphi 0, %s49
    %s51 = sphi 0, %s49
    %s52 = sphi 0, %s51
    %s66 = sphi 0, %s52
    %s70 = sphi 0, %s70
    %s72 = sphi 0, %s70
    %s73 = sphi 0, %s72
    %s87 = sphi 0, %s73
    %s91 = sphi 0, %s91
    %s93 = sphi 0, %s91
    %s94 = sphi 0, %s93
    %s108 = sphi 0, %s94
    %s112 = sphi 0, %s112
    %s114 = sphi 0, %s112
    %s115 = sphi 0, %s114
    %s129 = sphi 0, %s115
    %s133 = sphi 0, %s133
    %s135 = sphi 0, %s133
    %s136 = sphi 0, %s135
    %s150 = sphi 0, %s136
    %s154 = sphi 0, %s154
    %s156 = sphi 0, %s154
    %s157 = sphi 0, %s156
    %s171 = sphi 0, %s157
    %s175 = sphi 0, %s175
    %s177 = sphi 0, %s175
    %s178 = sphi 0, %s177
    %s192 = sphi 0, %s178
    %s196 = sphi 0, %s196
    %s198 = sphi 0, %s196
    %s199 = sphi 0, %s198
    %s213 = sphi 0, %s199
    %s219 = sphi 0, %s221
    %s222 = sphi 0, %s219
    %s223 = sphi 0, %s222
    %s239 = sphi 0, %s223
  $region4: #{cnn1_forward.1} parent=0 // loop_header_branch
    %18 = sbr.rel (%p16) target = $region8
  $region5: #{cnn1_forward.1} parent=0 // loop_body
    %s20 = ssub.s32 %s15, 1
    %s21 = ssub.s32 %s15, 2
    %s22 = sadd.s32 %s15, 1
    %s23 = ssub.s32 %s15, %s22
    %p24 = scmp.eq.s32.totalorder %s23, 0
    %s26 = sadd.s32 %s25, 1
    %s27 = scalar_select %p24, %s25, %s26
    %p30 = pneg %p24
    %p31 = scmp.eq.s32.totalorder %s15, 1
    %p32 = por %p30, %p31
    %p33 = scmp.ne.s32.totalorder %s25, %s28
    %p34 = scmp.eq.s32.totalorder %s15, 0
    %p35 = por %p33, %p34
    %p36 = scmp.ne.s32.totalorder %s25, %s28
    %p37 = scmp.eq.s32.totalorder %s20, 1
    %p38 = por %p36, %p37
    %p39 = scmp.ne.s32.totalorder %s28, %s29
    %p40 = scmp.eq.s32.totalorder %s20, 0
    %p41 = por %p39, %p40
    %p42 = scmp.ne.s32.totalorder %s28, %s29
    %p43 = scmp.eq.s32.totalorder %s21, 1
    %p44 = por %p42, %p43
    %p46 = scmp.ne.s32.totalorder %s29, %s45
    %p47 = scmp.eq.s32.totalorder %s21, 0
    %p48 = por %p46, %p47
    %s50 = sadd.s32 %s49, 1
    %p53 = scmp.eq.s32.totalorder %s15, 1
    %p54 = scmp.ne.s32.totalorder %s49, %s51
    %p55 = scmp.eq.s32.totalorder %s15, 0
    %p56 = por %p54, %p55
    %p57 = scmp.ne.s32.totalorder %s49, %s51
    %p58 = scmp.eq.s32.totalorder %s20, 1
    %p59 = por %p57, %p58
    %p60 = scmp.ne.s32.totalorder %s51, %s52
    %p61 = scmp.eq.s32.totalorder %s20, 0
    %p62 = por %p60, %p61
    %p63 = scmp.ne.s32.totalorder %s51, %s52
    %p64 = scmp.eq.s32.totalorder %s21, 1
    %p65 = por %p63, %p64
    %p67 = scmp.ne.s32.totalorder %s52, %s66
    %p68 = scmp.eq.s32.totalorder %s21, 0
    %p69 = por %p67, %p68
    %s71 = sadd.s32 %s70, 1
    %p74 = scmp.eq.s32.totalorder %s15, 1
    %p75 = scmp.ne.s32.totalorder %s70, %s72
    %p76 = scmp.eq.s32.totalorder %s15, 0
    %p77 = por %p75, %p76
    %p78 = scmp.ne.s32.totalorder %s70, %s72
    %p79 = scmp.eq.s32.totalorder %s20, 1
    %p80 = por %p78, %p79
    %p81 = scmp.ne.s32.totalorder %s72, %s73
    %p82 = scmp.eq.s32.totalorder %s20, 0
    %p83 = por %p81, %p82
    %p84 = scmp.ne.s32.totalorder %s72, %s73
    %p85 = scmp.eq.s32.totalorder %s21, 1
    %p86 = por %p84, %p85
    %p88 = scmp.ne.s32.totalorder %s73, %s87
    %p89 = scmp.eq.s32.totalorder %s21, 0
    %p90 = por %p88, %p89
    %s92 = sadd.s32 %s91, 1
    %p95 = scmp.eq.s32.totalorder %s15, 1
    %p96 = scmp.ne.s32.totalorder %s91, %s93
    %p97 = scmp.eq.s32.totalorder %s15, 0
    %p98 = por %p96, %p97
    %p99 = scmp.ne.s32.totalorder %s91, %s93
    %p100 = scmp.eq.s32.totalorder %s20, 1
    %p101 = por %p99, %p100
    %p102 = scmp.ne.s32.totalorder %s93, %s94
    %p103 = scmp.eq.s32.totalorder %s20, 0
    %p104 = por %p102, %p103
    %p105 = scmp.ne.s32.totalorder %s93, %s94
    %p106 = scmp.eq.s32.totalorder %s21, 1
    %p107 = por %p105, %p106
    %p109 = scmp.ne.s32.totalorder %s94, %s108
    %p110 = scmp.eq.s32.totalorder %s21, 0
    %p111 = por %p109, %p110
    %s113 = sadd.s32 %s112, 1
    %p116 = scmp.eq.s32.totalorder %s15, 1
    %p117 = scmp.ne.s32.totalorder %s112, %s114
    %p118 = scmp.eq.s32.totalorder %s15, 0
    %p119 = por %p117, %p118
    %p120 = scmp.ne.s32.totalorder %s112, %s114
    %p121 = scmp.eq.s32.totalorder %s20, 1
    %p122 = por %p120, %p121
    %p123 = scmp.ne.s32.totalorder %s114, %s115
    %p124 = scmp.eq.s32.totalorder %s20, 0
    %p125 = por %p123, %p124
    %p126 = scmp.ne.s32.totalorder %s114, %s115
    %p127 = scmp.eq.s32.totalorder %s21, 1
    %p128 = por %p126, %p127
    %p130 = scmp.ne.s32.totalorder %s115, %s129
    %p131 = scmp.eq.s32.totalorder %s21, 0
    %p132 = por %p130, %p131
    %s134 = sadd.s32 %s133, 1
    %p137 = scmp.eq.s32.totalorder %s15, 1
    %p138 = scmp.ne.s32.totalorder %s133, %s135
    %p139 = scmp.eq.s32.totalorder %s15, 0
    %p140 = por %p138, %p139
    %p141 = scmp.ne.s32.totalorder %s133, %s135
    %p142 = scmp.eq.s32.totalorder %s20, 1
    %p143 = por %p141, %p142
    %p144 = scmp.ne.s32.totalorder %s135, %s136
    %p145 = scmp.eq.s32.totalorder %s20, 0
    %p146 = por %p144, %p145
    %p147 = scmp.ne.s32.totalorder %s135, %s136
    %p148 = scmp.eq.s32.totalorder %s21, 1
    %p149 = por %p147, %p148
    %p151 = scmp.ne.s32.totalorder %s136, %s150
    %p152 = scmp.eq.s32.totalorder %s21, 0
    %p153 = por %p151, %p152
    %s155 = sadd.s32 %s154, 1
    %p158 = scmp.eq.s32.totalorder %s15, 1
    %p159 = scmp.ne.s32.totalorder %s154, %s156
    %p160 = scmp.eq.s32.totalorder %s15, 0
    %p161 = por %p159, %p160
    %p162 = scmp.ne.s32.totalorder %s154, %s156
    %p163 = scmp.eq.s32.totalorder %s20, 1
    %p164 = por %p162, %p163
    %p165 = scmp.ne.s32.totalorder %s156, %s157
    %p166 = scmp.eq.s32.totalorder %s20, 0
    %p167 = por %p165, %p166
    %p168 = scmp.ne.s32.totalorder %s156, %s157
    %p169 = scmp.eq.s32.totalorder %s21, 1
    %p170 = por %p168, %p169
    %p172 = scmp.ne.s32.totalorder %s157, %s171
    %p173 = scmp.eq.s32.totalorder %s21, 0
    %p174 = por %p172, %p173
    %s176 = sadd.s32 %s175, 1
    %p179 = scmp.eq.s32.totalorder %s15, 1
    %p180 = scmp.ne.s32.totalorder %s175, %s177
    %p181 = scmp.eq.s32.totalorder %s15, 0
    %p182 = por %p180, %p181
    %p183 = scmp.ne.s32.totalorder %s175, %s177
    %p184 = scmp.eq.s32.totalorder %s20, 1
    %p185 = por %p183, %p184
    %p186 = scmp.ne.s32.totalorder %s177, %s178
    %p187 = scmp.eq.s32.totalorder %s20, 0
    %p188 = por %p186, %p187
    %p189 = scmp.ne.s32.totalorder %s177, %s178
    %p190 = scmp.eq.s32.totalorder %s21, 1
    %p191 = por %p189, %p190
    %p193 = scmp.ne.s32.totalorder %s178, %s192
    %p194 = scmp.eq.s32.totalorder %s21, 0
    %p195 = por %p193, %p194
    %s197 = sadd.s32 %s196, 1
    %p200 = scmp.eq.s32.totalorder %s15, 1
    %p201 = scmp.ne.s32.totalorder %s196, %s198
    %p202 = scmp.eq.s32.totalorder %s15, 0
    %p203 = por %p201, %p202
    %p204 = scmp.ne.s32.totalorder %s196, %s198
    %p205 = scmp.eq.s32.totalorder %s20, 1
    %p206 = por %p204, %p205
    %p207 = scmp.ne.s32.totalorder %s198, %s199
    %p208 = scmp.eq.s32.totalorder %s20, 0
    %p209 = por %p207, %p208
    %p210 = scmp.ne.s32.totalorder %s198, %s199
    %p211 = scmp.eq.s32.totalorder %s21, 1
    %p212 = por %p210, %p211
    %p214 = scmp.ne.s32.totalorder %s199, %s213
    %p215 = scmp.eq.s32.totalorder %s21, 0
    %p216 = por %p214, %p215
    %s217 = ssub.s32 %s15, %s22
    %p218 = scmp.eq.s32.totalorder %s217, 0
    %s220 = sadd.s32 %s219, 1
    %s221 = scalar_select %p218, %s219, %s220
    %p224 = pneg %p218
    %p225 = scmp.eq.s32.totalorder %s15, 1
    %p226 = por %p224, %p225
    %p227 = scmp.ne.s32.totalorder %s219, %s222
    %p228 = scmp.eq.s32.totalorder %s15, 0
    %p229 = por %p227, %p228
    %p230 = scmp.ne.s32.totalorder %s219, %s222
    %p231 = scmp.eq.s32.totalorder %s20, 1
    %p232 = por %p230, %p231
    %p233 = scmp.ne.s32.totalorder %s222, %s223
    %p234 = scmp.eq.s32.totalorder %s20, 0
    %p235 = por %p233, %p234
    %p236 = scmp.ne.s32.totalorder %s222, %s223
    %p237 = scmp.eq.s32.totalorder %s21, 1
    %p238 = por %p236, %p237
    %p240 = scmp.ne.s32.totalorder %s223, %s239
    %p241 = scmp.eq.s32.totalorder %s21, 0
    %p242 = por %p240, %p241
    %p243 = scmp.le.s32.totalorder 1, %s15
    %p244 = scmp.lt.s32.totalorder %s15, 3
    %p245 = pnand %p243, %p244
    %p246 = pneg %p245
    // Predicated region
    $region9: #{cnn1_forward.1} parent=5 // pred_check
      _
    $region10: #{cnn1_forward.1} parent=5 // pred_check_branch
      %248 = sbr.rel (%p245) target = $region12
    $region11: #{cnn1_forward.1} parent=5 // pred_region
      %s249 = ssub.s32 %s15, 1
      // Predicated region
      $region13: #{cnn1_forward.1} parent=11 // pred_check
        %p250 = pneg %p62
      $region14: #{cnn1_forward.1} parent=11 // pred_check_branch
        %252 = sbr.rel (%p250) target = $region16
      $region15: #{cnn1_forward.1} parent=11 // pred_region
        _
      $region16: #{cnn1_forward.1} parent=11 // pred_fallthru
        _
      // Predicated region
      $region17: #{cnn1_forward.1} parent=11 // pred_check
        %p253 = pneg %p83
      $region18: #{cnn1_forward.1} parent=11 // pred_check_branch
        %255 = sbr.rel (%p253) target = $region20
      $region19: #{cnn1_forward.1} parent=11 // pred_region
        _
      $region20: #{cnn1_forward.1} parent=11 // pred_fallthru
        _
      // Predicated region
      $region21: #{cnn1_forward.1} parent=11 // pred_check
        %p256 = pneg %p104
      $region22: #{cnn1_forward.1} parent=11 // pred_check_branch
        %258 = sbr.rel (%p256) target = $region24
      $region23: #{cnn1_forward.1} parent=11 // pred_region
        _
      $region24: #{cnn1_forward.1} parent=11 // pred_fallthru
        _
      // Predicated region
      $region25: #{cnn1_forward.1} parent=11 // pred_check
        %p259 = pneg %p125
      $region26: #{cnn1_forward.1} parent=11 // pred_check_branch
        %261 = sbr.rel (%p259) target = $region28
      $region27: #{cnn1_forward.1} parent=11 // pred_region
        _
      $region28: #{cnn1_forward.1} parent=11 // pred_fallthru
        _
      // Predicated region
      $region29: #{cnn1_forward.1} parent=11 // pred_check
        %p262 = pneg %p146
      $region30: #{cnn1_forward.1} parent=11 // pred_check_branch
        %264 = sbr.rel (%p262) target = $region32
      $region31: #{cnn1_forward.1} parent=11 // pred_region
        _
      $region32: #{cnn1_forward.1} parent=11 // pred_fallthru
        _
      // Predicated region
      $region33: #{cnn1_forward.1} parent=11 // pred_check
        %p265 = pneg %p167
      $region34: #{cnn1_forward.1} parent=11 // pred_check_branch
        %267 = sbr.rel (%p265) target = $region36
      $region35: #{cnn1_forward.1} parent=11 // pred_region
        _
      $region36: #{cnn1_forward.1} parent=11 // pred_fallthru
        _
      // Predicated region
      $region37: #{cnn1_forward.1} parent=11 // pred_check
        %p268 = pneg %p188
      $region38: #{cnn1_forward.1} parent=11 // pred_check_branch
        %270 = sbr.rel (%p268) target = $region40
      $region39: #{cnn1_forward.1} parent=11 // pred_region
        _
      $region40: #{cnn1_forward.1} parent=11 // pred_fallthru
        _
      // Predicated region
      $region41: #{cnn1_forward.1} parent=11 // pred_check
        %p271 = pneg %p209
      $region42: #{cnn1_forward.1} parent=11 // pred_check_branch
        %273 = sbr.rel (%p271) target = $region44
      $region43: #{cnn1_forward.1} parent=11 // pred_region
        _
      $region44: #{cnn1_forward.1} parent=11 // pred_fallthru
        _
    $region12: #{cnn1_forward.1} parent=5 // pred_fallthru
      _
    %p274 = scmp.lt.s32.totalorder %s15, 2
    // Predicated region
    $region45: #{cnn1_forward.1} parent=5 // pred_check
      %p275 = pneg %p274
    $region46: #{cnn1_forward.1} parent=5 // pred_check_branch
      %277 = sbr.rel (%p275) target = $region48
    $region47: #{cnn1_forward.1} parent=5 // pred_region
      // Predicated region
      $region49: #{cnn1_forward.1} parent=47 // pred_check
        %p278 = pneg %p35
      $region50: #{cnn1_forward.1} parent=47 // pred_check_branch
        %280 = sbr.rel (%p278) target = $region52
      $region51: #{cnn1_forward.1} parent=47 // pred_region
        %p281 = scmp.lt.s32.totalorder %s15, 1
        %s282 = scalar_select %p281, %s15, 1
        %s283 = smul.addr %s282, 88
        %s284 = smul.addr %s283, 8
        %s285 = scalar_lea.vmem %s0, %s284
      $region52: #{cnn1_forward.1} parent=47 // pred_fallthru
        _
    $region48: #{cnn1_forward.1} parent=5 // pred_fallthru
      _
    %p286 = scmp.le.s32.totalorder 1, %s15
    %p287 = scmp.lt.s32.totalorder %s15, 3
    %p288 = pnand %p286, %p287
    %p289 = pneg %p288
    // Predicated region
    $region53: #{cnn1_forward.1} parent=5 // pred_check
      _
    $region54: #{cnn1_forward.1} parent=5 // pred_check_branch
      %291 = sbr.rel (%p288) target = $region56
    $region55: #{cnn1_forward.1} parent=5 // pred_region
      %s292 = ssub.s32 %s15, 1
      %p293 = scmp.lt.s32.totalorder %s20, 1
      %s294 = scalar_select %p293, %s20, 1
      %s295 = smul.addr %s294, 88
      %s296 = smul.addr %s295, 8
      %s297 = scalar_lea.vmem %s0, %s296
      %p298 = pneg %p41
      %p299 = pneg %p38
      %p300 = pneg %p62
      %p301 = pneg %p59
      %p302 = pneg %p83
      %p303 = pneg %p80
      %p304 = pneg %p104
      %p305 = pneg %p101
      %p306 = pneg %p125
      %p307 = pneg %p122
      %p308 = pneg %p146
      %p309 = pneg %p143
      %p310 = pneg %p167
      %p311 = pneg %p164
      %p312 = pneg %p188
      %p313 = pneg %p185
      %p314 = pneg %p209
      %p315 = pneg %p206
      %p316 = pneg %p235
      %p317 = pneg %p232
      %p318 = scmp.lt.s32.totalorder %s20, 1
      %s319 = scalar_select %p318, %s20, 1
      %s320 = smul.addr %s319, 8
      %s321 = scalar_lea.vmem %s9, %s320
      %p322 = scmp.lt.s32.totalorder %s20, 1
      %s323 = scalar_select %p322, %s20, 1
      %s324 = smul.addr %s323, 88
      %s325 = smul.addr %s324, 8
      %s326 = scalar_lea.vmem %s0, %s325
      %p327 = scmp.lt.s32.totalorder %s20, 1
      %s328 = scalar_select %p327, %s20, 1
      %s329 = smul.addr %s328, 8
      %s330 = scalar_lea.vmem %s9, %s329
      %v331 = vld [vmem:[%s326] sm:$0xff]
      %v332 = vld [vmem:[%s326 + $0x8] sm:$0xff]
      %v333 = vld [vmem:[%s326 + $0x10] sm:$0xff]
      %v334 = vld [vmem:[%s326 + $0x18] sm:$0xff]
      %v335 = vld [vmem:[%s326 + $0x20] sm:$0xff]
      %v336 = vld [vmem:[%s326 + $0x28] sm:$0xff]
      %v337 = vld [vmem:[%s326 + $0x30] sm:$0xff]
      %v338 = vld [vmem:[%s326 + $0x38] sm:$0xff]
      %v339 = vld [vmem:[%s326 + $0x40] sm:$0xff]
      %v340 = vld [vmem:[%s326 + $0x48] sm:$0xff]
      %v341 = vld [vmem:[%s326 + $0x50] sm:$0xff]
      %v342 = vld [vmem:[%s326 + $0x58] sm:$0xff]
      %v343 = vld [vmem:[%s326 + $0x60] sm:$0xff]
      %v344 = vld [vmem:[%s326 + $0x68] sm:$0xff]
      %v345 = vld [vmem:[%s326 + $0x70] sm:$0xff]
      %v346 = vld [vmem:[%s326 + $0x78] sm:$0xff]
      %v347 = vld [vmem:[%s326 + $0x80] sm:$0xff]
      %v348 = vld [vmem:[%s326 + $0x88] sm:$0xff]
      %v349 = vld [vmem:[%s326 + $0x90] sm:$0xff]
      %v350 = vld [vmem:[%s326 + $0x98] sm:$0xff]
      %v351 = vld [vmem:[%s326 + $0xa0] sm:$0xff]
      %v352 = vld [vmem:[%s326 + $0xa8] sm:$0xff]
      %v353 = vld [vmem:[%s326 + $0xb0] sm:$0xff]
      %v354 = vld [vmem:[%s326 + $0xb8] sm:$0xff]
      %v355 = vld [vmem:[%s326 + $0xc0] sm:$0xff]
      %v356 = vld [vmem:[%s326 + $0xc8] sm:$0xff]
      %v357 = vld [vmem:[%s326 + $0xd0] sm:$0xff]
      %v358 = vld [vmem:[%s326 + $0xd8] sm:$0xff]
      %v359 = vld [vmem:[%s326 + $0xe0] sm:$0xff]
      %v360 = vld [vmem:[%s326 + $0xe8] sm:$0xff]
      %v361 = vld [vmem:[%s326 + $0xf0] sm:$0xff]
      %v362 = vld [vmem:[%s326 + $0xf8] sm:$0xff]
      %v363 = vld [vmem:[%s326 + $0x100] sm:$0xff]
      %v364 = vld [vmem:[%s326 + $0x108] sm:$0xff]
      %v365 = vld [vmem:[%s326 + $0x110] sm:$0xff]
      %v366 = vld [vmem:[%s326 + $0x118] sm:$0xff]
      %v367 = vld [vmem:[%s326 + $0x120] sm:$0xff]
      %v368 = vld [vmem:[%s326 + $0x128] sm:$0xff]
      %v369 = vld [vmem:[%s326 + $0x130] sm:$0xff]
      %v370 = vld [vmem:[%s326 + $0x138] sm:$0xff]
      %v371 = vld [vmem:[%s326 + $0x140] sm:$0xff]
      %v372 = vld [vmem:[%s326 + $0x148] sm:$0xff]
      %v373 = vld [vmem:[%s326 + $0x150] sm:$0xff]
      %v374 = vld [vmem:[%s326 + $0x158] sm:$0xff]
      %v375 = vld [vmem:[%s326 + $0x160] sm:$0xff]
      %v376 = vld [vmem:[%s326 + $0x168] sm:$0xff]
      %v377 = vld [vmem:[%s326 + $0x170] sm:$0xff]
      %v378 = vld [vmem:[%s326 + $0x178] sm:$0xff]
      %v379 = vld [vmem:[%s326 + $0x180] sm:$0xff]
      %v380 = vld [vmem:[%s326 + $0x188] sm:$0xff]
      %v381 = vld [vmem:[%s326 + $0x190] sm:$0xff]
      %v382 = vld [vmem:[%s326 + $0x198] sm:$0xff]
      %v383 = vld [vmem:[%s326 + $0x1a0] sm:$0xff]
      %v384 = vld [vmem:[%s326 + $0x1a8] sm:$0xff]
      %v385 = vld [vmem:[%s326 + $0x1b0] sm:$0xff]
      %v386 = vld [vmem:[%s326 + $0x1b8] sm:$0xff]
      %v387 = vld [vmem:[%s326 + $0x1c0] sm:$0xff]
      %v388 = vld [vmem:[%s326 + $0x1c8] sm:$0xff]
      %v389 = vld [vmem:[%s326 + $0x1d0] sm:$0xff]
      %v390 = vld [vmem:[%s326 + $0x1d8] sm:$0xff]
      %v391 = vld [vmem:[%s326 + $0x1e0] sm:$0xff]
      %v392 = vld [vmem:[%s326 + $0x1e8] sm:$0xff]
      %v393 = vld [vmem:[%s326 + $0x1f0] sm:$0xff]
      %v394 = vld [vmem:[%s326 + $0x1f8] sm:$0xff]
      %v395 = vld [vmem:[%s326 + $0x200] sm:$0xff]
      %v396 = vld [vmem:[%s326 + $0x208] sm:$0xff]
      %v397 = vld [vmem:[%s326 + $0x210] sm:$0xff]
      %v398 = vld [vmem:[%s326 + $0x218] sm:$0xff]
      %v399 = vld [vmem:[%s326 + $0x220] sm:$0xff]
      %v400 = vld [vmem:[%s326 + $0x228] sm:$0xff]
      %v401 = vld [vmem:[%s326 + $0x230] sm:$0xff]
      %v402 = vld [vmem:[%s326 + $0x238] sm:$0xff]
      %v403 = vld [vmem:[%s326 + $0x240] sm:$0xff]
      %v404 = vld [vmem:[%s326 + $0x248] sm:$0xff]
      %v405 = vld [vmem:[%s326 + $0x250] sm:$0xff]
      %v406 = vld [vmem:[%s326 + $0x258] sm:$0xff]
      %v407 = vld [vmem:[%s326 + $0x260] sm:$0xff]
      %v408 = vld [vmem:[%s326 + $0x268] sm:$0xff]
      %v409 = vld [vmem:[%s326 + $0x270] sm:$0xff]
      %v410 = vld [vmem:[%s326 + $0x278] sm:$0xff]
      %v411 = vld [vmem:[%s326 + $0x280] sm:$0xff]
      %v412 = vld [vmem:[%s326 + $0x288] sm:$0xff]
      %v413 = vld [vmem:[%s326 + $0x290] sm:$0xff]
      %v414 = vld [vmem:[%s326 + $0x298] sm:$0xff]
      %v415 = vld [vmem:[%s326 + $0x2a0] sm:$0xff]
      %v416 = vld [vmem:[%s326 + $0x2a8] sm:$0xff]
      %v417 = vld [vmem:[%s326 + $0x2b0] sm:$0xff]
      %v418 = vld [vmem:[%s326 + $0x2b8] sm:$0xff]
      %v419 = vld [vmem:[%s1] sm:$0xff]
      %v420 = vld [vmem:[%s1 + $0x8] sm:$0xff]
      %v421 = vld [vmem:[%s2] sm:$0x1]
      %v423 = vlaneseq
      %v424 = vshrl.u32 %v423, 7
      %v425 = vsub.s32 0, %v424
      %v426 = vrot.slane %v421, %v425
      %vm428 = vcmask 130048
      %v430 = vsel %vm428, %v331, 0
      %v433 = vsel %vm428, %v332, 0
      %v436 = vsel %vm428, %v333, 0
      %v439 = vsel %vm428, %v334, 0
      %v442 = vsel %vm428, %v335, 0
      %v445 = vsel %vm428, %v336, 0
      %v448 = vsel %vm428, %v337, 0
      %v451 = vsel %vm428, %v338, 0
      %v454 = vsel %vm428, %v339, 0
      %v457 = vsel %vm428, %v340, 0
      %v460 = vsel %vm428, %v341, 0
      %v463 = vsel %vm428, %v342, 0
      %v466 = vsel %vm428, %v343, 0
      %v469 = vsel %vm428, %v344, 0
      %v472 = vsel %vm428, %v345, 0
      %v475 = vsel %vm428, %v346, 0
      %v478 = vsel %vm428, %v347, 0
      %v481 = vsel %vm428, %v348, 0
      %v484 = vsel %vm428, %v349, 0
      %v487 = vsel %vm428, %v350, 0
      %v490 = vsel %vm428, %v351, 0
      %v493 = vsel %vm428, %v352, 0
      %v496 = vsel %vm428, %v353, 0
      %v499 = vsel %vm428, %v354, 0
      %v502 = vsel %vm428, %v355, 0
      %v505 = vsel %vm428, %v356, 0
      %v508 = vsel %vm428, %v357, 0
      %v511 = vsel %vm428, %v358, 0
      %v514 = vsel %vm428, %v359, 0
      %v517 = vsel %vm428, %v360, 0
      %v520 = vsel %vm428, %v361, 0
      %v523 = vsel %vm428, %v362, 0
      %v526 = vsel %vm428, %v363, 0
      %v529 = vsel %vm428, %v364, 0
      %v532 = vsel %vm428, %v365, 0
      %v535 = vsel %vm428, %v366, 0
      %v538 = vsel %vm428, %v367, 0
      %v541 = vsel %vm428, %v368, 0
      %v544 = vsel %vm428, %v369, 0
      %v547 = vsel %vm428, %v370, 0
      %v550 = vsel %vm428, %v371, 0
      %v553 = vsel %vm428, %v372, 0
      %v556 = vsel %vm428, %v373, 0
      %v559 = vsel %vm428, %v374, 0
      %v562 = vsel %vm428, %v375, 0
      %v565 = vsel %vm428, %v376, 0
      %v568 = vsel %vm428, %v377, 0
      %v571 = vsel %vm428, %v378, 0
      %v574 = vsel %vm428, %v379, 0
      %v577 = vsel %vm428, %v380, 0
      %v580 = vsel %vm428, %v381, 0
      %v583 = vsel %vm428, %v382, 0
      %v586 = vsel %vm428, %v383, 0
      %v589 = vsel %vm428, %v384, 0
      %v592 = vsel %vm428, %v385, 0
      %v595 = vsel %vm428, %v386, 0
      %v598 = vsel %vm428, %v387, 0
      %v601 = vsel %vm428, %v388, 0
      %v604 = vsel %vm428, %v389, 0
      %v607 = vsel %vm428, %v390, 0
      %v610 = vsel %vm428, %v391, 0
      %v613 = vsel %vm428, %v392, 0
      %v616 = vsel %vm428, %v393, 0
      %v619 = vsel %vm428, %v394, 0
      %v622 = vsel %vm428, %v395, 0
      %v625 = vsel %vm428, %v396, 0
      %v628 = vsel %vm428, %v397, 0
      %v631 = vsel %vm428, %v398, 0
      %v634 = vsel %vm428, %v399, 0
      %v637 = vsel %vm428, %v400, 0
      %v640 = vsel %vm428, %v401, 0
      %v643 = vsel %vm428, %v402, 0
      %v646 = vsel %vm428, %v403, 0
      %v649 = vsel %vm428, %v404, 0
      %v652 = vsel %vm428, %v405, 0
      %v655 = vsel %vm428, %v406, 0
      %v658 = vsel %vm428, %v407, 0
      %v661 = vsel %vm428, %v408, 0
      %v664 = vsel %vm428, %v409, 0
      %v667 = vsel %vm428, %v410, 0
      %v670 = vsel %vm428, %v411, 0
      %v673 = vsel %vm428, %v412, 0
      %v676 = vsel %vm428, %v413, 0
      %v679 = vsel %vm428, %v414, 0
      %v682 = vsel %vm428, %v415, 0
      %v685 = vsel %vm428, %v416, 0
      %v688 = vsel %vm428, %v417, 0
      %v691 = vsel %vm428, %v418, 0
      %693 = vmatprep.subr.mxu0 0.0
      %694 = vmatpush1.msra.mxu0 %v419
      %695 = vmatprep.subr.mxu0 0.0
      %696 = vmatpush1.msra.mxu0 %v420
      %697 = vmatprep.subr.mxu0 0.0
      %698 = vmatpush1.msra.mxu0 0.0
      %699 = vmatprep.subr.mxu0 0.0
      %700 = vmatpush1.msra.mxu0 0.0
      %701 = vmatprep.subr.mxu0 0.0
      %702 = vmatpush1.msra.mxu0 0.0
      %703 = vmatprep.subr.mxu0 0.0
      %704 = vmatpush1.msra.mxu0 0.0
      %705 = vmatprep.subr.mxu0 0.0
      %706 = vmatpush1.msra.mxu0 0.0
      %707 = vmatprep.subr.mxu0 0.0
      %708 = vmatpush1.msra.mxu0 0.0
      %709 = vmatprep.subr.mxu0 0.0
      %710 = vmatpush1.msra.mxu0 0.0
      %711 = vmatprep.subr.mxu0 0.0
      %712 = vmatpush1.msra.mxu0 0.0
      %713 = vmatprep.subr.mxu0 0.0
      %714 = vmatpush1.msra.mxu0 0.0
      %715 = vmatprep.subr.mxu0 0.0
      %716 = vmatpush1.msra.mxu0 0.0
      %717 = vmatprep.subr.mxu0 0.0
      %718 = vmatpush1.msra.mxu0 0.0
      %719 = vmatprep.subr.mxu0 0.0
      %720 = vmatpush1.msra.mxu0 0.0
      %721 = vmatprep.subr.mxu0 0.0
      %722 = vmatpush1.msra.mxu0 0.0
      %723 = vmatprep.subr.mxu0 0.0
      %724 = vmatpush1.msra.mxu0 0.0
      %725 = vmatprep.subr.mxu0 0.0
      %726 = vmatpush1.msra.mxu0 0.0
      %727 = vmatprep.subr.mxu0 0.0
      %728 = vmatpush1.msra.mxu0 0.0
      %729 = vmatprep.subr.mxu0 0.0
      %730 = vmatpush1.msra.mxu0 0.0
      %731 = vmatprep.subr.mxu0 0.0
      %732 = vmatpush1.msra.mxu0 0.0
      %733 = vmatprep.subr.mxu0 0.0
      %734 = vmatpush1.msra.mxu0 0.0
      %735 = vmatprep.subr.mxu0 0.0
      %736 = vmatpush1.msra.mxu0 0.0
      %737 = vmatprep.subr.mxu0 0.0
      %738 = vmatpush1.msra.mxu0 0.0
      %739 = vmatprep.subr.mxu0 0.0
      %740 = vmatpush1.msra.mxu0 0.0
      %741 = vmatprep.subr.mxu0 0.0
      %742 = vmatpush1.msra.mxu0 0.0
      %743 = vmatprep.subr.mxu0 0.0
      %744 = vmatpush1.msra.mxu0 0.0
      %745 = vmatprep.subr.mxu0 0.0
      %746 = vmatpush1.msra.mxu0 0.0
      %747 = vmatprep.subr.mxu0 0.0
      %748 = vmatpush1.msra.mxu0 0.0
      %749 = vmatprep.subr.mxu0 0.0
      %750 = vmatpush1.msra.mxu0 0.0
      %751 = vmatprep.subr.mxu0 0.0
      %752 = vmatpush1.msra.mxu0 0.0
      %753 = vmatprep.subr.mxu0 0.0
      %754 = vmatpush1.msra.mxu0 0.0
      %755 = vmatprep.subr.mxu0 0.0
      %756 = vmatpush1.msra.mxu0 0.0
      %757 = vmatprep.mubr.f32.mxu0 0.0
      %758 = vmatmul.mubr.f32.gmra.mrb[0].mxu0 %v430
      %v759 = vpop.f32.mrb[0].mxu0
      %v760 = vadd.f32 %v426, %v759
      %v761 = vpop.f32.mrb[0].mxu0
      %762 = vmatprep.mubr.f32.mxu0 0.0
      %763 = vmatmul.mubr.f32.gmra.mrb[0].mxu0 %v433
      %v764 = vpop.f32.mrb[0].mxu0
      %v765 = vadd.f32 %v426, %v764
      %v766 = vpop.f32.mrb[0].mxu0
      %767 = vmatprep.mubr.f32.mxu0 0.0
      %768 = vmatmul.mubr.f32.gmra.mrb[0].mxu0 %v436
      %v769 = vpop.f32.mrb[0].mxu0
      %v770 = vadd.f32 %v426, %v769
      %v771 = vpop.f32.mrb[0].mxu0
      %772 = vmatprep.mubr.f32.mxu0 0.0
      %773 = vmatmul.mubr.f32.gmra.mrb[0].mxu0 %v439
      %v774 = vpop.f32.mrb[0].mxu0
      %v775 = vadd.f32 %v426, %v774
      %v776 = vpop.f32.mrb[0].mxu0
      %777 = vmatprep.mubr.f32.mxu0 0.0
      %778 = vmatmul.mubr.f32.gmra.mrb[0].mxu0 %v442
      %v779 = vpop.f32.mrb[0].mxu0
      %v780 = vadd.f32 %v426, %v779
      %v781 = vpop.f32.mrb[0].mxu0
      %782 = vmatprep.mubr.f32.mxu0 0.0
      %783 = vmatmul.mubr.f32.gmra.mrb[0].mxu0 %v445
      %v784 = vpop.f32.mrb[0].mxu0
      %v785 = vadd.f32 %v426, %v784
      %v786 = vpop.f32.mrb[0].mxu0
      %787 = vmatprep.mubr.f32.mxu0 0.0
      %788 = vmatmul.mubr.f32.gmra.mrb[0].mxu0 %v448
      %v789 = vpop.f32.mrb[0].mxu0
      %v790 = vadd.f32 %v426, %v789
      %v791 = vpop.f32.mrb[0].mxu0
      %792 = vmatprep.mubr.f32.mxu0 0.0
      %793 = vmatmul.mubr.f32.gmra.mrb[0].mxu0 %v451
      %v794 = vpop.f32.mrb[0].mxu0
      %v795 = vadd.f32 %v426, %v794
      %v796 = vpop.f32.mrb[0].mxu0
      %797 = vmatprep.mubr.f32.mxu0 0.0
      %798 = vmatmul.mubr.f32.gmra.mrb[0].mxu0 %v454
      %v799 = vpop.f32.mrb[0].mxu0
      %v800 = vadd.f32 %v426, %v799
      %v801 = vpop.f32.mrb[0].mxu0
      %802 = vmatprep.mubr.f32.mxu0 0.0
      %803 = vmatmul.mubr.f32.gmra.mrb[0].mxu0 %v457
      %v804 = vpop.f32.mrb[0].mxu0
      %v805 = vadd.f32 %v426, %v804
      %v806 = vpop.f32.mrb[0].mxu0
      %807 = vmatprep.mubr.f32.mxu0 0.0
      %808 = vmatmul.mubr.f32.gmra.mrb[0].mxu0 %v460
      %v809 = vpop.f32.mrb[0].mxu0
      %v810 = vadd.f32 %v426, %v809
      %v811 = vpop.f32.mrb[0].mxu0
      %812 = vmatprep.mubr.f32.mxu0 0.0
      %813 = vmatmul.mubr.f32.gmra.mrb[0].mxu0 %v463
      %v814 = vpop.f32.mrb[0].mxu0
      %v815 = vadd.f32 %v426, %v814
      %v816 = vpop.f32.mrb[0].mxu0
      %817 = vmatprep.mubr.f32.mxu0 0.0
      %818 = vmatmul.mubr.f32.gmra.mrb[0].mxu0 %v466
      %v819 = vpop.f32.mrb[0].mxu0
      %v820 = vadd.f32 %v426, %v819
      %v821 = vpop.f32.mrb[0].mxu0
      %822 = vmatprep.mubr.f32.mxu0 0.0
      %823 = vmatmul.mubr.f32.gmra.mrb[0].mxu0 %v469
      %v824 = vpop.f32.mrb[0].mxu0
      %v825 = vadd.f32 %v426, %v824
      %v826 = vpop.f32.mrb[0].mxu0
      %827 = vmatprep.mubr.f32.mxu0 0.0
      %828 = vmatmul.mubr.f32.gmra.mrb[0].mxu0 %v472
      %v829 = vpop.f32.mrb[0].mxu0
      %v830 = vadd.f32 %v426, %v829
      %v831 = vpop.f32.mrb[0].mxu0
      %832 = vmatprep.mubr.f32.mxu0 0.0
      %833 = vmatmul.mubr.f32.gmra.mrb[0].mxu0 %v475
      %v834 = vpop.f32.mrb[0].mxu0
      %v835 = vadd.f32 %v426, %v834
      %v836 = vpop.f32.mrb[0].mxu0
      %837 = vmatprep.mubr.f32.mxu0 0.0
      %838 = vmatmul.mubr.f32.gmra.mrb[0].mxu0 %v478
      %v839 = vpop.f32.mrb[0].mxu0
      %v840 = vadd.f32 %v426, %v839
      %v841 = vpop.f32.mrb[0].mxu0
      %842 = vmatprep.mubr.f32.mxu0 0.0
      %843 = vmatmul.mubr.f32.gmra.mrb[0].mxu0 %v481
      %v844 = vpop.f32.mrb[0].mxu0
      %v845 = vadd.f32 %v426, %v844
      %v846 = vpop.f32.mrb[0].mxu0
      %847 = vmatprep.mubr.f32.mxu0 0.0
      %848 = vmatmul.mubr.f32.gmra.mrb[0].mxu0 %v484
      %v849 = vpop.f32.mrb[0].mxu0
      %v850 = vadd.f32 %v426, %v849
      %v851 = vpop.f32.mrb[0].mxu0
      %852 = vmatprep.mubr.f32.mxu0 0.0
      %853 = vmatmul.mubr.f32.gmra.mrb[0].mxu0 %v487
      %v854 = vpop.f32.mrb[0].mxu0
      %v855 = vadd.f32 %v426, %v854
      %v856 = vpop.f32.mrb[0].mxu0
      %857 = vmatprep.mubr.f32.mxu0 0.0
      %858 = vmatmul.mubr.f32.gmra.mrb[0].mxu0 %v490
      %v859 = vpop.f32.mrb[0].mxu0
      %v860 = vadd.f32 %v426, %v859
      %v861 = vpop.f32.mrb[0].mxu0
      %862 = vmatprep.mubr.f32.mxu0 0.0
      %863 = vmatmul.mubr.f32.gmra.mrb[0].mxu0 %v493
      %v864 = vpop.f32.mrb[0].mxu0
      %v865 = vadd.f32 %v426, %v864
      %v866 = vpop.f32.mrb[0].mxu0
      %867 = vmatprep.mubr.f32.mxu0 0.0
      %868 = vmatmul.mubr.f32.gmra.mrb[0].mxu0 %v496
      %v869 = vpop.f32.mrb[0].mxu0
      %v870 = vadd.f32 %v426, %v869
      %v871 = vpop.f32.mrb[0].mxu0
      %872 = vmatprep.mubr.f32.mxu0 0.0
      %873 = vmatmul.mubr.f32.gmra.mrb[0].mxu0 %v499
      %v874 = vpop.f32.mrb[0].mxu0
      %v875 = vadd.f32 %v426, %v874
      %v876 = vpop.f32.mrb[0].mxu0
      %877 = vmatprep.mubr.f32.mxu0 0.0
      %878 = vmatmul.mubr.f32.gmra.mrb[0].mxu0 %v502
      %v879 = vpop.f32.mrb[0].mxu0
      %v880 = vadd.f32 %v426, %v879
      %v881 = vpop.f32.mrb[0].mxu0
      %882 = vmatprep.mubr.f32.mxu0 0.0
      %883 = vmatmul.mubr.f32.gmra.mrb[0].mxu0 %v505
      %v884 = vpop.f32.mrb[0].mxu0
      %v885 = vadd.f32 %v426, %v884
      %v886 = vpop.f32.mrb[0].mxu0
      %887 = vmatprep.mubr.f32.mxu0 0.0
      %888 = vmatmul.mubr.f32.gmra.mrb[0].mxu0 %v508
      %v889 = vpop.f32.mrb[0].mxu0
      %v890 = vadd.f32 %v426, %v889
      %v891 = vpop.f32.mrb[0].mxu0
      %892 = vmatprep.mubr.f32.mxu0 0.0
      %893 = vmatmul.mubr.f32.gmra.mrb[0].mxu0 %v511
      %v894 = vpop.f32.mrb[0].mxu0
      %v895 = vadd.f32 %v426, %v894
      %v896 = vpop.f32.mrb[0].mxu0
      %897 = vmatprep.mubr.f32.mxu0 0.0
      %898 = vmatmul.mubr.f32.gmra.mrb[0].mxu0 %v514
      %v899 = vpop.f32.mrb[0].mxu0
      %v900 = vadd.f32 %v426, %v899
      %v901 = vpop.f32.mrb[0].mxu0
      %902 = vmatprep.mubr.f32.mxu0 0.0
      %903 = vmatmul.mubr.f32.gmra.mrb[0].mxu0 %v517
      %v904 = vpop.f32.mrb[0].mxu0
      %v905 = vadd.f32 %v426, %v904
      %v906 = vpop.f32.mrb[0].mxu0
      %907 = vmatprep.mubr.f32.mxu0 0.0
      %908 = vmatmul.mubr.f32.gmra.mrb[0].mxu0 %v520
      %v909 = vpop.f32.mrb[0].mxu0
      %v910 = vadd.f32 %v426, %v909
      %v911 = vpop.f32.mrb[0].mxu0
      %912 = vmatprep.mubr.f32.mxu0 0.0
      %913 = vmatmul.mubr.f32.gmra.mrb[0].mxu0 %v523
      %v914 = vpop.f32.mrb[0].mxu0
      %v915 = vadd.f32 %v426, %v914
      %v916 = vpop.f32.mrb[0].mxu0
      %917 = vmatprep.mubr.f32.mxu0 0.0
      %918 = vmatmul.mubr.f32.gmra.mrb[0].mxu0 %v526
      %v919 = vpop.f32.mrb[0].mxu0
      %v920 = vadd.f32 %v426, %v919
      %v921 = vpop.f32.mrb[0].mxu0
      %922 = vmatprep.mubr.f32.mxu0 0.0
      %923 = vmatmul.mubr.f32.gmra.mrb[0].mxu0 %v529
      %v924 = vpop.f32.mrb[0].mxu0
      %v925 = vadd.f32 %v426, %v924
      %v926 = vpop.f32.mrb[0].mxu0
      %927 = vmatprep.mubr.f32.mxu0 0.0
      %928 = vmatmul.mubr.f32.gmra.mrb[0].mxu0 %v532
      %v929 = vpop.f32.mrb[0].mxu0
      %v930 = vadd.f32 %v426, %v929
      %v931 = vpop.f32.mrb[0].mxu0
      %932 = vmatprep.mubr.f32.mxu0 0.0
      %933 = vmatmul.mubr.f32.gmra.mrb[0].mxu0 %v535
      %v934 = vpop.f32.mrb[0].mxu0
      %v935 = vadd.f32 %v426, %v934
      %v936 = vpop.f32.mrb[0].mxu0
      %937 = vmatprep.mubr.f32.mxu0 0.0
      %938 = vmatmul.mubr.f32.gmra.mrb[0].mxu0 %v538
      %v939 = vpop.f32.mrb[0].mxu0
      %v940 = vadd.f32 %v426, %v939
      %v941 = vpop.f32.mrb[0].mxu0
      %942 = vmatprep.mubr.f32.mxu0 0.0
      %943 = vmatmul.mubr.f32.gmra.mrb[0].mxu0 %v541
      %v944 = vpop.f32.mrb[0].mxu0
      %v945 = vadd.f32 %v426, %v944
      %v946 = vpop.f32.mrb[0].mxu0
      %947 = vmatprep.mubr.f32.mxu0 0.0
      %948 = vmatmul.mubr.f32.gmra.mrb[0].mxu0 %v544
      %v949 = vpop.f32.mrb[0].mxu0
      %v950 = vadd.f32 %v426, %v949
      %v951 = vpop.f32.mrb[0].mxu0
      %952 = vmatprep.mubr.f32.mxu0 0.0
      %953 = vmatmul.mubr.f32.gmra.mrb[0].mxu0 %v547
      %v954 = vpop.f32.mrb[0].mxu0
      %v955 = vadd.f32 %v426, %v954
      %v956 = vpop.f32.mrb[0].mxu0
      %957 = vmatprep.mubr.f32.mxu0 0.0
      %958 = vmatmul.mubr.f32.gmra.mrb[0].mxu0 %v550
      %v959 = vpop.f32.mrb[0].mxu0
      %v960 = vadd.f32 %v426, %v959
      %v961 = vpop.f32.mrb[0].mxu0
      %962 = vmatprep.mubr.f32.mxu0 0.0
      %963 = vmatmul.mubr.f32.gmra.mrb[0].mxu0 %v553
      %v964 = vpop.f32.mrb[0].mxu0
      %v965 = vadd.f32 %v426, %v964
      %v966 = vpop.f32.mrb[0].mxu0
      %967 = vmatprep.mubr.f32.mxu0 0.0
      %968 = vmatmul.mubr.f32.gmra.mrb[0].mxu0 %v556
      %v969 = vpop.f32.mrb[0].mxu0
      %v970 = vadd.f32 %v426, %v969
      %v971 = vpop.f32.mrb[0].mxu0
      %972 = vmatprep.mubr.f32.mxu0 0.0
      %973 = vmatmul.mubr.f32.gmra.mrb[0].mxu0 %v559
      %v974 = vpop.f32.mrb[0].mxu0
      %v975 = vadd.f32 %v426, %v974
      %v976 = vpop.f32.mrb[0].mxu0
      %977 = vmatprep.mubr.f32.mxu0 0.0
      %978 = vmatmul.mubr.f32.gmra.mrb[0].mxu0 %v562
      %v979 = vpop.f32.mrb[0].mxu0
      %v980 = vadd.f32 %v426, %v979
      %v981 = vpop.f32.mrb[0].mxu0
      %982 = vmatprep.mubr.f32.mxu0 0.0
      %983 = vmatmul.mubr.f32.gmra.mrb[0].mxu0 %v565
      %v984 = vpop.f32.mrb[0].mxu0
      %v985 = vadd.f32 %v426, %v984
      %v986 = vpop.f32.mrb[0].mxu0
      %987 = vmatprep.mubr.f32.mxu0 0.0
      %988 = vmatmul.mubr.f32.gmra.mrb[0].mxu0 %v568
      %v989 = vpop.f32.mrb[0].mxu0
      %v990 = vadd.f32 %v426, %v989
      %v991 = vpop.f32.mrb[0].mxu0
      %992 = vmatprep.mubr.f32.mxu0 0.0
      %993 = vmatmul.mubr.f32.gmra.mrb[0].mxu0 %v571
      %v994 = vpop.f32.mrb[0].mxu0
      %v995 = vadd.f32 %v426, %v994
      %v996 = vpop.f32.mrb[0].mxu0
      %997 = vmatprep.mubr.f32.mxu0 0.0
      %998 = vmatmul.mubr.f32.gmra.mrb[0].mxu0 %v574
      %v999 = vpop.f32.mrb[0].mxu0
      %v1000 = vadd.f32 %v426, %v999
      %v1001 = vpop.f32.mrb[0].mxu0
      %1002 = vmatprep.mubr.f32.mxu0 0.0
      %1003 = vmatmul.mubr.f32.gmra.mrb[0].mxu0 %v577
      %v1004 = vpop.f32.mrb[0].mxu0
      %v1005 = vadd.f32 %v426, %v1004
      %v1006 = vpop.f32.mrb[0].mxu0
      %1007 = vmatprep.mubr.f32.mxu0 0.0
      %1008 = vmatmul.mubr.f32.gmra.mrb[0].mxu0 %v580
      %v1009 = vpop.f32.mrb[0].mxu0
      %v1010 = vadd.f32 %v426, %v1009
      %v1011 = vpop.f32.mrb[0].mxu0
      %1012 = vmatprep.mubr.f32.mxu0 0.0
      %1013 = vmatmul.mubr.f32.gmra.mrb[0].mxu0 %v583
      %v1014 = vpop.f32.mrb[0].mxu0
      %v1015 = vadd.f32 %v426, %v1014
      %v1016 = vpop.f32.mrb[0].mxu0
      %1017 = vmatprep.mubr.f32.mxu0 0.0
      %1018 = vmatmul.mubr.f32.gmra.mrb[0].mxu0 %v586
      %v1019 = vpop.f32.mrb[0].mxu0
      %v1020 = vadd.f32 %v426, %v1019
      %v1021 = vpop.f32.mrb[0].mxu0
      %1022 = vmatprep.mubr.f32.mxu0 0.0
      %1023 = vmatmul.mubr.f32.gmra.mrb[0].mxu0 %v589
      %v1024 = vpop.f32.mrb[0].mxu0
      %v1025 = vadd.f32 %v426, %v1024
      %v1026 = vpop.f32.mrb[0].mxu0
      %1027 = vmatprep.mubr.f32.mxu0 0.0
      %1028 = vmatmul.mubr.f32.gmra.mrb[0].mxu0 %v592
      %v1029 = vpop.f32.mrb[0].mxu0
      %v1030 = vadd.f32 %v426, %v1029
      %v1031 = vpop.f32.mrb[0].mxu0
      %1032 = vmatprep.mubr.f32.mxu0 0.0
      %1033 = vmatmul.mubr.f32.gmra.mrb[0].mxu0 %v595
      %v1034 = vpop.f32.mrb[0].mxu0
      %v1035 = vadd.f32 %v426, %v1034
      %v1036 = vpop.f32.mrb[0].mxu0
      %1037 = vmatprep.mubr.f32.mxu0 0.0
      %1038 = vmatmul.mubr.f32.gmra.mrb[0].mxu0 %v598
      %v1039 = vpop.f32.mrb[0].mxu0
      %v1040 = vadd.f32 %v426, %v1039
      %v1041 = vpop.f32.mrb[0].mxu0
      %1042 = vmatprep.mubr.f32.mxu0 0.0
      %1043 = vmatmul.mubr.f32.gmra.mrb[0].mxu0 %v601
      %v1044 = vpop.f32.mrb[0].mxu0
      %v1045 = vadd.f32 %v426, %v1044
      %v1046 = vpop.f32.mrb[0].mxu0
      %1047 = vmatprep.mubr.f32.mxu0 0.0
      %1048 = vmatmul.mubr.f32.gmra.mrb[0].mxu0 %v604
      %v1049 = vpop.f32.mrb[0].mxu0
      %v1050 = vadd.f32 %v426, %v1049
      %v1051 = vpop.f32.mrb[0].mxu0
      %1052 = vmatprep.mubr.f32.mxu0 0.0
      %1053 = vmatmul.mubr.f32.gmra.mrb[0].mxu0 %v607
      %v1054 = vpop.f32.mrb[0].mxu0
      %v1055 = vadd.f32 %v426, %v1054
      %v1056 = vpop.f32.mrb[0].mxu0
      %1057 = vmatprep.mubr.f32.mxu0 0.0
      %1058 = vmatmul.mubr.f32.gmra.mrb[0].mxu0 %v610
      %v1059 = vpop.f32.mrb[0].mxu0
      %v1060 = vadd.f32 %v426, %v1059
      %v1061 = vpop.f32.mrb[0].mxu0
      %1062 = vmatprep.mubr.f32.mxu0 0.0
      %1063 = vmatmul.mubr.f32.gmra.mrb[0].mxu0 %v613
      %v1064 = vpop.f32.mrb[0].mxu0
      %v1065 = vadd.f32 %v426, %v1064
      %v1066 = vpop.f32.mrb[0].mxu0
      %1067 = vmatprep.mubr.f32.mxu0 0.0
      %1068 = vmatmul.mubr.f32.gmra.mrb[0].mxu0 %v616
      %v1069 = vpop.f32.mrb[0].mxu0
      %v1070 = vadd.f32 %v426, %v1069
      %v1071 = vpop.f32.mrb[0].mxu0
      %1072 = vmatprep.mubr.f32.mxu0 0.0
      %1073 = vmatmul.mubr.f32.gmra.mrb[0].mxu0 %v619
      %v1074 = vpop.f32.mrb[0].mxu0
      %v1075 = vadd.f32 %v426, %v1074
      %v1076 = vpop.f32.mrb[0].mxu0
      %1077 = vmatprep.mubr.f32.mxu0 0.0
      %1078 = vmatmul.mubr.f32.gmra.mrb[0].mxu0 %v622
      %v1079 = vpop.f32.mrb[0].mxu0
      %v1080 = vadd.f32 %v426, %v1079
      %v1081 = vpop.f32.mrb[0].mxu0
      %1082 = vmatprep.mubr.f32.mxu0 0.0
      %1083 = vmatmul.mubr.f32.gmra.mrb[0].mxu0 %v625
      %v1084 = vpop.f32.mrb[0].mxu0
      %v1085 = vadd.f32 %v426, %v1084
      %v1086 = vpop.f32.mrb[0].mxu0
      %1087 = vmatprep.mubr.f32.mxu0 0.0
      %1088 = vmatmul.mubr.f32.gmra.mrb[0].mxu0 %v628
      %v1089 = vpop.f32.mrb[0].mxu0
      %v1090 = vadd.f32 %v426, %v1089
      %v1091 = vpop.f32.mrb[0].mxu0
      %1092 = vmatprep.mubr.f32.mxu0 0.0
      %1093 = vmatmul.mubr.f32.gmra.mrb[0].mxu0 %v631
      %v1094 = vpop.f32.mrb[0].mxu0
      %v1095 = vadd.f32 %v426, %v1094
      %v1096 = vpop.f32.mrb[0].mxu0
      %1097 = vmatprep.mubr.f32.mxu0 0.0
      %1098 = vmatmul.mubr.f32.gmra.mrb[0].mxu0 %v634
      %v1099 = vpop.f32.mrb[0].mxu0
      %v1100 = vadd.f32 %v426, %v1099
      %v1101 = vpop.f32.mrb[0].mxu0
      %1102 = vmatprep.mubr.f32.mxu0 0.0
      %1103 = vmatmul.mubr.f32.gmra.mrb[0].mxu0 %v637
      %v1104 = vpop.f32.mrb[0].mxu0
      %v1105 = vadd.f32 %v426, %v1104
      %v1106 = vpop.f32.mrb[0].mxu0
      %1107 = vmatprep.mubr.f32.mxu0 0.0
      %1108 = vmatmul.mubr.f32.gmra.mrb[0].mxu0 %v640
      %v1109 = vpop.f32.mrb[0].mxu0
      %v1110 = vadd.f32 %v426, %v1109
      %v1111 = vpop.f32.mrb[0].mxu0
      %1112 = vmatprep.mubr.f32.mxu0 0.0
      %1113 = vmatmul.mubr.f32.gmra.mrb[0].mxu0 %v643
      %v1114 = vpop.f32.mrb[0].mxu0
      %v1115 = vadd.f32 %v426, %v1114
      %v1116 = vpop.f32.mrb[0].mxu0
      %1117 = vmatprep.mubr.f32.mxu0 0.0
      %1118 = vmatmul.mubr.f32.gmra.mrb[0].mxu0 %v646
      %v1119 = vpop.f32.mrb[0].mxu0
      %v1120 = vadd.f32 %v426, %v1119
      %v1121 = vpop.f32.mrb[0].mxu0
      %1122 = vmatprep.mubr.f32.mxu0 0.0
      %1123 = vmatmul.mubr.f32.gmra.mrb[0].mxu0 %v649
      %v1124 = vpop.f32.mrb[0].mxu0
      %v1125 = vadd.f32 %v426, %v1124
      %v1126 = vpop.f32.mrb[0].mxu0
      %1127 = vmatprep.mubr.f32.mxu0 0.0
      %1128 = vmatmul.mubr.f32.gmra.mrb[0].mxu0 %v652
      %v1129 = vpop.f32.mrb[0].mxu0
      %v1130 = vadd.f32 %v426, %v1129
      %v1131 = vpop.f32.mrb[0].mxu0
      %1132 = vmatprep.mubr.f32.mxu0 0.0
      %1133 = vmatmul.mubr.f32.gmra.mrb[0].mxu0 %v655
      %v1134 = vpop.f32.mrb[0].mxu0
      %v1135 = vadd.f32 %v426, %v1134
      %v1136 = vpop.f32.mrb[0].mxu0
      %1137 = vmatprep.mubr.f32.mxu0 0.0
      %1138 = vmatmul.mubr.f32.gmra.mrb[0].mxu0 %v658
      %v1139 = vpop.f32.mrb[0].mxu0
      %v1140 = vadd.f32 %v426, %v1139
      %v1141 = vpop.f32.mrb[0].mxu0
      %1142 = vmatprep.mubr.f32.mxu0 0.0
      %1143 = vmatmul.mubr.f32.gmra.mrb[0].mxu0 %v661
      %v1144 = vpop.f32.mrb[0].mxu0
      %v1145 = vadd.f32 %v426, %v1144
      %v1146 = vpop.f32.mrb[0].mxu0
      %1147 = vmatprep.mubr.f32.mxu0 0.0
      %1148 = vmatmul.mubr.f32.gmra.mrb[0].mxu0 %v664
      %v1149 = vpop.f32.mrb[0].mxu0
      %v1150 = vadd.f32 %v426, %v1149
      %v1151 = vpop.f32.mrb[0].mxu0
      %1152 = vmatprep.mubr.f32.mxu0 0.0
      %1153 = vmatmul.mubr.f32.gmra.mrb[0].mxu0 %v667
      %v1154 = vpop.f32.mrb[0].mxu0
      %v1155 = vadd.f32 %v426, %v1154
      %v1156 = vpop.f32.mrb[0].mxu0
      %1157 = vmatprep.mubr.f32.mxu0 0.0
      %1158 = vmatmul.mubr.f32.gmra.mrb[0].mxu0 %v670
      %v1159 = vpop.f32.mrb[0].mxu0
      %v1160 = vadd.f32 %v426, %v1159
      %v1161 = vpop.f32.mrb[0].mxu0
      %1162 = vmatprep.mubr.f32.mxu0 0.0
      %1163 = vmatmul.mubr.f32.gmra.mrb[0].mxu0 %v673
      %v1164 = vpop.f32.mrb[0].mxu0
      %v1165 = vadd.f32 %v426, %v1164
      %v1166 = vpop.f32.mrb[0].mxu0
      %1167 = vmatprep.mubr.f32.mxu0 0.0
      %1168 = vmatmul.mubr.f32.gmra.mrb[0].mxu0 %v676
      %v1169 = vpop.f32.mrb[0].mxu0
      %v1170 = vadd.f32 %v426, %v1169
      %v1171 = vpop.f32.mrb[0].mxu0
      %1172 = vmatprep.mubr.f32.mxu0 0.0
      %1173 = vmatmul.mubr.f32.gmra.mrb[0].mxu0 %v679
      %v1174 = vpop.f32.mrb[0].mxu0
      %v1175 = vadd.f32 %v426, %v1174
      %v1176 = vpop.f32.mrb[0].mxu0
      %1177 = vmatprep.mubr.f32.mxu0 0.0
      %1178 = vmatmul.mubr.f32.gmra.mrb[0].mxu0 %v682
      %v1179 = vpop.f32.mrb[0].mxu0
      %v1180 = vadd.f32 %v426, %v1179
      %v1181 = vpop.f32.mrb[0].mxu0
      %1182 = vmatprep.mubr.f32.mxu0 0.0
      %1183 = vmatmul.mubr.f32.gmra.mrb[0].mxu0 %v685
      %v1184 = vpop.f32.mrb[0].mxu0
      %v1185 = vadd.f32 %v426, %v1184
      %v1186 = vpop.f32.mrb[0].mxu0
      %1187 = vmatprep.mubr.f32.mxu0 0.0
      %1188 = vmatmul.mubr.f32.gmra.mrb[0].mxu0 %v688
      %v1189 = vpop.f32.mrb[0].mxu0
      %v1190 = vadd.f32 %v426, %v1189
      %v1191 = vpop.f32.mrb[0].mxu0
      %1192 = vmatprep.mubr.f32.mxu0 0.0
      %1193 = vmatmul.mubr.f32.gmra.mrb[0].mxu0 %v691
      %v1194 = vpop.f32.mrb[0].mxu0
      %v1195 = vadd.f32 %v426, %v1194
      %v1196 = vpop.f32.mrb[0].mxu0
      %1197 = vdwg.mxu0
      %v1198 = vmax.f32 %v760, 0.0
      %v1199 = vmax.f32 %v765, 0.0
      %v1200 = vmax.f32 %v770, 0.0
      %v1201 = vmax.f32 %v775, 0.0
      %v1202 = vmax.f32 %v780, 0.0
      %v1203 = vmax.f32 %v785, 0.0
      %v1204 = vmax.f32 %v790, 0.0
      %v1205 = vmax.f32 %v795, 0.0
      %v1206 = vmax.f32 %v800, 0.0
      %v1207 = vmax.f32 %v805, 0.0
      %v1208 = vmax.f32 %v810, 0.0
      %v1209 = vmax.f32 %v815, 0.0
      %v1210 = vmax.f32 %v820, 0.0
      %v1211 = vmax.f32 %v825, 0.0
      %v1212 = vmax.f32 %v830, 0.0
      %v1213 = vmax.f32 %v835, 0.0
      %v1214 = vmax.f32 %v840, 0.0
      %v1215 = vmax.f32 %v845, 0.0
      %v1216 = vmax.f32 %v850, 0.0
      %v1217 = vmax.f32 %v855, 0.0
      %v1218 = vmax.f32 %v860, 0.0
      %v1219 = vmax.f32 %v865, 0.0
      %v1220 = vmax.f32 %v870, 0.0
      %v1221 = vmax.f32 %v875, 0.0
      %v1222 = vmax.f32 %v880, 0.0
      %v1223 = vmax.f32 %v885, 0.0
      %v1224 = vmax.f32 %v890, 0.0
      %v1225 = vmax.f32 %v895, 0.0
      %v1226 = vmax.f32 %v900, 0.0
      %v1227 = vmax.f32 %v905, 0.0
      %v1228 = vmax.f32 %v910, 0.0
      %v1229 = vmax.f32 %v915, 0.0
      %v1230 = vmax.f32 %v920, 0.0
      %v1231 = vmax.f32 %v925, 0.0
      %v1232 = vmax.f32 %v930, 0.0
      %v1233 = vmax.f32 %v935, 0.0
      %v1234 = vmax.f32 %v940, 0.0
      %v1235 = vmax.f32 %v945, 0.0
      %v1236 = vmax.f32 %v950, 0.0
      %v1237 = vmax.f32 %v955, 0.0
      %v1238 = vmax.f32 %v960, 0.0
      %v1239 = vmax.f32 %v965, 0.0
      %v1240 = vmax.f32 %v970, 0.0
      %v1241 = vmax.f32 %v975, 0.0
      %v1242 = vmax.f32 %v980, 0.0
      %v1243 = vmax.f32 %v985, 0.0
      %v1244 = vmax.f32 %v990, 0.0
      %v1245 = vmax.f32 %v995, 0.0
      %v1246 = vmax.f32 %v1000, 0.0
      %v1247 = vmax.f32 %v1005, 0.0
      %v1248 = vmax.f32 %v1010, 0.0
      %v1249 = vmax.f32 %v1015, 0.0
      %v1250 = vmax.f32 %v1020, 0.0
      %v1251 = vmax.f32 %v1025, 0.0
      %v1252 = vmax.f32 %v1030, 0.0
      %v1253 = vmax.f32 %v1035, 0.0
      %v1254 = vmax.f32 %v1040, 0.0
      %v1255 = vmax.f32 %v1045, 0.0
      %v1256 = vmax.f32 %v1050, 0.0
      %v1257 = vmax.f32 %v1055, 0.0
      %v1258 = vmax.f32 %v1060, 0.0
      %v1259 = vmax.f32 %v1065, 0.0
      %v1260 = vmax.f32 %v1070, 0.0
      %v1261 = vmax.f32 %v1075, 0.0
      %v1262 = vmax.f32 %v1080, 0.0
      %v1263 = vmax.f32 %v1085, 0.0
      %v1264 = vmax.f32 %v1090, 0.0
      %v1265 = vmax.f32 %v1095, 0.0
      %v1266 = vmax.f32 %v1100, 0.0
      %v1267 = vmax.f32 %v1105, 0.0
      %v1268 = vmax.f32 %v1110, 0.0
      %v1269 = vmax.f32 %v1115, 0.0
      %v1270 = vmax.f32 %v1120, 0.0
      %v1271 = vmax.f32 %v1125, 0.0
      %v1272 = vmax.f32 %v1130, 0.0
      %v1273 = vmax.f32 %v1135, 0.0
      %v1274 = vmax.f32 %v1140, 0.0
      %v1275 = vmax.f32 %v1145, 0.0
      %v1276 = vmax.f32 %v1150, 0.0
      %v1277 = vmax.f32 %v1155, 0.0
      %v1278 = vmax.f32 %v1160, 0.0
      %v1279 = vmax.f32 %v1165, 0.0
      %v1280 = vmax.f32 %v1170, 0.0
      %v1281 = vmax.f32 %v1175, 0.0
      %v1282 = vmax.f32 %v1180, 0.0
      %v1283 = vmax.f32 %v1185, 0.0
      %v1284 = vmax.f32 %v1190, 0.0
      %v1285 = vmax.f32 %v1195, 0.0
      %1286 = vst [vmem:[#allocation2] sm:$0xff] %v1198
      %1287 = vst [vmem:[#allocation2 + $0x8] sm:$0xff] %v1199
      %1288 = vst [vmem:[#allocation2 + $0x10] sm:$0xff] %v1200
      %1289 = vst [vmem:[#allocation2 + $0x18] sm:$0xff] %v1201
      %1290 = vst [vmem:[#allocation2 + $0x20] sm:$0xff] %v1202
      %1291 = vst [vmem:[#allocation2 + $0x28] sm:$0xff] %v1203
      %1292 = vst [vmem:[#allocation2 + $0x30] sm:$0xff] %v1204
      %1293 = vst [vmem:[#allocation2 + $0x38] sm:$0xff] %v1205
      %1294 = vst [vmem:[#allocation2 + $0x40] sm:$0xff] %v1206
      %1295 = vst [vmem:[#allocation2 + $0x48] sm:$0xff] %v1207
      %1296 = vst [vmem:[#allocation2 + $0x50] sm:$0xff] %v1208
      %1297 = vst [vmem:[#allocation2 + $0x58] sm:$0xff] %v1209
      %1298 = vst [vmem:[#allocation2 + $0x60] sm:$0xff] %v1210
      %1299 = vst [vmem:[#allocation2 + $0x68] sm:$0xff] %v1211
      %1300 = vst [vmem:[#allocation2 + $0x70] sm:$0xff] %v1212
      %1301 = vst [vmem:[#allocation2 + $0x78] sm:$0xff] %v1213
      %1302 = vst [vmem:[#allocation2 + $0x80] sm:$0xff] %v1214
      %1303 = vst [vmem:[#allocation2 + $0x88] sm:$0xff] %v1215
      %1304 = vst [vmem:[#allocation2 + $0x90] sm:$0xff] %v1216
      %1305 = vst [vmem:[#allocation2 + $0x98] sm:$0xff] %v1217
      %1306 = vst [vmem:[#allocation2 + $0xa0] sm:$0xff] %v1218
      %1307 = vst [vmem:[#allocation2 + $0xa8] sm:$0xff] %v1219
      %1308 = vst [vmem:[#allocation2 + $0xb0] sm:$0xff] %v1220
      %1309 = vst [vmem:[#allocation2 + $0xb8] sm:$0xff] %v1221
      %1310 = vst [vmem:[#allocation2 + $0xc0] sm:$0xff] %v1222
      %1311 = vst [vmem:[#allocation2 + $0xc8] sm:$0xff] %v1223
      %1312 = vst [vmem:[#allocation2 + $0xd0] sm:$0xff] %v1224
      %1313 = vst [vmem:[#allocation2 + $0xd8] sm:$0xff] %v1225
      %1314 = vst [vmem:[#allocation2 + $0xe0] sm:$0xff] %v1226
      %1315 = vst [vmem:[#allocation2 + $0xe8] sm:$0xff] %v1227
      %1316 = vst [vmem:[#allocation2 + $0xf0] sm:$0xff] %v1228
      %1317 = vst [vmem:[#allocation2 + $0xf8] sm:$0xff] %v1229
      %1318 = vst [vmem:[#allocation2 + $0x100] sm:$0xff] %v1230
      %1319 = vst [vmem:[#allocation2 + $0x108] sm:$0xff] %v1231
      %1320 = vst [vmem:[#allocation2 + $0x110] sm:$0xff] %v1232
      %1321 = vst [vmem:[#allocation2 + $0x118] sm:$0xff] %v1233
      %1322 = vst [vmem:[#allocation2 + $0x120] sm:$0xff] %v1234
      %1323 = vst [vmem:[#allocation2 + $0x128] sm:$0xff] %v1235
      %1324 = vst [vmem:[#allocation2 + $0x130] sm:$0xff] %v1236
      %1325 = vst [vmem:[#allocation2 + $0x138] sm:$0xff] %v1237
      %1326 = vst [vmem:[#allocation2 + $0x140] sm:$0xff] %v1238
      %1327 = vst [vmem:[#allocation2 + $0x148] sm:$0xff] %v1239
      %1328 = vst [vmem:[#allocation2 + $0x150] sm:$0xff] %v1240
      %1329 = vst [vmem:[#allocation2 + $0x158] sm:$0xff] %v1241
      %1330 = vst [vmem:[#allocation2 + $0x160] sm:$0xff] %v1242
      %1331 = vst [vmem:[#allocation2 + $0x168] sm:$0xff] %v1243
      %1332 = vst [vmem:[#allocation2 + $0x170] sm:$0xff] %v1244
      %1333 = vst [vmem:[#allocation2 + $0x178] sm:$0xff] %v1245
      %1334 = vst [vmem:[#allocation2 + $0x180] sm:$0xff] %v1246
      %1335 = vst [vmem:[#allocation2 + $0x188] sm:$0xff] %v1247
      %1336 = vst [vmem:[#allocation2 + $0x190] sm:$0xff] %v1248
      %1337 = vst [vmem:[#allocation2 + $0x198] sm:$0xff] %v1249
      %1338 = vst [vmem:[#allocation2 + $0x1a0] sm:$0xff] %v1250
      %1339 = vst [vmem:[#allocation2 + $0x1a8] sm:$0xff] %v1251
      %1340 = vst [vmem:[#allocation2 + $0x1b0] sm:$0xff] %v1252
      %1341 = vst [vmem:[#allocation2 + $0x1b8] sm:$0xff] %v1253
      %1342 = vst [vmem:[#allocation2 + $0x1c0] sm:$0xff] %v1254
      %1343 = vst [vmem:[#allocation2 + $0x1c8] sm:$0xff] %v1255
      %1344 = vst [vmem:[#allocation2 + $0x1d0] sm:$0xff] %v1256
      %1345 = vst [vmem:[#allocation2 + $0x1d8] sm:$0xff] %v1257
      %1346 = vst [vmem:[#allocation2 + $0x1e0] sm:$0xff] %v1258
      %1347 = vst [vmem:[#allocation2 + $0x1e8] sm:$0xff] %v1259
      %1348 = vst [vmem:[#allocation2 + $0x1f0] sm:$0xff] %v1260
      %1349 = vst [vmem:[#allocation2 + $0x1f8] sm:$0xff] %v1261
      %1350 = vst [vmem:[#allocation2 + $0x200] sm:$0xff] %v1262
      %1351 = vst [vmem:[#allocation2 + $0x208] sm:$0xff] %v1263
      %1352 = vst [vmem:[#allocation2 + $0x210] sm:$0xff] %v1264
      %1353 = vst [vmem:[#allocation2 + $0x218] sm:$0xff] %v1265
      %1354 = vst [vmem:[#allocation2 + $0x220] sm:$0xff] %v1266
      %1355 = vst [vmem:[#allocation2 + $0x228] sm:$0xff] %v1267
      %1356 = vst [vmem:[#allocation2 + $0x230] sm:$0xff] %v1268
      %1357 = vst [vmem:[#allocation2 + $0x238] sm:$0xff] %v1269
      %1358 = vst [vmem:[#allocation2 + $0x240] sm:$0xff] %v1270
      %1359 = vst [vmem:[#allocation2 + $0x248] sm:$0xff] %v1271
      %1360 = vst [vmem:[#allocation2 + $0x250] sm:$0xff] %v1272
      %1361 = vst [vmem:[#allocation2 + $0x258] sm:$0xff] %v1273
      %1362 = vst [vmem:[#allocation2 + $0x260] sm:$0xff] %v1274
      %1363 = vst [vmem:[#allocation2 + $0x268] sm:$0xff] %v1275
      %1364 = vst [vmem:[#allocation2 + $0x270] sm:$0xff] %v1276
      %1365 = vst [vmem:[#allocation2 + $0x278] sm:$0xff] %v1277
      %1366 = vst [vmem:[#allocation2 + $0x280] sm:$0xff] %v1278
      %1367 = vst [vmem:[#allocation2 + $0x288] sm:$0xff] %v1279
      %1368 = vst [vmem:[#allocation2 + $0x290] sm:$0xff] %v1280
      %1369 = vst [vmem:[#allocation2 + $0x298] sm:$0xff] %v1281
      %1370 = vst [vmem:[#allocation2 + $0x2a0] sm:$0xff] %v1282
      %1371 = vst [vmem:[#allocation2 + $0x2a8] sm:$0xff] %v1283
      %1372 = vst [vmem:[#allocation2 + $0x2b0] sm:$0xff] %v1284
      %1373 = vst [vmem:[#allocation2 + $0x2b8] sm:$0xff] %v1285
      %v1374 = vld [vmem:[#allocation2] sm:$0xff]
      %v1375 = vld [vmem:[#allocation2 + $0x8] sm:$0xff]
      %v1376 = vld [vmem:[#allocation2 + $0x10] sm:$0xff]
      %v1377 = vld [vmem:[#allocation2 + $0x18] sm:$0xff]
      %v1378 = vld [vmem:[#allocation2 + $0x20] sm:$0xff]
      %v1379 = vld [vmem:[#allocation2 + $0x28] sm:$0xff]
      %v1380 = vld [vmem:[#allocation2 + $0x30] sm:$0xff]
      %v1381 = vld [vmem:[#allocation2 + $0x38] sm:$0xff]
      %v1382 = vld [vmem:[#allocation2 + $0x40] sm:$0xff]
      %v1383 = vld [vmem:[#allocation2 + $0x48] sm:$0xff]
      %v1384 = vld [vmem:[#allocation2 + $0x50] sm:$0xff]
      %v1385 = vld [vmem:[#allocation2 + $0x58] sm:$0xff]
      %v1386 = vld [vmem:[#allocation2 + $0x60] sm:$0xff]
      %v1387 = vld [vmem:[#allocation2 + $0x68] sm:$0xff]
      %v1388 = vld [vmem:[#allocation2 + $0x70] sm:$0xff]
      %v1389 = vld [vmem:[#allocation2 + $0x78] sm:$0xff]
      %v1390 = vld [vmem:[#allocation2 + $0x80] sm:$0xff]
      %v1391 = vld [vmem:[#allocation2 + $0x88] sm:$0xff]
      %v1392 = vld [vmem:[#allocation2 + $0x90] sm:$0xff]
      %v1393 = vld [vmem:[#allocation2 + $0x98] sm:$0xff]
      %v1394 = vld [vmem:[#allocation2 + $0xa0] sm:$0xff]
      %v1395 = vld [vmem:[#allocation2 + $0xa8] sm:$0xff]
      %v1396 = vld [vmem:[%s3] sm:$0xff]
      %v1397 = vld [vmem:[%s3 + $0x8] sm:$0xff]
      %v1398 = vld [vmem:[%s3 + $0x10] sm:$0xff]
      %v1399 = vld [vmem:[%s3 + $0x18] sm:$0xff]
      %v1400 = vld [vmem:[%s3 + $0x20] sm:$0xff]
      %v1401 = vld [vmem:[%s3 + $0x28] sm:$0xff]
      %v1402 = vld [vmem:[%s3 + $0x30] sm:$0xff]
      %v1403 = vld [vmem:[%s3 + $0x38] sm:$0xff]
      %v1404 = vld [vmem:[%s3 + $0x40] sm:$0xff]
      %v1405 = vld [vmem:[%s3 + $0x48] sm:$0xff]
      %v1406 = vld [vmem:[%s3 + $0x50] sm:$0xff]
      %v1407 = vld [vmem:[%s3 + $0x58] sm:$0xff]
      %v1408 = vld [vmem:[%s3 + $0x60] sm:$0xff]
      %v1409 = vld [vmem:[%s3 + $0x68] sm:$0xff]
      %v1410 = vld [vmem:[%s3 + $0x70] sm:$0xff]
      %v1411 = vld [vmem:[%s3 + $0x78] sm:$0xff]
      %1412 = vmatprep.subr.mxu0 0.0
      %1413 = vmatpush1.msra.mxu0 %v1396
      %1414 = vmatprep.subr.mxu0 0.0
      %1415 = vmatpush1.msra.mxu0 %v1397
      %1416 = vmatprep.subr.mxu0 0.0
      %1417 = vmatpush1.msra.mxu0 %v1398
      %1418 = vmatprep.subr.mxu0 0.0
      %1419 = vmatpush1.msra.mxu0 %v1399
      %1420 = vmatprep.subr.mxu0 0.0
      %1421 = vmatpush1.msra.mxu0 %v1400
      %1422 = vmatprep.subr.mxu0 0.0
      %1423 = vmatpush1.msra.mxu0 %v1401
      %1424 = vmatprep.subr.mxu0 0.0
      %1425 = vmatpush1.msra.mxu0 %v1402
      %1426 = vmatprep.subr.mxu0 0.0
      %1427 = vmatpush1.msra.mxu0 %v1403
      %1428 = vmatprep.subr.mxu0 0.0
      %1429 = vmatpush1.msra.mxu0 %v1404
      %1430 = vmatprep.subr.mxu0 0.0
      %1431 = vmatpush1.msra.mxu0 %v1405
      %1432 = vmatprep.subr.mxu0 0.0
      %1433 = vmatpush1.msra.mxu0 %v1406
      %1434 = vmatprep.subr.mxu0 0.0
      %1435 = vmatpush1.msra.mxu0 %v1407
      %1436 = vmatprep.subr.mxu0 0.0
      %1437 = vmatpush1.msra.mxu0 %v1408
      %1438 = vmatprep.subr.mxu0 0.0
      %1439 = vmatpush1.msra.mxu0 %v1409
      %1440 = vmatprep.subr.mxu0 0.0
      %1441 = vmatpush1.msra.mxu0 %v1410
      %1442 = vmatprep.subr.mxu0 0.0
      %1443 = vmatpush1.msra.mxu0 %v1411
      %1444 = vmatprep.subr.mxu0 0.0
      %1445 = vmatpush1.msra.mxu0 0.0
      %1446 = vmatprep.subr.mxu0 0.0
      %1447 = vmatpush1.msra.mxu0 0.0
      %1448 = vmatprep.subr.mxu0 0.0
      %1449 = vmatpush1.msra.mxu0 0.0
      %1450 = vmatprep.subr.mxu0 0.0
      %1451 = vmatpush1.msra.mxu0 0.0
      %1452 = vmatprep.subr.mxu0 0.0
      %1453 = vmatpush1.msra.mxu0 0.0
      %1454 = vmatprep.subr.mxu0 0.0
      %1455 = vmatpush1.msra.mxu0 0.0
      %1456 = vmatprep.subr.mxu0 0.0
      %1457 = vmatpush1.msra.mxu0 0.0
      %1458 = vmatprep.subr.mxu0 0.0
      %1459 = vmatpush1.msra.mxu0 0.0
      %1460 = vmatprep.subr.mxu0 0.0
      %1461 = vmatpush1.msra.mxu0 0.0
      %1462 = vmatprep.subr.mxu0 0.0
      %1463 = vmatpush1.msra.mxu0 0.0
      %1464 = vmatprep.subr.mxu0 0.0
      %1465 = vmatpush1.msra.mxu0 0.0
      %1466 = vmatprep.subr.mxu0 0.0
      %1467 = vmatpush1.msra.mxu0 0.0
      %1468 = vmatprep.subr.mxu0 0.0
      %1469 = vmatpush1.msra.mxu0 0.0
      %1470 = vmatprep.subr.mxu0 0.0
      %1471 = vmatpush1.msra.mxu0 0.0
      %1472 = vmatprep.subr.mxu0 0.0
      %1473 = vmatpush1.msra.mxu0 0.0
      %1474 = vmatprep.subr.mxu0 0.0
      %1475 = vmatpush1.msra.mxu0 0.0
      %1476 = vmatprep.mubr.f32.mxu0 0.0
      %1477 = vmatmul.mubr.f32.gmra.mrb[0].mxu0 %v1374
      %v1478 = vpop.f32.mrb[0].mxu0
      %v1479 = vadd.f32 0.0, %v1478
      %v1480 = vpop.f32.mrb[0].mxu0
      %1481 = vmatprep.mubr.f32.mxu0 0.0
      %1482 = vmatmul.mubr.f32.gmra.mrb[0].mxu0 %v1375
      %v1483 = vpop.f32.mrb[0].mxu0
      %v1484 = vadd.f32 0.0, %v1483
      %v1485 = vpop.f32.mrb[0].mxu0
      %1486 = vmatprep.mubr.f32.mxu0 0.0
      %1487 = vmatmul.mubr.f32.gmra.mrb[0].mxu0 %v1376
      %v1488 = vpop.f32.mrb[0].mxu0
      %v1489 = vadd.f32 0.0, %v1488
      %v1490 = vpop.f32.mrb[0].mxu0
      %1491 = vmatprep.mubr.f32.mxu0 0.0
      %1492 = vmatmul.mubr.f32.gmra.mrb[0].mxu0 %v1377
      %v1493 = vpop.f32.mrb[0].mxu0
      %v1494 = vadd.f32 0.0, %v1493
      %v1495 = vpop.f32.mrb[0].mxu0
      %1496 = vmatprep.mubr.f32.mxu0 0.0
      %1497 = vmatmul.mubr.f32.gmra.mrb[0].mxu0 %v1378
      %v1498 = vpop.f32.mrb[0].mxu0
      %v1499 = vadd.f32 0.0, %v1498
      %v1500 = vpop.f32.mrb[0].mxu0
      %1501 = vmatprep.mubr.f32.mxu0 0.0
      %1502 = vmatmul.mubr.f32.gmra.mrb[0].mxu0 %v1379
      %v1503 = vpop.f32.mrb[0].mxu0
      %v1504 = vadd.f32 0.0, %v1503
      %v1505 = vpop.f32.mrb[0].mxu0
      %1506 = vmatprep.mubr.f32.mxu0 0.0
      %1507 = vmatmul.mubr.f32.gmra.mrb[0].mxu0 %v1380
      %v1508 = vpop.f32.mrb[0].mxu0
      %v1509 = vadd.f32 0.0, %v1508
      %v1510 = vpop.f32.mrb[0].mxu0
      %1511 = vmatprep.mubr.f32.mxu0 0.0
      %1512 = vmatmul.mubr.f32.gmra.mrb[0].mxu0 %v1381
      %v1513 = vpop.f32.mrb[0].mxu0
      %v1514 = vadd.f32 0.0, %v1513
      %v1515 = vpop.f32.mrb[0].mxu0
      %1516 = vmatprep.mubr.f32.mxu0 0.0
      %1517 = vmatmul.mubr.f32.gmra.mrb[0].mxu0 %v1382
      %v1518 = vpop.f32.mrb[0].mxu0
      %v1519 = vadd.f32 0.0, %v1518
      %v1520 = vpop.f32.mrb[0].mxu0
      %1521 = vmatprep.mubr.f32.mxu0 0.0
      %1522 = vmatmul.mubr.f32.gmra.mrb[0].mxu0 %v1383
      %v1523 = vpop.f32.mrb[0].mxu0
      %v1524 = vadd.f32 0.0, %v1523
      %v1525 = vpop.f32.mrb[0].mxu0
      %1526 = vmatprep.mubr.f32.mxu0 0.0
      %1527 = vmatmul.mubr.f32.gmra.mrb[0].mxu0 %v1384
      %v1528 = vpop.f32.mrb[0].mxu0
      %v1529 = vadd.f32 0.0, %v1528
      %v1530 = vpop.f32.mrb[0].mxu0
      %1531 = vmatprep.mubr.f32.mxu0 0.0
      %1532 = vmatmul.mubr.f32.gmra.mrb[0].mxu0 %v1385
      %v1533 = vpop.f32.mrb[0].mxu0
      %v1534 = vadd.f32 0.0, %v1533
      %v1535 = vpop.f32.mrb[0].mxu0
      %1536 = vmatprep.mubr.f32.mxu0 0.0
      %1537 = vmatmul.mubr.f32.gmra.mrb[0].mxu0 %v1386
      %v1538 = vpop.f32.mrb[0].mxu0
      %v1539 = vadd.f32 0.0, %v1538
      %v1540 = vpop.f32.mrb[0].mxu0
      %1541 = vmatprep.mubr.f32.mxu0 0.0
      %1542 = vmatmul.mubr.f32.gmra.mrb[0].mxu0 %v1387
      %v1543 = vpop.f32.mrb[0].mxu0
      %v1544 = vadd.f32 0.0, %v1543
      %v1545 = vpop.f32.mrb[0].mxu0
      %1546 = vmatprep.mubr.f32.mxu0 0.0
      %1547 = vmatmul.mubr.f32.gmra.mrb[0].mxu0 %v1388
      %v1548 = vpop.f32.mrb[0].mxu0
      %v1549 = vadd.f32 0.0, %v1548
      %v1550 = vpop.f32.mrb[0].mxu0
      %1551 = vmatprep.mubr.f32.mxu0 0.0
      %1552 = vmatmul.mubr.f32.gmra.mrb[0].mxu0 %v1389
      %v1553 = vpop.f32.mrb[0].mxu0
      %v1554 = vadd.f32 0.0, %v1553
      %v1555 = vpop.f32.mrb[0].mxu0
      %1556 = vmatprep.mubr.f32.mxu0 0.0
      %1557 = vmatmul.mubr.f32.gmra.mrb[0].mxu0 %v1390
      %v1558 = vpop.f32.mrb[0].mxu0
      %v1559 = vadd.f32 0.0, %v1558
      %v1560 = vpop.f32.mrb[0].mxu0
      %1561 = vmatprep.mubr.f32.mxu0 0.0
      %1562 = vmatmul.mubr.f32.gmra.mrb[0].mxu0 %v1391
      %v1563 = vpop.f32.mrb[0].mxu0
      %v1564 = vadd.f32 0.0, %v1563
      %v1565 = vpop.f32.mrb[0].mxu0
      %1566 = vmatprep.mubr.f32.mxu0 0.0
      %1567 = vmatmul.mubr.f32.gmra.mrb[0].mxu0 %v1392
      %v1568 = vpop.f32.mrb[0].mxu0
      %v1569 = vadd.f32 0.0, %v1568
      %v1570 = vpop.f32.mrb[0].mxu0
      %1571 = vmatprep.mubr.f32.mxu0 0.0
      %1572 = vmatmul.mubr.f32.gmra.mrb[0].mxu0 %v1393
      %v1573 = vpop.f32.mrb[0].mxu0
      %v1574 = vadd.f32 0.0, %v1573
      %v1575 = vpop.f32.mrb[0].mxu0
      %1576 = vmatprep.mubr.f32.mxu0 0.0
      %1577 = vmatmul.mubr.f32.gmra.mrb[0].mxu0 %v1394
      %v1578 = vpop.f32.mrb[0].mxu0
      %v1579 = vadd.f32 0.0, %v1578
      %v1580 = vpop.f32.mrb[0].mxu0
      %1581 = vmatprep.mubr.f32.mxu0 0.0
      %1582 = vmatmul.mubr.f32.gmra.mrb[0].mxu0 %v1395
      %v1583 = vpop.f32.mrb[0].mxu0
      %v1584 = vadd.f32 0.0, %v1583
      %v1585 = vpop.f32.mrb[0].mxu0
      %1586 = vdwg.mxu0
      %1587 = vst [vmem:[#allocation3] sm:$0xff] %v1479
      %1588 = vst [vmem:[#allocation3 + $0x8] sm:$0xff] %v1484
      %1589 = vst [vmem:[#allocation3 + $0x10] sm:$0xff] %v1489
      %1590 = vst [vmem:[#allocation3 + $0x18] sm:$0xff] %v1494
      %1591 = vst [vmem:[#allocation3 + $0x20] sm:$0xff] %v1499
      %1592 = vst [vmem:[#allocation3 + $0x28] sm:$0xff] %v1504
      %1593 = vst [vmem:[#allocation3 + $0x30] sm:$0xff] %v1509
      %1594 = vst [vmem:[#allocation3 + $0x38] sm:$0xff] %v1514
      %1595 = vst [vmem:[#allocation3 + $0x40] sm:$0xff] %v1519
      %1596 = vst [vmem:[#allocation3 + $0x48] sm:$0xff] %v1524
      %1597 = vst [vmem:[#allocation3 + $0x50] sm:$0xff] %v1529
      %1598 = vst [vmem:[#allocation3 + $0x58] sm:$0xff] %v1534
      %1599 = vst [vmem:[#allocation3 + $0x60] sm:$0xff] %v1539
      %1600 = vst [vmem:[#allocation3 + $0x68] sm:$0xff] %v1544
      %1601 = vst [vmem:[#allocation3 + $0x70] sm:$0xff] %v1549
      %1602 = vst [vmem:[#allocation3 + $0x78] sm:$0xff] %v1554
      %1603 = vst [vmem:[#allocation3 + $0x80] sm:$0xff] %v1559
      %1604 = vst [vmem:[#allocation3 + $0x88] sm:$0xff] %v1564
      %1605 = vst [vmem:[#allocation3 + $0x90] sm:$0xff] %v1569
      %1606 = vst [vmem:[#allocation3 + $0x98] sm:$0xff] %v1574
      %1607 = vst [vmem:[#allocation3 + $0xa0] sm:$0xff] %v1579
      %1608 = vst [vmem:[#allocation3 + $0xa8] sm:$0xff] %v1584
      %v1609 = vld [vmem:[#allocation2 + $0xb0] sm:$0xff]
      %v1610 = vld [vmem:[#allocation2 + $0xb8] sm:$0xff]
      %v1611 = vld [vmem:[#allocation2 + $0xc0] sm:$0xff]
      %v1612 = vld [vmem:[#allocation2 + $0xc8] sm:$0xff]
      %v1613 = vld [vmem:[#allocation2 + $0xd0] sm:$0xff]
      %v1614 = vld [vmem:[#allocation2 + $0xd8] sm:$0xff]
      %v1615 = vld [vmem:[#allocation2 + $0xe0] sm:$0xff]
      %v1616 = vld [vmem:[#allocation2 + $0xe8] sm:$0xff]
      %v1617 = vld [vmem:[#allocation2 + $0xf0] sm:$0xff]
      %v1618 = vld [vmem:[#allocation2 + $0xf8] sm:$0xff]
      %v1619 = vld [vmem:[#allocation2 + $0x100] sm:$0xff]
      %v1620 = vld [vmem:[#allocation2 + $0x108] sm:$0xff]
      %v1621 = vld [vmem:[#allocation2 + $0x110] sm:$0xff]
      %v1622 = vld [vmem:[#allocation2 + $0x118] sm:$0xff]
      %v1623 = vld [vmem:[#allocation2 + $0x120] sm:$0xff]
      %v1624 = vld [vmem:[#allocation2 + $0x128] sm:$0xff]
      %v1625 = vld [vmem:[#allocation2 + $0x130] sm:$0xff]
      %v1626 = vld [vmem:[#allocation2 + $0x138] sm:$0xff]
      %v1627 = vld [vmem:[#allocation2 + $0x140] sm:$0xff]
      %v1628 = vld [vmem:[#allocation2 + $0x148] sm:$0xff]
      %v1629 = vld [vmem:[#allocation2 + $0x150] sm:$0xff]
      %v1630 = vld [vmem:[#allocation2 + $0x158] sm:$0xff]
      %s1631 = scalar_lea.vmem %s3, 128
      %v1632 = vld [vmem:[%s1631] sm:$0xff]
      %v1633 = vld [vmem:[%s1631 + $0x8] sm:$0xff]
      %v1634 = vld [vmem:[%s1631 + $0x10] sm:$0xff]
      %v1635 = vld [vmem:[%s1631 + $0x18] sm:$0xff]
      %v1636 = vld [vmem:[%s1631 + $0x20] sm:$0xff]
      %v1637 = vld [vmem:[%s1631 + $0x28] sm:$0xff]
      %v1638 = vld [vmem:[%s1631 + $0x30] sm:$0xff]
      %v1639 = vld [vmem:[%s1631 + $0x38] sm:$0xff]
      %v1640 = vld [vmem:[%s1631 + $0x40] sm:$0xff]
      %v1641 = vld [vmem:[%s1631 + $0x48] sm:$0xff]
      %v1642 = vld [vmem:[%s1631 + $0x50] sm:$0xff]
      %v1643 = vld [vmem:[%s1631 + $0x58] sm:$0xff]
      %v1644 = vld [vmem:[%s1631 + $0x60] sm:$0xff]
      %v1645 = vld [vmem:[%s1631 + $0x68] sm:$0xff]
      %v1646 = vld [vmem:[%s1631 + $0x70] sm:$0xff]
      %v1647 = vld [vmem:[%s1631 + $0x78] sm:$0xff]
      %1648 = vmatprep.subr.mxu0 0.0
      %1649 = vmatpush1.msra.mxu0 %v1632
      %1650 = vmatprep.subr.mxu0 0.0
      %1651 = vmatpush1.msra.mxu0 %v1633
      %1652 = vmatprep.subr.mxu0 0.0
      %1653 = vmatpush1.msra.mxu0 %v1634
      %1654 = vmatprep.subr.mxu0 0.0
      %1655 = vmatpush1.msra.mxu0 %v1635
      %1656 = vmatprep.subr.mxu0 0.0
      %1657 = vmatpush1.msra.mxu0 %v1636
      %1658 = vmatprep.subr.mxu0 0.0
      %1659 = vmatpush1.msra.mxu0 %v1637
      %1660 = vmatprep.subr.mxu0 0.0
      %1661 = vmatpush1.msra.mxu0 %v1638
      %1662 = vmatprep.subr.mxu0 0.0
      %1663 = vmatpush1.msra.mxu0 %v1639
      %1664 = vmatprep.subr.mxu0 0.0
      %1665 = vmatpush1.msra.mxu0 %v1640
      %1666 = vmatprep.subr.mxu0 0.0
      %1667 = vmatpush1.msra.mxu0 %v1641
      %1668 = vmatprep.subr.mxu0 0.0
      %1669 = vmatpush1.msra.mxu0 %v1642
      %1670 = vmatprep.subr.mxu0 0.0
      %1671 = vmatpush1.msra.mxu0 %v1643
      %1672 = vmatprep.subr.mxu0 0.0
      %1673 = vmatpush1.msra.mxu0 %v1644
      %1674 = vmatprep.subr.mxu0 0.0
      %1675 = vmatpush1.msra.mxu0 %v1645
      %1676 = vmatprep.subr.mxu0 0.0
      %1677 = vmatpush1.msra.mxu0 %v1646
      %1678 = vmatprep.subr.mxu0 0.0
      %1679 = vmatpush1.msra.mxu0 %v1647
      %1680 = vmatprep.subr.mxu0 0.0
      %1681 = vmatpush1.msra.mxu0 0.0
      %1682 = vmatprep.subr.mxu0 0.0
      %1683 = vmatpush1.msra.mxu0 0.0
      %1684 = vmatprep.subr.mxu0 0.0
      %1685 = vmatpush1.msra.mxu0 0.0
      %1686 = vmatprep.subr.mxu0 0.0
      %1687 = vmatpush1.msra.mxu0 0.0
      %1688 = vmatprep.subr.mxu0 0.0
      %1689 = vmatpush1.msra.mxu0 0.0
      %1690 = vmatprep.subr.mxu0 0.0
      %1691 = vmatpush1.msra.mxu0 0.0
      %1692 = vmatprep.subr.mxu0 0.0
      %1693 = vmatpush1.msra.mxu0 0.0
      %1694 = vmatprep.subr.mxu0 0.0
      %1695 = vmatpush1.msra.mxu0 0.0
      %1696 = vmatprep.subr.mxu0 0.0
      %1697 = vmatpush1.msra.mxu0 0.0
      %1698 = vmatprep.subr.mxu0 0.0
      %1699 = vmatpush1.msra.mxu0 0.0
      %1700 = vmatprep.subr.mxu0 0.0
      %1701 = vmatpush1.msra.mxu0 0.0
      %1702 = vmatprep.subr.mxu0 0.0
      %1703 = vmatpush1.msra.mxu0 0.0
      %1704 = vmatprep.subr.mxu0 0.0
      %1705 = vmatpush1.msra.mxu0 0.0
      %1706 = vmatprep.subr.mxu0 0.0
      %1707 = vmatpush1.msra.mxu0 0.0
      %1708 = vmatprep.subr.mxu0 0.0
      %1709 = vmatpush1.msra.mxu0 0.0
      %1710 = vmatprep.subr.mxu0 0.0
      %1711 = vmatpush1.msra.mxu0 0.0
      %1712 = vmatprep.mubr.f32.mxu0 0.0
      %1713 = vmatmul.mubr.f32.gmra.mrb[0].mxu0 %v1609
      %v1714 = vpop.f32.mrb[0].mxu0
      %v1715 = vadd.f32 0.0, %v1714
      %v1716 = vpop.f32.mrb[0].mxu0
      %1717 = vmatprep.mubr.f32.mxu0 0.0
      %1718 = vmatmul.mubr.f32.gmra.mrb[0].mxu0 %v1610
      %v1719 = vpop.f32.mrb[0].mxu0
      %v1720 = vadd.f32 0.0, %v1719
      %v1721 = vpop.f32.mrb[0].mxu0
      %1722 = vmatprep.mubr.f32.mxu0 0.0
      %1723 = vmatmul.mubr.f32.gmra.mrb[0].mxu0 %v1611
      %v1724 = vpop.f32.mrb[0].mxu0
      %v1725 = vadd.f32 0.0, %v1724
      %v1726 = vpop.f32.mrb[0].mxu0
      %1727 = vmatprep.mubr.f32.mxu0 0.0
      %1728 = vmatmul.mubr.f32.gmra.mrb[0].mxu0 %v1612
      %v1729 = vpop.f32.mrb[0].mxu0
      %v1730 = vadd.f32 0.0, %v1729
      %v1731 = vpop.f32.mrb[0].mxu0
      %1732 = vmatprep.mubr.f32.mxu0 0.0
      %1733 = vmatmul.mubr.f32.gmra.mrb[0].mxu0 %v1613
      %v1734 = vpop.f32.mrb[0].mxu0
      %v1735 = vadd.f32 0.0, %v1734
      %v1736 = vpop.f32.mrb[0].mxu0
      %1737 = vmatprep.mubr.f32.mxu0 0.0
      %1738 = vmatmul.mubr.f32.gmra.mrb[0].mxu0 %v1614
      %v1739 = vpop.f32.mrb[0].mxu0
      %v1740 = vadd.f32 0.0, %v1739
      %v1741 = vpop.f32.mrb[0].mxu0
      %1742 = vmatprep.mubr.f32.mxu0 0.0
      %1743 = vmatmul.mubr.f32.gmra.mrb[0].mxu0 %v1615
      %v1744 = vpop.f32.mrb[0].mxu0
      %v1745 = vadd.f32 0.0, %v1744
      %v1746 = vpop.f32.mrb[0].mxu0
      %1747 = vmatprep.mubr.f32.mxu0 0.0
      %1748 = vmatmul.mubr.f32.gmra.mrb[0].mxu0 %v1616
      %v1749 = vpop.f32.mrb[0].mxu0
      %v1750 = vadd.f32 0.0, %v1749
      %v1751 = vpop.f32.mrb[0].mxu0
      %1752 = vmatprep.mubr.f32.mxu0 0.0
      %1753 = vmatmul.mubr.f32.gmra.mrb[0].mxu0 %v1617
      %v1754 = vpop.f32.mrb[0].mxu0
      %v1755 = vadd.f32 0.0, %v1754
      %v1756 = vpop.f32.mrb[0].mxu0
      %1757 = vmatprep.mubr.f32.mxu0 0.0
      %1758 = vmatmul.mubr.f32.gmra.mrb[0].mxu0 %v1618
      %v1759 = vpop.f32.mrb[0].mxu0
      %v1760 = vadd.f32 0.0, %v1759
      %v1761 = vpop.f32.mrb[0].mxu0
      %1762 = vmatprep.mubr.f32.mxu0 0.0
      %1763 = vmatmul.mubr.f32.gmra.mrb[0].mxu0 %v1619
      %v1764 = vpop.f32.mrb[0].mxu0
      %v1765 = vadd.f32 0.0, %v1764
      %v1766 = vpop.f32.mrb[0].mxu0
      %1767 = vmatprep.mubr.f32.mxu0 0.0
      %1768 = vmatmul.mubr.f32.gmra.mrb[0].mxu0 %v1620
      %v1769 = vpop.f32.mrb[0].mxu0
      %v1770 = vadd.f32 0.0, %v1769
      %v1771 = vpop.f32.mrb[0].mxu0
      %1772 = vmatprep.mubr.f32.mxu0 0.0
      %1773 = vmatmul.mubr.f32.gmra.mrb[0].mxu0 %v1621
      %v1774 = vpop.f32.mrb[0].mxu0
      %v1775 = vadd.f32 0.0, %v1774
      %v1776 = vpop.f32.mrb[0].mxu0
      %1777 = vmatprep.mubr.f32.mxu0 0.0
      %1778 = vmatmul.mubr.f32.gmra.mrb[0].mxu0 %v1622
      %v1779 = vpop.f32.mrb[0].mxu0
      %v1780 = vadd.f32 0.0, %v1779
      %v1781 = vpop.f32.mrb[0].mxu0
      %1782 = vmatprep.mubr.f32.mxu0 0.0
      %1783 = vmatmul.mubr.f32.gmra.mrb[0].mxu0 %v1623
      %v1784 = vpop.f32.mrb[0].mxu0
      %v1785 = vadd.f32 0.0, %v1784
      %v1786 = vpop.f32.mrb[0].mxu0
      %1787 = vmatprep.mubr.f32.mxu0 0.0
      %1788 = vmatmul.mubr.f32.gmra.mrb[0].mxu0 %v1624
      %v1789 = vpop.f32.mrb[0].mxu0
      %v1790 = vadd.f32 0.0, %v1789
      %v1791 = vpop.f32.mrb[0].mxu0
      %1792 = vmatprep.mubr.f32.mxu0 0.0
      %1793 = vmatmul.mubr.f32.gmra.mrb[0].mxu0 %v1625
      %v1794 = vpop.f32.mrb[0].mxu0
      %v1795 = vadd.f32 0.0, %v1794
      %v1796 = vpop.f32.mrb[0].mxu0
      %1797 = vmatprep.mubr.f32.mxu0 0.0
      %1798 = vmatmul.mubr.f32.gmra.mrb[0].mxu0 %v1626
      %v1799 = vpop.f32.mrb[0].mxu0
      %v1800 = vadd.f32 0.0, %v1799
      %v1801 = vpop.f32.mrb[0].mxu0
      %1802 = vmatprep.mubr.f32.mxu0 0.0
      %1803 = vmatmul.mubr.f32.gmra.mrb[0].mxu0 %v1627
      %v1804 = vpop.f32.mrb[0].mxu0
      %v1805 = vadd.f32 0.0, %v1804
      %v1806 = vpop.f32.mrb[0].mxu0
      %1807 = vmatprep.mubr.f32.mxu0 0.0
      %1808 = vmatmul.mubr.f32.gmra.mrb[0].mxu0 %v1628
      %v1809 = vpop.f32.mrb[0].mxu0
      %v1810 = vadd.f32 0.0, %v1809
      %v1811 = vpop.f32.mrb[0].mxu0
      %1812 = vmatprep.mubr.f32.mxu0 0.0
      %1813 = vmatmul.mubr.f32.gmra.mrb[0].mxu0 %v1629
      %v1814 = vpop.f32.mrb[0].mxu0
      %v1815 = vadd.f32 0.0, %v1814
      %v1816 = vpop.f32.mrb[0].mxu0
      %1817 = vmatprep.mubr.f32.mxu0 0.0
      %1818 = vmatmul.mubr.f32.gmra.mrb[0].mxu0 %v1630
      %v1819 = vpop.f32.mrb[0].mxu0
      %v1820 = vadd.f32 0.0, %v1819
      %v1821 = vpop.f32.mrb[0].mxu0
      %1822 = vdwg.mxu0
      %s1823 = scalar_lea.vmem [#allocation3], 176
      %1824 = vst [vmem:[%s1823] sm:$0xff] %v1715
      %1825 = vst [vmem:[%s1823 + $0x8] sm:$0xff] %v1720
      %1826 = vst [vmem:[%s1823 + $0x10] sm:$0xff] %v1725
      %1827 = vst [vmem:[%s1823 + $0x18] sm:$0xff] %v1730
      %1828 = vst [vmem:[%s1823 + $0x20] sm:$0xff] %v1735
      %1829 = vst [vmem:[%s1823 + $0x28] sm:$0xff] %v1740
      %1830 = vst [vmem:[%s1823 + $0x30] sm:$0xff] %v1745
      %1831 = vst [vmem:[%s1823 + $0x38] sm:$0xff] %v1750
      %1832 = vst [vmem:[%s1823 + $0x40] sm:$0xff] %v1755
      %1833 = vst [vmem:[%s1823 + $0x48] sm:$0xff] %v1760
      %1834 = vst [vmem:[%s1823 + $0x50] sm:$0xff] %v1765
      %1835 = vst [vmem:[%s1823 + $0x58] sm:$0xff] %v1770
      %1836 = vst [vmem:[%s1823 + $0x60] sm:$0xff] %v1775
      %1837 = vst [vmem:[%s1823 + $0x68] sm:$0xff] %v1780
      %1838 = vst [vmem:[%s1823 + $0x70] sm:$0xff] %v1785
      %1839 = vst [vmem:[%s1823 + $0x78] sm:$0xff] %v1790
      %1840 = vst [vmem:[%s1823 + $0x80] sm:$0xff] %v1795
      %1841 = vst [vmem:[%s1823 + $0x88] sm:$0xff] %v1800
      %1842 = vst [vmem:[%s1823 + $0x90] sm:$0xff] %v1805
      %1843 = vst [vmem:[%s1823 + $0x98] sm:$0xff] %v1810
      %1844 = vst [vmem:[%s1823 + $0xa0] sm:$0xff] %v1815
      %1845 = vst [vmem:[%s1823 + $0xa8] sm:$0xff] %v1820
      %v1846 = vld [vmem:[#allocation2] sm:$0xff]
      %v1847 = vld [vmem:[#allocation2 + $0x8] sm:$0xff]
      %v1848 = vld [vmem:[#allocation2 + $0x10] sm:$0xff]
      %v1849 = vld [vmem:[#allocation2 + $0x18] sm:$0xff]
      %v1850 = vld [vmem:[#allocation2 + $0x20] sm:$0xff]
      %v1851 = vld [vmem:[#allocation2 + $0x28] sm:$0xff]
      %v1852 = vld [vmem:[#allocation2 + $0x30] sm:$0xff]
      %v1853 = vld [vmem:[#allocation2 + $0x38] sm:$0xff]
      %v1854 = vld [vmem:[#allocation2 + $0x40] sm:$0xff]
      %v1855 = vld [vmem:[#allocation2 + $0x48] sm:$0xff]
      %v1856 = vld [vmem:[#allocation2 + $0x50] sm:$0xff]
      %v1857 = vld [vmem:[#allocation2 + $0x58] sm:$0xff]
      %v1858 = vld [vmem:[#allocation2 + $0x60] sm:$0xff]
      %v1859 = vld [vmem:[#allocation2 + $0x68] sm:$0xff]
      %v1860 = vld [vmem:[#allocation2 + $0x70] sm:$0xff]
      %v1861 = vld [vmem:[#allocation2 + $0x78] sm:$0xff]
      %v1862 = vld [vmem:[#allocation2 + $0x80] sm:$0xff]
      %v1863 = vld [vmem:[#allocation2 + $0x88] sm:$0xff]
      %v1864 = vld [vmem:[#allocation2 + $0x90] sm:$0xff]
      %v1865 = vld [vmem:[#allocation2 + $0x98] sm:$0xff]
      %v1866 = vld [vmem:[#allocation2 + $0xa0] sm:$0xff]
      %v1867 = vld [vmem:[#allocation2 + $0xa8] sm:$0xff]
      %s1868 = scalar_lea.vmem %s3, 256
      %v1869 = vld [vmem:[%s1868] sm:$0xff]
      %v1870 = vld [vmem:[%s1868 + $0x8] sm:$0xff]
      %v1871 = vld [vmem:[%s1868 + $0x10] sm:$0xff]
      %v1872 = vld [vmem:[%s1868 + $0x18] sm:$0xff]
      %v1873 = vld [vmem:[%s1868 + $0x20] sm:$0xff]
      %v1874 = vld [vmem:[%s1868 + $0x28] sm:$0xff]
      %v1875 = vld [vmem:[%s1868 + $0x30] sm:$0xff]
      %v1876 = vld [vmem:[%s1868 + $0x38] sm:$0xff]
      %v1877 = vld [vmem:[%s1868 + $0x40] sm:$0xff]
      %v1878 = vld [vmem:[%s1868 + $0x48] sm:$0xff]
      %v1879 = vld [vmem:[%s1868 + $0x50] sm:$0xff]
      %v1880 = vld [vmem:[%s1868 + $0x58] sm:$0xff]
      %v1881 = vld [vmem:[%s1868 + $0x60] sm:$0xff]
      %v1882 = vld [vmem:[%s1868 + $0x68] sm:$0xff]
      %v1883 = vld [vmem:[%s1868 + $0x70] sm:$0xff]
      %v1884 = vld [vmem:[%s1868 + $0x78] sm:$0xff]
      %1885 = vmatprep.subr.mxu0 0.0
      %1886 = vmatpush1.msra.mxu0 %v1869
      %1887 = vmatprep.subr.mxu0 0.0
      %1888 = vmatpush1.msra.mxu0 %v1870
      %1889 = vmatprep.subr.mxu0 0.0
      %1890 = vmatpush1.msra.mxu0 %v1871
      %1891 = vmatprep.subr.mxu0 0.0
      %1892 = vmatpush1.msra.mxu0 %v1872
      %1893 = vmatprep.subr.mxu0 0.0
      %1894 = vmatpush1.msra.mxu0 %v1873
      %1895 = vmatprep.subr.mxu0 0.0
      %1896 = vmatpush1.msra.mxu0 %v1874
      %1897 = vmatprep.subr.mxu0 0.0
      %1898 = vmatpush1.msra.mxu0 %v1875
      %1899 = vmatprep.subr.mxu0 0.0
      %1900 = vmatpush1.msra.mxu0 %v1876
      %1901 = vmatprep.subr.mxu0 0.0
      %1902 = vmatpush1.msra.mxu0 %v1877
      %1903 = vmatprep.subr.mxu0 0.0
      %1904 = vmatpush1.msra.mxu0 %v1878
      %1905 = vmatprep.subr.mxu0 0.0
      %1906 = vmatpush1.msra.mxu0 %v1879
      %1907 = vmatprep.subr.mxu0 0.0
      %1908 = vmatpush1.msra.mxu0 %v1880
      %1909 = vmatprep.subr.mxu0 0.0
      %1910 = vmatpush1.msra.mxu0 %v1881
      %1911 = vmatprep.subr.mxu0 0.0
      %1912 = vmatpush1.msra.mxu0 %v1882
      %1913 = vmatprep.subr.mxu0 0.0
      %1914 = vmatpush1.msra.mxu0 %v1883
      %1915 = vmatprep.subr.mxu0 0.0
      %1916 = vmatpush1.msra.mxu0 %v1884
      %1917 = vmatprep.subr.mxu0 0.0
      %1918 = vmatpush1.msra.mxu0 0.0
      %1919 = vmatprep.subr.mxu0 0.0
      %1920 = vmatpush1.msra.mxu0 0.0
      %1921 = vmatprep.subr.mxu0 0.0
      %1922 = vmatpush1.msra.mxu0 0.0
      %1923 = vmatprep.subr.mxu0 0.0
      %1924 = vmatpush1.msra.mxu0 0.0
      %1925 = vmatprep.subr.mxu0 0.0
      %1926 = vmatpush1.msra.mxu0 0.0
      %1927 = vmatprep.subr.mxu0 0.0
      %1928 = vmatpush1.msra.mxu0 0.0
      %1929 = vmatprep.subr.mxu0 0.0
      %1930 = vmatpush1.msra.mxu0 0.0
      %1931 = vmatprep.subr.mxu0 0.0
      %1932 = vmatpush1.msra.mxu0 0.0
      %1933 = vmatprep.subr.mxu0 0.0
      %1934 = vmatpush1.msra.mxu0 0.0
      %1935 = vmatprep.subr.mxu0 0.0
      %1936 = vmatpush1.msra.mxu0 0.0
      %1937 = vmatprep.subr.mxu0 0.0
      %1938 = vmatpush1.msra.mxu0 0.0
      %1939 = vmatprep.subr.mxu0 0.0
      %1940 = vmatpush1.msra.mxu0 0.0
      %1941 = vmatprep.subr.mxu0 0.0
      %1942 = vmatpush1.msra.mxu0 0.0
      %1943 = vmatprep.subr.mxu0 0.0
      %1944 = vmatpush1.msra.mxu0 0.0
      %1945 = vmatprep.subr.mxu0 0.0
      %1946 = vmatpush1.msra.mxu0 0.0
      %1947 = vmatprep.subr.mxu0 0.0
      %1948 = vmatpush1.msra.mxu0 0.0
      %1949 = vmatprep.mubr.f32.mxu0 0.0
      %1950 = vmatmul.mubr.f32.gmra.mrb[0].mxu0 %v1846
      %v1951 = vpop.f32.mrb[0].mxu0
      %v1952 = vadd.f32 0.0, %v1951
      %v1953 = vpop.f32.mrb[0].mxu0
      %1954 = vmatprep.mubr.f32.mxu0 0.0
      %1955 = vmatmul.mubr.f32.gmra.mrb[0].mxu0 %v1847
      %v1956 = vpop.f32.mrb[0].mxu0
      %v1957 = vadd.f32 0.0, %v1956
      %v1958 = vpop.f32.mrb[0].mxu0
      %1959 = vmatprep.mubr.f32.mxu0 0.0
      %1960 = vmatmul.mubr.f32.gmra.mrb[0].mxu0 %v1848
      %v1961 = vpop.f32.mrb[0].mxu0
      %v1962 = vadd.f32 0.0, %v1961
      %v1963 = vpop.f32.mrb[0].mxu0
      %1964 = vmatprep.mubr.f32.mxu0 0.0
      %1965 = vmatmul.mubr.f32.gmra.mrb[0].mxu0 %v1849
      %v1966 = vpop.f32.mrb[0].mxu0
      %v1967 = vadd.f32 0.0, %v1966
      %v1968 = vpop.f32.mrb[0].mxu0
      %1969 = vmatprep.mubr.f32.mxu0 0.0
      %1970 = vmatmul.mubr.f32.gmra.mrb[0].mxu0 %v1850
      %v1971 = vpop.f32.mrb[0].mxu0
      %v1972 = vadd.f32 0.0, %v1971
      %v1973 = vpop.f32.mrb[0].mxu0
      %1974 = vmatprep.mubr.f32.mxu0 0.0
      %1975 = vmatmul.mubr.f32.gmra.mrb[0].mxu0 %v1851
      %v1976 = vpop.f32.mrb[0].mxu0
      %v1977 = vadd.f32 0.0, %v1976
      %v1978 = vpop.f32.mrb[0].mxu0
      %1979 = vmatprep.mubr.f32.mxu0 0.0
      %1980 = vmatmul.mubr.f32.gmra.mrb[0].mxu0 %v1852
      %v1981 = vpop.f32.mrb[0].mxu0
      %v1982 = vadd.f32 0.0, %v1981
      %v1983 = vpop.f32.mrb[0].mxu0
      %1984 = vmatprep.mubr.f32.mxu0 0.0
      %1985 = vmatmul.mubr.f32.gmra.mrb[0].mxu0 %v1853
      %v1986 = vpop.f32.mrb[0].mxu0
      %v1987 = vadd.f32 0.0, %v1986
      %v1988 = vpop.f32.mrb[0].mxu0
      %1989 = vmatprep.mubr.f32.mxu0 0.0
      %1990 = vmatmul.mubr.f32.gmra.mrb[0].mxu0 %v1854
      %v1991 = vpop.f32.mrb[0].mxu0
      %v1992 = vadd.f32 0.0, %v1991
      %v1993 = vpop.f32.mrb[0].mxu0
      %1994 = vmatprep.mubr.f32.mxu0 0.0
      %1995 = vmatmul.mubr.f32.gmra.mrb[0].mxu0 %v1855
      %v1996 = vpop.f32.mrb[0].mxu0
      %v1997 = vadd.f32 0.0, %v1996
      %v1998 = vpop.f32.mrb[0].mxu0
      %1999 = vmatprep.mubr.f32.mxu0 0.0
      %2000 = vmatmul.mubr.f32.gmra.mrb[0].mxu0 %v1856
      %v2001 = vpop.f32.mrb[0].mxu0
      %v2002 = vadd.f32 0.0, %v2001
      %v2003 = vpop.f32.mrb[0].mxu0
      %2004 = vmatprep.mubr.f32.mxu0 0.0
      %2005 = vmatmul.mubr.f32.gmra.mrb[0].mxu0 %v1857
      %v2006 = vpop.f32.mrb[0].mxu0
      %v2007 = vadd.f32 0.0, %v2006
      %v2008 = vpop.f32.mrb[0].mxu0
      %2009 = vmatprep.mubr.f32.mxu0 0.0
      %2010 = vmatmul.mubr.f32.gmra.mrb[0].mxu0 %v1858
      %v2011 = vpop.f32.mrb[0].mxu0
      %v2012 = vadd.f32 0.0, %v2011
      %v2013 = vpop.f32.mrb[0].mxu0
      %2014 = vmatprep.mubr.f32.mxu0 0.0
      %2015 = vmatmul.mubr.f32.gmra.mrb[0].mxu0 %v1859
      %v2016 = vpop.f32.mrb[0].mxu0
      %v2017 = vadd.f32 0.0, %v2016
      %v2018 = vpop.f32.mrb[0].mxu0
      %2019 = vmatprep.mubr.f32.mxu0 0.0
      %2020 = vmatmul.mubr.f32.gmra.mrb[0].mxu0 %v1860
      %v2021 = vpop.f32.mrb[0].mxu0
      %v2022 = vadd.f32 0.0, %v2021
      %v2023 = vpop.f32.mrb[0].mxu0
      %2024 = vmatprep.mubr.f32.mxu0 0.0
      %2025 = vmatmul.mubr.f32.gmra.mrb[0].mxu0 %v1861
      %v2026 = vpop.f32.mrb[0].mxu0
      %v2027 = vadd.f32 0.0, %v2026
      %v2028 = vpop.f32.mrb[0].mxu0
      %2029 = vmatprep.mubr.f32.mxu0 0.0
      %2030 = vmatmul.mubr.f32.gmra.mrb[0].mxu0 %v1862
      %v2031 = vpop.f32.mrb[0].mxu0
      %v2032 = vadd.f32 0.0, %v2031
      %v2033 = vpop.f32.mrb[0].mxu0
      %2034 = vmatprep.mubr.f32.mxu0 0.0
      %2035 = vmatmul.mubr.f32.gmra.mrb[0].mxu0 %v1863
      %v2036 = vpop.f32.mrb[0].mxu0
      %v2037 = vadd.f32 0.0, %v2036
      %v2038 = vpop.f32.mrb[0].mxu0
      %2039 = vmatprep.mubr.f32.mxu0 0.0
      %2040 = vmatmul.mubr.f32.gmra.mrb[0].mxu0 %v1864
      %v2041 = vpop.f32.mrb[0].mxu0
      %v2042 = vadd.f32 0.0, %v2041
      %v2043 = vpop.f32.mrb[0].mxu0
      %2044 = vmatprep.mubr.f32.mxu0 0.0
      %2045 = vmatmul.mubr.f32.gmra.mrb[0].mxu0 %v1865
      %v2046 = vpop.f32.mrb[0].mxu0
      %v2047 = vadd.f32 0.0, %v2046
      %v2048 = vpop.f32.mrb[0].mxu0
      %2049 = vmatprep.mubr.f32.mxu0 0.0
      %2050 = vmatmul.mubr.f32.gmra.mrb[0].mxu0 %v1866
      %v2051 = vpop.f32.mrb[0].mxu0
      %v2052 = vadd.f32 0.0, %v2051
      %v2053 = vpop.f32.mrb[0].mxu0
      %2054 = vmatprep.mubr.f32.mxu0 0.0
      %2055 = vmatmul.mubr.f32.gmra.mrb[0].mxu0 %v1867
      %v2056 = vpop.f32.mrb[0].mxu0
      %v2057 = vadd.f32 0.0, %v2056
      %v2058 = vpop.f32.mrb[0].mxu0
      %2059 = vdwg.mxu0
      %s2060 = scalar_lea.vmem [#allocation3], 352
      %2061 = vst [vmem:[%s2060] sm:$0xff] %v1952
      %2062 = vst [vmem:[%s2060 + $0x8] sm:$0xff] %v1957
      %2063 = vst [vmem:[%s2060 + $0x10] sm:$0xff] %v1962
      %2064 = vst [vmem:[%s2060 + $0x18] sm:$0xff] %v1967
      %2065 = vst [vmem:[%s2060 + $0x20] sm:$0xff] %v1972
      %2066 = vst [vmem:[%s2060 + $0x28] sm:$0xff] %v1977
      %2067 = vst [vmem:[%s2060 + $0x30] sm:$0xff] %v1982
      %2068 = vst [vmem:[%s2060 + $0x38] sm:$0xff] %v1987
      %2069 = vst [vmem:[%s2060 + $0x40] sm:$0xff] %v1992
      %2070 = vst [vmem:[%s2060 + $0x48] sm:$0xff] %v1997
      %2071 = vst [vmem:[%s2060 + $0x50] sm:$0xff] %v2002
      %2072 = vst [vmem:[%s2060 + $0x58] sm:$0xff] %v2007
      %2073 = vst [vmem:[%s2060 + $0x60] sm:$0xff] %v2012
      %2074 = vst [vmem:[%s2060 + $0x68] sm:$0xff] %v2017
      %2075 = vst [vmem:[%s2060 + $0x70] sm:$0xff] %v2022
      %2076 = vst [vmem:[%s2060 + $0x78] sm:$0xff] %v2027
      %2077 = vst [vmem:[%s2060 + $0x80] sm:$0xff] %v2032
      %2078 = vst [vmem:[%s2060 + $0x88] sm:$0xff] %v2037
      %2079 = vst [vmem:[%s2060 + $0x90] sm:$0xff] %v2042
      %2080 = vst [vmem:[%s2060 + $0x98] sm:$0xff] %v2047
      %2081 = vst [vmem:[%s2060 + $0xa0] sm:$0xff] %v2052
      %2082 = vst [vmem:[%s2060 + $0xa8] sm:$0xff] %v2057
      %v2083 = vld [vmem:[#allocation2 + $0xb0] sm:$0xff]
      %v2084 = vld [vmem:[#allocation2 + $0xb8] sm:$0xff]
      %v2085 = vld [vmem:[#allocation2 + $0xc0] sm:$0xff]
      %v2086 = vld [vmem:[#allocation2 + $0xc8] sm:$0xff]
      %v2087 = vld [vmem:[#allocation2 + $0xd0] sm:$0xff]
      %v2088 = vld [vmem:[#allocation2 + $0xd8] sm:$0xff]
      %v2089 = vld [vmem:[#allocation2 + $0xe0] sm:$0xff]
      %v2090 = vld [vmem:[#allocation2 + $0xe8] sm:$0xff]
      %v2091 = vld [vmem:[#allocation2 + $0xf0] sm:$0xff]
      %v2092 = vld [vmem:[#allocation2 + $0xf8] sm:$0xff]
      %v2093 = vld [vmem:[#allocation2 + $0x100] sm:$0xff]
      %v2094 = vld [vmem:[#allocation2 + $0x108] sm:$0xff]
      %v2095 = vld [vmem:[#allocation2 + $0x110] sm:$0xff]
      %v2096 = vld [vmem:[#allocation2 + $0x118] sm:$0xff]
      %v2097 = vld [vmem:[#allocation2 + $0x120] sm:$0xff]
      %v2098 = vld [vmem:[#allocation2 + $0x128] sm:$0xff]
      %v2099 = vld [vmem:[#allocation2 + $0x130] sm:$0xff]
      %v2100 = vld [vmem:[#allocation2 + $0x138] sm:$0xff]
      %v2101 = vld [vmem:[#allocation2 + $0x140] sm:$0xff]
      %v2102 = vld [vmem:[#allocation2 + $0x148] sm:$0xff]
      %v2103 = vld [vmem:[#allocation2 + $0x150] sm:$0xff]
      %v2104 = vld [vmem:[#allocation2 + $0x158] sm:$0xff]
      %s2105 = scalar_lea.vmem %s3, 384
      %v2106 = vld [vmem:[%s2105] sm:$0xff]
      %v2107 = vld [vmem:[%s2105 + $0x8] sm:$0xff]
      %v2108 = vld [vmem:[%s2105 + $0x10] sm:$0xff]
      %v2109 = vld [vmem:[%s2105 + $0x18] sm:$0xff]
      %v2110 = vld [vmem:[%s2105 + $0x20] sm:$0xff]
      %v2111 = vld [vmem:[%s2105 + $0x28] sm:$0xff]
      %v2112 = vld [vmem:[%s2105 + $0x30] sm:$0xff]
      %v2113 = vld [vmem:[%s2105 + $0x38] sm:$0xff]
      %v2114 = vld [vmem:[%s2105 + $0x40] sm:$0xff]
      %v2115 = vld [vmem:[%s2105 + $0x48] sm:$0xff]
      %v2116 = vld [vmem:[%s2105 + $0x50] sm:$0xff]
      %v2117 = vld [vmem:[%s2105 + $0x58] sm:$0xff]
      %v2118 = vld [vmem:[%s2105 + $0x60] sm:$0xff]
      %v2119 = vld [vmem:[%s2105 + $0x68] sm:$0xff]
      %v2120 = vld [vmem:[%s2105 + $0x70] sm:$0xff]
      %v2121 = vld [vmem:[%s2105 + $0x78] sm:$0xff]
      %2122 = vmatprep.subr.mxu0 0.0
      %2123 = vmatpush1.msra.mxu0 %v2106
      %2124 = vmatprep.subr.mxu0 0.0
      %2125 = vmatpush1.msra.mxu0 %v2107
      %2126 = vmatprep.subr.mxu0 0.0
      %2127 = vmatpush1.msra.mxu0 %v2108
      %2128 = vmatprep.subr.mxu0 0.0
      %2129 = vmatpush1.msra.mxu0 %v2109
      %2130 = vmatprep.subr.mxu0 0.0
      %2131 = vmatpush1.msra.mxu0 %v2110
      %2132 = vmatprep.subr.mxu0 0.0
      %2133 = vmatpush1.msra.mxu0 %v2111
      %2134 = vmatprep.subr.mxu0 0.0
      %2135 = vmatpush1.msra.mxu0 %v2112
      %2136 = vmatprep.subr.mxu0 0.0
      %2137 = vmatpush1.msra.mxu0 %v2113
      %2138 = vmatprep.subr.mxu0 0.0
      %2139 = vmatpush1.msra.mxu0 %v2114
      %2140 = vmatprep.subr.mxu0 0.0
      %2141 = vmatpush1.msra.mxu0 %v2115
      %2142 = vmatprep.subr.mxu0 0.0
      %2143 = vmatpush1.msra.mxu0 %v2116
      %2144 = vmatprep.subr.mxu0 0.0
      %2145 = vmatpush1.msra.mxu0 %v2117
      %2146 = vmatprep.subr.mxu0 0.0
      %2147 = vmatpush1.msra.mxu0 %v2118
      %2148 = vmatprep.subr.mxu0 0.0
      %2149 = vmatpush1.msra.mxu0 %v2119
      %2150 = vmatprep.subr.mxu0 0.0
      %2151 = vmatpush1.msra.mxu0 %v2120
      %2152 = vmatprep.subr.mxu0 0.0
      %2153 = vmatpush1.msra.mxu0 %v2121
      %2154 = vmatprep.subr.mxu0 0.0
      %2155 = vmatpush1.msra.mxu0 0.0
      %2156 = vmatprep.subr.mxu0 0.0
      %2157 = vmatpush1.msra.mxu0 0.0
      %2158 = vmatprep.subr.mxu0 0.0
      %2159 = vmatpush1.msra.mxu0 0.0
      %2160 = vmatprep.subr.mxu0 0.0
      %2161 = vmatpush1.msra.mxu0 0.0
      %2162 = vmatprep.subr.mxu0 0.0
      %2163 = vmatpush1.msra.mxu0 0.0
      %2164 = vmatprep.subr.mxu0 0.0
      %2165 = vmatpush1.msra.mxu0 0.0
      %2166 = vmatprep.subr.mxu0 0.0
      %2167 = vmatpush1.msra.mxu0 0.0
      %2168 = vmatprep.subr.mxu0 0.0
      %2169 = vmatpush1.msra.mxu0 0.0
      %2170 = vmatprep.subr.mxu0 0.0
      %2171 = vmatpush1.msra.mxu0 0.0
      %2172 = vmatprep.subr.mxu0 0.0
      %2173 = vmatpush1.msra.mxu0 0.0
      %2174 = vmatprep.subr.mxu0 0.0
      %2175 = vmatpush1.msra.mxu0 0.0
      %2176 = vmatprep.subr.mxu0 0.0
      %2177 = vmatpush1.msra.mxu0 0.0
      %2178 = vmatprep.subr.mxu0 0.0
      %2179 = vmatpush1.msra.mxu0 0.0
      %2180 = vmatprep.subr.mxu0 0.0
      %2181 = vmatpush1.msra.mxu0 0.0
      %2182 = vmatprep.subr.mxu0 0.0
      %2183 = vmatpush1.msra.mxu0 0.0
      %2184 = vmatprep.subr.mxu0 0.0
      %2185 = vmatpush1.msra.mxu0 0.0
      %2186 = vmatprep.mubr.f32.mxu0 0.0
      %2187 = vmatmul.mubr.f32.gmra.mrb[0].mxu0 %v2083
      %v2188 = vpop.f32.mrb[0].mxu0
      %v2189 = vadd.f32 0.0, %v2188
      %v2190 = vpop.f32.mrb[0].mxu0
      %2191 = vmatprep.mubr.f32.mxu0 0.0
      %2192 = vmatmul.mubr.f32.gmra.mrb[0].mxu0 %v2084
      %v2193 = vpop.f32.mrb[0].mxu0
      %v2194 = vadd.f32 0.0, %v2193
      %v2195 = vpop.f32.mrb[0].mxu0
      %2196 = vmatprep.mubr.f32.mxu0 0.0
      %2197 = vmatmul.mubr.f32.gmra.mrb[0].mxu0 %v2085
      %v2198 = vpop.f32.mrb[0].mxu0
      %v2199 = vadd.f32 0.0, %v2198
      %v2200 = vpop.f32.mrb[0].mxu0
      %2201 = vmatprep.mubr.f32.mxu0 0.0
      %2202 = vmatmul.mubr.f32.gmra.mrb[0].mxu0 %v2086
      %v2203 = vpop.f32.mrb[0].mxu0
      %v2204 = vadd.f32 0.0, %v2203
      %v2205 = vpop.f32.mrb[0].mxu0
      %2206 = vmatprep.mubr.f32.mxu0 0.0
      %2207 = vmatmul.mubr.f32.gmra.mrb[0].mxu0 %v2087
      %v2208 = vpop.f32.mrb[0].mxu0
      %v2209 = vadd.f32 0.0, %v2208
      %v2210 = vpop.f32.mrb[0].mxu0
      %2211 = vmatprep.mubr.f32.mxu0 0.0
      %2212 = vmatmul.mubr.f32.gmra.mrb[0].mxu0 %v2088
      %v2213 = vpop.f32.mrb[0].mxu0
      %v2214 = vadd.f32 0.0, %v2213
      %v2215 = vpop.f32.mrb[0].mxu0
      %2216 = vmatprep.mubr.f32.mxu0 0.0
      %2217 = vmatmul.mubr.f32.gmra.mrb[0].mxu0 %v2089
      %v2218 = vpop.f32.mrb[0].mxu0
      %v2219 = vadd.f32 0.0, %v2218
      %v2220 = vpop.f32.mrb[0].mxu0
      %2221 = vmatprep.mubr.f32.mxu0 0.0
      %2222 = vmatmul.mubr.f32.gmra.mrb[0].mxu0 %v2090
      %v2223 = vpop.f32.mrb[0].mxu0
      %v2224 = vadd.f32 0.0, %v2223
      %v2225 = vpop.f32.mrb[0].mxu0
      %2226 = vmatprep.mubr.f32.mxu0 0.0
      %2227 = vmatmul.mubr.f32.gmra.mrb[0].mxu0 %v2091
      %v2228 = vpop.f32.mrb[0].mxu0
      %v2229 = vadd.f32 0.0, %v2228
      %v2230 = vpop.f32.mrb[0].mxu0
      %2231 = vmatprep.mubr.f32.mxu0 0.0
      %2232 = vmatmul.mubr.f32.gmra.mrb[0].mxu0 %v2092
      %v2233 = vpop.f32.mrb[0].mxu0
      %v2234 = vadd.f32 0.0, %v2233
      %v2235 = vpop.f32.mrb[0].mxu0
      %2236 = vmatprep.mubr.f32.mxu0 0.0
      %2237 = vmatmul.mubr.f32.gmra.mrb[0].mxu0 %v2093
      %v2238 = vpop.f32.mrb[0].mxu0
      %v2239 = vadd.f32 0.0, %v2238
      %v2240 = vpop.f32.mrb[0].mxu0
      %2241 = vmatprep.mubr.f32.mxu0 0.0
      %2242 = vmatmul.mubr.f32.gmra.mrb[0].mxu0 %v2094
      %v2243 = vpop.f32.mrb[0].mxu0
      %v2244 = vadd.f32 0.0, %v2243
      %v2245 = vpop.f32.mrb[0].mxu0
      %2246 = vmatprep.mubr.f32.mxu0 0.0
      %2247 = vmatmul.mubr.f32.gmra.mrb[0].mxu0 %v2095
      %v2248 = vpop.f32.mrb[0].mxu0
      %v2249 = vadd.f32 0.0, %v2248
      %v2250 = vpop.f32.mrb[0].mxu0
      %2251 = vmatprep.mubr.f32.mxu0 0.0
      %2252 = vmatmul.mubr.f32.gmra.mrb[0].mxu0 %v2096
      %v2253 = vpop.f32.mrb[0].mxu0
      %v2254 = vadd.f32 0.0, %v2253
      %v2255 = vpop.f32.mrb[0].mxu0
      %2256 = vmatprep.mubr.f32.mxu0 0.0
      %2257 = vmatmul.mubr.f32.gmra.mrb[0].mxu0 %v2097
      %v2258 = vpop.f32.mrb[0].mxu0
      %v2259 = vadd.f32 0.0, %v2258
      %v2260 = vpop.f32.mrb[0].mxu0
      %2261 = vmatprep.mubr.f32.mxu0 0.0
      %2262 = vmatmul.mubr.f32.gmra.mrb[0].mxu0 %v2098
      %v2263 = vpop.f32.mrb[0].mxu0
      %v2264 = vadd.f32 0.0, %v2263
      %v2265 = vpop.f32.mrb[0].mxu0
      %2266 = vmatprep.mubr.f32.mxu0 0.0
      %2267 = vmatmul.mubr.f32.gmra.mrb[0].mxu0 %v2099
      %v2268 = vpop.f32.mrb[0].mxu0
      %v2269 = vadd.f32 0.0, %v2268
      %v2270 = vpop.f32.mrb[0].mxu0
      %2271 = vmatprep.mubr.f32.mxu0 0.0
      %2272 = vmatmul.mubr.f32.gmra.mrb[0].mxu0 %v2100
      %v2273 = vpop.f32.mrb[0].mxu0
      %v2274 = vadd.f32 0.0, %v2273
      %v2275 = vpop.f32.mrb[0].mxu0
      %2276 = vmatprep.mubr.f32.mxu0 0.0
      %2277 = vmatmul.mubr.f32.gmra.mrb[0].mxu0 %v2101
      %v2278 = vpop.f32.mrb[0].mxu0
      %v2279 = vadd.f32 0.0, %v2278
      %v2280 = vpop.f32.mrb[0].mxu0
      %2281 = vmatprep.mubr.f32.mxu0 0.0
      %2282 = vmatmul.mubr.f32.gmra.mrb[0].mxu0 %v2102
      %v2283 = vpop.f32.mrb[0].mxu0
      %v2284 = vadd.f32 0.0, %v2283
      %v2285 = vpop.f32.mrb[0].mxu0
      %2286 = vmatprep.mubr.f32.mxu0 0.0
      %2287 = vmatmul.mubr.f32.gmra.mrb[0].mxu0 %v2103
      %v2288 = vpop.f32.mrb[0].mxu0
      %v2289 = vadd.f32 0.0, %v2288
      %v2290 = vpop.f32.mrb[0].mxu0
      %2291 = vmatprep.mubr.f32.mxu0 0.0
      %2292 = vmatmul.mubr.f32.gmra.mrb[0].mxu0 %v2104
      %v2293 = vpop.f32.mrb[0].mxu0
      %v2294 = vadd.f32 0.0, %v2293
      %v2295 = vpop.f32.mrb[0].mxu0
      %2296 = vdwg.mxu0
      %s2297 = scalar_lea.vmem [#allocation3], 528
      %2298 = vst [vmem:[%s2297] sm:$0xff] %v2189
      %2299 = vst [vmem:[%s2297 + $0x8] sm:$0xff] %v2194
      %2300 = vst [vmem:[%s2297 + $0x10] sm:$0xff] %v2199
      %2301 = vst [vmem:[%s2297 + $0x18] sm:$0xff] %v2204
      %2302 = vst [vmem:[%s2297 + $0x20] sm:$0xff] %v2209
      %2303 = vst [vmem:[%s2297 + $0x28] sm:$0xff] %v2214
      %2304 = vst [vmem:[%s2297 + $0x30] sm:$0xff] %v2219
      %2305 = vst [vmem:[%s2297 + $0x38] sm:$0xff] %v2224
      %2306 = vst [vmem:[%s2297 + $0x40] sm:$0xff] %v2229
      %2307 = vst [vmem:[%s2297 + $0x48] sm:$0xff] %v2234
      %2308 = vst [vmem:[%s2297 + $0x50] sm:$0xff] %v2239
      %2309 = vst [vmem:[%s2297 + $0x58] sm:$0xff] %v2244
      %2310 = vst [vmem:[%s2297 + $0x60] sm:$0xff] %v2249
      %2311 = vst [vmem:[%s2297 + $0x68] sm:$0xff] %v2254
      %2312 = vst [vmem:[%s2297 + $0x70] sm:$0xff] %v2259
      %2313 = vst [vmem:[%s2297 + $0x78] sm:$0xff] %v2264
      %2314 = vst [vmem:[%s2297 + $0x80] sm:$0xff] %v2269
      %2315 = vst [vmem:[%s2297 + $0x88] sm:$0xff] %v2274
      %2316 = vst [vmem:[%s2297 + $0x90] sm:$0xff] %v2279
      %2317 = vst [vmem:[%s2297 + $0x98] sm:$0xff] %v2284
      %2318 = vst [vmem:[%s2297 + $0xa0] sm:$0xff] %v2289
      %2319 = vst [vmem:[%s2297 + $0xa8] sm:$0xff] %v2294
      %v2320 = vld [vmem:[#allocation2 + $0x160] sm:$0xff]
      %v2321 = vld [vmem:[#allocation2 + $0x168] sm:$0xff]
      %v2322 = vld [vmem:[#allocation2 + $0x170] sm:$0xff]
      %v2323 = vld [vmem:[#allocation2 + $0x178] sm:$0xff]
      %v2324 = vld [vmem:[#allocation2 + $0x180] sm:$0xff]
      %v2325 = vld [vmem:[#allocation2 + $0x188] sm:$0xff]
      %v2326 = vld [vmem:[#allocation2 + $0x190] sm:$0xff]
      %v2327 = vld [vmem:[#allocation2 + $0x198] sm:$0xff]
      %v2328 = vld [vmem:[#allocation2 + $0x1a0] sm:$0xff]
      %v2329 = vld [vmem:[#allocation2 + $0x1a8] sm:$0xff]
      %v2330 = vld [vmem:[#allocation2 + $0x1b0] sm:$0xff]
      %v2331 = vld [vmem:[#allocation2 + $0x1b8] sm:$0xff]
      %v2332 = vld [vmem:[#allocation2 + $0x1c0] sm:$0xff]
      %v2333 = vld [vmem:[#allocation2 + $0x1c8] sm:$0xff]
      %v2334 = vld [vmem:[#allocation2 + $0x1d0] sm:$0xff]
      %v2335 = vld [vmem:[#allocation2 + $0x1d8] sm:$0xff]
      %v2336 = vld [vmem:[#allocation2 + $0x1e0] sm:$0xff]
      %v2337 = vld [vmem:[#allocation2 + $0x1e8] sm:$0xff]
      %v2338 = vld [vmem:[#allocation2 + $0x1f0] sm:$0xff]
      %v2339 = vld [vmem:[#allocation2 + $0x1f8] sm:$0xff]
      %v2340 = vld [vmem:[#allocation2 + $0x200] sm:$0xff]
      %v2341 = vld [vmem:[#allocation2 + $0x208] sm:$0xff]
      %s2342 = scalar_lea.vmem %s3, 512
      %v2343 = vld [vmem:[%s2342] sm:$0xff]
      %v2344 = vld [vmem:[%s2342 + $0x8] sm:$0xff]
      %v2345 = vld [vmem:[%s2342 + $0x10] sm:$0xff]
      %v2346 = vld [vmem:[%s2342 + $0x18] sm:$0xff]
      %v2347 = vld [vmem:[%s2342 + $0x20] sm:$0xff]
      %v2348 = vld [vmem:[%s2342 + $0x28] sm:$0xff]
      %v2349 = vld [vmem:[%s2342 + $0x30] sm:$0xff]
      %v2350 = vld [vmem:[%s2342 + $0x38] sm:$0xff]
      %v2351 = vld [vmem:[%s2342 + $0x40] sm:$0xff]
      %v2352 = vld [vmem:[%s2342 + $0x48] sm:$0xff]
      %v2353 = vld [vmem:[%s2342 + $0x50] sm:$0xff]
      %v2354 = vld [vmem:[%s2342 + $0x58] sm:$0xff]
      %v2355 = vld [vmem:[%s2342 + $0x60] sm:$0xff]
      %v2356 = vld [vmem:[%s2342 + $0x68] sm:$0xff]
      %v2357 = vld [vmem:[%s2342 + $0x70] sm:$0xff]
      %v2358 = vld [vmem:[%s2342 + $0x78] sm:$0xff]
      %2359 = vmatprep.subr.mxu0 0.0
      %2360 = vmatpush1.msra.mxu0 %v2343
      %2361 = vmatprep.subr.mxu0 0.0
      %2362 = vmatpush1.msra.mxu0 %v2344
      %2363 = vmatprep.subr.mxu0 0.0
      %2364 = vmatpush1.msra.mxu0 %v2345
      %2365 = vmatprep.subr.mxu0 0.0
      %2366 = vmatpush1.msra.mxu0 %v2346
      %2367 = vmatprep.subr.mxu0 0.0
      %2368 = vmatpush1.msra.mxu0 %v2347
      %2369 = vmatprep.subr.mxu0 0.0
      %2370 = vmatpush1.msra.mxu0 %v2348
      %2371 = vmatprep.subr.mxu0 0.0
      %2372 = vmatpush1.msra.mxu0 %v2349
      %2373 = vmatprep.subr.mxu0 0.0
      %2374 = vmatpush1.msra.mxu0 %v2350
      %2375 = vmatprep.subr.mxu0 0.0
      %2376 = vmatpush1.msra.mxu0 %v2351
      %2377 = vmatprep.subr.mxu0 0.0
      %2378 = vmatpush1.msra.mxu0 %v2352
      %2379 = vmatprep.subr.mxu0 0.0
      %2380 = vmatpush1.msra.mxu0 %v2353
      %2381 = vmatprep.subr.mxu0 0.0
      %2382 = vmatpush1.msra.mxu0 %v2354
      %2383 = vmatprep.subr.mxu0 0.0
      %2384 = vmatpush1.msra.mxu0 %v2355
      %2385 = vmatprep.subr.mxu0 0.0
      %2386 = vmatpush1.msra.mxu0 %v2356
      %2387 = vmatprep.subr.mxu0 0.0
      %2388 = vmatpush1.msra.mxu0 %v2357
      %2389 = vmatprep.subr.mxu0 0.0
      %2390 = vmatpush1.msra.mxu0 %v2358
      %2391 = vmatprep.subr.mxu0 0.0
      %2392 = vmatpush1.msra.mxu0 0.0
      %2393 = vmatprep.subr.mxu0 0.0
      %2394 = vmatpush1.msra.mxu0 0.0
      %2395 = vmatprep.subr.mxu0 0.0
      %2396 = vmatpush1.msra.mxu0 0.0
      %2397 = vmatprep.subr.mxu0 0.0
      %2398 = vmatpush1.msra.mxu0 0.0
      %2399 = vmatprep.subr.mxu0 0.0
      %2400 = vmatpush1.msra.mxu0 0.0
      %2401 = vmatprep.subr.mxu0 0.0
      %2402 = vmatpush1.msra.mxu0 0.0
      %2403 = vmatprep.subr.mxu0 0.0
      %2404 = vmatpush1.msra.mxu0 0.0
      %2405 = vmatprep.subr.mxu0 0.0
      %2406 = vmatpush1.msra.mxu0 0.0
      %2407 = vmatprep.subr.mxu0 0.0
      %2408 = vmatpush1.msra.mxu0 0.0
      %2409 = vmatprep.subr.mxu0 0.0
      %2410 = vmatpush1.msra.mxu0 0.0
      %2411 = vmatprep.subr.mxu0 0.0
      %2412 = vmatpush1.msra.mxu0 0.0
      %2413 = vmatprep.subr.mxu0 0.0
      %2414 = vmatpush1.msra.mxu0 0.0
      %2415 = vmatprep.subr.mxu0 0.0
      %2416 = vmatpush1.msra.mxu0 0.0
      %2417 = vmatprep.subr.mxu0 0.0
      %2418 = vmatpush1.msra.mxu0 0.0
      %2419 = vmatprep.subr.mxu0 0.0
      %2420 = vmatpush1.msra.mxu0 0.0
      %2421 = vmatprep.subr.mxu0 0.0
      %2422 = vmatpush1.msra.mxu0 0.0
      %2423 = vmatprep.mubr.f32.mxu0 0.0
      %2424 = vmatmul.mubr.f32.gmra.mrb[0].mxu0 %v2320
      %v2425 = vpop.f32.mrb[0].mxu0
      %v2426 = vadd.f32 0.0, %v2425
      %v2427 = vpop.f32.mrb[0].mxu0
      %2428 = vmatprep.mubr.f32.mxu0 0.0
      %2429 = vmatmul.mubr.f32.gmra.mrb[0].mxu0 %v2321
      %v2430 = vpop.f32.mrb[0].mxu0
      %v2431 = vadd.f32 0.0, %v2430
      %v2432 = vpop.f32.mrb[0].mxu0
      %2433 = vmatprep.mubr.f32.mxu0 0.0
      %2434 = vmatmul.mubr.f32.gmra.mrb[0].mxu0 %v2322
      %v2435 = vpop.f32.mrb[0].mxu0
      %v2436 = vadd.f32 0.0, %v2435
      %v2437 = vpop.f32.mrb[0].mxu0
      %2438 = vmatprep.mubr.f32.mxu0 0.0
      %2439 = vmatmul.mubr.f32.gmra.mrb[0].mxu0 %v2323
      %v2440 = vpop.f32.mrb[0].mxu0
      %v2441 = vadd.f32 0.0, %v2440
      %v2442 = vpop.f32.mrb[0].mxu0
      %2443 = vmatprep.mubr.f32.mxu0 0.0
      %2444 = vmatmul.mubr.f32.gmra.mrb[0].mxu0 %v2324
      %v2445 = vpop.f32.mrb[0].mxu0
      %v2446 = vadd.f32 0.0, %v2445
      %v2447 = vpop.f32.mrb[0].mxu0
      %2448 = vmatprep.mubr.f32.mxu0 0.0
      %2449 = vmatmul.mubr.f32.gmra.mrb[0].mxu0 %v2325
      %v2450 = vpop.f32.mrb[0].mxu0
      %v2451 = vadd.f32 0.0, %v2450
      %v2452 = vpop.f32.mrb[0].mxu0
      %2453 = vmatprep.mubr.f32.mxu0 0.0
      %2454 = vmatmul.mubr.f32.gmra.mrb[0].mxu0 %v2326
      %v2455 = vpop.f32.mrb[0].mxu0
      %v2456 = vadd.f32 0.0, %v2455
      %v2457 = vpop.f32.mrb[0].mxu0
      %2458 = vmatprep.mubr.f32.mxu0 0.0
      %2459 = vmatmul.mubr.f32.gmra.mrb[0].mxu0 %v2327
      %v2460 = vpop.f32.mrb[0].mxu0
      %v2461 = vadd.f32 0.0, %v2460
      %v2462 = vpop.f32.mrb[0].mxu0
      %2463 = vmatprep.mubr.f32.mxu0 0.0
      %2464 = vmatmul.mubr.f32.gmra.mrb[0].mxu0 %v2328
      %v2465 = vpop.f32.mrb[0].mxu0
      %v2466 = vadd.f32 0.0, %v2465
      %v2467 = vpop.f32.mrb[0].mxu0
      %2468 = vmatprep.mubr.f32.mxu0 0.0
      %2469 = vmatmul.mubr.f32.gmra.mrb[0].mxu0 %v2329
      %v2470 = vpop.f32.mrb[0].mxu0
      %v2471 = vadd.f32 0.0, %v2470
      %v2472 = vpop.f32.mrb[0].mxu0
      %2473 = vmatprep.mubr.f32.mxu0 0.0
      %2474 = vmatmul.mubr.f32.gmra.mrb[0].mxu0 %v2330
      %v2475 = vpop.f32.mrb[0].mxu0
      %v2476 = vadd.f32 0.0, %v2475
      %v2477 = vpop.f32.mrb[0].mxu0
      %2478 = vmatprep.mubr.f32.mxu0 0.0
      %2479 = vmatmul.mubr.f32.gmra.mrb[0].mxu0 %v2331
      %v2480 = vpop.f32.mrb[0].mxu0
      %v2481 = vadd.f32 0.0, %v2480
      %v2482 = vpop.f32.mrb[0].mxu0
      %2483 = vmatprep.mubr.f32.mxu0 0.0
      %2484 = vmatmul.mubr.f32.gmra.mrb[0].mxu0 %v2332
      %v2485 = vpop.f32.mrb[0].mxu0
      %v2486 = vadd.f32 0.0, %v2485
      %v2487 = vpop.f32.mrb[0].mxu0
      %2488 = vmatprep.mubr.f32.mxu0 0.0
      %2489 = vmatmul.mubr.f32.gmra.mrb[0].mxu0 %v2333
      %v2490 = vpop.f32.mrb[0].mxu0
      %v2491 = vadd.f32 0.0, %v2490
      %v2492 = vpop.f32.mrb[0].mxu0
      %2493 = vmatprep.mubr.f32.mxu0 0.0
      %2494 = vmatmul.mubr.f32.gmra.mrb[0].mxu0 %v2334
      %v2495 = vpop.f32.mrb[0].mxu0
      %v2496 = vadd.f32 0.0, %v2495
      %v2497 = vpop.f32.mrb[0].mxu0
      %2498 = vmatprep.mubr.f32.mxu0 0.0
      %2499 = vmatmul.mubr.f32.gmra.mrb[0].mxu0 %v2335
      %v2500 = vpop.f32.mrb[0].mxu0
      %v2501 = vadd.f32 0.0, %v2500
      %v2502 = vpop.f32.mrb[0].mxu0
      %2503 = vmatprep.mubr.f32.mxu0 0.0
      %2504 = vmatmul.mubr.f32.gmra.mrb[0].mxu0 %v2336
      %v2505 = vpop.f32.mrb[0].mxu0
      %v2506 = vadd.f32 0.0, %v2505
      %v2507 = vpop.f32.mrb[0].mxu0
      %2508 = vmatprep.mubr.f32.mxu0 0.0
      %2509 = vmatmul.mubr.f32.gmra.mrb[0].mxu0 %v2337
      %v2510 = vpop.f32.mrb[0].mxu0
      %v2511 = vadd.f32 0.0, %v2510
      %v2512 = vpop.f32.mrb[0].mxu0
      %2513 = vmatprep.mubr.f32.mxu0 0.0
      %2514 = vmatmul.mubr.f32.gmra.mrb[0].mxu0 %v2338
      %v2515 = vpop.f32.mrb[0].mxu0
      %v2516 = vadd.f32 0.0, %v2515
      %v2517 = vpop.f32.mrb[0].mxu0
      %2518 = vmatprep.mubr.f32.mxu0 0.0
      %2519 = vmatmul.mubr.f32.gmra.mrb[0].mxu0 %v2339
      %v2520 = vpop.f32.mrb[0].mxu0
      %v2521 = vadd.f32 0.0, %v2520
      %v2522 = vpop.f32.mrb[0].mxu0
      %2523 = vmatprep.mubr.f32.mxu0 0.0
      %2524 = vmatmul.mubr.f32.gmra.mrb[0].mxu0 %v2340
      %v2525 = vpop.f32.mrb[0].mxu0
      %v2526 = vadd.f32 0.0, %v2525
      %v2527 = vpop.f32.mrb[0].mxu0
      %2528 = vmatprep.mubr.f32.mxu0 0.0
      %2529 = vmatmul.mubr.f32.gmra.mrb[0].mxu0 %v2341
      %v2530 = vpop.f32.mrb[0].mxu0
      %v2531 = vadd.f32 0.0, %v2530
      %v2532 = vpop.f32.mrb[0].mxu0
      %2533 = vdwg.mxu0
      %s2534 = scalar_lea.vmem [#allocation3], 704
      %2535 = vst [vmem:[%s2534] sm:$0xff] %v2426
      %2536 = vst [vmem:[%s2534 + $0x8] sm:$0xff] %v2431
      %2537 = vst [vmem:[%s2534 + $0x10] sm:$0xff] %v2436
      %2538 = vst [vmem:[%s2534 + $0x18] sm:$0xff] %v2441
      %2539 = vst [vmem:[%s2534 + $0x20] sm:$0xff] %v2446
      %2540 = vst [vmem:[%s2534 + $0x28] sm:$0xff] %v2451
      %2541 = vst [vmem:[%s2534 + $0x30] sm:$0xff] %v2456
      %2542 = vst [vmem:[%s2534 + $0x38] sm:$0xff] %v2461
      %2543 = vst [vmem:[%s2534 + $0x40] sm:$0xff] %v2466
      %2544 = vst [vmem:[%s2534 + $0x48] sm:$0xff] %v2471
      %2545 = vst [vmem:[%s2534 + $0x50] sm:$0xff] %v2476
      %2546 = vst [vmem:[%s2534 + $0x58] sm:$0xff] %v2481
      %2547 = vst [vmem:[%s2534 + $0x60] sm:$0xff] %v2486
      %2548 = vst [vmem:[%s2534 + $0x68] sm:$0xff] %v2491
      %2549 = vst [vmem:[%s2534 + $0x70] sm:$0xff] %v2496
      %2550 = vst [vmem:[%s2534 + $0x78] sm:$0xff] %v2501
      %2551 = vst [vmem:[%s2534 + $0x80] sm:$0xff] %v2506
      %2552 = vst [vmem:[%s2534 + $0x88] sm:$0xff] %v2511
      %2553 = vst [vmem:[%s2534 + $0x90] sm:$0xff] %v2516
      %2554 = vst [vmem:[%s2534 + $0x98] sm:$0xff] %v2521
      %2555 = vst [vmem:[%s2534 + $0xa0] sm:$0xff] %v2526
      %2556 = vst [vmem:[%s2534 + $0xa8] sm:$0xff] %v2531
      %v2557 = vld [vmem:[#allocation2 + $0x210] sm:$0xff]
      %v2558 = vld [vmem:[#allocation2 + $0x218] sm:$0xff]
      %v2559 = vld [vmem:[#allocation2 + $0x220] sm:$0xff]
      %v2560 = vld [vmem:[#allocation2 + $0x228] sm:$0xff]
      %v2561 = vld [vmem:[#allocation2 + $0x230] sm:$0xff]
      %v2562 = vld [vmem:[#allocation2 + $0x238] sm:$0xff]
      %v2563 = vld [vmem:[#allocation2 + $0x240] sm:$0xff]
      %v2564 = vld [vmem:[#allocation2 + $0x248] sm:$0xff]
      %v2565 = vld [vmem:[#allocation2 + $0x250] sm:$0xff]
      %v2566 = vld [vmem:[#allocation2 + $0x258] sm:$0xff]
      %v2567 = vld [vmem:[#allocation2 + $0x260] sm:$0xff]
      %v2568 = vld [vmem:[#allocation2 + $0x268] sm:$0xff]
      %v2569 = vld [vmem:[#allocation2 + $0x270] sm:$0xff]
      %v2570 = vld [vmem:[#allocation2 + $0x278] sm:$0xff]
      %v2571 = vld [vmem:[#allocation2 + $0x280] sm:$0xff]
      %v2572 = vld [vmem:[#allocation2 + $0x288] sm:$0xff]
      %v2573 = vld [vmem:[#allocation2 + $0x290] sm:$0xff]
      %v2574 = vld [vmem:[#allocation2 + $0x298] sm:$0xff]
      %v2575 = vld [vmem:[#allocation2 + $0x2a0] sm:$0xff]
      %v2576 = vld [vmem:[#allocation2 + $0x2a8] sm:$0xff]
      %v2577 = vld [vmem:[#allocation2 + $0x2b0] sm:$0xff]
      %v2578 = vld [vmem:[#allocation2 + $0x2b8] sm:$0xff]
      %s2579 = scalar_lea.vmem %s3, 640
      %v2580 = vld [vmem:[%s2579] sm:$0xff]
      %v2581 = vld [vmem:[%s2579 + $0x8] sm:$0xff]
      %v2582 = vld [vmem:[%s2579 + $0x10] sm:$0xff]
      %v2583 = vld [vmem:[%s2579 + $0x18] sm:$0xff]
      %v2584 = vld [vmem:[%s2579 + $0x20] sm:$0xff]
      %v2585 = vld [vmem:[%s2579 + $0x28] sm:$0xff]
      %v2586 = vld [vmem:[%s2579 + $0x30] sm:$0xff]
      %v2587 = vld [vmem:[%s2579 + $0x38] sm:$0xff]
      %v2588 = vld [vmem:[%s2579 + $0x40] sm:$0xff]
      %v2589 = vld [vmem:[%s2579 + $0x48] sm:$0xff]
      %v2590 = vld [vmem:[%s2579 + $0x50] sm:$0xff]
      %v2591 = vld [vmem:[%s2579 + $0x58] sm:$0xff]
      %v2592 = vld [vmem:[%s2579 + $0x60] sm:$0xff]
      %v2593 = vld [vmem:[%s2579 + $0x68] sm:$0xff]
      %v2594 = vld [vmem:[%s2579 + $0x70] sm:$0xff]
      %v2595 = vld [vmem:[%s2579 + $0x78] sm:$0xff]
      %2596 = vmatprep.subr.mxu0 0.0
      %2597 = vmatpush1.msra.mxu0 %v2580
      %2598 = vmatprep.subr.mxu0 0.0
      %2599 = vmatpush1.msra.mxu0 %v2581
      %2600 = vmatprep.subr.mxu0 0.0
      %2601 = vmatpush1.msra.mxu0 %v2582
      %2602 = vmatprep.subr.mxu0 0.0
      %2603 = vmatpush1.msra.mxu0 %v2583
      %2604 = vmatprep.subr.mxu0 0.0
      %2605 = vmatpush1.msra.mxu0 %v2584
      %2606 = vmatprep.subr.mxu0 0.0
      %2607 = vmatpush1.msra.mxu0 %v2585
      %2608 = vmatprep.subr.mxu0 0.0
      %2609 = vmatpush1.msra.mxu0 %v2586
      %2610 = vmatprep.subr.mxu0 0.0
      %2611 = vmatpush1.msra.mxu0 %v2587
      %2612 = vmatprep.subr.mxu0 0.0
      %2613 = vmatpush1.msra.mxu0 %v2588
      %2614 = vmatprep.subr.mxu0 0.0
      %2615 = vmatpush1.msra.mxu0 %v2589
      %2616 = vmatprep.subr.mxu0 0.0
      %2617 = vmatpush1.msra.mxu0 %v2590
      %2618 = vmatprep.subr.mxu0 0.0
      %2619 = vmatpush1.msra.mxu0 %v2591
      %2620 = vmatprep.subr.mxu0 0.0
      %2621 = vmatpush1.msra.mxu0 %v2592
      %2622 = vmatprep.subr.mxu0 0.0
      %2623 = vmatpush1.msra.mxu0 %v2593
      %2624 = vmatprep.subr.mxu0 0.0
      %2625 = vmatpush1.msra.mxu0 %v2594
      %2626 = vmatprep.subr.mxu0 0.0
      %2627 = vmatpush1.msra.mxu0 %v2595
      %2628 = vmatprep.subr.mxu0 0.0
      %2629 = vmatpush1.msra.mxu0 0.0
      %2630 = vmatprep.subr.mxu0 0.0
      %2631 = vmatpush1.msra.mxu0 0.0
      %2632 = vmatprep.subr.mxu0 0.0
      %2633 = vmatpush1.msra.mxu0 0.0
      %2634 = vmatprep.subr.mxu0 0.0
      %2635 = vmatpush1.msra.mxu0 0.0
      %2636 = vmatprep.subr.mxu0 0.0
      %2637 = vmatpush1.msra.mxu0 0.0
      %2638 = vmatprep.subr.mxu0 0.0
      %2639 = vmatpush1.msra.mxu0 0.0
      %2640 = vmatprep.subr.mxu0 0.0
      %2641 = vmatpush1.msra.mxu0 0.0
      %2642 = vmatprep.subr.mxu0 0.0
      %2643 = vmatpush1.msra.mxu0 0.0
      %2644 = vmatprep.subr.mxu0 0.0
      %2645 = vmatpush1.msra.mxu0 0.0
      %2646 = vmatprep.subr.mxu0 0.0
      %2647 = vmatpush1.msra.mxu0 0.0
      %2648 = vmatprep.subr.mxu0 0.0
      %2649 = vmatpush1.msra.mxu0 0.0
      %2650 = vmatprep.subr.mxu0 0.0
      %2651 = vmatpush1.msra.mxu0 0.0
      %2652 = vmatprep.subr.mxu0 0.0
      %2653 = vmatpush1.msra.mxu0 0.0
      %2654 = vmatprep.subr.mxu0 0.0
      %2655 = vmatpush1.msra.mxu0 0.0
      %2656 = vmatprep.subr.mxu0 0.0
      %2657 = vmatpush1.msra.mxu0 0.0
      %2658 = vmatprep.subr.mxu0 0.0
      %2659 = vmatpush1.msra.mxu0 0.0
      %2660 = vmatprep.mubr.f32.mxu0 0.0
      %2661 = vmatmul.mubr.f32.gmra.mrb[0].mxu0 %v2557
      %v2662 = vpop.f32.mrb[0].mxu0
      %v2663 = vadd.f32 0.0, %v2662
      %v2664 = vpop.f32.mrb[0].mxu0
      %2665 = vmatprep.mubr.f32.mxu0 0.0
      %2666 = vmatmul.mubr.f32.gmra.mrb[0].mxu0 %v2558
      %v2667 = vpop.f32.mrb[0].mxu0
      %v2668 = vadd.f32 0.0, %v2667
      %v2669 = vpop.f32.mrb[0].mxu0
      %2670 = vmatprep.mubr.f32.mxu0 0.0
      %2671 = vmatmul.mubr.f32.gmra.mrb[0].mxu0 %v2559
      %v2672 = vpop.f32.mrb[0].mxu0
      %v2673 = vadd.f32 0.0, %v2672
      %v2674 = vpop.f32.mrb[0].mxu0
      %2675 = vmatprep.mubr.f32.mxu0 0.0
      %2676 = vmatmul.mubr.f32.gmra.mrb[0].mxu0 %v2560
      %v2677 = vpop.f32.mrb[0].mxu0
      %v2678 = vadd.f32 0.0, %v2677
      %v2679 = vpop.f32.mrb[0].mxu0
      %2680 = vmatprep.mubr.f32.mxu0 0.0
      %2681 = vmatmul.mubr.f32.gmra.mrb[0].mxu0 %v2561
      %v2682 = vpop.f32.mrb[0].mxu0
      %v2683 = vadd.f32 0.0, %v2682
      %v2684 = vpop.f32.mrb[0].mxu0
      %2685 = vmatprep.mubr.f32.mxu0 0.0
      %2686 = vmatmul.mubr.f32.gmra.mrb[0].mxu0 %v2562
      %v2687 = vpop.f32.mrb[0].mxu0
      %v2688 = vadd.f32 0.0, %v2687
      %v2689 = vpop.f32.mrb[0].mxu0
      %2690 = vmatprep.mubr.f32.mxu0 0.0
      %2691 = vmatmul.mubr.f32.gmra.mrb[0].mxu0 %v2563
      %v2692 = vpop.f32.mrb[0].mxu0
      %v2693 = vadd.f32 0.0, %v2692
      %v2694 = vpop.f32.mrb[0].mxu0
      %2695 = vmatprep.mubr.f32.mxu0 0.0
      %2696 = vmatmul.mubr.f32.gmra.mrb[0].mxu0 %v2564
      %v2697 = vpop.f32.mrb[0].mxu0
      %v2698 = vadd.f32 0.0, %v2697
      %v2699 = vpop.f32.mrb[0].mxu0
      %2700 = vmatprep.mubr.f32.mxu0 0.0
      %2701 = vmatmul.mubr.f32.gmra.mrb[0].mxu0 %v2565
      %v2702 = vpop.f32.mrb[0].mxu0
      %v2703 = vadd.f32 0.0, %v2702
      %v2704 = vpop.f32.mrb[0].mxu0
      %2705 = vmatprep.mubr.f32.mxu0 0.0
      %2706 = vmatmul.mubr.f32.gmra.mrb[0].mxu0 %v2566
      %v2707 = vpop.f32.mrb[0].mxu0
      %v2708 = vadd.f32 0.0, %v2707
      %v2709 = vpop.f32.mrb[0].mxu0
      %2710 = vmatprep.mubr.f32.mxu0 0.0
      %2711 = vmatmul.mubr.f32.gmra.mrb[0].mxu0 %v2567
      %v2712 = vpop.f32.mrb[0].mxu0
      %v2713 = vadd.f32 0.0, %v2712
      %v2714 = vpop.f32.mrb[0].mxu0
      %2715 = vmatprep.mubr.f32.mxu0 0.0
      %2716 = vmatmul.mubr.f32.gmra.mrb[0].mxu0 %v2568
      %v2717 = vpop.f32.mrb[0].mxu0
      %v2718 = vadd.f32 0.0, %v2717
      %v2719 = vpop.f32.mrb[0].mxu0
      %2720 = vmatprep.mubr.f32.mxu0 0.0
      %2721 = vmatmul.mubr.f32.gmra.mrb[0].mxu0 %v2569
      %v2722 = vpop.f32.mrb[0].mxu0
      %v2723 = vadd.f32 0.0, %v2722
      %v2724 = vpop.f32.mrb[0].mxu0
      %2725 = vmatprep.mubr.f32.mxu0 0.0
      %2726 = vmatmul.mubr.f32.gmra.mrb[0].mxu0 %v2570
      %v2727 = vpop.f32.mrb[0].mxu0
      %v2728 = vadd.f32 0.0, %v2727
      %v2729 = vpop.f32.mrb[0].mxu0
      %2730 = vmatprep.mubr.f32.mxu0 0.0
      %2731 = vmatmul.mubr.f32.gmra.mrb[0].mxu0 %v2571
      %v2732 = vpop.f32.mrb[0].mxu0
      %v2733 = vadd.f32 0.0, %v2732
      %v2734 = vpop.f32.mrb[0].mxu0
      %2735 = vmatprep.mubr.f32.mxu0 0.0
      %2736 = vmatmul.mubr.f32.gmra.mrb[0].mxu0 %v2572
      %v2737 = vpop.f32.mrb[0].mxu0
      %v2738 = vadd.f32 0.0, %v2737
      %v2739 = vpop.f32.mrb[0].mxu0
      %2740 = vmatprep.mubr.f32.mxu0 0.0
      %2741 = vmatmul.mubr.f32.gmra.mrb[0].mxu0 %v2573
      %v2742 = vpop.f32.mrb[0].mxu0
      %v2743 = vadd.f32 0.0, %v2742
      %v2744 = vpop.f32.mrb[0].mxu0
      %2745 = vmatprep.mubr.f32.mxu0 0.0
      %2746 = vmatmul.mubr.f32.gmra.mrb[0].mxu0 %v2574
      %v2747 = vpop.f32.mrb[0].mxu0
      %v2748 = vadd.f32 0.0, %v2747
      %v2749 = vpop.f32.mrb[0].mxu0
      %2750 = vmatprep.mubr.f32.mxu0 0.0
      %2751 = vmatmul.mubr.f32.gmra.mrb[0].mxu0 %v2575
      %v2752 = vpop.f32.mrb[0].mxu0
      %v2753 = vadd.f32 0.0, %v2752
      %v2754 = vpop.f32.mrb[0].mxu0
      %2755 = vmatprep.mubr.f32.mxu0 0.0
      %2756 = vmatmul.mubr.f32.gmra.mrb[0].mxu0 %v2576
      %v2757 = vpop.f32.mrb[0].mxu0
      %v2758 = vadd.f32 0.0, %v2757
      %v2759 = vpop.f32.mrb[0].mxu0
      %2760 = vmatprep.mubr.f32.mxu0 0.0
      %2761 = vmatmul.mubr.f32.gmra.mrb[0].mxu0 %v2577
      %v2762 = vpop.f32.mrb[0].mxu0
      %v2763 = vadd.f32 0.0, %v2762
      %v2764 = vpop.f32.mrb[0].mxu0
      %2765 = vmatprep.mubr.f32.mxu0 0.0
      %2766 = vmatmul.mubr.f32.gmra.mrb[0].mxu0 %v2578
      %v2767 = vpop.f32.mrb[0].mxu0
      %v2768 = vadd.f32 0.0, %v2767
      %v2769 = vpop.f32.mrb[0].mxu0
      %2770 = vdwg.mxu0
      %s2771 = scalar_lea.vmem [#allocation3], 880
      %2772 = vst [vmem:[%s2771] sm:$0xff] %v2663
      %2773 = vst [vmem:[%s2771 + $0x8] sm:$0xff] %v2668
      %2774 = vst [vmem:[%s2771 + $0x10] sm:$0xff] %v2673
      %2775 = vst [vmem:[%s2771 + $0x18] sm:$0xff] %v2678
      %2776 = vst [vmem:[%s2771 + $0x20] sm:$0xff] %v2683
      %2777 = vst [vmem:[%s2771 + $0x28] sm:$0xff] %v2688
      %2778 = vst [vmem:[%s2771 + $0x30] sm:$0xff] %v2693
      %2779 = vst [vmem:[%s2771 + $0x38] sm:$0xff] %v2698
      %2780 = vst [vmem:[%s2771 + $0x40] sm:$0xff] %v2703
      %2781 = vst [vmem:[%s2771 + $0x48] sm:$0xff] %v2708
      %2782 = vst [vmem:[%s2771 + $0x50] sm:$0xff] %v2713
      %2783 = vst [vmem:[%s2771 + $0x58] sm:$0xff] %v2718
      %2784 = vst [vmem:[%s2771 + $0x60] sm:$0xff] %v2723
      %2785 = vst [vmem:[%s2771 + $0x68] sm:$0xff] %v2728
      %2786 = vst [vmem:[%s2771 + $0x70] sm:$0xff] %v2733
      %2787 = vst [vmem:[%s2771 + $0x78] sm:$0xff] %v2738
      %2788 = vst [vmem:[%s2771 + $0x80] sm:$0xff] %v2743
      %2789 = vst [vmem:[%s2771 + $0x88] sm:$0xff] %v2748
      %2790 = vst [vmem:[%s2771 + $0x90] sm:$0xff] %v2753
      %2791 = vst [vmem:[%s2771 + $0x98] sm:$0xff] %v2758
      %2792 = vst [vmem:[%s2771 + $0xa0] sm:$0xff] %v2763
      %2793 = vst [vmem:[%s2771 + $0xa8] sm:$0xff] %v2768
      %v2794 = vld [vmem:[#allocation2 + $0x160] sm:$0xff]
      %v2795 = vld [vmem:[#allocation2 + $0x168] sm:$0xff]
      %v2796 = vld [vmem:[#allocation2 + $0x170] sm:$0xff]
      %v2797 = vld [vmem:[#allocation2 + $0x178] sm:$0xff]
      %v2798 = vld [vmem:[#allocation2 + $0x180] sm:$0xff]
      %v2799 = vld [vmem:[#allocation2 + $0x188] sm:$0xff]
      %v2800 = vld [vmem:[#allocation2 + $0x190] sm:$0xff]
      %v2801 = vld [vmem:[#allocation2 + $0x198] sm:$0xff]
      %v2802 = vld [vmem:[#allocation2 + $0x1a0] sm:$0xff]
      %v2803 = vld [vmem:[#allocation2 + $0x1a8] sm:$0xff]
      %v2804 = vld [vmem:[#allocation2 + $0x1b0] sm:$0xff]
      %v2805 = vld [vmem:[#allocation2 + $0x1b8] sm:$0xff]
      %v2806 = vld [vmem:[#allocation2 + $0x1c0] sm:$0xff]
      %v2807 = vld [vmem:[#allocation2 + $0x1c8] sm:$0xff]
      %v2808 = vld [vmem:[#allocation2 + $0x1d0] sm:$0xff]
      %v2809 = vld [vmem:[#allocation2 + $0x1d8] sm:$0xff]
      %v2810 = vld [vmem:[#allocation2 + $0x1e0] sm:$0xff]
      %v2811 = vld [vmem:[#allocation2 + $0x1e8] sm:$0xff]
      %v2812 = vld [vmem:[#allocation2 + $0x1f0] sm:$0xff]
      %v2813 = vld [vmem:[#allocation2 + $0x1f8] sm:$0xff]
      %v2814 = vld [vmem:[#allocation2 + $0x200] sm:$0xff]
      %v2815 = vld [vmem:[#allocation2 + $0x208] sm:$0xff]
      %s2816 = scalar_lea.vmem %s3, 768
      %v2817 = vld [vmem:[%s2816] sm:$0xff]
      %v2818 = vld [vmem:[%s2816 + $0x8] sm:$0xff]
      %v2819 = vld [vmem:[%s2816 + $0x10] sm:$0xff]
      %v2820 = vld [vmem:[%s2816 + $0x18] sm:$0xff]
      %v2821 = vld [vmem:[%s2816 + $0x20] sm:$0xff]
      %v2822 = vld [vmem:[%s2816 + $0x28] sm:$0xff]
      %v2823 = vld [vmem:[%s2816 + $0x30] sm:$0xff]
      %v2824 = vld [vmem:[%s2816 + $0x38] sm:$0xff]
      %v2825 = vld [vmem:[%s2816 + $0x40] sm:$0xff]
      %v2826 = vld [vmem:[%s2816 + $0x48] sm:$0xff]
      %v2827 = vld [vmem:[%s2816 + $0x50] sm:$0xff]
      %v2828 = vld [vmem:[%s2816 + $0x58] sm:$0xff]
      %v2829 = vld [vmem:[%s2816 + $0x60] sm:$0xff]
      %v2830 = vld [vmem:[%s2816 + $0x68] sm:$0xff]
      %v2831 = vld [vmem:[%s2816 + $0x70] sm:$0xff]
      %v2832 = vld [vmem:[%s2816 + $0x78] sm:$0xff]
      %2833 = vmatprep.subr.mxu0 0.0
      %2834 = vmatpush1.msra.mxu0 %v2817
      %2835 = vmatprep.subr.mxu0 0.0
      %2836 = vmatpush1.msra.mxu0 %v2818
      %2837 = vmatprep.subr.mxu0 0.0
      %2838 = vmatpush1.msra.mxu0 %v2819
      %2839 = vmatprep.subr.mxu0 0.0
      %2840 = vmatpush1.msra.mxu0 %v2820
      %2841 = vmatprep.subr.mxu0 0.0
      %2842 = vmatpush1.msra.mxu0 %v2821
      %2843 = vmatprep.subr.mxu0 0.0
      %2844 = vmatpush1.msra.mxu0 %v2822
      %2845 = vmatprep.subr.mxu0 0.0
      %2846 = vmatpush1.msra.mxu0 %v2823
      %2847 = vmatprep.subr.mxu0 0.0
      %2848 = vmatpush1.msra.mxu0 %v2824
      %2849 = vmatprep.subr.mxu0 0.0
      %2850 = vmatpush1.msra.mxu0 %v2825
      %2851 = vmatprep.subr.mxu0 0.0
      %2852 = vmatpush1.msra.mxu0 %v2826
      %2853 = vmatprep.subr.mxu0 0.0
      %2854 = vmatpush1.msra.mxu0 %v2827
      %2855 = vmatprep.subr.mxu0 0.0
      %2856 = vmatpush1.msra.mxu0 %v2828
      %2857 = vmatprep.subr.mxu0 0.0
      %2858 = vmatpush1.msra.mxu0 %v2829
      %2859 = vmatprep.subr.mxu0 0.0
      %2860 = vmatpush1.msra.mxu0 %v2830
      %2861 = vmatprep.subr.mxu0 0.0
      %2862 = vmatpush1.msra.mxu0 %v2831
      %2863 = vmatprep.subr.mxu0 0.0
      %2864 = vmatpush1.msra.mxu0 %v2832
      %2865 = vmatprep.subr.mxu0 0.0
      %2866 = vmatpush1.msra.mxu0 0.0
      %2867 = vmatprep.subr.mxu0 0.0
      %2868 = vmatpush1.msra.mxu0 0.0
      %2869 = vmatprep.subr.mxu0 0.0
      %2870 = vmatpush1.msra.mxu0 0.0
      %2871 = vmatprep.subr.mxu0 0.0
      %2872 = vmatpush1.msra.mxu0 0.0
      %2873 = vmatprep.subr.mxu0 0.0
      %2874 = vmatpush1.msra.mxu0 0.0
      %2875 = vmatprep.subr.mxu0 0.0
      %2876 = vmatpush1.msra.mxu0 0.0
      %2877 = vmatprep.subr.mxu0 0.0
      %2878 = vmatpush1.msra.mxu0 0.0
      %2879 = vmatprep.subr.mxu0 0.0
      %2880 = vmatpush1.msra.mxu0 0.0
      %2881 = vmatprep.subr.mxu0 0.0
      %2882 = vmatpush1.msra.mxu0 0.0
      %2883 = vmatprep.subr.mxu0 0.0
      %2884 = vmatpush1.msra.mxu0 0.0
      %2885 = vmatprep.subr.mxu0 0.0
      %2886 = vmatpush1.msra.mxu0 0.0
      %2887 = vmatprep.subr.mxu0 0.0
      %2888 = vmatpush1.msra.mxu0 0.0
      %2889 = vmatprep.subr.mxu0 0.0
      %2890 = vmatpush1.msra.mxu0 0.0
      %2891 = vmatprep.subr.mxu0 0.0
      %2892 = vmatpush1.msra.mxu0 0.0
      %2893 = vmatprep.subr.mxu0 0.0
      %2894 = vmatpush1.msra.mxu0 0.0
      %2895 = vmatprep.subr.mxu0 0.0
      %2896 = vmatpush1.msra.mxu0 0.0
      %2897 = vmatprep.mubr.f32.mxu0 0.0
      %2898 = vmatmul.mubr.f32.gmra.mrb[0].mxu0 %v2794
      %v2899 = vpop.f32.mrb[0].mxu0
      %v2900 = vadd.f32 0.0, %v2899
      %v2901 = vpop.f32.mrb[0].mxu0
      %2902 = vmatprep.mubr.f32.mxu0 0.0
      %2903 = vmatmul.mubr.f32.gmra.mrb[0].mxu0 %v2795
      %v2904 = vpop.f32.mrb[0].mxu0
      %v2905 = vadd.f32 0.0, %v2904
      %v2906 = vpop.f32.mrb[0].mxu0
      %2907 = vmatprep.mubr.f32.mxu0 0.0
      %2908 = vmatmul.mubr.f32.gmra.mrb[0].mxu0 %v2796
      %v2909 = vpop.f32.mrb[0].mxu0
      %v2910 = vadd.f32 0.0, %v2909
      %v2911 = vpop.f32.mrb[0].mxu0
      %2912 = vmatprep.mubr.f32.mxu0 0.0
      %2913 = vmatmul.mubr.f32.gmra.mrb[0].mxu0 %v2797
      %v2914 = vpop.f32.mrb[0].mxu0
      %v2915 = vadd.f32 0.0, %v2914
      %v2916 = vpop.f32.mrb[0].mxu0
      %2917 = vmatprep.mubr.f32.mxu0 0.0
      %2918 = vmatmul.mubr.f32.gmra.mrb[0].mxu0 %v2798
      %v2919 = vpop.f32.mrb[0].mxu0
      %v2920 = vadd.f32 0.0, %v2919
      %v2921 = vpop.f32.mrb[0].mxu0
      %2922 = vmatprep.mubr.f32.mxu0 0.0
      %2923 = vmatmul.mubr.f32.gmra.mrb[0].mxu0 %v2799
      %v2924 = vpop.f32.mrb[0].mxu0
      %v2925 = vadd.f32 0.0, %v2924
      %v2926 = vpop.f32.mrb[0].mxu0
      %2927 = vmatprep.mubr.f32.mxu0 0.0
      %2928 = vmatmul.mubr.f32.gmra.mrb[0].mxu0 %v2800
      %v2929 = vpop.f32.mrb[0].mxu0
      %v2930 = vadd.f32 0.0, %v2929
      %v2931 = vpop.f32.mrb[0].mxu0
      %2932 = vmatprep.mubr.f32.mxu0 0.0
      %2933 = vmatmul.mubr.f32.gmra.mrb[0].mxu0 %v2801
      %v2934 = vpop.f32.mrb[0].mxu0
      %v2935 = vadd.f32 0.0, %v2934
      %v2936 = vpop.f32.mrb[0].mxu0
      %2937 = vmatprep.mubr.f32.mxu0 0.0
      %2938 = vmatmul.mubr.f32.gmra.mrb[0].mxu0 %v2802
      %v2939 = vpop.f32.mrb[0].mxu0
      %v2940 = vadd.f32 0.0, %v2939
      %v2941 = vpop.f32.mrb[0].mxu0
      %2942 = vmatprep.mubr.f32.mxu0 0.0
      %2943 = vmatmul.mubr.f32.gmra.mrb[0].mxu0 %v2803
      %v2944 = vpop.f32.mrb[0].mxu0
      %v2945 = vadd.f32 0.0, %v2944
      %v2946 = vpop.f32.mrb[0].mxu0
      %2947 = vmatprep.mubr.f32.mxu0 0.0
      %2948 = vmatmul.mubr.f32.gmra.mrb[0].mxu0 %v2804
      %v2949 = vpop.f32.mrb[0].mxu0
      %v2950 = vadd.f32 0.0, %v2949
      %v2951 = vpop.f32.mrb[0].mxu0
      %2952 = vmatprep.mubr.f32.mxu0 0.0
      %2953 = vmatmul.mubr.f32.gmra.mrb[0].mxu0 %v2805
      %v2954 = vpop.f32.mrb[0].mxu0
      %v2955 = vadd.f32 0.0, %v2954
      %v2956 = vpop.f32.mrb[0].mxu0
      %2957 = vmatprep.mubr.f32.mxu0 0.0
      %2958 = vmatmul.mubr.f32.gmra.mrb[0].mxu0 %v2806
      %v2959 = vpop.f32.mrb[0].mxu0
      %v2960 = vadd.f32 0.0, %v2959
      %v2961 = vpop.f32.mrb[0].mxu0
      %2962 = vmatprep.mubr.f32.mxu0 0.0
      %2963 = vmatmul.mubr.f32.gmra.mrb[0].mxu0 %v2807
      %v2964 = vpop.f32.mrb[0].mxu0
      %v2965 = vadd.f32 0.0, %v2964
      %v2966 = vpop.f32.mrb[0].mxu0
      %2967 = vmatprep.mubr.f32.mxu0 0.0
      %2968 = vmatmul.mubr.f32.gmra.mrb[0].mxu0 %v2808
      %v2969 = vpop.f32.mrb[0].mxu0
      %v2970 = vadd.f32 0.0, %v2969
      %v2971 = vpop.f32.mrb[0].mxu0
      %2972 = vmatprep.mubr.f32.mxu0 0.0
      %2973 = vmatmul.mubr.f32.gmra.mrb[0].mxu0 %v2809
      %v2974 = vpop.f32.mrb[0].mxu0
      %v2975 = vadd.f32 0.0, %v2974
      %v2976 = vpop.f32.mrb[0].mxu0
      %2977 = vmatprep.mubr.f32.mxu0 0.0
      %2978 = vmatmul.mubr.f32.gmra.mrb[0].mxu0 %v2810
      %v2979 = vpop.f32.mrb[0].mxu0
      %v2980 = vadd.f32 0.0, %v2979
      %v2981 = vpop.f32.mrb[0].mxu0
      %2982 = vmatprep.mubr.f32.mxu0 0.0
      %2983 = vmatmul.mubr.f32.gmra.mrb[0].mxu0 %v2811
      %v2984 = vpop.f32.mrb[0].mxu0
      %v2985 = vadd.f32 0.0, %v2984
      %v2986 = vpop.f32.mrb[0].mxu0
      %2987 = vmatprep.mubr.f32.mxu0 0.0
      %2988 = vmatmul.mubr.f32.gmra.mrb[0].mxu0 %v2812
      %v2989 = vpop.f32.mrb[0].mxu0
      %v2990 = vadd.f32 0.0, %v2989
      %v2991 = vpop.f32.mrb[0].mxu0
      %2992 = vmatprep.mubr.f32.mxu0 0.0
      %2993 = vmatmul.mubr.f32.gmra.mrb[0].mxu0 %v2813
      %v2994 = vpop.f32.mrb[0].mxu0
      %v2995 = vadd.f32 0.0, %v2994
      %v2996 = vpop.f32.mrb[0].mxu0
      %2997 = vmatprep.mubr.f32.mxu0 0.0
      %2998 = vmatmul.mubr.f32.gmra.mrb[0].mxu0 %v2814
      %v2999 = vpop.f32.mrb[0].mxu0
      %v3000 = vadd.f32 0.0, %v2999
      %v3001 = vpop.f32.mrb[0].mxu0
      %3002 = vmatprep.mubr.f32.mxu0 0.0
      %3003 = vmatmul.mubr.f32.gmra.mrb[0].mxu0 %v2815
      %v3004 = vpop.f32.mrb[0].mxu0
      %v3005 = vadd.f32 0.0, %v3004
      %v3006 = vpop.f32.mrb[0].mxu0
      %3007 = vdwg.mxu0
      %s3008 = scalar_lea.vmem [#allocation3], 1056
      %3009 = vst [vmem:[%s3008] sm:$0xff] %v2900
      %3010 = vst [vmem:[%s3008 + $0x8] sm:$0xff] %v2905
      %3011 = vst [vmem:[%s3008 + $0x10] sm:$0xff] %v2910
      %3012 = vst [vmem:[%s3008 + $0x18] sm:$0xff] %v2915
      %3013 = vst [vmem:[%s3008 + $0x20] sm:$0xff] %v2920
      %3014 = vst [vmem:[%s3008 + $0x28] sm:$0xff] %v2925
      %3015 = vst [vmem:[%s3008 + $0x30] sm:$0xff] %v2930
      %3016 = vst [vmem:[%s3008 + $0x38] sm:$0xff] %v2935
      %3017 = vst [vmem:[%s3008 + $0x40] sm:$0xff] %v2940
      %3018 = vst [vmem:[%s3008 + $0x48] sm:$0xff] %v2945
      %3019 = vst [vmem:[%s3008 + $0x50] sm:$0xff] %v2950
      %3020 = vst [vmem:[%s3008 + $0x58] sm:$0xff] %v2955
      %3021 = vst [vmem:[%s3008 + $0x60] sm:$0xff] %v2960
      %3022 = vst [vmem:[%s3008 + $0x68] sm:$0xff] %v2965
      %3023 = vst [vmem:[%s3008 + $0x70] sm:$0xff] %v2970
      %3024 = vst [vmem:[%s3008 + $0x78] sm:$0xff] %v2975
      %3025 = vst [vmem:[%s3008 + $0x80] sm:$0xff] %v2980
      %3026 = vst [vmem:[%s3008 + $0x88] sm:$0xff] %v2985
      %3027 = vst [vmem:[%s3008 + $0x90] sm:$0xff] %v2990
      %3028 = vst [vmem:[%s3008 + $0x98] sm:$0xff] %v2995
      %3029 = vst [vmem:[%s3008 + $0xa0] sm:$0xff] %v3000
      %3030 = vst [vmem:[%s3008 + $0xa8] sm:$0xff] %v3005
      %v3031 = vld [vmem:[#allocation2 + $0x210] sm:$0xff]
      %v3032 = vld [vmem:[#allocation2 + $0x218] sm:$0xff]
      %v3033 = vld [vmem:[#allocation2 + $0x220] sm:$0xff]
      %v3034 = vld [vmem:[#allocation2 + $0x228] sm:$0xff]
      %v3035 = vld [vmem:[#allocation2 + $0x230] sm:$0xff]
      %v3036 = vld [vmem:[#allocation2 + $0x238] sm:$0xff]
      %v3037 = vld [vmem:[#allocation2 + $0x240] sm:$0xff]
      %v3038 = vld [vmem:[#allocation2 + $0x248] sm:$0xff]
      %v3039 = vld [vmem:[#allocation2 + $0x250] sm:$0xff]
      %v3040 = vld [vmem:[#allocation2 + $0x258] sm:$0xff]
      %v3041 = vld [vmem:[#allocation2 + $0x260] sm:$0xff]
      %v3042 = vld [vmem:[#allocation2 + $0x268] sm:$0xff]
      %v3043 = vld [vmem:[#allocation2 + $0x270] sm:$0xff]
      %v3044 = vld [vmem:[#allocation2 + $0x278] sm:$0xff]
      %v3045 = vld [vmem:[#allocation2 + $0x280] sm:$0xff]
      %v3046 = vld [vmem:[#allocation2 + $0x288] sm:$0xff]
      %v3047 = vld [vmem:[#allocation2 + $0x290] sm:$0xff]
      %v3048 = vld [vmem:[#allocation2 + $0x298] sm:$0xff]
      %v3049 = vld [vmem:[#allocation2 + $0x2a0] sm:$0xff]
      %v3050 = vld [vmem:[#allocation2 + $0x2a8] sm:$0xff]
      %v3051 = vld [vmem:[#allocation2 + $0x2b0] sm:$0xff]
      %v3052 = vld [vmem:[#allocation2 + $0x2b8] sm:$0xff]
      %s3053 = scalar_lea.vmem %s3, 896
      %v3054 = vld [vmem:[%s3053] sm:$0xff]
      %v3055 = vld [vmem:[%s3053 + $0x8] sm:$0xff]
      %v3056 = vld [vmem:[%s3053 + $0x10] sm:$0xff]
      %v3057 = vld [vmem:[%s3053 + $0x18] sm:$0xff]
      %v3058 = vld [vmem:[%s3053 + $0x20] sm:$0xff]
      %v3059 = vld [vmem:[%s3053 + $0x28] sm:$0xff]
      %v3060 = vld [vmem:[%s3053 + $0x30] sm:$0xff]
      %v3061 = vld [vmem:[%s3053 + $0x38] sm:$0xff]
      %v3062 = vld [vmem:[%s3053 + $0x40] sm:$0xff]
      %v3063 = vld [vmem:[%s3053 + $0x48] sm:$0xff]
      %v3064 = vld [vmem:[%s3053 + $0x50] sm:$0xff]
      %v3065 = vld [vmem:[%s3053 + $0x58] sm:$0xff]
      %v3066 = vld [vmem:[%s3053 + $0x60] sm:$0xff]
      %v3067 = vld [vmem:[%s3053 + $0x68] sm:$0xff]
      %v3068 = vld [vmem:[%s3053 + $0x70] sm:$0xff]
      %v3069 = vld [vmem:[%s3053 + $0x78] sm:$0xff]
      %3070 = vmatprep.subr.mxu0 0.0
      %3071 = vmatpush1.msra.mxu0 %v3054
      %3072 = vmatprep.subr.mxu0 0.0
      %3073 = vmatpush1.msra.mxu0 %v3055
      %3074 = vmatprep.subr.mxu0 0.0
      %3075 = vmatpush1.msra.mxu0 %v3056
      %3076 = vmatprep.subr.mxu0 0.0
      %3077 = vmatpush1.msra.mxu0 %v3057
      %3078 = vmatprep.subr.mxu0 0.0
      %3079 = vmatpush1.msra.mxu0 %v3058
      %3080 = vmatprep.subr.mxu0 0.0
      %3081 = vmatpush1.msra.mxu0 %v3059
      %3082 = vmatprep.subr.mxu0 0.0
      %3083 = vmatpush1.msra.mxu0 %v3060
      %3084 = vmatprep.subr.mxu0 0.0
      %3085 = vmatpush1.msra.mxu0 %v3061
      %3086 = vmatprep.subr.mxu0 0.0
      %3087 = vmatpush1.msra.mxu0 %v3062
      %3088 = vmatprep.subr.mxu0 0.0
      %3089 = vmatpush1.msra.mxu0 %v3063
      %3090 = vmatprep.subr.mxu0 0.0
      %3091 = vmatpush1.msra.mxu0 %v3064
      %3092 = vmatprep.subr.mxu0 0.0
      %3093 = vmatpush1.msra.mxu0 %v3065
      %3094 = vmatprep.subr.mxu0 0.0
      %3095 = vmatpush1.msra.mxu0 %v3066
      %3096 = vmatprep.subr.mxu0 0.0
      %3097 = vmatpush1.msra.mxu0 %v3067
      %3098 = vmatprep.subr.mxu0 0.0
      %3099 = vmatpush1.msra.mxu0 %v3068
      %3100 = vmatprep.subr.mxu0 0.0
      %3101 = vmatpush1.msra.mxu0 %v3069
      %3102 = vmatprep.subr.mxu0 0.0
      %3103 = vmatpush1.msra.mxu0 0.0
      %3104 = vmatprep.subr.mxu0 0.0
      %3105 = vmatpush1.msra.mxu0 0.0
      %3106 = vmatprep.subr.mxu0 0.0
      %3107 = vmatpush1.msra.mxu0 0.0
      %3108 = vmatprep.subr.mxu0 0.0
      %3109 = vmatpush1.msra.mxu0 0.0
      %3110 = vmatprep.subr.mxu0 0.0
      %3111 = vmatpush1.msra.mxu0 0.0
      %3112 = vmatprep.subr.mxu0 0.0
      %3113 = vmatpush1.msra.mxu0 0.0
      %3114 = vmatprep.subr.mxu0 0.0
      %3115 = vmatpush1.msra.mxu0 0.0
      %3116 = vmatprep.subr.mxu0 0.0
      %3117 = vmatpush1.msra.mxu0 0.0
      %3118 = vmatprep.subr.mxu0 0.0
      %3119 = vmatpush1.msra.mxu0 0.0
      %3120 = vmatprep.subr.mxu0 0.0
      %3121 = vmatpush1.msra.mxu0 0.0
      %3122 = vmatprep.subr.mxu0 0.0
      %3123 = vmatpush1.msra.mxu0 0.0
      %3124 = vmatprep.subr.mxu0 0.0
      %3125 = vmatpush1.msra.mxu0 0.0
      %3126 = vmatprep.subr.mxu0 0.0
      %3127 = vmatpush1.msra.mxu0 0.0
      %3128 = vmatprep.subr.mxu0 0.0
      %3129 = vmatpush1.msra.mxu0 0.0
      %3130 = vmatprep.subr.mxu0 0.0
      %3131 = vmatpush1.msra.mxu0 0.0
      %3132 = vmatprep.subr.mxu0 0.0
      %3133 = vmatpush1.msra.mxu0 0.0
      %3134 = vmatprep.mubr.f32.mxu0 0.0
      %3135 = vmatmul.mubr.f32.gmra.mrb[0].mxu0 %v3031
      %v3136 = vpop.f32.mrb[0].mxu0
      %v3137 = vadd.f32 0.0, %v3136
      %v3138 = vpop.f32.mrb[0].mxu0
      %3139 = vmatprep.mubr.f32.mxu0 0.0
      %3140 = vmatmul.mubr.f32.gmra.mrb[0].mxu0 %v3032
      %v3141 = vpop.f32.mrb[0].mxu0
      %v3142 = vadd.f32 0.0, %v3141
      %v3143 = vpop.f32.mrb[0].mxu0
      %3144 = vmatprep.mubr.f32.mxu0 0.0
      %3145 = vmatmul.mubr.f32.gmra.mrb[0].mxu0 %v3033
      %v3146 = vpop.f32.mrb[0].mxu0
      %v3147 = vadd.f32 0.0, %v3146
      %v3148 = vpop.f32.mrb[0].mxu0
      %3149 = vmatprep.mubr.f32.mxu0 0.0
      %3150 = vmatmul.mubr.f32.gmra.mrb[0].mxu0 %v3034
      %v3151 = vpop.f32.mrb[0].mxu0
      %v3152 = vadd.f32 0.0, %v3151
      %v3153 = vpop.f32.mrb[0].mxu0
      %3154 = vmatprep.mubr.f32.mxu0 0.0
      %3155 = vmatmul.mubr.f32.gmra.mrb[0].mxu0 %v3035
      %v3156 = vpop.f32.mrb[0].mxu0
      %v3157 = vadd.f32 0.0, %v3156
      %v3158 = vpop.f32.mrb[0].mxu0
      %3159 = vmatprep.mubr.f32.mxu0 0.0
      %3160 = vmatmul.mubr.f32.gmra.mrb[0].mxu0 %v3036
      %v3161 = vpop.f32.mrb[0].mxu0
      %v3162 = vadd.f32 0.0, %v3161
      %v3163 = vpop.f32.mrb[0].mxu0
      %3164 = vmatprep.mubr.f32.mxu0 0.0
      %3165 = vmatmul.mubr.f32.gmra.mrb[0].mxu0 %v3037
      %v3166 = vpop.f32.mrb[0].mxu0
      %v3167 = vadd.f32 0.0, %v3166
      %v3168 = vpop.f32.mrb[0].mxu0
      %3169 = vmatprep.mubr.f32.mxu0 0.0
      %3170 = vmatmul.mubr.f32.gmra.mrb[0].mxu0 %v3038
      %v3171 = vpop.f32.mrb[0].mxu0
      %v3172 = vadd.f32 0.0, %v3171
      %v3173 = vpop.f32.mrb[0].mxu0
      %3174 = vmatprep.mubr.f32.mxu0 0.0
      %3175 = vmatmul.mubr.f32.gmra.mrb[0].mxu0 %v3039
      %v3176 = vpop.f32.mrb[0].mxu0
      %v3177 = vadd.f32 0.0, %v3176
      %v3178 = vpop.f32.mrb[0].mxu0
      %3179 = vmatprep.mubr.f32.mxu0 0.0
      %3180 = vmatmul.mubr.f32.gmra.mrb[0].mxu0 %v3040
      %v3181 = vpop.f32.mrb[0].mxu0
      %v3182 = vadd.f32 0.0, %v3181
      %v3183 = vpop.f32.mrb[0].mxu0
      %3184 = vmatprep.mubr.f32.mxu0 0.0
      %3185 = vmatmul.mubr.f32.gmra.mrb[0].mxu0 %v3041
      %v3186 = vpop.f32.mrb[0].mxu0
      %v3187 = vadd.f32 0.0, %v3186
      %v3188 = vpop.f32.mrb[0].mxu0
      %3189 = vmatprep.mubr.f32.mxu0 0.0
      %3190 = vmatmul.mubr.f32.gmra.mrb[0].mxu0 %v3042
      %v3191 = vpop.f32.mrb[0].mxu0
      %v3192 = vadd.f32 0.0, %v3191
      %v3193 = vpop.f32.mrb[0].mxu0
      %3194 = vmatprep.mubr.f32.mxu0 0.0
      %3195 = vmatmul.mubr.f32.gmra.mrb[0].mxu0 %v3043
      %v3196 = vpop.f32.mrb[0].mxu0
      %v3197 = vadd.f32 0.0, %v3196
      %v3198 = vpop.f32.mrb[0].mxu0
      %3199 = vmatprep.mubr.f32.mxu0 0.0
      %3200 = vmatmul.mubr.f32.gmra.mrb[0].mxu0 %v3044
      %v3201 = vpop.f32.mrb[0].mxu0
      %v3202 = vadd.f32 0.0, %v3201
      %v3203 = vpop.f32.mrb[0].mxu0
      %3204 = vmatprep.mubr.f32.mxu0 0.0
      %3205 = vmatmul.mubr.f32.gmra.mrb[0].mxu0 %v3045
      %v3206 = vpop.f32.mrb[0].mxu0
      %v3207 = vadd.f32 0.0, %v3206
      %v3208 = vpop.f32.mrb[0].mxu0
      %3209 = vmatprep.mubr.f32.mxu0 0.0
      %3210 = vmatmul.mubr.f32.gmra.mrb[0].mxu0 %v3046
      %v3211 = vpop.f32.mrb[0].mxu0
      %v3212 = vadd.f32 0.0, %v3211
      %v3213 = vpop.f32.mrb[0].mxu0
      %3214 = vmatprep.mubr.f32.mxu0 0.0
      %3215 = vmatmul.mubr.f32.gmra.mrb[0].mxu0 %v3047
      %v3216 = vpop.f32.mrb[0].mxu0
      %v3217 = vadd.f32 0.0, %v3216
      %v3218 = vpop.f32.mrb[0].mxu0
      %3219 = vmatprep.mubr.f32.mxu0 0.0
      %3220 = vmatmul.mubr.f32.gmra.mrb[0].mxu0 %v3048
      %v3221 = vpop.f32.mrb[0].mxu0
      %v3222 = vadd.f32 0.0, %v3221
      %v3223 = vpop.f32.mrb[0].mxu0
      %3224 = vmatprep.mubr.f32.mxu0 0.0
      %3225 = vmatmul.mubr.f32.gmra.mrb[0].mxu0 %v3049
      %v3226 = vpop.f32.mrb[0].mxu0
      %v3227 = vadd.f32 0.0, %v3226
      %v3228 = vpop.f32.mrb[0].mxu0
      %3229 = vmatprep.mubr.f32.mxu0 0.0
      %3230 = vmatmul.mubr.f32.gmra.mrb[0].mxu0 %v3050
      %v3231 = vpop.f32.mrb[0].mxu0
      %v3232 = vadd.f32 0.0, %v3231
      %v3233 = vpop.f32.mrb[0].mxu0
      %3234 = vmatprep.mubr.f32.mxu0 0.0
      %3235 = vmatmul.mubr.f32.gmra.mrb[0].mxu0 %v3051
      %v3236 = vpop.f32.mrb[0].mxu0
      %v3237 = vadd.f32 0.0, %v3236
      %v3238 = vpop.f32.mrb[0].mxu0
      %3239 = vmatprep.mubr.f32.mxu0 0.0
      %3240 = vmatmul.mubr.f32.gmra.mrb[0].mxu0 %v3052
      %v3241 = vpop.f32.mrb[0].mxu0
      %v3242 = vadd.f32 0.0, %v3241
      %v3243 = vpop.f32.mrb[0].mxu0
      %3244 = vdwg.mxu0
      %s3245 = scalar_lea.vmem [#allocation3], 1232
      %3246 = vst [vmem:[%s3245] sm:$0xff] %v3137
      %3247 = vst [vmem:[%s3245 + $0x8] sm:$0xff] %v3142
      %3248 = vst [vmem:[%s3245 + $0x10] sm:$0xff] %v3147
      %3249 = vst [vmem:[%s3245 + $0x18] sm:$0xff] %v3152
      %3250 = vst [vmem:[%s3245 + $0x20] sm:$0xff] %v3157
      %3251 = vst [vmem:[%s3245 + $0x28] sm:$0xff] %v3162
      %3252 = vst [vmem:[%s3245 + $0x30] sm:$0xff] %v3167
      %3253 = vst [vmem:[%s3245 + $0x38] sm:$0xff] %v3172
      %3254 = vst [vmem:[%s3245 + $0x40] sm:$0xff] %v3177
      %3255 = vst [vmem:[%s3245 + $0x48] sm:$0xff] %v3182
      %3256 = vst [vmem:[%s3245 + $0x50] sm:$0xff] %v3187
      %3257 = vst [vmem:[%s3245 + $0x58] sm:$0xff] %v3192
      %3258 = vst [vmem:[%s3245 + $0x60] sm:$0xff] %v3197
      %3259 = vst [vmem:[%s3245 + $0x68] sm:$0xff] %v3202
      %3260 = vst [vmem:[%s3245 + $0x70] sm:$0xff] %v3207
      %3261 = vst [vmem:[%s3245 + $0x78] sm:$0xff] %v3212
      %3262 = vst [vmem:[%s3245 + $0x80] sm:$0xff] %v3217
      %3263 = vst [vmem:[%s3245 + $0x88] sm:$0xff] %v3222
      %3264 = vst [vmem:[%s3245 + $0x90] sm:$0xff] %v3227
      %3265 = vst [vmem:[%s3245 + $0x98] sm:$0xff] %v3232
      %3266 = vst [vmem:[%s3245 + $0xa0] sm:$0xff] %v3237
      %3267 = vst [vmem:[%s3245 + $0xa8] sm:$0xff] %v3242
      %v3268 = vld [vmem:[#allocation2] sm:$0xff]
      %v3269 = vld [vmem:[#allocation2 + $0x8] sm:$0xff]
      %v3270 = vld [vmem:[#allocation2 + $0x10] sm:$0xff]
      %v3271 = vld [vmem:[#allocation2 + $0x18] sm:$0xff]
      %v3272 = vld [vmem:[#allocation2 + $0x20] sm:$0xff]
      %v3273 = vld [vmem:[#allocation2 + $0x28] sm:$0xff]
      %v3274 = vld [vmem:[#allocation2 + $0x30] sm:$0xff]
      %v3275 = vld [vmem:[#allocation2 + $0x38] sm:$0xff]
      %v3276 = vld [vmem:[#allocation2 + $0x40] sm:$0xff]
      %v3277 = vld [vmem:[#allocation2 + $0x48] sm:$0xff]
      %v3278 = vld [vmem:[#allocation2 + $0x50] sm:$0xff]
      %v3279 = vld [vmem:[#allocation2 + $0x58] sm:$0xff]
      %v3280 = vld [vmem:[#allocation2 + $0x60] sm:$0xff]
      %v3281 = vld [vmem:[#allocation2 + $0x68] sm:$0xff]
      %v3282 = vld [vmem:[#allocation2 + $0x70] sm:$0xff]
      %v3283 = vld [vmem:[#allocation2 + $0x78] sm:$0xff]
      %v3284 = vld [vmem:[#allocation2 + $0x80] sm:$0xff]
      %v3285 = vld [vmem:[#allocation2 + $0x88] sm:$0xff]
      %v3286 = vld [vmem:[#allocation2 + $0x90] sm:$0xff]
      %v3287 = vld [vmem:[#allocation2 + $0x98] sm:$0xff]
      %v3288 = vld [vmem:[#allocation2 + $0xa0] sm:$0xff]
      %v3289 = vld [vmem:[#allocation2 + $0xa8] sm:$0xff]
      %s3290 = scalar_lea.vmem %s3, 1024
      %v3291 = vld [vmem:[%s3290] sm:$0xff]
      %v3292 = vld [vmem:[%s3290 + $0x8] sm:$0xff]
      %v3293 = vld [vmem:[%s3290 + $0x10] sm:$0xff]
      %v3294 = vld [vmem:[%s3290 + $0x18] sm:$0xff]
      %v3295 = vld [vmem:[%s3290 + $0x20] sm:$0xff]
      %v3296 = vld [vmem:[%s3290 + $0x28] sm:$0xff]
      %v3297 = vld [vmem:[%s3290 + $0x30] sm:$0xff]
      %v3298 = vld [vmem:[%s3290 + $0x38] sm:$0xff]
      %v3299 = vld [vmem:[%s3290 + $0x40] sm:$0xff]
      %v3300 = vld [vmem:[%s3290 + $0x48] sm:$0xff]
      %v3301 = vld [vmem:[%s3290 + $0x50] sm:$0xff]
      %v3302 = vld [vmem:[%s3290 + $0x58] sm:$0xff]
      %v3303 = vld [vmem:[%s3290 + $0x60] sm:$0xff]
      %v3304 = vld [vmem:[%s3290 + $0x68] sm:$0xff]
      %v3305 = vld [vmem:[%s3290 + $0x70] sm:$0xff]
      %v3306 = vld [vmem:[%s3290 + $0x78] sm:$0xff]
      %3307 = vmatprep.subr.mxu0 0.0
      %3308 = vmatpush1.msra.mxu0 %v3291
      %3309 = vmatprep.subr.mxu0 0.0
      %3310 = vmatpush1.msra.mxu0 %v3292
      %3311 = vmatprep.subr.mxu0 0.0
      %3312 = vmatpush1.msra.mxu0 %v3293
      %3313 = vmatprep.subr.mxu0 0.0
      %3314 = vmatpush1.msra.mxu0 %v3294
      %3315 = vmatprep.subr.mxu0 0.0
      %3316 = vmatpush1.msra.mxu0 %v3295
      %3317 = vmatprep.subr.mxu0 0.0
      %3318 = vmatpush1.msra.mxu0 %v3296
      %3319 = vmatprep.subr.mxu0 0.0
      %3320 = vmatpush1.msra.mxu0 %v3297
      %3321 = vmatprep.subr.mxu0 0.0
      %3322 = vmatpush1.msra.mxu0 %v3298
      %3323 = vmatprep.subr.mxu0 0.0
      %3324 = vmatpush1.msra.mxu0 %v3299
      %3325 = vmatprep.subr.mxu0 0.0
      %3326 = vmatpush1.msra.mxu0 %v3300
      %3327 = vmatprep.subr.mxu0 0.0
      %3328 = vmatpush1.msra.mxu0 %v3301
      %3329 = vmatprep.subr.mxu0 0.0
      %3330 = vmatpush1.msra.mxu0 %v3302
      %3331 = vmatprep.subr.mxu0 0.0
      %3332 = vmatpush1.msra.mxu0 %v3303
      %3333 = vmatprep.subr.mxu0 0.0
      %3334 = vmatpush1.msra.mxu0 %v3304
      %3335 = vmatprep.subr.mxu0 0.0
      %3336 = vmatpush1.msra.mxu0 %v3305
      %3337 = vmatprep.subr.mxu0 0.0
      %3338 = vmatpush1.msra.mxu0 %v3306
      %3339 = vmatprep.subr.mxu0 0.0
      %3340 = vmatpush1.msra.mxu0 0.0
      %3341 = vmatprep.subr.mxu0 0.0
      %3342 = vmatpush1.msra.mxu0 0.0
      %3343 = vmatprep.subr.mxu0 0.0
      %3344 = vmatpush1.msra.mxu0 0.0
      %3345 = vmatprep.subr.mxu0 0.0
      %3346 = vmatpush1.msra.mxu0 0.0
      %3347 = vmatprep.subr.mxu0 0.0
      %3348 = vmatpush1.msra.mxu0 0.0
      %3349 = vmatprep.subr.mxu0 0.0
      %3350 = vmatpush1.msra.mxu0 0.0
      %3351 = vmatprep.subr.mxu0 0.0
      %3352 = vmatpush1.msra.mxu0 0.0
      %3353 = vmatprep.subr.mxu0 0.0
      %3354 = vmatpush1.msra.mxu0 0.0
      %3355 = vmatprep.subr.mxu0 0.0
      %3356 = vmatpush1.msra.mxu0 0.0
      %3357 = vmatprep.subr.mxu0 0.0
      %3358 = vmatpush1.msra.mxu0 0.0
      %3359 = vmatprep.subr.mxu0 0.0
      %3360 = vmatpush1.msra.mxu0 0.0
      %3361 = vmatprep.subr.mxu0 0.0
      %3362 = vmatpush1.msra.mxu0 0.0
      %3363 = vmatprep.subr.mxu0 0.0
      %3364 = vmatpush1.msra.mxu0 0.0
      %3365 = vmatprep.subr.mxu0 0.0
      %3366 = vmatpush1.msra.mxu0 0.0
      %3367 = vmatprep.subr.mxu0 0.0
      %3368 = vmatpush1.msra.mxu0 0.0
      %3369 = vmatprep.subr.mxu0 0.0
      %3370 = vmatpush1.msra.mxu0 0.0
      %3371 = vmatprep.mubr.f32.mxu0 0.0
      %3372 = vmatmul.mubr.f32.gmra.mrb[0].mxu0 %v3268
      %v3373 = vpop.f32.mrb[0].mxu0
      %v3374 = vadd.f32 0.0, %v3373
      %v3375 = vpop.f32.mrb[0].mxu0
      %3376 = vmatprep.mubr.f32.mxu0 0.0
      %3377 = vmatmul.mubr.f32.gmra.mrb[0].mxu0 %v3269
      %v3378 = vpop.f32.mrb[0].mxu0
      %v3379 = vadd.f32 0.0, %v3378
      %v3380 = vpop.f32.mrb[0].mxu0
      %3381 = vmatprep.mubr.f32.mxu0 0.0
      %3382 = vmatmul.mubr.f32.gmra.mrb[0].mxu0 %v3270
      %v3383 = vpop.f32.mrb[0].mxu0
      %v3384 = vadd.f32 0.0, %v3383
      %v3385 = vpop.f32.mrb[0].mxu0
      %3386 = vmatprep.mubr.f32.mxu0 0.0
      %3387 = vmatmul.mubr.f32.gmra.mrb[0].mxu0 %v3271
      %v3388 = vpop.f32.mrb[0].mxu0
      %v3389 = vadd.f32 0.0, %v3388
      %v3390 = vpop.f32.mrb[0].mxu0
      %3391 = vmatprep.mubr.f32.mxu0 0.0
      %3392 = vmatmul.mubr.f32.gmra.mrb[0].mxu0 %v3272
      %v3393 = vpop.f32.mrb[0].mxu0
      %v3394 = vadd.f32 0.0, %v3393
      %v3395 = vpop.f32.mrb[0].mxu0
      %3396 = vmatprep.mubr.f32.mxu0 0.0
      %3397 = vmatmul.mubr.f32.gmra.mrb[0].mxu0 %v3273
      %v3398 = vpop.f32.mrb[0].mxu0
      %v3399 = vadd.f32 0.0, %v3398
      %v3400 = vpop.f32.mrb[0].mxu0
      %3401 = vmatprep.mubr.f32.mxu0 0.0
      %3402 = vmatmul.mubr.f32.gmra.mrb[0].mxu0 %v3274
      %v3403 = vpop.f32.mrb[0].mxu0
      %v3404 = vadd.f32 0.0, %v3403
      %v3405 = vpop.f32.mrb[0].mxu0
      %3406 = vmatprep.mubr.f32.mxu0 0.0
      %3407 = vmatmul.mubr.f32.gmra.mrb[0].mxu0 %v3275
      %v3408 = vpop.f32.mrb[0].mxu0
      %v3409 = vadd.f32 0.0, %v3408
      %v3410 = vpop.f32.mrb[0].mxu0
      %3411 = vmatprep.mubr.f32.mxu0 0.0
      %3412 = vmatmul.mubr.f32.gmra.mrb[0].mxu0 %v3276
      %v3413 = vpop.f32.mrb[0].mxu0
      %v3414 = vadd.f32 0.0, %v3413
      %v3415 = vpop.f32.mrb[0].mxu0
      %3416 = vmatprep.mubr.f32.mxu0 0.0
      %3417 = vmatmul.mubr.f32.gmra.mrb[0].mxu0 %v3277
      %v3418 = vpop.f32.mrb[0].mxu0
      %v3419 = vadd.f32 0.0, %v3418
      %v3420 = vpop.f32.mrb[0].mxu0
      %3421 = vmatprep.mubr.f32.mxu0 0.0
      %3422 = vmatmul.mubr.f32.gmra.mrb[0].mxu0 %v3278
      %v3423 = vpop.f32.mrb[0].mxu0
      %v3424 = vadd.f32 0.0, %v3423
      %v3425 = vpop.f32.mrb[0].mxu0
      %3426 = vmatprep.mubr.f32.mxu0 0.0
      %3427 = vmatmul.mubr.f32.gmra.mrb[0].mxu0 %v3279
      %v3428 = vpop.f32.mrb[0].mxu0
      %v3429 = vadd.f32 0.0, %v3428
      %v3430 = vpop.f32.mrb[0].mxu0
      %3431 = vmatprep.mubr.f32.mxu0 0.0
      %3432 = vmatmul.mubr.f32.gmra.mrb[0].mxu0 %v3280
      %v3433 = vpop.f32.mrb[0].mxu0
      %v3434 = vadd.f32 0.0, %v3433
      %v3435 = vpop.f32.mrb[0].mxu0
      %3436 = vmatprep.mubr.f32.mxu0 0.0
      %3437 = vmatmul.mubr.f32.gmra.mrb[0].mxu0 %v3281
      %v3438 = vpop.f32.mrb[0].mxu0
      %v3439 = vadd.f32 0.0, %v3438
      %v3440 = vpop.f32.mrb[0].mxu0
      %3441 = vmatprep.mubr.f32.mxu0 0.0
      %3442 = vmatmul.mubr.f32.gmra.mrb[0].mxu0 %v3282
      %v3443 = vpop.f32.mrb[0].mxu0
      %v3444 = vadd.f32 0.0, %v3443
      %v3445 = vpop.f32.mrb[0].mxu0
      %3446 = vmatprep.mubr.f32.mxu0 0.0
      %3447 = vmatmul.mubr.f32.gmra.mrb[0].mxu0 %v3283
      %v3448 = vpop.f32.mrb[0].mxu0
      %v3449 = vadd.f32 0.0, %v3448
      %v3450 = vpop.f32.mrb[0].mxu0
      %3451 = vmatprep.mubr.f32.mxu0 0.0
      %3452 = vmatmul.mubr.f32.gmra.mrb[0].mxu0 %v3284
      %v3453 = vpop.f32.mrb[0].mxu0
      %v3454 = vadd.f32 0.0, %v3453
      %v3455 = vpop.f32.mrb[0].mxu0
      %3456 = vmatprep.mubr.f32.mxu0 0.0
      %3457 = vmatmul.mubr.f32.gmra.mrb[0].mxu0 %v3285
      %v3458 = vpop.f32.mrb[0].mxu0
      %v3459 = vadd.f32 0.0, %v3458
      %v3460 = vpop.f32.mrb[0].mxu0
      %3461 = vmatprep.mubr.f32.mxu0 0.0
      %3462 = vmatmul.mubr.f32.gmra.mrb[0].mxu0 %v3286
      %v3463 = vpop.f32.mrb[0].mxu0
      %v3464 = vadd.f32 0.0, %v3463
      %v3465 = vpop.f32.mrb[0].mxu0
      %3466 = vmatprep.mubr.f32.mxu0 0.0
      %3467 = vmatmul.mubr.f32.gmra.mrb[0].mxu0 %v3287
      %v3468 = vpop.f32.mrb[0].mxu0
      %v3469 = vadd.f32 0.0, %v3468
      %v3470 = vpop.f32.mrb[0].mxu0
      %3471 = vmatprep.mubr.f32.mxu0 0.0
      %3472 = vmatmul.mubr.f32.gmra.mrb[0].mxu0 %v3288
      %v3473 = vpop.f32.mrb[0].mxu0
      %v3474 = vadd.f32 0.0, %v3473
      %v3475 = vpop.f32.mrb[0].mxu0
      %3476 = vmatprep.mubr.f32.mxu0 0.0
      %3477 = vmatmul.mubr.f32.gmra.mrb[0].mxu0 %v3289
      %v3478 = vpop.f32.mrb[0].mxu0
      %v3479 = vadd.f32 0.0, %v3478
      %v3480 = vpop.f32.mrb[0].mxu0
      %3481 = vdwg.mxu0
      %s3482 = scalar_lea.vmem [#allocation3], 1408
      %3483 = vst [vmem:[%s3482] sm:$0xff] %v3374
      %3484 = vst [vmem:[%s3482 + $0x8] sm:$0xff] %v3379
      %3485 = vst [vmem:[%s3482 + $0x10] sm:$0xff] %v3384
      %3486 = vst [vmem:[%s3482 + $0x18] sm:$0xff] %v3389
      %3487 = vst [vmem:[%s3482 + $0x20] sm:$0xff] %v3394
      %3488 = vst [vmem:[%s3482 + $0x28] sm:$0xff] %v3399
      %3489 = vst [vmem:[%s3482 + $0x30] sm:$0xff] %v3404
      %3490 = vst [vmem:[%s3482 + $0x38] sm:$0xff] %v3409
      %3491 = vst [vmem:[%s3482 + $0x40] sm:$0xff] %v3414
      %3492 = vst [vmem:[%s3482 + $0x48] sm:$0xff] %v3419
      %3493 = vst [vmem:[%s3482 + $0x50] sm:$0xff] %v3424
      %3494 = vst [vmem:[%s3482 + $0x58] sm:$0xff] %v3429
      %3495 = vst [vmem:[%s3482 + $0x60] sm:$0xff] %v3434
      %3496 = vst [vmem:[%s3482 + $0x68] sm:$0xff] %v3439
      %3497 = vst [vmem:[%s3482 + $0x70] sm:$0xff] %v3444
      %3498 = vst [vmem:[%s3482 + $0x78] sm:$0xff] %v3449
      %3499 = vst [vmem:[%s3482 + $0x80] sm:$0xff] %v3454
      %3500 = vst [vmem:[%s3482 + $0x88] sm:$0xff] %v3459
      %3501 = vst [vmem:[%s3482 + $0x90] sm:$0xff] %v3464
      %3502 = vst [vmem:[%s3482 + $0x98] sm:$0xff] %v3469
      %3503 = vst [vmem:[%s3482 + $0xa0] sm:$0xff] %v3474
      %3504 = vst [vmem:[%s3482 + $0xa8] sm:$0xff] %v3479
      %v3505 = vld [vmem:[#allocation2 + $0xb0] sm:$0xff]
      %v3506 = vld [vmem:[#allocation2 + $0xb8] sm:$0xff]
      %v3507 = vld [vmem:[#allocation2 + $0xc0] sm:$0xff]
      %v3508 = vld [vmem:[#allocation2 + $0xc8] sm:$0xff]
      %v3509 = vld [vmem:[#allocation2 + $0xd0] sm:$0xff]
      %v3510 = vld [vmem:[#allocation2 + $0xd8] sm:$0xff]
      %v3511 = vld [vmem:[#allocation2 + $0xe0] sm:$0xff]
      %v3512 = vld [vmem:[#allocation2 + $0xe8] sm:$0xff]
      %v3513 = vld [vmem:[#allocation2 + $0xf0] sm:$0xff]
      %v3514 = vld [vmem:[#allocation2 + $0xf8] sm:$0xff]
      %v3515 = vld [vmem:[#allocation2 + $0x100] sm:$0xff]
      %v3516 = vld [vmem:[#allocation2 + $0x108] sm:$0xff]
      %v3517 = vld [vmem:[#allocation2 + $0x110] sm:$0xff]
      %v3518 = vld [vmem:[#allocation2 + $0x118] sm:$0xff]
      %v3519 = vld [vmem:[#allocation2 + $0x120] sm:$0xff]
      %v3520 = vld [vmem:[#allocation2 + $0x128] sm:$0xff]
      %v3521 = vld [vmem:[#allocation2 + $0x130] sm:$0xff]
      %v3522 = vld [vmem:[#allocation2 + $0x138] sm:$0xff]
      %v3523 = vld [vmem:[#allocation2 + $0x140] sm:$0xff]
      %v3524 = vld [vmem:[#allocation2 + $0x148] sm:$0xff]
      %v3525 = vld [vmem:[#allocation2 + $0x150] sm:$0xff]
      %v3526 = vld [vmem:[#allocation2 + $0x158] sm:$0xff]
      %s3527 = scalar_lea.vmem %s3, 1152
      %v3528 = vld [vmem:[%s3527] sm:$0xff]
      %v3529 = vld [vmem:[%s3527 + $0x8] sm:$0xff]
      %v3530 = vld [vmem:[%s3527 + $0x10] sm:$0xff]
      %v3531 = vld [vmem:[%s3527 + $0x18] sm:$0xff]
      %v3532 = vld [vmem:[%s3527 + $0x20] sm:$0xff]
      %v3533 = vld [vmem:[%s3527 + $0x28] sm:$0xff]
      %v3534 = vld [vmem:[%s3527 + $0x30] sm:$0xff]
      %v3535 = vld [vmem:[%s3527 + $0x38] sm:$0xff]
      %v3536 = vld [vmem:[%s3527 + $0x40] sm:$0xff]
      %v3537 = vld [vmem:[%s3527 + $0x48] sm:$0xff]
      %v3538 = vld [vmem:[%s3527 + $0x50] sm:$0xff]
      %v3539 = vld [vmem:[%s3527 + $0x58] sm:$0xff]
      %v3540 = vld [vmem:[%s3527 + $0x60] sm:$0xff]
      %v3541 = vld [vmem:[%s3527 + $0x68] sm:$0xff]
      %v3542 = vld [vmem:[%s3527 + $0x70] sm:$0xff]
      %v3543 = vld [vmem:[%s3527 + $0x78] sm:$0xff]
      %3544 = vmatprep.subr.mxu0 0.0
      %3545 = vmatpush1.msra.mxu0 %v3528
      %3546 = vmatprep.subr.mxu0 0.0
      %3547 = vmatpush1.msra.mxu0 %v3529
      %3548 = vmatprep.subr.mxu0 0.0
      %3549 = vmatpush1.msra.mxu0 %v3530
      %3550 = vmatprep.subr.mxu0 0.0
      %3551 = vmatpush1.msra.mxu0 %v3531
      %3552 = vmatprep.subr.mxu0 0.0
      %3553 = vmatpush1.msra.mxu0 %v3532
      %3554 = vmatprep.subr.mxu0 0.0
      %3555 = vmatpush1.msra.mxu0 %v3533
      %3556 = vmatprep.subr.mxu0 0.0
      %3557 = vmatpush1.msra.mxu0 %v3534
      %3558 = vmatprep.subr.mxu0 0.0
      %3559 = vmatpush1.msra.mxu0 %v3535
      %3560 = vmatprep.subr.mxu0 0.0
      %3561 = vmatpush1.msra.mxu0 %v3536
      %3562 = vmatprep.subr.mxu0 0.0
      %3563 = vmatpush1.msra.mxu0 %v3537
      %3564 = vmatprep.subr.mxu0 0.0
      %3565 = vmatpush1.msra.mxu0 %v3538
      %3566 = vmatprep.subr.mxu0 0.0
      %3567 = vmatpush1.msra.mxu0 %v3539
      %3568 = vmatprep.subr.mxu0 0.0
      %3569 = vmatpush1.msra.mxu0 %v3540
      %3570 = vmatprep.subr.mxu0 0.0
      %3571 = vmatpush1.msra.mxu0 %v3541
      %3572 = vmatprep.subr.mxu0 0.0
      %3573 = vmatpush1.msra.mxu0 %v3542
      %3574 = vmatprep.subr.mxu0 0.0
      %3575 = vmatpush1.msra.mxu0 %v3543
      %3576 = vmatprep.subr.mxu0 0.0
      %3577 = vmatpush1.msra.mxu0 0.0
      %3578 = vmatprep.subr.mxu0 0.0
      %3579 = vmatpush1.msra.mxu0 0.0
      %3580 = vmatprep.subr.mxu0 0.0
      %3581 = vmatpush1.msra.mxu0 0.0
      %3582 = vmatprep.subr.mxu0 0.0
      %3583 = vmatpush1.msra.mxu0 0.0
      %3584 = vmatprep.subr.mxu0 0.0
      %3585 = vmatpush1.msra.mxu0 0.0
      %3586 = vmatprep.subr.mxu0 0.0
      %3587 = vmatpush1.msra.mxu0 0.0
      %3588 = vmatprep.subr.mxu0 0.0
      %3589 = vmatpush1.msra.mxu0 0.0
      %3590 = vmatprep.subr.mxu0 0.0
      %3591 = vmatpush1.msra.mxu0 0.0
      %3592 = vmatprep.subr.mxu0 0.0
      %3593 = vmatpush1.msra.mxu0 0.0
      %3594 = vmatprep.subr.mxu0 0.0
      %3595 = vmatpush1.msra.mxu0 0.0
      %3596 = vmatprep.subr.mxu0 0.0
      %3597 = vmatpush1.msra.mxu0 0.0
      %3598 = vmatprep.subr.mxu0 0.0
      %3599 = vmatpush1.msra.mxu0 0.0
      %3600 = vmatprep.subr.mxu0 0.0
      %3601 = vmatpush1.msra.mxu0 0.0
      %3602 = vmatprep.subr.mxu0 0.0
      %3603 = vmatpush1.msra.mxu0 0.0
      %3604 = vmatprep.subr.mxu0 0.0
      %3605 = vmatpush1.msra.mxu0 0.0
      %3606 = vmatprep.subr.mxu0 0.0
      %3607 = vmatpush1.msra.mxu0 0.0
      %3608 = vmatprep.mubr.f32.mxu0 0.0
      %3609 = vmatmul.mubr.f32.gmra.mrb[0].mxu0 %v3505
      %v3610 = vpop.f32.mrb[0].mxu0
      %v3611 = vadd.f32 0.0, %v3610
      %v3612 = vpop.f32.mrb[0].mxu0
      %3613 = vmatprep.mubr.f32.mxu0 0.0
      %3614 = vmatmul.mubr.f32.gmra.mrb[0].mxu0 %v3506
      %v3615 = vpop.f32.mrb[0].mxu0
      %v3616 = vadd.f32 0.0, %v3615
      %v3617 = vpop.f32.mrb[0].mxu0
      %3618 = vmatprep.mubr.f32.mxu0 0.0
      %3619 = vmatmul.mubr.f32.gmra.mrb[0].mxu0 %v3507
      %v3620 = vpop.f32.mrb[0].mxu0
      %v3621 = vadd.f32 0.0, %v3620
      %v3622 = vpop.f32.mrb[0].mxu0
      %3623 = vmatprep.mubr.f32.mxu0 0.0
      %3624 = vmatmul.mubr.f32.gmra.mrb[0].mxu0 %v3508
      %v3625 = vpop.f32.mrb[0].mxu0
      %v3626 = vadd.f32 0.0, %v3625
      %v3627 = vpop.f32.mrb[0].mxu0
      %3628 = vmatprep.mubr.f32.mxu0 0.0
      %3629 = vmatmul.mubr.f32.gmra.mrb[0].mxu0 %v3509
      %v3630 = vpop.f32.mrb[0].mxu0
      %v3631 = vadd.f32 0.0, %v3630
      %v3632 = vpop.f32.mrb[0].mxu0
      %3633 = vmatprep.mubr.f32.mxu0 0.0
      %3634 = vmatmul.mubr.f32.gmra.mrb[0].mxu0 %v3510
      %v3635 = vpop.f32.mrb[0].mxu0
      %v3636 = vadd.f32 0.0, %v3635
      %v3637 = vpop.f32.mrb[0].mxu0
      %3638 = vmatprep.mubr.f32.mxu0 0.0
      %3639 = vmatmul.mubr.f32.gmra.mrb[0].mxu0 %v3511
      %v3640 = vpop.f32.mrb[0].mxu0
      %v3641 = vadd.f32 0.0, %v3640
      %v3642 = vpop.f32.mrb[0].mxu0
      %3643 = vmatprep.mubr.f32.mxu0 0.0
      %3644 = vmatmul.mubr.f32.gmra.mrb[0].mxu0 %v3512
      %v3645 = vpop.f32.mrb[0].mxu0
      %v3646 = vadd.f32 0.0, %v3645
      %v3647 = vpop.f32.mrb[0].mxu0
      %3648 = vmatprep.mubr.f32.mxu0 0.0
      %3649 = vmatmul.mubr.f32.gmra.mrb[0].mxu0 %v3513
      %v3650 = vpop.f32.mrb[0].mxu0
      %v3651 = vadd.f32 0.0, %v3650
      %v3652 = vpop.f32.mrb[0].mxu0
      %3653 = vmatprep.mubr.f32.mxu0 0.0
      %3654 = vmatmul.mubr.f32.gmra.mrb[0].mxu0 %v3514
      %v3655 = vpop.f32.mrb[0].mxu0
      %v3656 = vadd.f32 0.0, %v3655
      %v3657 = vpop.f32.mrb[0].mxu0
      %3658 = vmatprep.mubr.f32.mxu0 0.0
      %3659 = vmatmul.mubr.f32.gmra.mrb[0].mxu0 %v3515
      %v3660 = vpop.f32.mrb[0].mxu0
      %v3661 = vadd.f32 0.0, %v3660
      %v3662 = vpop.f32.mrb[0].mxu0
      %3663 = vmatprep.mubr.f32.mxu0 0.0
      %3664 = vmatmul.mubr.f32.gmra.mrb[0].mxu0 %v3516
      %v3665 = vpop.f32.mrb[0].mxu0
      %v3666 = vadd.f32 0.0, %v3665
      %v3667 = vpop.f32.mrb[0].mxu0
      %3668 = vmatprep.mubr.f32.mxu0 0.0
      %3669 = vmatmul.mubr.f32.gmra.mrb[0].mxu0 %v3517
      %v3670 = vpop.f32.mrb[0].mxu0
      %v3671 = vadd.f32 0.0, %v3670
      %v3672 = vpop.f32.mrb[0].mxu0
      %3673 = vmatprep.mubr.f32.mxu0 0.0
      %3674 = vmatmul.mubr.f32.gmra.mrb[0].mxu0 %v3518
      %v3675 = vpop.f32.mrb[0].mxu0
      %v3676 = vadd.f32 0.0, %v3675
      %v3677 = vpop.f32.mrb[0].mxu0
      %3678 = vmatprep.mubr.f32.mxu0 0.0
      %3679 = vmatmul.mubr.f32.gmra.mrb[0].mxu0 %v3519
      %v3680 = vpop.f32.mrb[0].mxu0
      %v3681 = vadd.f32 0.0, %v3680
      %v3682 = vpop.f32.mrb[0].mxu0
      %3683 = vmatprep.mubr.f32.mxu0 0.0
      %3684 = vmatmul.mubr.f32.gmra.mrb[0].mxu0 %v3520
      %v3685 = vpop.f32.mrb[0].mxu0
      %v3686 = vadd.f32 0.0, %v3685
      %v3687 = vpop.f32.mrb[0].mxu0
      %3688 = vmatprep.mubr.f32.mxu0 0.0
      %3689 = vmatmul.mubr.f32.gmra.mrb[0].mxu0 %v3521
      %v3690 = vpop.f32.mrb[0].mxu0
      %v3691 = vadd.f32 0.0, %v3690
      %v3692 = vpop.f32.mrb[0].mxu0
      %3693 = vmatprep.mubr.f32.mxu0 0.0
      %3694 = vmatmul.mubr.f32.gmra.mrb[0].mxu0 %v3522
      %v3695 = vpop.f32.mrb[0].mxu0
      %v3696 = vadd.f32 0.0, %v3695
      %v3697 = vpop.f32.mrb[0].mxu0
      %3698 = vmatprep.mubr.f32.mxu0 0.0
      %3699 = vmatmul.mubr.f32.gmra.mrb[0].mxu0 %v3523
      %v3700 = vpop.f32.mrb[0].mxu0
      %v3701 = vadd.f32 0.0, %v3700
      %v3702 = vpop.f32.mrb[0].mxu0
      %3703 = vmatprep.mubr.f32.mxu0 0.0
      %3704 = vmatmul.mubr.f32.gmra.mrb[0].mxu0 %v3524
      %v3705 = vpop.f32.mrb[0].mxu0
      %v3706 = vadd.f32 0.0, %v3705
      %v3707 = vpop.f32.mrb[0].mxu0
      %3708 = vmatprep.mubr.f32.mxu0 0.0
      %3709 = vmatmul.mubr.f32.gmra.mrb[0].mxu0 %v3525
      %v3710 = vpop.f32.mrb[0].mxu0
      %v3711 = vadd.f32 0.0, %v3710
      %v3712 = vpop.f32.mrb[0].mxu0
      %3713 = vmatprep.mubr.f32.mxu0 0.0
      %3714 = vmatmul.mubr.f32.gmra.mrb[0].mxu0 %v3526
      %v3715 = vpop.f32.mrb[0].mxu0
      %v3716 = vadd.f32 0.0, %v3715
      %v3717 = vpop.f32.mrb[0].mxu0
      %3718 = vdwg.mxu0
      %s3719 = scalar_lea.vmem [#allocation3], 1584
      %3720 = vst [vmem:[%s3719] sm:$0xff] %v3611
      %3721 = vst [vmem:[%s3719 + $0x8] sm:$0xff] %v3616
      %3722 = vst [vmem:[%s3719 + $0x10] sm:$0xff] %v3621
      %3723 = vst [vmem:[%s3719 + $0x18] sm:$0xff] %v3626
      %3724 = vst [vmem:[%s3719 + $0x20] sm:$0xff] %v3631
      %3725 = vst [vmem:[%s3719 + $0x28] sm:$0xff] %v3636
      %3726 = vst [vmem:[%s3719 + $0x30] sm:$0xff] %v3641
      %3727 = vst [vmem:[%s3719 + $0x38] sm:$0xff] %v3646
      %3728 = vst [vmem:[%s3719 + $0x40] sm:$0xff] %v3651
      %3729 = vst [vmem:[%s3719 + $0x48] sm:$0xff] %v3656
      %3730 = vst [vmem:[%s3719 + $0x50] sm:$0xff] %v3661
      %3731 = vst [vmem:[%s3719 + $0x58] sm:$0xff] %v3666
      %3732 = vst [vmem:[%s3719 + $0x60] sm:$0xff] %v3671
      %3733 = vst [vmem:[%s3719 + $0x68] sm:$0xff] %v3676
      %3734 = vst [vmem:[%s3719 + $0x70] sm:$0xff] %v3681
      %3735 = vst [vmem:[%s3719 + $0x78] sm:$0xff] %v3686
      %3736 = vst [vmem:[%s3719 + $0x80] sm:$0xff] %v3691
      %3737 = vst [vmem:[%s3719 + $0x88] sm:$0xff] %v3696
      %3738 = vst [vmem:[%s3719 + $0x90] sm:$0xff] %v3701
      %3739 = vst [vmem:[%s3719 + $0x98] sm:$0xff] %v3706
      %3740 = vst [vmem:[%s3719 + $0xa0] sm:$0xff] %v3711
      %3741 = vst [vmem:[%s3719 + $0xa8] sm:$0xff] %v3716
      %v3742 = vld [vmem:[#allocation2] sm:$0xff]
      %v3743 = vld [vmem:[#allocation2 + $0x8] sm:$0xff]
      %v3744 = vld [vmem:[#allocation2 + $0x10] sm:$0xff]
      %v3745 = vld [vmem:[#allocation2 + $0x18] sm:$0xff]
      %v3746 = vld [vmem:[#allocation2 + $0x20] sm:$0xff]
      %v3747 = vld [vmem:[#allocation2 + $0x28] sm:$0xff]
      %v3748 = vld [vmem:[#allocation2 + $0x30] sm:$0xff]
      %v3749 = vld [vmem:[#allocation2 + $0x38] sm:$0xff]
      %v3750 = vld [vmem:[#allocation2 + $0x40] sm:$0xff]
      %v3751 = vld [vmem:[#allocation2 + $0x48] sm:$0xff]
      %v3752 = vld [vmem:[#allocation2 + $0x50] sm:$0xff]
      %v3753 = vld [vmem:[#allocation2 + $0x58] sm:$0xff]
      %v3754 = vld [vmem:[#allocation2 + $0x60] sm:$0xff]
      %v3755 = vld [vmem:[#allocation2 + $0x68] sm:$0xff]
      %v3756 = vld [vmem:[#allocation2 + $0x70] sm:$0xff]
      %v3757 = vld [vmem:[#allocation2 + $0x78] sm:$0xff]
      %v3758 = vld [vmem:[#allocation2 + $0x80] sm:$0xff]
      %v3759 = vld [vmem:[#allocation2 + $0x88] sm:$0xff]
      %v3760 = vld [vmem:[#allocation2 + $0x90] sm:$0xff]
      %v3761 = vld [vmem:[#allocation2 + $0x98] sm:$0xff]
      %v3762 = vld [vmem:[#allocation2 + $0xa0] sm:$0xff]
      %v3763 = vld [vmem:[#allocation2 + $0xa8] sm:$0xff]
      %s3764 = scalar_lea.vmem %s3, 1280
      %v3765 = vld [vmem:[%s3764] sm:$0xff]
      %v3766 = vld [vmem:[%s3764 + $0x8] sm:$0xff]
      %v3767 = vld [vmem:[%s3764 + $0x10] sm:$0xff]
      %v3768 = vld [vmem:[%s3764 + $0x18] sm:$0xff]
      %v3769 = vld [vmem:[%s3764 + $0x20] sm:$0xff]
      %v3770 = vld [vmem:[%s3764 + $0x28] sm:$0xff]
      %v3771 = vld [vmem:[%s3764 + $0x30] sm:$0xff]
      %v3772 = vld [vmem:[%s3764 + $0x38] sm:$0xff]
      %v3773 = vld [vmem:[%s3764 + $0x40] sm:$0xff]
      %v3774 = vld [vmem:[%s3764 + $0x48] sm:$0xff]
      %v3775 = vld [vmem:[%s3764 + $0x50] sm:$0xff]
      %v3776 = vld [vmem:[%s3764 + $0x58] sm:$0xff]
      %v3777 = vld [vmem:[%s3764 + $0x60] sm:$0xff]
      %v3778 = vld [vmem:[%s3764 + $0x68] sm:$0xff]
      %v3779 = vld [vmem:[%s3764 + $0x70] sm:$0xff]
      %v3780 = vld [vmem:[%s3764 + $0x78] sm:$0xff]
      %3781 = vmatprep.subr.mxu0 0.0
      %3782 = vmatpush1.msra.mxu0 %v3765
      %3783 = vmatprep.subr.mxu0 0.0
      %3784 = vmatpush1.msra.mxu0 %v3766
      %3785 = vmatprep.subr.mxu0 0.0
      %3786 = vmatpush1.msra.mxu0 %v3767
      %3787 = vmatprep.subr.mxu0 0.0
      %3788 = vmatpush1.msra.mxu0 %v3768
      %3789 = vmatprep.subr.mxu0 0.0
      %3790 = vmatpush1.msra.mxu0 %v3769
      %3791 = vmatprep.subr.mxu0 0.0
      %3792 = vmatpush1.msra.mxu0 %v3770
      %3793 = vmatprep.subr.mxu0 0.0
      %3794 = vmatpush1.msra.mxu0 %v3771
      %3795 = vmatprep.subr.mxu0 0.0
      %3796 = vmatpush1.msra.mxu0 %v3772
      %3797 = vmatprep.subr.mxu0 0.0
      %3798 = vmatpush1.msra.mxu0 %v3773
      %3799 = vmatprep.subr.mxu0 0.0
      %3800 = vmatpush1.msra.mxu0 %v3774
      %3801 = vmatprep.subr.mxu0 0.0
      %3802 = vmatpush1.msra.mxu0 %v3775
      %3803 = vmatprep.subr.mxu0 0.0
      %3804 = vmatpush1.msra.mxu0 %v3776
      %3805 = vmatprep.subr.mxu0 0.0
      %3806 = vmatpush1.msra.mxu0 %v3777
      %3807 = vmatprep.subr.mxu0 0.0
      %3808 = vmatpush1.msra.mxu0 %v3778
      %3809 = vmatprep.subr.mxu0 0.0
      %3810 = vmatpush1.msra.mxu0 %v3779
      %3811 = vmatprep.subr.mxu0 0.0
      %3812 = vmatpush1.msra.mxu0 %v3780
      %3813 = vmatprep.subr.mxu0 0.0
      %3814 = vmatpush1.msra.mxu0 0.0
      %3815 = vmatprep.subr.mxu0 0.0
      %3816 = vmatpush1.msra.mxu0 0.0
      %3817 = vmatprep.subr.mxu0 0.0
      %3818 = vmatpush1.msra.mxu0 0.0
      %3819 = vmatprep.subr.mxu0 0.0
      %3820 = vmatpush1.msra.mxu0 0.0
      %3821 = vmatprep.subr.mxu0 0.0
      %3822 = vmatpush1.msra.mxu0 0.0
      %3823 = vmatprep.subr.mxu0 0.0
      %3824 = vmatpush1.msra.mxu0 0.0
      %3825 = vmatprep.subr.mxu0 0.0
      %3826 = vmatpush1.msra.mxu0 0.0
      %3827 = vmatprep.subr.mxu0 0.0
      %3828 = vmatpush1.msra.mxu0 0.0
      %3829 = vmatprep.subr.mxu0 0.0
      %3830 = vmatpush1.msra.mxu0 0.0
      %3831 = vmatprep.subr.mxu0 0.0
      %3832 = vmatpush1.msra.mxu0 0.0
      %3833 = vmatprep.subr.mxu0 0.0
      %3834 = vmatpush1.msra.mxu0 0.0
      %3835 = vmatprep.subr.mxu0 0.0
      %3836 = vmatpush1.msra.mxu0 0.0
      %3837 = vmatprep.subr.mxu0 0.0
      %3838 = vmatpush1.msra.mxu0 0.0
      %3839 = vmatprep.subr.mxu0 0.0
      %3840 = vmatpush1.msra.mxu0 0.0
      %3841 = vmatprep.subr.mxu0 0.0
      %3842 = vmatpush1.msra.mxu0 0.0
      %3843 = vmatprep.subr.mxu0 0.0
      %3844 = vmatpush1.msra.mxu0 0.0
      %3845 = vmatprep.mubr.f32.mxu0 0.0
      %3846 = vmatmul.mubr.f32.gmra.mrb[0].mxu0 %v3742
      %v3847 = vpop.f32.mrb[0].mxu0
      %v3848 = vadd.f32 0.0, %v3847
      %v3849 = vpop.f32.mrb[0].mxu0
      %3850 = vmatprep.mubr.f32.mxu0 0.0
      %3851 = vmatmul.mubr.f32.gmra.mrb[0].mxu0 %v3743
      %v3852 = vpop.f32.mrb[0].mxu0
      %v3853 = vadd.f32 0.0, %v3852
      %v3854 = vpop.f32.mrb[0].mxu0
      %3855 = vmatprep.mubr.f32.mxu0 0.0
      %3856 = vmatmul.mubr.f32.gmra.mrb[0].mxu0 %v3744
      %v3857 = vpop.f32.mrb[0].mxu0
      %v3858 = vadd.f32 0.0, %v3857
      %v3859 = vpop.f32.mrb[0].mxu0
      %3860 = vmatprep.mubr.f32.mxu0 0.0
      %3861 = vmatmul.mubr.f32.gmra.mrb[0].mxu0 %v3745
      %v3862 = vpop.f32.mrb[0].mxu0
      %v3863 = vadd.f32 0.0, %v3862
      %v3864 = vpop.f32.mrb[0].mxu0
      %3865 = vmatprep.mubr.f32.mxu0 0.0
      %3866 = vmatmul.mubr.f32.gmra.mrb[0].mxu0 %v3746
      %v3867 = vpop.f32.mrb[0].mxu0
      %v3868 = vadd.f32 0.0, %v3867
      %v3869 = vpop.f32.mrb[0].mxu0
      %3870 = vmatprep.mubr.f32.mxu0 0.0
      %3871 = vmatmul.mubr.f32.gmra.mrb[0].mxu0 %v3747
      %v3872 = vpop.f32.mrb[0].mxu0
      %v3873 = vadd.f32 0.0, %v3872
      %v3874 = vpop.f32.mrb[0].mxu0
      %3875 = vmatprep.mubr.f32.mxu0 0.0
      %3876 = vmatmul.mubr.f32.gmra.mrb[0].mxu0 %v3748
      %v3877 = vpop.f32.mrb[0].mxu0
      %v3878 = vadd.f32 0.0, %v3877
      %v3879 = vpop.f32.mrb[0].mxu0
      %3880 = vmatprep.mubr.f32.mxu0 0.0
      %3881 = vmatmul.mubr.f32.gmra.mrb[0].mxu0 %v3749
      %v3882 = vpop.f32.mrb[0].mxu0
      %v3883 = vadd.f32 0.0, %v3882
      %v3884 = vpop.f32.mrb[0].mxu0
      %3885 = vmatprep.mubr.f32.mxu0 0.0
      %3886 = vmatmul.mubr.f32.gmra.mrb[0].mxu0 %v3750
      %v3887 = vpop.f32.mrb[0].mxu0
      %v3888 = vadd.f32 0.0, %v3887
      %v3889 = vpop.f32.mrb[0].mxu0
      %3890 = vmatprep.mubr.f32.mxu0 0.0
      %3891 = vmatmul.mubr.f32.gmra.mrb[0].mxu0 %v3751
      %v3892 = vpop.f32.mrb[0].mxu0
      %v3893 = vadd.f32 0.0, %v3892
      %v3894 = vpop.f32.mrb[0].mxu0
      %3895 = vmatprep.mubr.f32.mxu0 0.0
      %3896 = vmatmul.mubr.f32.gmra.mrb[0].mxu0 %v3752
      %v3897 = vpop.f32.mrb[0].mxu0
      %v3898 = vadd.f32 0.0, %v3897
      %v3899 = vpop.f32.mrb[0].mxu0
      %3900 = vmatprep.mubr.f32.mxu0 0.0
      %3901 = vmatmul.mubr.f32.gmra.mrb[0].mxu0 %v3753
      %v3902 = vpop.f32.mrb[0].mxu0
      %v3903 = vadd.f32 0.0, %v3902
      %v3904 = vpop.f32.mrb[0].mxu0
      %3905 = vmatprep.mubr.f32.mxu0 0.0
      %3906 = vmatmul.mubr.f32.gmra.mrb[0].mxu0 %v3754
      %v3907 = vpop.f32.mrb[0].mxu0
      %v3908 = vadd.f32 0.0, %v3907
      %v3909 = vpop.f32.mrb[0].mxu0
      %3910 = vmatprep.mubr.f32.mxu0 0.0
      %3911 = vmatmul.mubr.f32.gmra.mrb[0].mxu0 %v3755
      %v3912 = vpop.f32.mrb[0].mxu0
      %v3913 = vadd.f32 0.0, %v3912
      %v3914 = vpop.f32.mrb[0].mxu0
      %3915 = vmatprep.mubr.f32.mxu0 0.0
      %3916 = vmatmul.mubr.f32.gmra.mrb[0].mxu0 %v3756
      %v3917 = vpop.f32.mrb[0].mxu0
      %v3918 = vadd.f32 0.0, %v3917
      %v3919 = vpop.f32.mrb[0].mxu0
      %3920 = vmatprep.mubr.f32.mxu0 0.0
      %3921 = vmatmul.mubr.f32.gmra.mrb[0].mxu0 %v3757
      %v3922 = vpop.f32.mrb[0].mxu0
      %v3923 = vadd.f32 0.0, %v3922
      %v3924 = vpop.f32.mrb[0].mxu0
      %3925 = vmatprep.mubr.f32.mxu0 0.0
      %3926 = vmatmul.mubr.f32.gmra.mrb[0].mxu0 %v3758
      %v3927 = vpop.f32.mrb[0].mxu0
      %v3928 = vadd.f32 0.0, %v3927
      %v3929 = vpop.f32.mrb[0].mxu0
      %3930 = vmatprep.mubr.f32.mxu0 0.0
      %3931 = vmatmul.mubr.f32.gmra.mrb[0].mxu0 %v3759
      %v3932 = vpop.f32.mrb[0].mxu0
      %v3933 = vadd.f32 0.0, %v3932
      %v3934 = vpop.f32.mrb[0].mxu0
      %3935 = vmatprep.mubr.f32.mxu0 0.0
      %3936 = vmatmul.mubr.f32.gmra.mrb[0].mxu0 %v3760
      %v3937 = vpop.f32.mrb[0].mxu0
      %v3938 = vadd.f32 0.0, %v3937
      %v3939 = vpop.f32.mrb[0].mxu0
      %3940 = vmatprep.mubr.f32.mxu0 0.0
      %3941 = vmatmul.mubr.f32.gmra.mrb[0].mxu0 %v3761
      %v3942 = vpop.f32.mrb[0].mxu0
      %v3943 = vadd.f32 0.0, %v3942
      %v3944 = vpop.f32.mrb[0].mxu0
      %3945 = vmatprep.mubr.f32.mxu0 0.0
      %3946 = vmatmul.mubr.f32.gmra.mrb[0].mxu0 %v3762
      %v3947 = vpop.f32.mrb[0].mxu0
      %v3948 = vadd.f32 0.0, %v3947
      %v3949 = vpop.f32.mrb[0].mxu0
      %3950 = vmatprep.mubr.f32.mxu0 0.0
      %3951 = vmatmul.mubr.f32.gmra.mrb[0].mxu0 %v3763
      %v3952 = vpop.f32.mrb[0].mxu0
      %v3953 = vadd.f32 0.0, %v3952
      %v3954 = vpop.f32.mrb[0].mxu0
      %3955 = vdwg.mxu0
      %s3956 = scalar_lea.vmem [#allocation3], 1760
      %3957 = vst [vmem:[%s3956] sm:$0xff] %v3848
      %3958 = vst [vmem:[%s3956 + $0x8] sm:$0xff] %v3853
      %3959 = vst [vmem:[%s3956 + $0x10] sm:$0xff] %v3858
      %3960 = vst [vmem:[%s3956 + $0x18] sm:$0xff] %v3863
      %3961 = vst [vmem:[%s3956 + $0x20] sm:$0xff] %v3868
      %3962 = vst [vmem:[%s3956 + $0x28] sm:$0xff] %v3873
      %3963 = vst [vmem:[%s3956 + $0x30] sm:$0xff] %v3878
      %3964 = vst [vmem:[%s3956 + $0x38] sm:$0xff] %v3883
      %3965 = vst [vmem:[%s3956 + $0x40] sm:$0xff] %v3888
      %3966 = vst [vmem:[%s3956 + $0x48] sm:$0xff] %v3893
      %3967 = vst [vmem:[%s3956 + $0x50] sm:$0xff] %v3898
      %3968 = vst [vmem:[%s3956 + $0x58] sm:$0xff] %v3903
      %3969 = vst [vmem:[%s3956 + $0x60] sm:$0xff] %v3908
      %3970 = vst [vmem:[%s3956 + $0x68] sm:$0xff] %v3913
      %3971 = vst [vmem:[%s3956 + $0x70] sm:$0xff] %v3918
      %3972 = vst [vmem:[%s3956 + $0x78] sm:$0xff] %v3923
      %3973 = vst [vmem:[%s3956 + $0x80] sm:$0xff] %v3928
      %3974 = vst [vmem:[%s3956 + $0x88] sm:$0xff] %v3933
      %3975 = vst [vmem:[%s3956 + $0x90] sm:$0xff] %v3938
      %3976 = vst [vmem:[%s3956 + $0x98] sm:$0xff] %v3943
      %3977 = vst [vmem:[%s3956 + $0xa0] sm:$0xff] %v3948
      %3978 = vst [vmem:[%s3956 + $0xa8] sm:$0xff] %v3953
      %v3979 = vld [vmem:[#allocation2 + $0xb0] sm:$0xff]
      %v3980 = vld [vmem:[#allocation2 + $0xb8] sm:$0xff]
      %v3981 = vld [vmem:[#allocation2 + $0xc0] sm:$0xff]
      %v3982 = vld [vmem:[#allocation2 + $0xc8] sm:$0xff]
      %v3983 = vld [vmem:[#allocation2 + $0xd0] sm:$0xff]
      %v3984 = vld [vmem:[#allocation2 + $0xd8] sm:$0xff]
      %v3985 = vld [vmem:[#allocation2 + $0xe0] sm:$0xff]
      %v3986 = vld [vmem:[#allocation2 + $0xe8] sm:$0xff]
      %v3987 = vld [vmem:[#allocation2 + $0xf0] sm:$0xff]
      %v3988 = vld [vmem:[#allocation2 + $0xf8] sm:$0xff]
      %v3989 = vld [vmem:[#allocation2 + $0x100] sm:$0xff]
      %v3990 = vld [vmem:[#allocation2 + $0x108] sm:$0xff]
      %v3991 = vld [vmem:[#allocation2 + $0x110] sm:$0xff]
      %v3992 = vld [vmem:[#allocation2 + $0x118] sm:$0xff]
      %v3993 = vld [vmem:[#allocation2 + $0x120] sm:$0xff]
      %v3994 = vld [vmem:[#allocation2 + $0x128] sm:$0xff]
      %v3995 = vld [vmem:[#allocation2 + $0x130] sm:$0xff]
      %v3996 = vld [vmem:[#allocation2 + $0x138] sm:$0xff]
      %v3997 = vld [vmem:[#allocation2 + $0x140] sm:$0xff]
      %v3998 = vld [vmem:[#allocation2 + $0x148] sm:$0xff]
      %v3999 = vld [vmem:[#allocation2 + $0x150] sm:$0xff]
      %v4000 = vld [vmem:[#allocation2 + $0x158] sm:$0xff]
      %s4001 = scalar_lea.vmem %s3, 1408
      %v4002 = vld [vmem:[%s4001] sm:$0xff]
      %v4003 = vld [vmem:[%s4001 + $0x8] sm:$0xff]
      %v4004 = vld [vmem:[%s4001 + $0x10] sm:$0xff]
      %v4005 = vld [vmem:[%s4001 + $0x18] sm:$0xff]
      %v4006 = vld [vmem:[%s4001 + $0x20] sm:$0xff]
      %v4007 = vld [vmem:[%s4001 + $0x28] sm:$0xff]
      %v4008 = vld [vmem:[%s4001 + $0x30] sm:$0xff]
      %v4009 = vld [vmem:[%s4001 + $0x38] sm:$0xff]
      %v4010 = vld [vmem:[%s4001 + $0x40] sm:$0xff]
      %v4011 = vld [vmem:[%s4001 + $0x48] sm:$0xff]
      %v4012 = vld [vmem:[%s4001 + $0x50] sm:$0xff]
      %v4013 = vld [vmem:[%s4001 + $0x58] sm:$0xff]
      %v4014 = vld [vmem:[%s4001 + $0x60] sm:$0xff]
      %v4015 = vld [vmem:[%s4001 + $0x68] sm:$0xff]
      %v4016 = vld [vmem:[%s4001 + $0x70] sm:$0xff]
      %v4017 = vld [vmem:[%s4001 + $0x78] sm:$0xff]
      %4018 = vmatprep.subr.mxu0 0.0
      %4019 = vmatpush1.msra.mxu0 %v4002
      %4020 = vmatprep.subr.mxu0 0.0
      %4021 = vmatpush1.msra.mxu0 %v4003
      %4022 = vmatprep.subr.mxu0 0.0
      %4023 = vmatpush1.msra.mxu0 %v4004
      %4024 = vmatprep.subr.mxu0 0.0
      %4025 = vmatpush1.msra.mxu0 %v4005
      %4026 = vmatprep.subr.mxu0 0.0
      %4027 = vmatpush1.msra.mxu0 %v4006
      %4028 = vmatprep.subr.mxu0 0.0
      %4029 = vmatpush1.msra.mxu0 %v4007
      %4030 = vmatprep.subr.mxu0 0.0
      %4031 = vmatpush1.msra.mxu0 %v4008
      %4032 = vmatprep.subr.mxu0 0.0
      %4033 = vmatpush1.msra.mxu0 %v4009
      %4034 = vmatprep.subr.mxu0 0.0
      %4035 = vmatpush1.msra.mxu0 %v4010
      %4036 = vmatprep.subr.mxu0 0.0
      %4037 = vmatpush1.msra.mxu0 %v4011
      %4038 = vmatprep.subr.mxu0 0.0
      %4039 = vmatpush1.msra.mxu0 %v4012
      %4040 = vmatprep.subr.mxu0 0.0
      %4041 = vmatpush1.msra.mxu0 %v4013
      %4042 = vmatprep.subr.mxu0 0.0
      %4043 = vmatpush1.msra.mxu0 %v4014
      %4044 = vmatprep.subr.mxu0 0.0
      %4045 = vmatpush1.msra.mxu0 %v4015
      %4046 = vmatprep.subr.mxu0 0.0
      %4047 = vmatpush1.msra.mxu0 %v4016
      %4048 = vmatprep.subr.mxu0 0.0
      %4049 = vmatpush1.msra.mxu0 %v4017
      %4050 = vmatprep.subr.mxu0 0.0
      %4051 = vmatpush1.msra.mxu0 0.0
      %4052 = vmatprep.subr.mxu0 0.0
      %4053 = vmatpush1.msra.mxu0 0.0
      %4054 = vmatprep.subr.mxu0 0.0
      %4055 = vmatpush1.msra.mxu0 0.0
      %4056 = vmatprep.subr.mxu0 0.0
      %4057 = vmatpush1.msra.mxu0 0.0
      %4058 = vmatprep.subr.mxu0 0.0
      %4059 = vmatpush1.msra.mxu0 0.0
      %4060 = vmatprep.subr.mxu0 0.0
      %4061 = vmatpush1.msra.mxu0 0.0
      %4062 = vmatprep.subr.mxu0 0.0
      %4063 = vmatpush1.msra.mxu0 0.0
      %4064 = vmatprep.subr.mxu0 0.0
      %4065 = vmatpush1.msra.mxu0 0.0
      %4066 = vmatprep.subr.mxu0 0.0
      %4067 = vmatpush1.msra.mxu0 0.0
      %4068 = vmatprep.subr.mxu0 0.0
      %4069 = vmatpush1.msra.mxu0 0.0
      %4070 = vmatprep.subr.mxu0 0.0
      %4071 = vmatpush1.msra.mxu0 0.0
      %4072 = vmatprep.subr.mxu0 0.0
      %4073 = vmatpush1.msra.mxu0 0.0
      %4074 = vmatprep.subr.mxu0 0.0
      %4075 = vmatpush1.msra.mxu0 0.0
      %4076 = vmatprep.subr.mxu0 0.0
      %4077 = vmatpush1.msra.mxu0 0.0
      %4078 = vmatprep.subr.mxu0 0.0
      %4079 = vmatpush1.msra.mxu0 0.0
      %4080 = vmatprep.subr.mxu0 0.0
      %4081 = vmatpush1.msra.mxu0 0.0
      %4082 = vmatprep.mubr.f32.mxu0 0.0
      %4083 = vmatmul.mubr.f32.gmra.mrb[0].mxu0 %v3979
      %v4084 = vpop.f32.mrb[0].mxu0
      %v4085 = vadd.f32 0.0, %v4084
      %v4086 = vpop.f32.mrb[0].mxu0
      %4087 = vmatprep.mubr.f32.mxu0 0.0
      %4088 = vmatmul.mubr.f32.gmra.mrb[0].mxu0 %v3980
      %v4089 = vpop.f32.mrb[0].mxu0
      %v4090 = vadd.f32 0.0, %v4089
      %v4091 = vpop.f32.mrb[0].mxu0
      %4092 = vmatprep.mubr.f32.mxu0 0.0
      %4093 = vmatmul.mubr.f32.gmra.mrb[0].mxu0 %v3981
      %v4094 = vpop.f32.mrb[0].mxu0
      %v4095 = vadd.f32 0.0, %v4094
      %v4096 = vpop.f32.mrb[0].mxu0
      %4097 = vmatprep.mubr.f32.mxu0 0.0
      %4098 = vmatmul.mubr.f32.gmra.mrb[0].mxu0 %v3982
      %v4099 = vpop.f32.mrb[0].mxu0
      %v4100 = vadd.f32 0.0, %v4099
      %v4101 = vpop.f32.mrb[0].mxu0
      %4102 = vmatprep.mubr.f32.mxu0 0.0
      %4103 = vmatmul.mubr.f32.gmra.mrb[0].mxu0 %v3983
      %v4104 = vpop.f32.mrb[0].mxu0
      %v4105 = vadd.f32 0.0, %v4104
      %v4106 = vpop.f32.mrb[0].mxu0
      %4107 = vmatprep.mubr.f32.mxu0 0.0
      %4108 = vmatmul.mubr.f32.gmra.mrb[0].mxu0 %v3984
      %v4109 = vpop.f32.mrb[0].mxu0
      %v4110 = vadd.f32 0.0, %v4109
      %v4111 = vpop.f32.mrb[0].mxu0
      %4112 = vmatprep.mubr.f32.mxu0 0.0
      %4113 = vmatmul.mubr.f32.gmra.mrb[0].mxu0 %v3985
      %v4114 = vpop.f32.mrb[0].mxu0
      %v4115 = vadd.f32 0.0, %v4114
      %v4116 = vpop.f32.mrb[0].mxu0
      %4117 = vmatprep.mubr.f32.mxu0 0.0
      %4118 = vmatmul.mubr.f32.gmra.mrb[0].mxu0 %v3986
      %v4119 = vpop.f32.mrb[0].mxu0
      %v4120 = vadd.f32 0.0, %v4119
      %v4121 = vpop.f32.mrb[0].mxu0
      %4122 = vmatprep.mubr.f32.mxu0 0.0
      %4123 = vmatmul.mubr.f32.gmra.mrb[0].mxu0 %v3987
      %v4124 = vpop.f32.mrb[0].mxu0
      %v4125 = vadd.f32 0.0, %v4124
      %v4126 = vpop.f32.mrb[0].mxu0
      %4127 = vmatprep.mubr.f32.mxu0 0.0
      %4128 = vmatmul.mubr.f32.gmra.mrb[0].mxu0 %v3988
      %v4129 = vpop.f32.mrb[0].mxu0
      %v4130 = vadd.f32 0.0, %v4129
      %v4131 = vpop.f32.mrb[0].mxu0
      %4132 = vmatprep.mubr.f32.mxu0 0.0
      %4133 = vmatmul.mubr.f32.gmra.mrb[0].mxu0 %v3989
      %v4134 = vpop.f32.mrb[0].mxu0
      %v4135 = vadd.f32 0.0, %v4134
      %v4136 = vpop.f32.mrb[0].mxu0
      %4137 = vmatprep.mubr.f32.mxu0 0.0
      %4138 = vmatmul.mubr.f32.gmra.mrb[0].mxu0 %v3990
      %v4139 = vpop.f32.mrb[0].mxu0
      %v4140 = vadd.f32 0.0, %v4139
      %v4141 = vpop.f32.mrb[0].mxu0
      %4142 = vmatprep.mubr.f32.mxu0 0.0
      %4143 = vmatmul.mubr.f32.gmra.mrb[0].mxu0 %v3991
      %v4144 = vpop.f32.mrb[0].mxu0
      %v4145 = vadd.f32 0.0, %v4144
      %v4146 = vpop.f32.mrb[0].mxu0
      %4147 = vmatprep.mubr.f32.mxu0 0.0
      %4148 = vmatmul.mubr.f32.gmra.mrb[0].mxu0 %v3992
      %v4149 = vpop.f32.mrb[0].mxu0
      %v4150 = vadd.f32 0.0, %v4149
      %v4151 = vpop.f32.mrb[0].mxu0
      %4152 = vmatprep.mubr.f32.mxu0 0.0
      %4153 = vmatmul.mubr.f32.gmra.mrb[0].mxu0 %v3993
      %v4154 = vpop.f32.mrb[0].mxu0
      %v4155 = vadd.f32 0.0, %v4154
      %v4156 = vpop.f32.mrb[0].mxu0
      %4157 = vmatprep.mubr.f32.mxu0 0.0
      %4158 = vmatmul.mubr.f32.gmra.mrb[0].mxu0 %v3994
      %v4159 = vpop.f32.mrb[0].mxu0
      %v4160 = vadd.f32 0.0, %v4159
      %v4161 = vpop.f32.mrb[0].mxu0
      %4162 = vmatprep.mubr.f32.mxu0 0.0
      %4163 = vmatmul.mubr.f32.gmra.mrb[0].mxu0 %v3995
      %v4164 = vpop.f32.mrb[0].mxu0
      %v4165 = vadd.f32 0.0, %v4164
      %v4166 = vpop.f32.mrb[0].mxu0
      %4167 = vmatprep.mubr.f32.mxu0 0.0
      %4168 = vmatmul.mubr.f32.gmra.mrb[0].mxu0 %v3996
      %v4169 = vpop.f32.mrb[0].mxu0
      %v4170 = vadd.f32 0.0, %v4169
      %v4171 = vpop.f32.mrb[0].mxu0
      %4172 = vmatprep.mubr.f32.mxu0 0.0
      %4173 = vmatmul.mubr.f32.gmra.mrb[0].mxu0 %v3997
      %v4174 = vpop.f32.mrb[0].mxu0
      %v4175 = vadd.f32 0.0, %v4174
      %v4176 = vpop.f32.mrb[0].mxu0
      %4177 = vmatprep.mubr.f32.mxu0 0.0
      %4178 = vmatmul.mubr.f32.gmra.mrb[0].mxu0 %v3998
      %v4179 = vpop.f32.mrb[0].mxu0
      %v4180 = vadd.f32 0.0, %v4179
      %v4181 = vpop.f32.mrb[0].mxu0
      %4182 = vmatprep.mubr.f32.mxu0 0.0
      %4183 = vmatmul.mubr.f32.gmra.mrb[0].mxu0 %v3999
      %v4184 = vpop.f32.mrb[0].mxu0
      %v4185 = vadd.f32 0.0, %v4184
      %v4186 = vpop.f32.mrb[0].mxu0
      %4187 = vmatprep.mubr.f32.mxu0 0.0
      %4188 = vmatmul.mubr.f32.gmra.mrb[0].mxu0 %v4000
      %v4189 = vpop.f32.mrb[0].mxu0
      %v4190 = vadd.f32 0.0, %v4189
      %v4191 = vpop.f32.mrb[0].mxu0
      %4192 = vdwg.mxu0
      %s4193 = scalar_lea.vmem [#allocation3], 1936
      %4194 = vst [vmem:[%s4193] sm:$0xff] %v4085
      %4195 = vst [vmem:[%s4193 + $0x8] sm:$0xff] %v4090
      %4196 = vst [vmem:[%s4193 + $0x10] sm:$0xff] %v4095
      %4197 = vst [vmem:[%s4193 + $0x18] sm:$0xff] %v4100
      %4198 = vst [vmem:[%s4193 + $0x20] sm:$0xff] %v4105
      %4199 = vst [vmem:[%s4193 + $0x28] sm:$0xff] %v4110
      %4200 = vst [vmem:[%s4193 + $0x30] sm:$0xff] %v4115
      %4201 = vst [vmem:[%s4193 + $0x38] sm:$0xff] %v4120
      %4202 = vst [vmem:[%s4193 + $0x40] sm:$0xff] %v4125
      %4203 = vst [vmem:[%s4193 + $0x48] sm:$0xff] %v4130
      %4204 = vst [vmem:[%s4193 + $0x50] sm:$0xff] %v4135
      %4205 = vst [vmem:[%s4193 + $0x58] sm:$0xff] %v4140
      %4206 = vst [vmem:[%s4193 + $0x60] sm:$0xff] %v4145
      %4207 = vst [vmem:[%s4193 + $0x68] sm:$0xff] %v4150
      %4208 = vst [vmem:[%s4193 + $0x70] sm:$0xff] %v4155
      %4209 = vst [vmem:[%s4193 + $0x78] sm:$0xff] %v4160
      %4210 = vst [vmem:[%s4193 + $0x80] sm:$0xff] %v4165
      %4211 = vst [vmem:[%s4193 + $0x88] sm:$0xff] %v4170
      %4212 = vst [vmem:[%s4193 + $0x90] sm:$0xff] %v4175
      %4213 = vst [vmem:[%s4193 + $0x98] sm:$0xff] %v4180
      %4214 = vst [vmem:[%s4193 + $0xa0] sm:$0xff] %v4185
      %4215 = vst [vmem:[%s4193 + $0xa8] sm:$0xff] %v4190
      %v4216 = vld [vmem:[#allocation2 + $0x160] sm:$0xff]
      %v4217 = vld [vmem:[#allocation2 + $0x168] sm:$0xff]
      %v4218 = vld [vmem:[#allocation2 + $0x170] sm:$0xff]
      %v4219 = vld [vmem:[#allocation2 + $0x178] sm:$0xff]
      %v4220 = vld [vmem:[#allocation2 + $0x180] sm:$0xff]
      %v4221 = vld [vmem:[#allocation2 + $0x188] sm:$0xff]
      %v4222 = vld [vmem:[#allocation2 + $0x190] sm:$0xff]
      %v4223 = vld [vmem:[#allocation2 + $0x198] sm:$0xff]
      %v4224 = vld [vmem:[#allocation2 + $0x1a0] sm:$0xff]
      %v4225 = vld [vmem:[#allocation2 + $0x1a8] sm:$0xff]
      %v4226 = vld [vmem:[#allocation2 + $0x1b0] sm:$0xff]
      %v4227 = vld [vmem:[#allocation2 + $0x1b8] sm:$0xff]
      %v4228 = vld [vmem:[#allocation2 + $0x1c0] sm:$0xff]
      %v4229 = vld [vmem:[#allocation2 + $0x1c8] sm:$0xff]
      %v4230 = vld [vmem:[#allocation2 + $0x1d0] sm:$0xff]
      %v4231 = vld [vmem:[#allocation2 + $0x1d8] sm:$0xff]
      %v4232 = vld [vmem:[#allocation2 + $0x1e0] sm:$0xff]
      %v4233 = vld [vmem:[#allocation2 + $0x1e8] sm:$0xff]
      %v4234 = vld [vmem:[#allocation2 + $0x1f0] sm:$0xff]
      %v4235 = vld [vmem:[#allocation2 + $0x1f8] sm:$0xff]
      %v4236 = vld [vmem:[#allocation2 + $0x200] sm:$0xff]
      %v4237 = vld [vmem:[#allocation2 + $0x208] sm:$0xff]
      %s4238 = scalar_lea.vmem %s3, 1536
      %v4239 = vld [vmem:[%s4238] sm:$0xff]
      %v4240 = vld [vmem:[%s4238 + $0x8] sm:$0xff]
      %v4241 = vld [vmem:[%s4238 + $0x10] sm:$0xff]
      %v4242 = vld [vmem:[%s4238 + $0x18] sm:$0xff]
      %v4243 = vld [vmem:[%s4238 + $0x20] sm:$0xff]
      %v4244 = vld [vmem:[%s4238 + $0x28] sm:$0xff]
      %v4245 = vld [vmem:[%s4238 + $0x30] sm:$0xff]
      %v4246 = vld [vmem:[%s4238 + $0x38] sm:$0xff]
      %v4247 = vld [vmem:[%s4238 + $0x40] sm:$0xff]
      %v4248 = vld [vmem:[%s4238 + $0x48] sm:$0xff]
      %v4249 = vld [vmem:[%s4238 + $0x50] sm:$0xff]
      %v4250 = vld [vmem:[%s4238 + $0x58] sm:$0xff]
      %v4251 = vld [vmem:[%s4238 + $0x60] sm:$0xff]
      %v4252 = vld [vmem:[%s4238 + $0x68] sm:$0xff]
      %v4253 = vld [vmem:[%s4238 + $0x70] sm:$0xff]
      %v4254 = vld [vmem:[%s4238 + $0x78] sm:$0xff]
      %4255 = vmatprep.subr.mxu0 0.0
      %4256 = vmatpush1.msra.mxu0 %v4239
      %4257 = vmatprep.subr.mxu0 0.0
      %4258 = vmatpush1.msra.mxu0 %v4240
      %4259 = vmatprep.subr.mxu0 0.0
      %4260 = vmatpush1.msra.mxu0 %v4241
      %4261 = vmatprep.subr.mxu0 0.0
      %4262 = vmatpush1.msra.mxu0 %v4242
      %4263 = vmatprep.subr.mxu0 0.0
      %4264 = vmatpush1.msra.mxu0 %v4243
      %4265 = vmatprep.subr.mxu0 0.0
      %4266 = vmatpush1.msra.mxu0 %v4244
      %4267 = vmatprep.subr.mxu0 0.0
      %4268 = vmatpush1.msra.mxu0 %v4245
      %4269 = vmatprep.subr.mxu0 0.0
      %4270 = vmatpush1.msra.mxu0 %v4246
      %4271 = vmatprep.subr.mxu0 0.0
      %4272 = vmatpush1.msra.mxu0 %v4247
      %4273 = vmatprep.subr.mxu0 0.0
      %4274 = vmatpush1.msra.mxu0 %v4248
      %4275 = vmatprep.subr.mxu0 0.0
      %4276 = vmatpush1.msra.mxu0 %v4249
      %4277 = vmatprep.subr.mxu0 0.0
      %4278 = vmatpush1.msra.mxu0 %v4250
      %4279 = vmatprep.subr.mxu0 0.0
      %4280 = vmatpush1.msra.mxu0 %v4251
      %4281 = vmatprep.subr.mxu0 0.0
      %4282 = vmatpush1.msra.mxu0 %v4252
      %4283 = vmatprep.subr.mxu0 0.0
      %4284 = vmatpush1.msra.mxu0 %v4253
      %4285 = vmatprep.subr.mxu0 0.0
      %4286 = vmatpush1.msra.mxu0 %v4254
      %4287 = vmatprep.subr.mxu0 0.0
      %4288 = vmatpush1.msra.mxu0 0.0
      %4289 = vmatprep.subr.mxu0 0.0
      %4290 = vmatpush1.msra.mxu0 0.0
      %4291 = vmatprep.subr.mxu0 0.0
      %4292 = vmatpush1.msra.mxu0 0.0
      %4293 = vmatprep.subr.mxu0 0.0
      %4294 = vmatpush1.msra.mxu0 0.0
      %4295 = vmatprep.subr.mxu0 0.0
      %4296 = vmatpush1.msra.mxu0 0.0
      %4297 = vmatprep.subr.mxu0 0.0
      %4298 = vmatpush1.msra.mxu0 0.0
      %4299 = vmatprep.subr.mxu0 0.0
      %4300 = vmatpush1.msra.mxu0 0.0
      %4301 = vmatprep.subr.mxu0 0.0
      %4302 = vmatpush1.msra.mxu0 0.0
      %4303 = vmatprep.subr.mxu0 0.0
      %4304 = vmatpush1.msra.mxu0 0.0
      %4305 = vmatprep.subr.mxu0 0.0
      %4306 = vmatpush1.msra.mxu0 0.0
      %4307 = vmatprep.subr.mxu0 0.0
      %4308 = vmatpush1.msra.mxu0 0.0
      %4309 = vmatprep.subr.mxu0 0.0
      %4310 = vmatpush1.msra.mxu0 0.0
      %4311 = vmatprep.subr.mxu0 0.0
      %4312 = vmatpush1.msra.mxu0 0.0
      %4313 = vmatprep.subr.mxu0 0.0
      %4314 = vmatpush1.msra.mxu0 0.0
      %4315 = vmatprep.subr.mxu0 0.0
      %4316 = vmatpush1.msra.mxu0 0.0
      %4317 = vmatprep.subr.mxu0 0.0
      %4318 = vmatpush1.msra.mxu0 0.0
      %4319 = vmatprep.mubr.f32.mxu0 0.0
      %4320 = vmatmul.mubr.f32.gmra.mrb[0].mxu0 %v4216
      %v4321 = vpop.f32.mrb[0].mxu0
      %v4322 = vadd.f32 0.0, %v4321
      %v4323 = vpop.f32.mrb[0].mxu0
      %4324 = vmatprep.mubr.f32.mxu0 0.0
      %4325 = vmatmul.mubr.f32.gmra.mrb[0].mxu0 %v4217
      %v4326 = vpop.f32.mrb[0].mxu0
      %v4327 = vadd.f32 0.0, %v4326
      %v4328 = vpop.f32.mrb[0].mxu0
      %4329 = vmatprep.mubr.f32.mxu0 0.0
      %4330 = vmatmul.mubr.f32.gmra.mrb[0].mxu0 %v4218
      %v4331 = vpop.f32.mrb[0].mxu0
      %v4332 = vadd.f32 0.0, %v4331
      %v4333 = vpop.f32.mrb[0].mxu0
      %4334 = vmatprep.mubr.f32.mxu0 0.0
      %4335 = vmatmul.mubr.f32.gmra.mrb[0].mxu0 %v4219
      %v4336 = vpop.f32.mrb[0].mxu0
      %v4337 = vadd.f32 0.0, %v4336
      %v4338 = vpop.f32.mrb[0].mxu0
      %4339 = vmatprep.mubr.f32.mxu0 0.0
      %4340 = vmatmul.mubr.f32.gmra.mrb[0].mxu0 %v4220
      %v4341 = vpop.f32.mrb[0].mxu0
      %v4342 = vadd.f32 0.0, %v4341
      %v4343 = vpop.f32.mrb[0].mxu0
      %4344 = vmatprep.mubr.f32.mxu0 0.0
      %4345 = vmatmul.mubr.f32.gmra.mrb[0].mxu0 %v4221
      %v4346 = vpop.f32.mrb[0].mxu0
      %v4347 = vadd.f32 0.0, %v4346
      %v4348 = vpop.f32.mrb[0].mxu0
      %4349 = vmatprep.mubr.f32.mxu0 0.0
      %4350 = vmatmul.mubr.f32.gmra.mrb[0].mxu0 %v4222
      %v4351 = vpop.f32.mrb[0].mxu0
      %v4352 = vadd.f32 0.0, %v4351
      %v4353 = vpop.f32.mrb[0].mxu0
      %4354 = vmatprep.mubr.f32.mxu0 0.0
      %4355 = vmatmul.mubr.f32.gmra.mrb[0].mxu0 %v4223
      %v4356 = vpop.f32.mrb[0].mxu0
      %v4357 = vadd.f32 0.0, %v4356
      %v4358 = vpop.f32.mrb[0].mxu0
      %4359 = vmatprep.mubr.f32.mxu0 0.0
      %4360 = vmatmul.mubr.f32.gmra.mrb[0].mxu0 %v4224
      %v4361 = vpop.f32.mrb[0].mxu0
      %v4362 = vadd.f32 0.0, %v4361
      %v4363 = vpop.f32.mrb[0].mxu0
      %4364 = vmatprep.mubr.f32.mxu0 0.0
      %4365 = vmatmul.mubr.f32.gmra.mrb[0].mxu0 %v4225
      %v4366 = vpop.f32.mrb[0].mxu0
      %v4367 = vadd.f32 0.0, %v4366
      %v4368 = vpop.f32.mrb[0].mxu0
      %4369 = vmatprep.mubr.f32.mxu0 0.0
      %4370 = vmatmul.mubr.f32.gmra.mrb[0].mxu0 %v4226
      %v4371 = vpop.f32.mrb[0].mxu0
      %v4372 = vadd.f32 0.0, %v4371
      %v4373 = vpop.f32.mrb[0].mxu0
      %4374 = vmatprep.mubr.f32.mxu0 0.0
      %4375 = vmatmul.mubr.f32.gmra.mrb[0].mxu0 %v4227
      %v4376 = vpop.f32.mrb[0].mxu0
      %v4377 = vadd.f32 0.0, %v4376
      %v4378 = vpop.f32.mrb[0].mxu0
      %4379 = vmatprep.mubr.f32.mxu0 0.0
      %4380 = vmatmul.mubr.f32.gmra.mrb[0].mxu0 %v4228
      %v4381 = vpop.f32.mrb[0].mxu0
      %v4382 = vadd.f32 0.0, %v4381
      %v4383 = vpop.f32.mrb[0].mxu0
      %4384 = vmatprep.mubr.f32.mxu0 0.0
      %4385 = vmatmul.mubr.f32.gmra.mrb[0].mxu0 %v4229
      %v4386 = vpop.f32.mrb[0].mxu0
      %v4387 = vadd.f32 0.0, %v4386
      %v4388 = vpop.f32.mrb[0].mxu0
      %4389 = vmatprep.mubr.f32.mxu0 0.0
      %4390 = vmatmul.mubr.f32.gmra.mrb[0].mxu0 %v4230
      %v4391 = vpop.f32.mrb[0].mxu0
      %v4392 = vadd.f32 0.0, %v4391
      %v4393 = vpop.f32.mrb[0].mxu0
      %4394 = vmatprep.mubr.f32.mxu0 0.0
      %4395 = vmatmul.mubr.f32.gmra.mrb[0].mxu0 %v4231
      %v4396 = vpop.f32.mrb[0].mxu0
      %v4397 = vadd.f32 0.0, %v4396
      %v4398 = vpop.f32.mrb[0].mxu0
      %4399 = vmatprep.mubr.f32.mxu0 0.0
      %4400 = vmatmul.mubr.f32.gmra.mrb[0].mxu0 %v4232
      %v4401 = vpop.f32.mrb[0].mxu0
      %v4402 = vadd.f32 0.0, %v4401
      %v4403 = vpop.f32.mrb[0].mxu0
      %4404 = vmatprep.mubr.f32.mxu0 0.0
      %4405 = vmatmul.mubr.f32.gmra.mrb[0].mxu0 %v4233
      %v4406 = vpop.f32.mrb[0].mxu0
      %v4407 = vadd.f32 0.0, %v4406
      %v4408 = vpop.f32.mrb[0].mxu0
      %4409 = vmatprep.mubr.f32.mxu0 0.0
      %4410 = vmatmul.mubr.f32.gmra.mrb[0].mxu0 %v4234
      %v4411 = vpop.f32.mrb[0].mxu0
      %v4412 = vadd.f32 0.0, %v4411
      %v4413 = vpop.f32.mrb[0].mxu0
      %4414 = vmatprep.mubr.f32.mxu0 0.0
      %4415 = vmatmul.mubr.f32.gmra.mrb[0].mxu0 %v4235
      %v4416 = vpop.f32.mrb[0].mxu0
      %v4417 = vadd.f32 0.0, %v4416
      %v4418 = vpop.f32.mrb[0].mxu0
      %4419 = vmatprep.mubr.f32.mxu0 0.0
      %4420 = vmatmul.mubr.f32.gmra.mrb[0].mxu0 %v4236
      %v4421 = vpop.f32.mrb[0].mxu0
      %v4422 = vadd.f32 0.0, %v4421
      %v4423 = vpop.f32.mrb[0].mxu0
      %4424 = vmatprep.mubr.f32.mxu0 0.0
      %4425 = vmatmul.mubr.f32.gmra.mrb[0].mxu0 %v4237
      %v4426 = vpop.f32.mrb[0].mxu0
      %v4427 = vadd.f32 0.0, %v4426
      %v4428 = vpop.f32.mrb[0].mxu0
      %4429 = vdwg.mxu0
      %s4430 = scalar_lea.vmem [#allocation3], 2112
      %4431 = vst [vmem:[%s4430] sm:$0xff] %v4322
      %4432 = vst [vmem:[%s4430 + $0x8] sm:$0xff] %v4327
      %4433 = vst [vmem:[%s4430 + $0x10] sm:$0xff] %v4332
      %4434 = vst [vmem:[%s4430 + $0x18] sm:$0xff] %v4337
      %4435 = vst [vmem:[%s4430 + $0x20] sm:$0xff] %v4342
      %4436 = vst [vmem:[%s4430 + $0x28] sm:$0xff] %v4347
      %4437 = vst [vmem:[%s4430 + $0x30] sm:$0xff] %v4352
      %4438 = vst [vmem:[%s4430 + $0x38] sm:$0xff] %v4357
      %4439 = vst [vmem:[%s4430 + $0x40] sm:$0xff] %v4362
      %4440 = vst [vmem:[%s4430 + $0x48] sm:$0xff] %v4367
      %4441 = vst [vmem:[%s4430 + $0x50] sm:$0xff] %v4372
      %4442 = vst [vmem:[%s4430 + $0x58] sm:$0xff] %v4377
      %4443 = vst [vmem:[%s4430 + $0x60] sm:$0xff] %v4382
      %4444 = vst [vmem:[%s4430 + $0x68] sm:$0xff] %v4387
      %4445 = vst [vmem:[%s4430 + $0x70] sm:$0xff] %v4392
      %4446 = vst [vmem:[%s4430 + $0x78] sm:$0xff] %v4397
      %4447 = vst [vmem:[%s4430 + $0x80] sm:$0xff] %v4402
      %4448 = vst [vmem:[%s4430 + $0x88] sm:$0xff] %v4407
      %4449 = vst [vmem:[%s4430 + $0x90] sm:$0xff] %v4412
      %4450 = vst [vmem:[%s4430 + $0x98] sm:$0xff] %v4417
      %4451 = vst [vmem:[%s4430 + $0xa0] sm:$0xff] %v4422
      %4452 = vst [vmem:[%s4430 + $0xa8] sm:$0xff] %v4427
      %v4453 = vld [vmem:[#allocation2 + $0x210] sm:$0xff]
      %v4454 = vld [vmem:[#allocation2 + $0x218] sm:$0xff]
      %v4455 = vld [vmem:[#allocation2 + $0x220] sm:$0xff]
      %v4456 = vld [vmem:[#allocation2 + $0x228] sm:$0xff]
      %v4457 = vld [vmem:[#allocation2 + $0x230] sm:$0xff]
      %v4458 = vld [vmem:[#allocation2 + $0x238] sm:$0xff]
      %v4459 = vld [vmem:[#allocation2 + $0x240] sm:$0xff]
      %v4460 = vld [vmem:[#allocation2 + $0x248] sm:$0xff]
      %v4461 = vld [vmem:[#allocation2 + $0x250] sm:$0xff]
      %v4462 = vld [vmem:[#allocation2 + $0x258] sm:$0xff]
      %v4463 = vld [vmem:[#allocation2 + $0x260] sm:$0xff]
      %v4464 = vld [vmem:[#allocation2 + $0x268] sm:$0xff]
      %v4465 = vld [vmem:[#allocation2 + $0x270] sm:$0xff]
      %v4466 = vld [vmem:[#allocation2 + $0x278] sm:$0xff]
      %v4467 = vld [vmem:[#allocation2 + $0x280] sm:$0xff]
      %v4468 = vld [vmem:[#allocation2 + $0x288] sm:$0xff]
      %v4469 = vld [vmem:[#allocation2 + $0x290] sm:$0xff]
      %v4470 = vld [vmem:[#allocation2 + $0x298] sm:$0xff]
      %v4471 = vld [vmem:[#allocation2 + $0x2a0] sm:$0xff]
      %v4472 = vld [vmem:[#allocation2 + $0x2a8] sm:$0xff]
      %v4473 = vld [vmem:[#allocation2 + $0x2b0] sm:$0xff]
      %v4474 = vld [vmem:[#allocation2 + $0x2b8] sm:$0xff]
      %s4475 = scalar_lea.vmem %s3, 1664
      %v4476 = vld [vmem:[%s4475] sm:$0xff]
      %v4477 = vld [vmem:[%s4475 + $0x8] sm:$0xff]
      %v4478 = vld [vmem:[%s4475 + $0x10] sm:$0xff]
      %v4479 = vld [vmem:[%s4475 + $0x18] sm:$0xff]
      %v4480 = vld [vmem:[%s4475 + $0x20] sm:$0xff]
      %v4481 = vld [vmem:[%s4475 + $0x28] sm:$0xff]
      %v4482 = vld [vmem:[%s4475 + $0x30] sm:$0xff]
      %v4483 = vld [vmem:[%s4475 + $0x38] sm:$0xff]
      %v4484 = vld [vmem:[%s4475 + $0x40] sm:$0xff]
      %v4485 = vld [vmem:[%s4475 + $0x48] sm:$0xff]
      %v4486 = vld [vmem:[%s4475 + $0x50] sm:$0xff]
      %v4487 = vld [vmem:[%s4475 + $0x58] sm:$0xff]
      %v4488 = vld [vmem:[%s4475 + $0x60] sm:$0xff]
      %v4489 = vld [vmem:[%s4475 + $0x68] sm:$0xff]
      %v4490 = vld [vmem:[%s4475 + $0x70] sm:$0xff]
      %v4491 = vld [vmem:[%s4475 + $0x78] sm:$0xff]
      %4492 = vmatprep.subr.mxu0 0.0
      %4493 = vmatpush1.msra.mxu0 %v4476
      %4494 = vmatprep.subr.mxu0 0.0
      %4495 = vmatpush1.msra.mxu0 %v4477
      %4496 = vmatprep.subr.mxu0 0.0
      %4497 = vmatpush1.msra.mxu0 %v4478
      %4498 = vmatprep.subr.mxu0 0.0
      %4499 = vmatpush1.msra.mxu0 %v4479
      %4500 = vmatprep.subr.mxu0 0.0
      %4501 = vmatpush1.msra.mxu0 %v4480
      %4502 = vmatprep.subr.mxu0 0.0
      %4503 = vmatpush1.msra.mxu0 %v4481
      %4504 = vmatprep.subr.mxu0 0.0
      %4505 = vmatpush1.msra.mxu0 %v4482
      %4506 = vmatprep.subr.mxu0 0.0
      %4507 = vmatpush1.msra.mxu0 %v4483
      %4508 = vmatprep.subr.mxu0 0.0
      %4509 = vmatpush1.msra.mxu0 %v4484
      %4510 = vmatprep.subr.mxu0 0.0
      %4511 = vmatpush1.msra.mxu0 %v4485
      %4512 = vmatprep.subr.mxu0 0.0
      %4513 = vmatpush1.msra.mxu0 %v4486
      %4514 = vmatprep.subr.mxu0 0.0
      %4515 = vmatpush1.msra.mxu0 %v4487
      %4516 = vmatprep.subr.mxu0 0.0
      %4517 = vmatpush1.msra.mxu0 %v4488
      %4518 = vmatprep.subr.mxu0 0.0
      %4519 = vmatpush1.msra.mxu0 %v4489
      %4520 = vmatprep.subr.mxu0 0.0
      %4521 = vmatpush1.msra.mxu0 %v4490
      %4522 = vmatprep.subr.mxu0 0.0
      %4523 = vmatpush1.msra.mxu0 %v4491
      %4524 = vmatprep.subr.mxu0 0.0
      %4525 = vmatpush1.msra.mxu0 0.0
      %4526 = vmatprep.subr.mxu0 0.0
      %4527 = vmatpush1.msra.mxu0 0.0
      %4528 = vmatprep.subr.mxu0 0.0
      %4529 = vmatpush1.msra.mxu0 0.0
      %4530 = vmatprep.subr.mxu0 0.0
      %4531 = vmatpush1.msra.mxu0 0.0
      %4532 = vmatprep.subr.mxu0 0.0
      %4533 = vmatpush1.msra.mxu0 0.0
      %4534 = vmatprep.subr.mxu0 0.0
      %4535 = vmatpush1.msra.mxu0 0.0
      %4536 = vmatprep.subr.mxu0 0.0
      %4537 = vmatpush1.msra.mxu0 0.0
      %4538 = vmatprep.subr.mxu0 0.0
      %4539 = vmatpush1.msra.mxu0 0.0
      %4540 = vmatprep.subr.mxu0 0.0
      %4541 = vmatpush1.msra.mxu0 0.0
      %4542 = vmatprep.subr.mxu0 0.0
      %4543 = vmatpush1.msra.mxu0 0.0
      %4544 = vmatprep.subr.mxu0 0.0
      %4545 = vmatpush1.msra.mxu0 0.0
      %4546 = vmatprep.subr.mxu0 0.0
      %4547 = vmatpush1.msra.mxu0 0.0
      %4548 = vmatprep.subr.mxu0 0.0
      %4549 = vmatpush1.msra.mxu0 0.0
      %4550 = vmatprep.subr.mxu0 0.0
      %4551 = vmatpush1.msra.mxu0 0.0
      %4552 = vmatprep.subr.mxu0 0.0
      %4553 = vmatpush1.msra.mxu0 0.0
      %4554 = vmatprep.subr.mxu0 0.0
      %4555 = vmatpush1.msra.mxu0 0.0
      %4556 = vmatprep.mubr.f32.mxu0 0.0
      %4557 = vmatmul.mubr.f32.gmra.mrb[0].mxu0 %v4453
      %v4558 = vpop.f32.mrb[0].mxu0
      %v4559 = vadd.f32 0.0, %v4558
      %v4560 = vpop.f32.mrb[0].mxu0
      %4561 = vmatprep.mubr.f32.mxu0 0.0
      %4562 = vmatmul.mubr.f32.gmra.mrb[0].mxu0 %v4454
      %v4563 = vpop.f32.mrb[0].mxu0
      %v4564 = vadd.f32 0.0, %v4563
      %v4565 = vpop.f32.mrb[0].mxu0
      %4566 = vmatprep.mubr.f32.mxu0 0.0
      %4567 = vmatmul.mubr.f32.gmra.mrb[0].mxu0 %v4455
      %v4568 = vpop.f32.mrb[0].mxu0
      %v4569 = vadd.f32 0.0, %v4568
      %v4570 = vpop.f32.mrb[0].mxu0
      %4571 = vmatprep.mubr.f32.mxu0 0.0
      %4572 = vmatmul.mubr.f32.gmra.mrb[0].mxu0 %v4456
      %v4573 = vpop.f32.mrb[0].mxu0
      %v4574 = vadd.f32 0.0, %v4573
      %v4575 = vpop.f32.mrb[0].mxu0
      %4576 = vmatprep.mubr.f32.mxu0 0.0
      %4577 = vmatmul.mubr.f32.gmra.mrb[0].mxu0 %v4457
      %v4578 = vpop.f32.mrb[0].mxu0
      %v4579 = vadd.f32 0.0, %v4578
      %v4580 = vpop.f32.mrb[0].mxu0
      %4581 = vmatprep.mubr.f32.mxu0 0.0
      %4582 = vmatmul.mubr.f32.gmra.mrb[0].mxu0 %v4458
      %v4583 = vpop.f32.mrb[0].mxu0
      %v4584 = vadd.f32 0.0, %v4583
      %v4585 = vpop.f32.mrb[0].mxu0
      %4586 = vmatprep.mubr.f32.mxu0 0.0
      %4587 = vmatmul.mubr.f32.gmra.mrb[0].mxu0 %v4459
      %v4588 = vpop.f32.mrb[0].mxu0
      %v4589 = vadd.f32 0.0, %v4588
      %v4590 = vpop.f32.mrb[0].mxu0
      %4591 = vmatprep.mubr.f32.mxu0 0.0
      %4592 = vmatmul.mubr.f32.gmra.mrb[0].mxu0 %v4460
      %v4593 = vpop.f32.mrb[0].mxu0
      %v4594 = vadd.f32 0.0, %v4593
      %v4595 = vpop.f32.mrb[0].mxu0
      %4596 = vmatprep.mubr.f32.mxu0 0.0
      %4597 = vmatmul.mubr.f32.gmra.mrb[0].mxu0 %v4461
      %v4598 = vpop.f32.mrb[0].mxu0
      %v4599 = vadd.f32 0.0, %v4598
      %v4600 = vpop.f32.mrb[0].mxu0
      %4601 = vmatprep.mubr.f32.mxu0 0.0
      %4602 = vmatmul.mubr.f32.gmra.mrb[0].mxu0 %v4462
      %v4603 = vpop.f32.mrb[0].mxu0
      %v4604 = vadd.f32 0.0, %v4603
      %v4605 = vpop.f32.mrb[0].mxu0
      %4606 = vmatprep.mubr.f32.mxu0 0.0
      %4607 = vmatmul.mubr.f32.gmra.mrb[0].mxu0 %v4463
      %v4608 = vpop.f32.mrb[0].mxu0
      %v4609 = vadd.f32 0.0, %v4608
      %v4610 = vpop.f32.mrb[0].mxu0
      %4611 = vmatprep.mubr.f32.mxu0 0.0
      %4612 = vmatmul.mubr.f32.gmra.mrb[0].mxu0 %v4464
      %v4613 = vpop.f32.mrb[0].mxu0
      %v4614 = vadd.f32 0.0, %v4613
      %v4615 = vpop.f32.mrb[0].mxu0
      %4616 = vmatprep.mubr.f32.mxu0 0.0
      %4617 = vmatmul.mubr.f32.gmra.mrb[0].mxu0 %v4465
      %v4618 = vpop.f32.mrb[0].mxu0
      %v4619 = vadd.f32 0.0, %v4618
      %v4620 = vpop.f32.mrb[0].mxu0
      %4621 = vmatprep.mubr.f32.mxu0 0.0
      %4622 = vmatmul.mubr.f32.gmra.mrb[0].mxu0 %v4466
      %v4623 = vpop.f32.mrb[0].mxu0
      %v4624 = vadd.f32 0.0, %v4623
      %v4625 = vpop.f32.mrb[0].mxu0
      %4626 = vmatprep.mubr.f32.mxu0 0.0
      %4627 = vmatmul.mubr.f32.gmra.mrb[0].mxu0 %v4467
      %v4628 = vpop.f32.mrb[0].mxu0
      %v4629 = vadd.f32 0.0, %v4628
      %v4630 = vpop.f32.mrb[0].mxu0
      %4631 = vmatprep.mubr.f32.mxu0 0.0
      %4632 = vmatmul.mubr.f32.gmra.mrb[0].mxu0 %v4468
      %v4633 = vpop.f32.mrb[0].mxu0
      %v4634 = vadd.f32 0.0, %v4633
      %v4635 = vpop.f32.mrb[0].mxu0
      %4636 = vmatprep.mubr.f32.mxu0 0.0
      %4637 = vmatmul.mubr.f32.gmra.mrb[0].mxu0 %v4469
      %v4638 = vpop.f32.mrb[0].mxu0
      %v4639 = vadd.f32 0.0, %v4638
      %v4640 = vpop.f32.mrb[0].mxu0
      %4641 = vmatprep.mubr.f32.mxu0 0.0
      %4642 = vmatmul.mubr.f32.gmra.mrb[0].mxu0 %v4470
      %v4643 = vpop.f32.mrb[0].mxu0
      %v4644 = vadd.f32 0.0, %v4643
      %v4645 = vpop.f32.mrb[0].mxu0
      %4646 = vmatprep.mubr.f32.mxu0 0.0
      %4647 = vmatmul.mubr.f32.gmra.mrb[0].mxu0 %v4471
      %v4648 = vpop.f32.mrb[0].mxu0
      %v4649 = vadd.f32 0.0, %v4648
      %v4650 = vpop.f32.mrb[0].mxu0
      %4651 = vmatprep.mubr.f32.mxu0 0.0
      %4652 = vmatmul.mubr.f32.gmra.mrb[0].mxu0 %v4472
      %v4653 = vpop.f32.mrb[0].mxu0
      %v4654 = vadd.f32 0.0, %v4653
      %v4655 = vpop.f32.mrb[0].mxu0
      %4656 = vmatprep.mubr.f32.mxu0 0.0
      %4657 = vmatmul.mubr.f32.gmra.mrb[0].mxu0 %v4473
      %v4658 = vpop.f32.mrb[0].mxu0
      %v4659 = vadd.f32 0.0, %v4658
      %v4660 = vpop.f32.mrb[0].mxu0
      %4661 = vmatprep.mubr.f32.mxu0 0.0
      %4662 = vmatmul.mubr.f32.gmra.mrb[0].mxu0 %v4474
      %v4663 = vpop.f32.mrb[0].mxu0
      %v4664 = vadd.f32 0.0, %v4663
      %v4665 = vpop.f32.mrb[0].mxu0
      %4666 = vdwg.mxu0
      %s4667 = scalar_lea.vmem [#allocation3], 2288
      %4668 = vst [vmem:[%s4667] sm:$0xff] %v4559
      %4669 = vst [vmem:[%s4667 + $0x8] sm:$0xff] %v4564
      %4670 = vst [vmem:[%s4667 + $0x10] sm:$0xff] %v4569
      %4671 = vst [vmem:[%s4667 + $0x18] sm:$0xff] %v4574
      %4672 = vst [vmem:[%s4667 + $0x20] sm:$0xff] %v4579
      %4673 = vst [vmem:[%s4667 + $0x28] sm:$0xff] %v4584
      %4674 = vst [vmem:[%s4667 + $0x30] sm:$0xff] %v4589
      %4675 = vst [vmem:[%s4667 + $0x38] sm:$0xff] %v4594
      %4676 = vst [vmem:[%s4667 + $0x40] sm:$0xff] %v4599
      %4677 = vst [vmem:[%s4667 + $0x48] sm:$0xff] %v4604
      %4678 = vst [vmem:[%s4667 + $0x50] sm:$0xff] %v4609
      %4679 = vst [vmem:[%s4667 + $0x58] sm:$0xff] %v4614
      %4680 = vst [vmem:[%s4667 + $0x60] sm:$0xff] %v4619
      %4681 = vst [vmem:[%s4667 + $0x68] sm:$0xff] %v4624
      %4682 = vst [vmem:[%s4667 + $0x70] sm:$0xff] %v4629
      %4683 = vst [vmem:[%s4667 + $0x78] sm:$0xff] %v4634
      %4684 = vst [vmem:[%s4667 + $0x80] sm:$0xff] %v4639
      %4685 = vst [vmem:[%s4667 + $0x88] sm:$0xff] %v4644
      %4686 = vst [vmem:[%s4667 + $0x90] sm:$0xff] %v4649
      %4687 = vst [vmem:[%s4667 + $0x98] sm:$0xff] %v4654
      %4688 = vst [vmem:[%s4667 + $0xa0] sm:$0xff] %v4659
      %4689 = vst [vmem:[%s4667 + $0xa8] sm:$0xff] %v4664
      %v4690 = vld [vmem:[#allocation2 + $0x160] sm:$0xff]
      %v4691 = vld [vmem:[#allocation2 + $0x168] sm:$0xff]
      %v4692 = vld [vmem:[#allocation2 + $0x170] sm:$0xff]
      %v4693 = vld [vmem:[#allocation2 + $0x178] sm:$0xff]
      %v4694 = vld [vmem:[#allocation2 + $0x180] sm:$0xff]
      %v4695 = vld [vmem:[#allocation2 + $0x188] sm:$0xff]
      %v4696 = vld [vmem:[#allocation2 + $0x190] sm:$0xff]
      %v4697 = vld [vmem:[#allocation2 + $0x198] sm:$0xff]
      %v4698 = vld [vmem:[#allocation2 + $0x1a0] sm:$0xff]
      %v4699 = vld [vmem:[#allocation2 + $0x1a8] sm:$0xff]
      %v4700 = vld [vmem:[#allocation2 + $0x1b0] sm:$0xff]
      %v4701 = vld [vmem:[#allocation2 + $0x1b8] sm:$0xff]
      %v4702 = vld [vmem:[#allocation2 + $0x1c0] sm:$0xff]
      %v4703 = vld [vmem:[#allocation2 + $0x1c8] sm:$0xff]
      %v4704 = vld [vmem:[#allocation2 + $0x1d0] sm:$0xff]
      %v4705 = vld [vmem:[#allocation2 + $0x1d8] sm:$0xff]
      %v4706 = vld [vmem:[#allocation2 + $0x1e0] sm:$0xff]
      %v4707 = vld [vmem:[#allocation2 + $0x1e8] sm:$0xff]
      %v4708 = vld [vmem:[#allocation2 + $0x1f0] sm:$0xff]
      %v4709 = vld [vmem:[#allocation2 + $0x1f8] sm:$0xff]
      %v4710 = vld [vmem:[#allocation2 + $0x200] sm:$0xff]
      %v4711 = vld [vmem:[#allocation2 + $0x208] sm:$0xff]
      %s4712 = scalar_lea.vmem %s3, 1792
      %v4713 = vld [vmem:[%s4712] sm:$0xff]
      %v4714 = vld [vmem:[%s4712 + $0x8] sm:$0xff]
      %v4715 = vld [vmem:[%s4712 + $0x10] sm:$0xff]
      %v4716 = vld [vmem:[%s4712 + $0x18] sm:$0xff]
      %v4717 = vld [vmem:[%s4712 + $0x20] sm:$0xff]
      %v4718 = vld [vmem:[%s4712 + $0x28] sm:$0xff]
      %v4719 = vld [vmem:[%s4712 + $0x30] sm:$0xff]
      %v4720 = vld [vmem:[%s4712 + $0x38] sm:$0xff]
      %v4721 = vld [vmem:[%s4712 + $0x40] sm:$0xff]
      %v4722 = vld [vmem:[%s4712 + $0x48] sm:$0xff]
      %v4723 = vld [vmem:[%s4712 + $0x50] sm:$0xff]
      %v4724 = vld [vmem:[%s4712 + $0x58] sm:$0xff]
      %v4725 = vld [vmem:[%s4712 + $0x60] sm:$0xff]
      %v4726 = vld [vmem:[%s4712 + $0x68] sm:$0xff]
      %v4727 = vld [vmem:[%s4712 + $0x70] sm:$0xff]
      %v4728 = vld [vmem:[%s4712 + $0x78] sm:$0xff]
      %4729 = vmatprep.subr.mxu0 0.0
      %4730 = vmatpush1.msra.mxu0 %v4713
      %4731 = vmatprep.subr.mxu0 0.0
      %4732 = vmatpush1.msra.mxu0 %v4714
      %4733 = vmatprep.subr.mxu0 0.0
      %4734 = vmatpush1.msra.mxu0 %v4715
      %4735 = vmatprep.subr.mxu0 0.0
      %4736 = vmatpush1.msra.mxu0 %v4716
      %4737 = vmatprep.subr.mxu0 0.0
      %4738 = vmatpush1.msra.mxu0 %v4717
      %4739 = vmatprep.subr.mxu0 0.0
      %4740 = vmatpush1.msra.mxu0 %v4718
      %4741 = vmatprep.subr.mxu0 0.0
      %4742 = vmatpush1.msra.mxu0 %v4719
      %4743 = vmatprep.subr.mxu0 0.0
      %4744 = vmatpush1.msra.mxu0 %v4720
      %4745 = vmatprep.subr.mxu0 0.0
      %4746 = vmatpush1.msra.mxu0 %v4721
      %4747 = vmatprep.subr.mxu0 0.0
      %4748 = vmatpush1.msra.mxu0 %v4722
      %4749 = vmatprep.subr.mxu0 0.0
      %4750 = vmatpush1.msra.mxu0 %v4723
      %4751 = vmatprep.subr.mxu0 0.0
      %4752 = vmatpush1.msra.mxu0 %v4724
      %4753 = vmatprep.subr.mxu0 0.0
      %4754 = vmatpush1.msra.mxu0 %v4725
      %4755 = vmatprep.subr.mxu0 0.0
      %4756 = vmatpush1.msra.mxu0 %v4726
      %4757 = vmatprep.subr.mxu0 0.0
      %4758 = vmatpush1.msra.mxu0 %v4727
      %4759 = vmatprep.subr.mxu0 0.0
      %4760 = vmatpush1.msra.mxu0 %v4728
      %4761 = vmatprep.subr.mxu0 0.0
      %4762 = vmatpush1.msra.mxu0 0.0
      %4763 = vmatprep.subr.mxu0 0.0
      %4764 = vmatpush1.msra.mxu0 0.0
      %4765 = vmatprep.subr.mxu0 0.0
      %4766 = vmatpush1.msra.mxu0 0.0
      %4767 = vmatprep.subr.mxu0 0.0
      %4768 = vmatpush1.msra.mxu0 0.0
      %4769 = vmatprep.subr.mxu0 0.0
      %4770 = vmatpush1.msra.mxu0 0.0
      %4771 = vmatprep.subr.mxu0 0.0
      %4772 = vmatpush1.msra.mxu0 0.0
      %4773 = vmatprep.subr.mxu0 0.0
      %4774 = vmatpush1.msra.mxu0 0.0
      %4775 = vmatprep.subr.mxu0 0.0
      %4776 = vmatpush1.msra.mxu0 0.0
      %4777 = vmatprep.subr.mxu0 0.0
      %4778 = vmatpush1.msra.mxu0 0.0
      %4779 = vmatprep.subr.mxu0 0.0
      %4780 = vmatpush1.msra.mxu0 0.0
      %4781 = vmatprep.subr.mxu0 0.0
      %4782 = vmatpush1.msra.mxu0 0.0
      %4783 = vmatprep.subr.mxu0 0.0
      %4784 = vmatpush1.msra.mxu0 0.0
      %4785 = vmatprep.subr.mxu0 0.0
      %4786 = vmatpush1.msra.mxu0 0.0
      %4787 = vmatprep.subr.mxu0 0.0
      %4788 = vmatpush1.msra.mxu0 0.0
      %4789 = vmatprep.subr.mxu0 0.0
      %4790 = vmatpush1.msra.mxu0 0.0
      %4791 = vmatprep.subr.mxu0 0.0
      %4792 = vmatpush1.msra.mxu0 0.0
      %4793 = vmatprep.mubr.f32.mxu0 0.0
      %4794 = vmatmul.mubr.f32.gmra.mrb[0].mxu0 %v4690
      %v4795 = vpop.f32.mrb[0].mxu0
      %v4796 = vadd.f32 0.0, %v4795
      %v4797 = vpop.f32.mrb[0].mxu0
      %4798 = vmatprep.mubr.f32.mxu0 0.0
      %4799 = vmatmul.mubr.f32.gmra.mrb[0].mxu0 %v4691
      %v4800 = vpop.f32.mrb[0].mxu0
      %v4801 = vadd.f32 0.0, %v4800
      %v4802 = vpop.f32.mrb[0].mxu0
      %4803 = vmatprep.mubr.f32.mxu0 0.0
      %4804 = vmatmul.mubr.f32.gmra.mrb[0].mxu0 %v4692
      %v4805 = vpop.f32.mrb[0].mxu0
      %v4806 = vadd.f32 0.0, %v4805
      %v4807 = vpop.f32.mrb[0].mxu0
      %4808 = vmatprep.mubr.f32.mxu0 0.0
      %4809 = vmatmul.mubr.f32.gmra.mrb[0].mxu0 %v4693
      %v4810 = vpop.f32.mrb[0].mxu0
      %v4811 = vadd.f32 0.0, %v4810
      %v4812 = vpop.f32.mrb[0].mxu0
      %4813 = vmatprep.mubr.f32.mxu0 0.0
      %4814 = vmatmul.mubr.f32.gmra.mrb[0].mxu0 %v4694
      %v4815 = vpop.f32.mrb[0].mxu0
      %v4816 = vadd.f32 0.0, %v4815
      %v4817 = vpop.f32.mrb[0].mxu0
      %4818 = vmatprep.mubr.f32.mxu0 0.0
      %4819 = vmatmul.mubr.f32.gmra.mrb[0].mxu0 %v4695
      %v4820 = vpop.f32.mrb[0].mxu0
      %v4821 = vadd.f32 0.0, %v4820
      %v4822 = vpop.f32.mrb[0].mxu0
      %4823 = vmatprep.mubr.f32.mxu0 0.0
      %4824 = vmatmul.mubr.f32.gmra.mrb[0].mxu0 %v4696
      %v4825 = vpop.f32.mrb[0].mxu0
      %v4826 = vadd.f32 0.0, %v4825
      %v4827 = vpop.f32.mrb[0].mxu0
      %4828 = vmatprep.mubr.f32.mxu0 0.0
      %4829 = vmatmul.mubr.f32.gmra.mrb[0].mxu0 %v4697
      %v4830 = vpop.f32.mrb[0].mxu0
      %v4831 = vadd.f32 0.0, %v4830
      %v4832 = vpop.f32.mrb[0].mxu0
      %4833 = vmatprep.mubr.f32.mxu0 0.0
      %4834 = vmatmul.mubr.f32.gmra.mrb[0].mxu0 %v4698
      %v4835 = vpop.f32.mrb[0].mxu0
      %v4836 = vadd.f32 0.0, %v4835
      %v4837 = vpop.f32.mrb[0].mxu0
      %4838 = vmatprep.mubr.f32.mxu0 0.0
      %4839 = vmatmul.mubr.f32.gmra.mrb[0].mxu0 %v4699
      %v4840 = vpop.f32.mrb[0].mxu0
      %v4841 = vadd.f32 0.0, %v4840
      %v4842 = vpop.f32.mrb[0].mxu0
      %4843 = vmatprep.mubr.f32.mxu0 0.0
      %4844 = vmatmul.mubr.f32.gmra.mrb[0].mxu0 %v4700
      %v4845 = vpop.f32.mrb[0].mxu0
      %v4846 = vadd.f32 0.0, %v4845
      %v4847 = vpop.f32.mrb[0].mxu0
      %4848 = vmatprep.mubr.f32.mxu0 0.0
      %4849 = vmatmul.mubr.f32.gmra.mrb[0].mxu0 %v4701
      %v4850 = vpop.f32.mrb[0].mxu0
      %v4851 = vadd.f32 0.0, %v4850
      %v4852 = vpop.f32.mrb[0].mxu0
      %4853 = vmatprep.mubr.f32.mxu0 0.0
      %4854 = vmatmul.mubr.f32.gmra.mrb[0].mxu0 %v4702
      %v4855 = vpop.f32.mrb[0].mxu0
      %v4856 = vadd.f32 0.0, %v4855
      %v4857 = vpop.f32.mrb[0].mxu0
      %4858 = vmatprep.mubr.f32.mxu0 0.0
      %4859 = vmatmul.mubr.f32.gmra.mrb[0].mxu0 %v4703
      %v4860 = vpop.f32.mrb[0].mxu0
      %v4861 = vadd.f32 0.0, %v4860
      %v4862 = vpop.f32.mrb[0].mxu0
      %4863 = vmatprep.mubr.f32.mxu0 0.0
      %4864 = vmatmul.mubr.f32.gmra.mrb[0].mxu0 %v4704
      %v4865 = vpop.f32.mrb[0].mxu0
      %v4866 = vadd.f32 0.0, %v4865
      %v4867 = vpop.f32.mrb[0].mxu0
      %4868 = vmatprep.mubr.f32.mxu0 0.0
      %4869 = vmatmul.mubr.f32.gmra.mrb[0].mxu0 %v4705
      %v4870 = vpop.f32.mrb[0].mxu0
      %v4871 = vadd.f32 0.0, %v4870
      %v4872 = vpop.f32.mrb[0].mxu0
      %4873 = vmatprep.mubr.f32.mxu0 0.0
      %4874 = vmatmul.mubr.f32.gmra.mrb[0].mxu0 %v4706
      %v4875 = vpop.f32.mrb[0].mxu0
      %v4876 = vadd.f32 0.0, %v4875
      %v4877 = vpop.f32.mrb[0].mxu0
      %4878 = vmatprep.mubr.f32.mxu0 0.0
      %4879 = vmatmul.mubr.f32.gmra.mrb[0].mxu0 %v4707
      %v4880 = vpop.f32.mrb[0].mxu0
      %v4881 = vadd.f32 0.0, %v4880
      %v4882 = vpop.f32.mrb[0].mxu0
      %4883 = vmatprep.mubr.f32.mxu0 0.0
      %4884 = vmatmul.mubr.f32.gmra.mrb[0].mxu0 %v4708
      %v4885 = vpop.f32.mrb[0].mxu0
      %v4886 = vadd.f32 0.0, %v4885
      %v4887 = vpop.f32.mrb[0].mxu0
      %4888 = vmatprep.mubr.f32.mxu0 0.0
      %4889 = vmatmul.mubr.f32.gmra.mrb[0].mxu0 %v4709
      %v4890 = vpop.f32.mrb[0].mxu0
      %v4891 = vadd.f32 0.0, %v4890
      %v4892 = vpop.f32.mrb[0].mxu0
      %4893 = vmatprep.mubr.f32.mxu0 0.0
      %4894 = vmatmul.mubr.f32.gmra.mrb[0].mxu0 %v4710
      %v4895 = vpop.f32.mrb[0].mxu0
      %v4896 = vadd.f32 0.0, %v4895
      %v4897 = vpop.f32.mrb[0].mxu0
      %4898 = vmatprep.mubr.f32.mxu0 0.0
      %4899 = vmatmul.mubr.f32.gmra.mrb[0].mxu0 %v4711
      %v4900 = vpop.f32.mrb[0].mxu0
      %v4901 = vadd.f32 0.0, %v4900
      %v4902 = vpop.f32.mrb[0].mxu0
      %4903 = vdwg.mxu0
      %s4904 = scalar_lea.vmem [#allocation3], 2464
      %4905 = vst [vmem:[%s4904] sm:$0xff] %v4796
      %4906 = vst [vmem:[%s4904 + $0x8] sm:$0xff] %v4801
      %4907 = vst [vmem:[%s4904 + $0x10] sm:$0xff] %v4806
      %4908 = vst [vmem:[%s4904 + $0x18] sm:$0xff] %v4811
      %4909 = vst [vmem:[%s4904 + $0x20] sm:$0xff] %v4816
      %4910 = vst [vmem:[%s4904 + $0x28] sm:$0xff] %v4821
      %4911 = vst [vmem:[%s4904 + $0x30] sm:$0xff] %v4826
      %4912 = vst [vmem:[%s4904 + $0x38] sm:$0xff] %v4831
      %4913 = vst [vmem:[%s4904 + $0x40] sm:$0xff] %v4836
      %4914 = vst [vmem:[%s4904 + $0x48] sm:$0xff] %v4841
      %4915 = vst [vmem:[%s4904 + $0x50] sm:$0xff] %v4846
      %4916 = vst [vmem:[%s4904 + $0x58] sm:$0xff] %v4851
      %4917 = vst [vmem:[%s4904 + $0x60] sm:$0xff] %v4856
      %4918 = vst [vmem:[%s4904 + $0x68] sm:$0xff] %v4861
      %4919 = vst [vmem:[%s4904 + $0x70] sm:$0xff] %v4866
      %4920 = vst [vmem:[%s4904 + $0x78] sm:$0xff] %v4871
      %4921 = vst [vmem:[%s4904 + $0x80] sm:$0xff] %v4876
      %4922 = vst [vmem:[%s4904 + $0x88] sm:$0xff] %v4881
      %4923 = vst [vmem:[%s4904 + $0x90] sm:$0xff] %v4886
      %4924 = vst [vmem:[%s4904 + $0x98] sm:$0xff] %v4891
      %4925 = vst [vmem:[%s4904 + $0xa0] sm:$0xff] %v4896
      %4926 = vst [vmem:[%s4904 + $0xa8] sm:$0xff] %v4901
      %v4927 = vld [vmem:[#allocation2 + $0x210] sm:$0xff]
      %v4928 = vld [vmem:[#allocation2 + $0x218] sm:$0xff]
      %v4929 = vld [vmem:[#allocation2 + $0x220] sm:$0xff]
      %v4930 = vld [vmem:[#allocation2 + $0x228] sm:$0xff]
      %v4931 = vld [vmem:[#allocation2 + $0x230] sm:$0xff]
      %v4932 = vld [vmem:[#allocation2 + $0x238] sm:$0xff]
      %v4933 = vld [vmem:[#allocation2 + $0x240] sm:$0xff]
      %v4934 = vld [vmem:[#allocation2 + $0x248] sm:$0xff]
      %v4935 = vld [vmem:[#allocation2 + $0x250] sm:$0xff]
      %v4936 = vld [vmem:[#allocation2 + $0x258] sm:$0xff]
      %v4937 = vld [vmem:[#allocation2 + $0x260] sm:$0xff]
      %v4938 = vld [vmem:[#allocation2 + $0x268] sm:$0xff]
      %v4939 = vld [vmem:[#allocation2 + $0x270] sm:$0xff]
      %v4940 = vld [vmem:[#allocation2 + $0x278] sm:$0xff]
      %v4941 = vld [vmem:[#allocation2 + $0x280] sm:$0xff]
      %v4942 = vld [vmem:[#allocation2 + $0x288] sm:$0xff]
      %v4943 = vld [vmem:[#allocation2 + $0x290] sm:$0xff]
      %v4944 = vld [vmem:[#allocation2 + $0x298] sm:$0xff]
      %v4945 = vld [vmem:[#allocation2 + $0x2a0] sm:$0xff]
      %v4946 = vld [vmem:[#allocation2 + $0x2a8] sm:$0xff]
      %v4947 = vld [vmem:[#allocation2 + $0x2b0] sm:$0xff]
      %v4948 = vld [vmem:[#allocation2 + $0x2b8] sm:$0xff]
      %s4949 = scalar_lea.vmem %s3, 1920
      %v4950 = vld [vmem:[%s4949] sm:$0xff]
      %v4951 = vld [vmem:[%s4949 + $0x8] sm:$0xff]
      %v4952 = vld [vmem:[%s4949 + $0x10] sm:$0xff]
      %v4953 = vld [vmem:[%s4949 + $0x18] sm:$0xff]
      %v4954 = vld [vmem:[%s4949 + $0x20] sm:$0xff]
      %v4955 = vld [vmem:[%s4949 + $0x28] sm:$0xff]
      %v4956 = vld [vmem:[%s4949 + $0x30] sm:$0xff]
      %v4957 = vld [vmem:[%s4949 + $0x38] sm:$0xff]
      %v4958 = vld [vmem:[%s4949 + $0x40] sm:$0xff]
      %v4959 = vld [vmem:[%s4949 + $0x48] sm:$0xff]
      %v4960 = vld [vmem:[%s4949 + $0x50] sm:$0xff]
      %v4961 = vld [vmem:[%s4949 + $0x58] sm:$0xff]
      %v4962 = vld [vmem:[%s4949 + $0x60] sm:$0xff]
      %v4963 = vld [vmem:[%s4949 + $0x68] sm:$0xff]
      %v4964 = vld [vmem:[%s4949 + $0x70] sm:$0xff]
      %v4965 = vld [vmem:[%s4949 + $0x78] sm:$0xff]
      %4966 = vmatprep.subr.mxu0 0.0
      %4967 = vmatpush1.msra.mxu0 %v4950
      %4968 = vmatprep.subr.mxu0 0.0
      %4969 = vmatpush1.msra.mxu0 %v4951
      %4970 = vmatprep.subr.mxu0 0.0
      %4971 = vmatpush1.msra.mxu0 %v4952
      %4972 = vmatprep.subr.mxu0 0.0
      %4973 = vmatpush1.msra.mxu0 %v4953
      %4974 = vmatprep.subr.mxu0 0.0
      %4975 = vmatpush1.msra.mxu0 %v4954
      %4976 = vmatprep.subr.mxu0 0.0
      %4977 = vmatpush1.msra.mxu0 %v4955
      %4978 = vmatprep.subr.mxu0 0.0
      %4979 = vmatpush1.msra.mxu0 %v4956
      %4980 = vmatprep.subr.mxu0 0.0
      %4981 = vmatpush1.msra.mxu0 %v4957
      %4982 = vmatprep.subr.mxu0 0.0
      %4983 = vmatpush1.msra.mxu0 %v4958
      %4984 = vmatprep.subr.mxu0 0.0
      %4985 = vmatpush1.msra.mxu0 %v4959
      %4986 = vmatprep.subr.mxu0 0.0
      %4987 = vmatpush1.msra.mxu0 %v4960
      %4988 = vmatprep.subr.mxu0 0.0
      %4989 = vmatpush1.msra.mxu0 %v4961
      %4990 = vmatprep.subr.mxu0 0.0
      %4991 = vmatpush1.msra.mxu0 %v4962
      %4992 = vmatprep.subr.mxu0 0.0
      %4993 = vmatpush1.msra.mxu0 %v4963
      %4994 = vmatprep.subr.mxu0 0.0
      %4995 = vmatpush1.msra.mxu0 %v4964
      %4996 = vmatprep.subr.mxu0 0.0
      %4997 = vmatpush1.msra.mxu0 %v4965
      %4998 = vmatprep.subr.mxu0 0.0
      %4999 = vmatpush1.msra.mxu0 0.0
      %5000 = vmatprep.subr.mxu0 0.0
      %5001 = vmatpush1.msra.mxu0 0.0
      %5002 = vmatprep.subr.mxu0 0.0
      %5003 = vmatpush1.msra.mxu0 0.0
      %5004 = vmatprep.subr.mxu0 0.0
      %5005 = vmatpush1.msra.mxu0 0.0
      %5006 = vmatprep.subr.mxu0 0.0
      %5007 = vmatpush1.msra.mxu0 0.0
      %5008 = vmatprep.subr.mxu0 0.0
      %5009 = vmatpush1.msra.mxu0 0.0
      %5010 = vmatprep.subr.mxu0 0.0
      %5011 = vmatpush1.msra.mxu0 0.0
      %5012 = vmatprep.subr.mxu0 0.0
      %5013 = vmatpush1.msra.mxu0 0.0
      %5014 = vmatprep.subr.mxu0 0.0
      %5015 = vmatpush1.msra.mxu0 0.0
      %5016 = vmatprep.subr.mxu0 0.0
      %5017 = vmatpush1.msra.mxu0 0.0
      %5018 = vmatprep.subr.mxu0 0.0
      %5019 = vmatpush1.msra.mxu0 0.0
      %5020 = vmatprep.subr.mxu0 0.0
      %5021 = vmatpush1.msra.mxu0 0.0
      %5022 = vmatprep.subr.mxu0 0.0
      %5023 = vmatpush1.msra.mxu0 0.0
      %5024 = vmatprep.subr.mxu0 0.0
      %5025 = vmatpush1.msra.mxu0 0.0
      %5026 = vmatprep.subr.mxu0 0.0
      %5027 = vmatpush1.msra.mxu0 0.0
      %5028 = vmatprep.subr.mxu0 0.0
      %5029 = vmatpush1.msra.mxu0 0.0
      %5030 = vmatprep.mubr.f32.mxu0 0.0
      %5031 = vmatmul.mubr.f32.gmra.mrb[0].mxu0 %v4927
      %v5032 = vpop.f32.mrb[0].mxu0
      %v5033 = vadd.f32 0.0, %v5032
      %v5034 = vpop.f32.mrb[0].mxu0
      %5035 = vmatprep.mubr.f32.mxu0 0.0
      %5036 = vmatmul.mubr.f32.gmra.mrb[0].mxu0 %v4928
      %v5037 = vpop.f32.mrb[0].mxu0
      %v5038 = vadd.f32 0.0, %v5037
      %v5039 = vpop.f32.mrb[0].mxu0
      %5040 = vmatprep.mubr.f32.mxu0 0.0
      %5041 = vmatmul.mubr.f32.gmra.mrb[0].mxu0 %v4929
      %v5042 = vpop.f32.mrb[0].mxu0
      %v5043 = vadd.f32 0.0, %v5042
      %v5044 = vpop.f32.mrb[0].mxu0
      %5045 = vmatprep.mubr.f32.mxu0 0.0
      %5046 = vmatmul.mubr.f32.gmra.mrb[0].mxu0 %v4930
      %v5047 = vpop.f32.mrb[0].mxu0
      %v5048 = vadd.f32 0.0, %v5047
      %v5049 = vpop.f32.mrb[0].mxu0
      %5050 = vmatprep.mubr.f32.mxu0 0.0
      %5051 = vmatmul.mubr.f32.gmra.mrb[0].mxu0 %v4931
      %v5052 = vpop.f32.mrb[0].mxu0
      %v5053 = vadd.f32 0.0, %v5052
      %v5054 = vpop.f32.mrb[0].mxu0
      %5055 = vmatprep.mubr.f32.mxu0 0.0
      %5056 = vmatmul.mubr.f32.gmra.mrb[0].mxu0 %v4932
      %v5057 = vpop.f32.mrb[0].mxu0
      %v5058 = vadd.f32 0.0, %v5057
      %v5059 = vpop.f32.mrb[0].mxu0
      %5060 = vmatprep.mubr.f32.mxu0 0.0
      %5061 = vmatmul.mubr.f32.gmra.mrb[0].mxu0 %v4933
      %v5062 = vpop.f32.mrb[0].mxu0
      %v5063 = vadd.f32 0.0, %v5062
      %v5064 = vpop.f32.mrb[0].mxu0
      %5065 = vmatprep.mubr.f32.mxu0 0.0
      %5066 = vmatmul.mubr.f32.gmra.mrb[0].mxu0 %v4934
      %v5067 = vpop.f32.mrb[0].mxu0
      %v5068 = vadd.f32 0.0, %v5067
      %v5069 = vpop.f32.mrb[0].mxu0
      %5070 = vmatprep.mubr.f32.mxu0 0.0
      %5071 = vmatmul.mubr.f32.gmra.mrb[0].mxu0 %v4935
      %v5072 = vpop.f32.mrb[0].mxu0
      %v5073 = vadd.f32 0.0, %v5072
      %v5074 = vpop.f32.mrb[0].mxu0
      %5075 = vmatprep.mubr.f32.mxu0 0.0
      %5076 = vmatmul.mubr.f32.gmra.mrb[0].mxu0 %v4936
      %v5077 = vpop.f32.mrb[0].mxu0
      %v5078 = vadd.f32 0.0, %v5077
      %v5079 = vpop.f32.mrb[0].mxu0
      %5080 = vmatprep.mubr.f32.mxu0 0.0
      %5081 = vmatmul.mubr.f32.gmra.mrb[0].mxu0 %v4937
      %v5082 = vpop.f32.mrb[0].mxu0
      %v5083 = vadd.f32 0.0, %v5082
      %v5084 = vpop.f32.mrb[0].mxu0
      %5085 = vmatprep.mubr.f32.mxu0 0.0
      %5086 = vmatmul.mubr.f32.gmra.mrb[0].mxu0 %v4938
      %v5087 = vpop.f32.mrb[0].mxu0
      %v5088 = vadd.f32 0.0, %v5087
      %v5089 = vpop.f32.mrb[0].mxu0
      %5090 = vmatprep.mubr.f32.mxu0 0.0
      %5091 = vmatmul.mubr.f32.gmra.mrb[0].mxu0 %v4939
      %v5092 = vpop.f32.mrb[0].mxu0
      %v5093 = vadd.f32 0.0, %v5092
      %v5094 = vpop.f32.mrb[0].mxu0
      %5095 = vmatprep.mubr.f32.mxu0 0.0
      %5096 = vmatmul.mubr.f32.gmra.mrb[0].mxu0 %v4940
      %v5097 = vpop.f32.mrb[0].mxu0
      %v5098 = vadd.f32 0.0, %v5097
      %v5099 = vpop.f32.mrb[0].mxu0
      %5100 = vmatprep.mubr.f32.mxu0 0.0
      %5101 = vmatmul.mubr.f32.gmra.mrb[0].mxu0 %v4941
      %v5102 = vpop.f32.mrb[0].mxu0
      %v5103 = vadd.f32 0.0, %v5102
      %v5104 = vpop.f32.mrb[0].mxu0
      %5105 = vmatprep.mubr.f32.mxu0 0.0
      %5106 = vmatmul.mubr.f32.gmra.mrb[0].mxu0 %v4942
      %v5107 = vpop.f32.mrb[0].mxu0
      %v5108 = vadd.f32 0.0, %v5107
      %v5109 = vpop.f32.mrb[0].mxu0
      %5110 = vmatprep.mubr.f32.mxu0 0.0
      %5111 = vmatmul.mubr.f32.gmra.mrb[0].mxu0 %v4943
      %v5112 = vpop.f32.mrb[0].mxu0
      %v5113 = vadd.f32 0.0, %v5112
      %v5114 = vpop.f32.mrb[0].mxu0
      %5115 = vmatprep.mubr.f32.mxu0 0.0
      %5116 = vmatmul.mubr.f32.gmra.mrb[0].mxu0 %v4944
      %v5117 = vpop.f32.mrb[0].mxu0
      %v5118 = vadd.f32 0.0, %v5117
      %v5119 = vpop.f32.mrb[0].mxu0
      %5120 = vmatprep.mubr.f32.mxu0 0.0
      %5121 = vmatmul.mubr.f32.gmra.mrb[0].mxu0 %v4945
      %v5122 = vpop.f32.mrb[0].mxu0
      %v5123 = vadd.f32 0.0, %v5122
      %v5124 = vpop.f32.mrb[0].mxu0
      %5125 = vmatprep.mubr.f32.mxu0 0.0
      %5126 = vmatmul.mubr.f32.gmra.mrb[0].mxu0 %v4946
      %v5127 = vpop.f32.mrb[0].mxu0
      %v5128 = vadd.f32 0.0, %v5127
      %v5129 = vpop.f32.mrb[0].mxu0
      %5130 = vmatprep.mubr.f32.mxu0 0.0
      %5131 = vmatmul.mubr.f32.gmra.mrb[0].mxu0 %v4947
      %v5132 = vpop.f32.mrb[0].mxu0
      %v5133 = vadd.f32 0.0, %v5132
      %v5134 = vpop.f32.mrb[0].mxu0
      %5135 = vmatprep.mubr.f32.mxu0 0.0
      %5136 = vmatmul.mubr.f32.gmra.mrb[0].mxu0 %v4948
      %v5137 = vpop.f32.mrb[0].mxu0
      %v5138 = vadd.f32 0.0, %v5137
      %v5139 = vpop.f32.mrb[0].mxu0
      %5140 = vdwg.mxu0
      %s5141 = scalar_lea.vmem [#allocation3], 2640
      %5142 = vst [vmem:[%s5141] sm:$0xff] %v5033
      %5143 = vst [vmem:[%s5141 + $0x8] sm:$0xff] %v5038
      %5144 = vst [vmem:[%s5141 + $0x10] sm:$0xff] %v5043
      %5145 = vst [vmem:[%s5141 + $0x18] sm:$0xff] %v5048
      %5146 = vst [vmem:[%s5141 + $0x20] sm:$0xff] %v5053
      %5147 = vst [vmem:[%s5141 + $0x28] sm:$0xff] %v5058
      %5148 = vst [vmem:[%s5141 + $0x30] sm:$0xff] %v5063
      %5149 = vst [vmem:[%s5141 + $0x38] sm:$0xff] %v5068
      %5150 = vst [vmem:[%s5141 + $0x40] sm:$0xff] %v5073
      %5151 = vst [vmem:[%s5141 + $0x48] sm:$0xff] %v5078
      %5152 = vst [vmem:[%s5141 + $0x50] sm:$0xff] %v5083
      %5153 = vst [vmem:[%s5141 + $0x58] sm:$0xff] %v5088
      %5154 = vst [vmem:[%s5141 + $0x60] sm:$0xff] %v5093
      %5155 = vst [vmem:[%s5141 + $0x68] sm:$0xff] %v5098
      %5156 = vst [vmem:[%s5141 + $0x70] sm:$0xff] %v5103
      %5157 = vst [vmem:[%s5141 + $0x78] sm:$0xff] %v5108
      %5158 = vst [vmem:[%s5141 + $0x80] sm:$0xff] %v5113
      %5159 = vst [vmem:[%s5141 + $0x88] sm:$0xff] %v5118
      %5160 = vst [vmem:[%s5141 + $0x90] sm:$0xff] %v5123
      %5161 = vst [vmem:[%s5141 + $0x98] sm:$0xff] %v5128
      %5162 = vst [vmem:[%s5141 + $0xa0] sm:$0xff] %v5133
      %5163 = vst [vmem:[%s5141 + $0xa8] sm:$0xff] %v5138
      %v5164 = vld [vmem:[%s4] sm:$0x1]
      %v5165 = vld [vmem:[#allocation3] sm:$0xff]
      %v5166 = vld [vmem:[#allocation3 + $0x8] sm:$0x7]
      %v5167 = vadd.f32 %v5165, 0.0
      %v5168 = vadd.f32 %v5166, 0.0
      %v5169 = vld [vmem:[%s1823] sm:$0xff]
      %v5170 = vld [vmem:[%s1823 + $0x8] sm:$0x7]
      %v5171 = vadd.f32 %v5167, %v5169
      %v5172 = vadd.f32 %v5168, %v5170
      %v5173 = vld [vmem:[%s2060 + $0x1] sm:$0xff]
      %v5174 = vld [vmem:[%s2060 + $0x9] sm:$0x7]
      %v5175 = vadd.f32 %v5171, %v5173
      %v5176 = vadd.f32 %v5172, %v5174
      %v5177 = vld [vmem:[%s2297 + $0x1] sm:$0xff]
      %v5178 = vld [vmem:[%s2297 + $0x9] sm:$0x7]
      %v5179 = vadd.f32 %v5175, %v5177
      %v5180 = vadd.f32 %v5176, %v5178
      %v5181 = vld [vmem:[%s2534] sm:$0xff]
      %v5182 = vld [vmem:[%s2534 + $0x8] sm:$0x7]
      %v5183 = vadd.f32 %v5179, %v5181
      %v5184 = vadd.f32 %v5180, %v5182
      %v5185 = vld [vmem:[%s2771] sm:$0xff]
      %v5186 = vld [vmem:[%s2771 + $0x8] sm:$0x7]
      %v5187 = vadd.f32 %v5183, %v5185
      %v5188 = vadd.f32 %v5184, %v5186
      %v5189 = vld [vmem:[%s3008 + $0x1] sm:$0xff]
      %v5190 = vld [vmem:[%s3008 + $0x9] sm:$0x7]
      %v5191 = vadd.f32 %v5187, %v5189
      %v5192 = vadd.f32 %v5188, %v5190
      %v5193 = vld [vmem:[%s3245 + $0x1] sm:$0xff]
      %v5194 = vld [vmem:[%s3245 + $0x9] sm:$0x7]
      %v5195 = vadd.f32 %v5191, %v5193
      %v5196 = vadd.f32 %v5192, %v5194
      %v5197 = vld [vmem:[%s3482 + $0xd] sm:$0xff]
      %v5198 = vld [vmem:[%s3482 + $0x15] sm:$0x7]
      %v5199 = vadd.f32 %v5195, %v5197
      %v5200 = vadd.f32 %v5196, %v5198
      %v5201 = vld [vmem:[%s3719 + $0xd] sm:$0xff]
      %v5202 = vld [vmem:[%s3719 + $0x15] sm:$0x7]
      %v5203 = vadd.f32 %v5199, %v5201
      %v5204 = vadd.f32 %v5200, %v5202
      %v5205 = vld [vmem:[%s3956 + $0xe] sm:$0xff]
      %v5206 = vld [vmem:[%s3956 + $0x16] sm:$0x7]
      %v5207 = vadd.f32 %v5203, %v5205
      %v5208 = vadd.f32 %v5204, %v5206
      %v5209 = vld [vmem:[%s4193 + $0xe] sm:$0xff]
      %v5210 = vld [vmem:[%s4193 + $0x16] sm:$0x7]
      %v5211 = vadd.f32 %v5207, %v5209
      %v5212 = vadd.f32 %v5208, %v5210
      %v5213 = vld [vmem:[%s4430 + $0xd] sm:$0xff]
      %v5214 = vld [vmem:[%s4430 + $0x15] sm:$0x7]
      %v5215 = vadd.f32 %v5211, %v5213
      %v5216 = vadd.f32 %v5212, %v5214
      %v5217 = vld [vmem:[%s4667 + $0xd] sm:$0xff]
      %v5218 = vld [vmem:[%s4667 + $0x15] sm:$0x7]
      %v5219 = vadd.f32 %v5215, %v5217
      %v5220 = vadd.f32 %v5216, %v5218
      %v5221 = vld [vmem:[%s4904 + $0xe] sm:$0xff]
      %v5222 = vld [vmem:[%s4904 + $0x16] sm:$0x7]
      %v5223 = vadd.f32 %v5219, %v5221
      %v5224 = vadd.f32 %v5220, %v5222
      %v5225 = vld [vmem:[%s5141 + $0xe] sm:$0xff]
      %v5226 = vld [vmem:[%s5141 + $0x16] sm:$0x7]
      %v5227 = vadd.f32 %v5223, %v5225
      %v5228 = vadd.f32 %v5224, %v5226
      %v5230 = vlaneseq
      %v5231 = vshrl.u32 %v5230, 7
      %v5232 = vsub.s32 0, %v5231
      %v5233 = vrot.slane %v5164, %v5232
      %v5235 = vadd.f32 %v5227, %v5233
      %v5236 = vadd.f32 %v5228, %v5233
      %v5237 = vmax.f32 %v5235, 0.0
      %v5238 = vmax.f32 %v5236, 0.0
      %5239 = vst [vmem:[#allocation4] sm:$0xff] %v5237
      %5240 = vst [vmem:[#allocation4 + $0x8] sm:$0x7] %v5238
      %v5241 = vld [vmem:[#allocation3 + $0xd] sm:$0xff]
      %v5242 = vld [vmem:[#allocation3 + $0x15] sm:$0x7]
      %v5243 = vadd.f32 %v5241, 0.0
      %v5244 = vadd.f32 %v5242, 0.0
      %v5245 = vld [vmem:[%s1823 + $0xd] sm:$0xff]
      %v5246 = vld [vmem:[%s1823 + $0x15] sm:$0x7]
      %v5247 = vadd.f32 %v5243, %v5245
      %v5248 = vadd.f32 %v5244, %v5246
      %v5249 = vld [vmem:[%s2060 + $0xe] sm:$0xff]
      %v5250 = vld [vmem:[%s2060 + $0x16] sm:$0x7]
      %v5251 = vadd.f32 %v5247, %v5249
      %v5252 = vadd.f32 %v5248, %v5250
      %v5253 = vld [vmem:[%s2297 + $0xe] sm:$0xff]
      %v5254 = vld [vmem:[%s2297 + $0x16] sm:$0x7]
      %v5255 = vadd.f32 %v5251, %v5253
      %v5256 = vadd.f32 %v5252, %v5254
      %v5257 = vld [vmem:[%s2534 + $0xd] sm:$0xff]
      %v5258 = vld [vmem:[%s2534 + $0x15] sm:$0x7]
      %v5259 = vadd.f32 %v5255, %v5257
      %v5260 = vadd.f32 %v5256, %v5258
      %v5261 = vld [vmem:[%s2771 + $0xd] sm:$0xff]
      %v5262 = vld [vmem:[%s2771 + $0x15] sm:$0x7]
      %v5263 = vadd.f32 %v5259, %v5261
      %v5264 = vadd.f32 %v5260, %v5262
      %v5265 = vld [vmem:[%s3008 + $0xe] sm:$0xff]
      %v5266 = vld [vmem:[%s3008 + $0x16] sm:$0x7]
      %v5267 = vadd.f32 %v5263, %v5265
      %v5268 = vadd.f32 %v5264, %v5266
      %v5269 = vld [vmem:[%s3245 + $0xe] sm:$0xff]
      %v5270 = vld [vmem:[%s3245 + $0x16] sm:$0x7]
      %v5271 = vadd.f32 %v5267, %v5269
      %v5272 = vadd.f32 %v5268, %v5270
      %v5273 = vld [vmem:[%s3482 + $0x1a] sm:$0xff]
      %v5274 = vld [vmem:[%s3482 + $0x22] sm:$0x7]
      %v5275 = vadd.f32 %v5271, %v5273
      %v5276 = vadd.f32 %v5272, %v5274
      %v5277 = vld [vmem:[%s3719 + $0x1a] sm:$0xff]
      %v5278 = vld [vmem:[%s3719 + $0x22] sm:$0x7]
      %v5279 = vadd.f32 %v5275, %v5277
      %v5280 = vadd.f32 %v5276, %v5278
      %v5281 = vld [vmem:[%s3956 + $0x1b] sm:$0xff]
      %v5282 = vld [vmem:[%s3956 + $0x23] sm:$0x7]
      %v5283 = vadd.f32 %v5279, %v5281
      %v5284 = vadd.f32 %v5280, %v5282
      %v5285 = vld [vmem:[%s4193 + $0x1b] sm:$0xff]
      %v5286 = vld [vmem:[%s4193 + $0x23] sm:$0x7]
      %v5287 = vadd.f32 %v5283, %v5285
      %v5288 = vadd.f32 %v5284, %v5286
      %v5289 = vld [vmem:[%s4430 + $0x1a] sm:$0xff]
      %v5290 = vld [vmem:[%s4430 + $0x22] sm:$0x7]
      %v5291 = vadd.f32 %v5287, %v5289
      %v5292 = vadd.f32 %v5288, %v5290
      %v5293 = vld [vmem:[%s4667 + $0x1a] sm:$0xff]
      %v5294 = vld [vmem:[%s4667 + $0x22] sm:$0x7]
      %v5295 = vadd.f32 %v5291, %v5293
      %v5296 = vadd.f32 %v5292, %v5294
      %v5297 = vld [vmem:[%s4904 + $0x1b] sm:$0xff]
      %v5298 = vld [vmem:[%s4904 + $0x23] sm:$0x7]
      %v5299 = vadd.f32 %v5295, %v5297
      %v5300 = vadd.f32 %v5296, %v5298
      %v5301 = vld [vmem:[%s5141 + $0x1b] sm:$0xff]
      %v5302 = vld [vmem:[%s5141 + $0x23] sm:$0x7]
      %v5303 = vadd.f32 %v5299, %v5301
      %v5304 = vadd.f32 %v5300, %v5302
      %v5305 = vadd.f32 %v5303, %v5233
      %v5306 = vadd.f32 %v5304, %v5233
      %v5307 = vmax.f32 %v5305, 0.0
      %v5308 = vmax.f32 %v5306, 0.0
      %5309 = vst [vmem:[#allocation4 + $0xb] sm:$0xff] %v5307
      %5310 = vst [vmem:[#allocation4 + $0x13] sm:$0x7] %v5308
      %v5311 = vld [vmem:[#allocation3 + $0x1a] sm:$0xff]
      %v5312 = vld [vmem:[#allocation3 + $0x22] sm:$0x7]
      %v5313 = vadd.f32 %v5311, 0.0
      %v5314 = vadd.f32 %v5312, 0.0
      %v5315 = vld [vmem:[%s1823 + $0x1a] sm:$0xff]
      %v5316 = vld [vmem:[%s1823 + $0x22] sm:$0x7]
      %v5317 = vadd.f32 %v5313, %v5315
      %v5318 = vadd.f32 %v5314, %v5316
      %v5319 = vld [vmem:[%s2060 + $0x1b] sm:$0xff]
      %v5320 = vld [vmem:[%s2060 + $0x23] sm:$0x7]
      %v5321 = vadd.f32 %v5317, %v5319
      %v5322 = vadd.f32 %v5318, %v5320
      %v5323 = vld [vmem:[%s2297 + $0x1b] sm:$0xff]
      %v5324 = vld [vmem:[%s2297 + $0x23] sm:$0x7]
      %v5325 = vadd.f32 %v5321, %v5323
      %v5326 = vadd.f32 %v5322, %v5324
      %v5327 = vld [vmem:[%s2534 + $0x1a] sm:$0xff]
      %v5328 = vld [vmem:[%s2534 + $0x22] sm:$0x7]
      %v5329 = vadd.f32 %v5325, %v5327
      %v5330 = vadd.f32 %v5326, %v5328
      %v5331 = vld [vmem:[%s2771 + $0x1a] sm:$0xff]
      %v5332 = vld [vmem:[%s2771 + $0x22] sm:$0x7]
      %v5333 = vadd.f32 %v5329, %v5331
      %v5334 = vadd.f32 %v5330, %v5332
      %v5335 = vld [vmem:[%s3008 + $0x1b] sm:$0xff]
      %v5336 = vld [vmem:[%s3008 + $0x23] sm:$0x7]
      %v5337 = vadd.f32 %v5333, %v5335
      %v5338 = vadd.f32 %v5334, %v5336
      %v5339 = vld [vmem:[%s3245 + $0x1b] sm:$0xff]
      %v5340 = vld [vmem:[%s3245 + $0x23] sm:$0x7]
      %v5341 = vadd.f32 %v5337, %v5339
      %v5342 = vadd.f32 %v5338, %v5340
      %v5343 = vld [vmem:[%s3482 + $0x27] sm:$0xff]
      %v5344 = vld [vmem:[%s3482 + $0x2f] sm:$0x7]
      %v5345 = vadd.f32 %v5341, %v5343
      %v5346 = vadd.f32 %v5342, %v5344
      %v5347 = vld [vmem:[%s3719 + $0x27] sm:$0xff]
      %v5348 = vld [vmem:[%s3719 + $0x2f] sm:$0x7]
      %v5349 = vadd.f32 %v5345, %v5347
      %v5350 = vadd.f32 %v5346, %v5348
      %v5351 = vld [vmem:[%s3956 + $0x28] sm:$0xff]
      %v5352 = vld [vmem:[%s3956 + $0x30] sm:$0x7]
      %v5353 = vadd.f32 %v5349, %v5351
      %v5354 = vadd.f32 %v5350, %v5352
      %v5355 = vld [vmem:[%s4193 + $0x28] sm:$0xff]
      %v5356 = vld [vmem:[%s4193 + $0x30] sm:$0x7]
      %v5357 = vadd.f32 %v5353, %v5355
      %v5358 = vadd.f32 %v5354, %v5356
      %v5359 = vld [vmem:[%s4430 + $0x27] sm:$0xff]
      %v5360 = vld [vmem:[%s4430 + $0x2f] sm:$0x7]
      %v5361 = vadd.f32 %v5357, %v5359
      %v5362 = vadd.f32 %v5358, %v5360
      %v5363 = vld [vmem:[%s4667 + $0x27] sm:$0xff]
      %v5364 = vld [vmem:[%s4667 + $0x2f] sm:$0x7]
      %v5365 = vadd.f32 %v5361, %v5363
      %v5366 = vadd.f32 %v5362, %v5364
      %v5367 = vld [vmem:[%s4904 + $0x28] sm:$0xff]
      %v5368 = vld [vmem:[%s4904 + $0x30] sm:$0x7]
      %v5369 = vadd.f32 %v5365, %v5367
      %v5370 = vadd.f32 %v5366, %v5368
      %v5371 = vld [vmem:[%s5141 + $0x28] sm:$0xff]
      %v5372 = vld [vmem:[%s5141 + $0x30] sm:$0x7]
      %v5373 = vadd.f32 %v5369, %v5371
      %v5374 = vadd.f32 %v5370, %v5372
      %v5375 = vadd.f32 %v5373, %v5233
      %v5376 = vadd.f32 %v5374, %v5233
      %v5377 = vmax.f32 %v5375, 0.0
      %v5378 = vmax.f32 %v5376, 0.0
      %5379 = vst [vmem:[#allocation4 + $0x16] sm:$0xff] %v5377
      %5380 = vst [vmem:[#allocation4 + $0x1e] sm:$0x7] %v5378
      %v5381 = vld [vmem:[#allocation3 + $0x27] sm:$0xff]
      %v5382 = vld [vmem:[#allocation3 + $0x2f] sm:$0x7]
      %v5383 = vadd.f32 %v5381, 0.0
      %v5384 = vadd.f32 %v5382, 0.0
      %v5385 = vld [vmem:[%s1823 + $0x27] sm:$0xff]
      %v5386 = vld [vmem:[%s1823 + $0x2f] sm:$0x7]
      %v5387 = vadd.f32 %v5383, %v5385
      %v5388 = vadd.f32 %v5384, %v5386
      %v5389 = vld [vmem:[%s2060 + $0x28] sm:$0xff]
      %v5390 = vld [vmem:[%s2060 + $0x30] sm:$0x7]
      %v5391 = vadd.f32 %v5387, %v5389
      %v5392 = vadd.f32 %v5388, %v5390
      %v5393 = vld [vmem:[%s2297 + $0x28] sm:$0xff]
      %v5394 = vld [vmem:[%s2297 + $0x30] sm:$0x7]
      %v5395 = vadd.f32 %v5391, %v5393
      %v5396 = vadd.f32 %v5392, %v5394
      %v5397 = vld [vmem:[%s2534 + $0x27] sm:$0xff]
      %v5398 = vld [vmem:[%s2534 + $0x2f] sm:$0x7]
      %v5399 = vadd.f32 %v5395, %v5397
      %v5400 = vadd.f32 %v5396, %v5398
      %v5401 = vld [vmem:[%s2771 + $0x27] sm:$0xff]
      %v5402 = vld [vmem:[%s2771 + $0x2f] sm:$0x7]
      %v5403 = vadd.f32 %v5399, %v5401
      %v5404 = vadd.f32 %v5400, %v5402
      %v5405 = vld [vmem:[%s3008 + $0x28] sm:$0xff]
      %v5406 = vld [vmem:[%s3008 + $0x30] sm:$0x7]
      %v5407 = vadd.f32 %v5403, %v5405
      %v5408 = vadd.f32 %v5404, %v5406
      %v5409 = vld [vmem:[%s3245 + $0x28] sm:$0xff]
      %v5410 = vld [vmem:[%s3245 + $0x30] sm:$0x7]
      %v5411 = vadd.f32 %v5407, %v5409
      %v5412 = vadd.f32 %v5408, %v5410
      %v5413 = vld [vmem:[%s3482 + $0x34] sm:$0xff]
      %v5414 = vld [vmem:[%s3482 + $0x3c] sm:$0x7]
      %v5415 = vadd.f32 %v5411, %v5413
      %v5416 = vadd.f32 %v5412, %v5414
      %v5417 = vld [vmem:[%s3719 + $0x34] sm:$0xff]
      %v5418 = vld [vmem:[%s3719 + $0x3c] sm:$0x7]
      %v5419 = vadd.f32 %v5415, %v5417
      %v5420 = vadd.f32 %v5416, %v5418
      %v5421 = vld [vmem:[%s3956 + $0x35] sm:$0xff]
      %v5422 = vld [vmem:[%s3956 + $0x3d] sm:$0x7]
      %v5423 = vadd.f32 %v5419, %v5421
      %v5424 = vadd.f32 %v5420, %v5422
      %v5425 = vld [vmem:[%s4193 + $0x35] sm:$0xff]
      %v5426 = vld [vmem:[%s4193 + $0x3d] sm:$0x7]
      %v5427 = vadd.f32 %v5423, %v5425
      %v5428 = vadd.f32 %v5424, %v5426
      %v5429 = vld [vmem:[%s4430 + $0x34] sm:$0xff]
      %v5430 = vld [vmem:[%s4430 + $0x3c] sm:$0x7]
      %v5431 = vadd.f32 %v5427, %v5429
      %v5432 = vadd.f32 %v5428, %v5430
      %v5433 = vld [vmem:[%s4667 + $0x34] sm:$0xff]
      %v5434 = vld [vmem:[%s4667 + $0x3c] sm:$0x7]
      %v5435 = vadd.f32 %v5431, %v5433
      %v5436 = vadd.f32 %v5432, %v5434
      %v5437 = vld [vmem:[%s4904 + $0x35] sm:$0xff]
      %v5438 = vld [vmem:[%s4904 + $0x3d] sm:$0x7]
      %v5439 = vadd.f32 %v5435, %v5437
      %v5440 = vadd.f32 %v5436, %v5438
      %v5441 = vld [vmem:[%s5141 + $0x35] sm:$0xff]
      %v5442 = vld [vmem:[%s5141 + $0x3d] sm:$0x7]
      %v5443 = vadd.f32 %v5439, %v5441
      %v5444 = vadd.f32 %v5440, %v5442
      %v5445 = vadd.f32 %v5443, %v5233
      %v5446 = vadd.f32 %v5444, %v5233
      %v5447 = vmax.f32 %v5445, 0.0
      %v5448 = vmax.f32 %v5446, 0.0
      %5449 = vst [vmem:[#allocation4 + $0x21] sm:$0xff] %v5447
      %5450 = vst [vmem:[#allocation4 + $0x29] sm:$0x7] %v5448
      %v5451 = vld [vmem:[#allocation3 + $0x34] sm:$0xff]
      %v5452 = vld [vmem:[#allocation3 + $0x3c] sm:$0x7]
      %v5453 = vadd.f32 %v5451, 0.0
      %v5454 = vadd.f32 %v5452, 0.0
      %v5455 = vld [vmem:[%s1823 + $0x34] sm:$0xff]
      %v5456 = vld [vmem:[%s1823 + $0x3c] sm:$0x7]
      %v5457 = vadd.f32 %v5453, %v5455
      %v5458 = vadd.f32 %v5454, %v5456
      %v5459 = vld [vmem:[%s2060 + $0x35] sm:$0xff]
      %v5460 = vld [vmem:[%s2060 + $0x3d] sm:$0x7]
      %v5461 = vadd.f32 %v5457, %v5459
      %v5462 = vadd.f32 %v5458, %v5460
      %v5463 = vld [vmem:[%s2297 + $0x35] sm:$0xff]
      %v5464 = vld [vmem:[%s2297 + $0x3d] sm:$0x7]
      %v5465 = vadd.f32 %v5461, %v5463
      %v5466 = vadd.f32 %v5462, %v5464
      %v5467 = vld [vmem:[%s2534 + $0x34] sm:$0xff]
      %v5468 = vld [vmem:[%s2534 + $0x3c] sm:$0x7]
      %v5469 = vadd.f32 %v5465, %v5467
      %v5470 = vadd.f32 %v5466, %v5468
      %v5471 = vld [vmem:[%s2771 + $0x34] sm:$0xff]
      %v5472 = vld [vmem:[%s2771 + $0x3c] sm:$0x7]
      %v5473 = vadd.f32 %v5469, %v5471
      %v5474 = vadd.f32 %v5470, %v5472
      %v5475 = vld [vmem:[%s3008 + $0x35] sm:$0xff]
      %v5476 = vld [vmem:[%s3008 + $0x3d] sm:$0x7]
      %v5477 = vadd.f32 %v5473, %v5475
      %v5478 = vadd.f32 %v5474, %v5476
      %v5479 = vld [vmem:[%s3245 + $0x35] sm:$0xff]
      %v5480 = vld [vmem:[%s3245 + $0x3d] sm:$0x7]
      %v5481 = vadd.f32 %v5477, %v5479
      %v5482 = vadd.f32 %v5478, %v5480
      %v5483 = vld [vmem:[%s3482 + $0x41] sm:$0xff]
      %v5484 = vld [vmem:[%s3482 + $0x49] sm:$0x7]
      %v5485 = vadd.f32 %v5481, %v5483
      %v5486 = vadd.f32 %v5482, %v5484
      %v5487 = vld [vmem:[%s3719 + $0x41] sm:$0xff]
      %v5488 = vld [vmem:[%s3719 + $0x49] sm:$0x7]
      %v5489 = vadd.f32 %v5485, %v5487
      %v5490 = vadd.f32 %v5486, %v5488
      %v5491 = vld [vmem:[%s3956 + $0x42] sm:$0xff]
      %v5492 = vld [vmem:[%s3956 + $0x4a] sm:$0x7]
      %v5493 = vadd.f32 %v5489, %v5491
      %v5494 = vadd.f32 %v5490, %v5492
      %v5495 = vld [vmem:[%s4193 + $0x42] sm:$0xff]
      %v5496 = vld [vmem:[%s4193 + $0x4a] sm:$0x7]
      %v5497 = vadd.f32 %v5493, %v5495
      %v5498 = vadd.f32 %v5494, %v5496
      %v5499 = vld [vmem:[%s4430 + $0x41] sm:$0xff]
      %v5500 = vld [vmem:[%s4430 + $0x49] sm:$0x7]
      %v5501 = vadd.f32 %v5497, %v5499
      %v5502 = vadd.f32 %v5498, %v5500
      %v5503 = vld [vmem:[%s4667 + $0x41] sm:$0xff]
      %v5504 = vld [vmem:[%s4667 + $0x49] sm:$0x7]
      %v5505 = vadd.f32 %v5501, %v5503
      %v5506 = vadd.f32 %v5502, %v5504
      %v5507 = vld [vmem:[%s4904 + $0x42] sm:$0xff]
      %v5508 = vld [vmem:[%s4904 + $0x4a] sm:$0x7]
      %v5509 = vadd.f32 %v5505, %v5507
      %v5510 = vadd.f32 %v5506, %v5508
      %v5511 = vld [vmem:[%s5141 + $0x42] sm:$0xff]
      %v5512 = vld [vmem:[%s5141 + $0x4a] sm:$0x7]
      %v5513 = vadd.f32 %v5509, %v5511
      %v5514 = vadd.f32 %v5510, %v5512
      %v5515 = vadd.f32 %v5513, %v5233
      %v5516 = vadd.f32 %v5514, %v5233
      %v5517 = vmax.f32 %v5515, 0.0
      %v5518 = vmax.f32 %v5516, 0.0
      %5519 = vst [vmem:[#allocation4 + $0x2c] sm:$0xff] %v5517
      %5520 = vst [vmem:[#allocation4 + $0x34] sm:$0x7] %v5518
      %v5521 = vld [vmem:[#allocation3 + $0x41] sm:$0xff]
      %v5522 = vld [vmem:[#allocation3 + $0x49] sm:$0x7]
      %v5523 = vadd.f32 %v5521, 0.0
      %v5524 = vadd.f32 %v5522, 0.0
      %v5525 = vld [vmem:[%s1823 + $0x41] sm:$0xff]
      %v5526 = vld [vmem:[%s1823 + $0x49] sm:$0x7]
      %v5527 = vadd.f32 %v5523, %v5525
      %v5528 = vadd.f32 %v5524, %v5526
      %v5529 = vld [vmem:[%s2060 + $0x42] sm:$0xff]
      %v5530 = vld [vmem:[%s2060 + $0x4a] sm:$0x7]
      %v5531 = vadd.f32 %v5527, %v5529
      %v5532 = vadd.f32 %v5528, %v5530
      %v5533 = vld [vmem:[%s2297 + $0x42] sm:$0xff]
      %v5534 = vld [vmem:[%s2297 + $0x4a] sm:$0x7]
      %v5535 = vadd.f32 %v5531, %v5533
      %v5536 = vadd.f32 %v5532, %v5534
      %v5537 = vld [vmem:[%s2534 + $0x41] sm:$0xff]
      %v5538 = vld [vmem:[%s2534 + $0x49] sm:$0x7]
      %v5539 = vadd.f32 %v5535, %v5537
      %v5540 = vadd.f32 %v5536, %v5538
      %v5541 = vld [vmem:[%s2771 + $0x41] sm:$0xff]
      %v5542 = vld [vmem:[%s2771 + $0x49] sm:$0x7]
      %v5543 = vadd.f32 %v5539, %v5541
      %v5544 = vadd.f32 %v5540, %v5542
      %v5545 = vld [vmem:[%s3008 + $0x42] sm:$0xff]
      %v5546 = vld [vmem:[%s3008 + $0x4a] sm:$0x7]
      %v5547 = vadd.f32 %v5543, %v5545
      %v5548 = vadd.f32 %v5544, %v5546
      %v5549 = vld [vmem:[%s3245 + $0x42] sm:$0xff]
      %v5550 = vld [vmem:[%s3245 + $0x4a] sm:$0x7]
      %v5551 = vadd.f32 %v5547, %v5549
      %v5552 = vadd.f32 %v5548, %v5550
      %v5553 = vld [vmem:[%s3482 + $0x4e] sm:$0xff]
      %v5554 = vld [vmem:[%s3482 + $0x56] sm:$0x7]
      %v5555 = vadd.f32 %v5551, %v5553
      %v5556 = vadd.f32 %v5552, %v5554
      %v5557 = vld [vmem:[%s3719 + $0x4e] sm:$0xff]
      %v5558 = vld [vmem:[%s3719 + $0x56] sm:$0x7]
      %v5559 = vadd.f32 %v5555, %v5557
      %v5560 = vadd.f32 %v5556, %v5558
      %v5561 = vld [vmem:[%s3956 + $0x4f] sm:$0xff]
      %v5562 = vld [vmem:[%s3956 + $0x57] sm:$0x7]
      %v5563 = vadd.f32 %v5559, %v5561
      %v5564 = vadd.f32 %v5560, %v5562
      %v5565 = vld [vmem:[%s4193 + $0x4f] sm:$0xff]
      %v5566 = vld [vmem:[%s4193 + $0x57] sm:$0x7]
      %v5567 = vadd.f32 %v5563, %v5565
      %v5568 = vadd.f32 %v5564, %v5566
      %v5569 = vld [vmem:[%s4430 + $0x4e] sm:$0xff]
      %v5570 = vld [vmem:[%s4430 + $0x56] sm:$0x7]
      %v5571 = vadd.f32 %v5567, %v5569
      %v5572 = vadd.f32 %v5568, %v5570
      %v5573 = vld [vmem:[%s4667 + $0x4e] sm:$0xff]
      %v5574 = vld [vmem:[%s4667 + $0x56] sm:$0x7]
      %v5575 = vadd.f32 %v5571, %v5573
      %v5576 = vadd.f32 %v5572, %v5574
      %v5577 = vld [vmem:[%s4904 + $0x4f] sm:$0xff]
      %v5578 = vld [vmem:[%s4904 + $0x57] sm:$0x7]
      %v5579 = vadd.f32 %v5575, %v5577
      %v5580 = vadd.f32 %v5576, %v5578
      %v5581 = vld [vmem:[%s5141 + $0x4f] sm:$0xff]
      %v5582 = vld [vmem:[%s5141 + $0x57] sm:$0x7]
      %v5583 = vadd.f32 %v5579, %v5581
      %v5584 = vadd.f32 %v5580, %v5582
      %v5585 = vadd.f32 %v5583, %v5233
      %v5586 = vadd.f32 %v5584, %v5233
      %v5587 = vmax.f32 %v5585, 0.0
      %v5588 = vmax.f32 %v5586, 0.0
      %5589 = vst [vmem:[#allocation4 + $0x37] sm:$0xff] %v5587
      %5590 = vst [vmem:[#allocation4 + $0x3f] sm:$0x7] %v5588
      %v5591 = vld [vmem:[#allocation3 + $0x4e] sm:$0xff]
      %v5592 = vld [vmem:[#allocation3 + $0x56] sm:$0x7]
      %v5593 = vadd.f32 %v5591, 0.0
      %v5594 = vadd.f32 %v5592, 0.0
      %v5595 = vld [vmem:[%s1823 + $0x4e] sm:$0xff]
      %v5596 = vld [vmem:[%s1823 + $0x56] sm:$0x7]
      %v5597 = vadd.f32 %v5593, %v5595
      %v5598 = vadd.f32 %v5594, %v5596
      %v5599 = vld [vmem:[%s2060 + $0x4f] sm:$0xff]
      %v5600 = vld [vmem:[%s2060 + $0x57] sm:$0x7]
      %v5601 = vadd.f32 %v5597, %v5599
      %v5602 = vadd.f32 %v5598, %v5600
      %v5603 = vld [vmem:[%s2297 + $0x4f] sm:$0xff]
      %v5604 = vld [vmem:[%s2297 + $0x57] sm:$0x7]
      %v5605 = vadd.f32 %v5601, %v5603
      %v5606 = vadd.f32 %v5602, %v5604
      %v5607 = vld [vmem:[%s2534 + $0x4e] sm:$0xff]
      %v5608 = vld [vmem:[%s2534 + $0x56] sm:$0x7]
      %v5609 = vadd.f32 %v5605, %v5607
      %v5610 = vadd.f32 %v5606, %v5608
      %v5611 = vld [vmem:[%s2771 + $0x4e] sm:$0xff]
      %v5612 = vld [vmem:[%s2771 + $0x56] sm:$0x7]
      %v5613 = vadd.f32 %v5609, %v5611
      %v5614 = vadd.f32 %v5610, %v5612
      %v5615 = vld [vmem:[%s3008 + $0x4f] sm:$0xff]
      %v5616 = vld [vmem:[%s3008 + $0x57] sm:$0x7]
      %v5617 = vadd.f32 %v5613, %v5615
      %v5618 = vadd.f32 %v5614, %v5616
      %v5619 = vld [vmem:[%s3245 + $0x4f] sm:$0xff]
      %v5620 = vld [vmem:[%s3245 + $0x57] sm:$0x7]
      %v5621 = vadd.f32 %v5617, %v5619
      %v5622 = vadd.f32 %v5618, %v5620
      %v5623 = vld [vmem:[%s3482 + $0x5b] sm:$0xff]
      %v5624 = vld [vmem:[%s3482 + $0x63] sm:$0x7]
      %v5625 = vadd.f32 %v5621, %v5623
      %v5626 = vadd.f32 %v5622, %v5624
      %v5627 = vld [vmem:[%s3719 + $0x5b] sm:$0xff]
      %v5628 = vld [vmem:[%s3719 + $0x63] sm:$0x7]
      %v5629 = vadd.f32 %v5625, %v5627
      %v5630 = vadd.f32 %v5626, %v5628
      %v5631 = vld [vmem:[%s3956 + $0x5c] sm:$0xff]
      %v5632 = vld [vmem:[%s3956 + $0x64] sm:$0x7]
      %v5633 = vadd.f32 %v5629, %v5631
      %v5634 = vadd.f32 %v5630, %v5632
      %v5635 = vld [vmem:[%s4193 + $0x5c] sm:$0xff]
      %v5636 = vld [vmem:[%s4193 + $0x64] sm:$0x7]
      %v5637 = vadd.f32 %v5633, %v5635
      %v5638 = vadd.f32 %v5634, %v5636
      %v5639 = vld [vmem:[%s4430 + $0x5b] sm:$0xff]
      %v5640 = vld [vmem:[%s4430 + $0x63] sm:$0x7]
      %v5641 = vadd.f32 %v5637, %v5639
      %v5642 = vadd.f32 %v5638, %v5640
      %v5643 = vld [vmem:[%s4667 + $0x5b] sm:$0xff]
      %v5644 = vld [vmem:[%s4667 + $0x63] sm:$0x7]
      %v5645 = vadd.f32 %v5641, %v5643
      %v5646 = vadd.f32 %v5642, %v5644
      %v5647 = vld [vmem:[%s4904 + $0x5c] sm:$0xff]
      %v5648 = vld [vmem:[%s4904 + $0x64] sm:$0x7]
      %v5649 = vadd.f32 %v5645, %v5647
      %v5650 = vadd.f32 %v5646, %v5648
      %v5651 = vld [vmem:[%s5141 + $0x5c] sm:$0xff]
      %v5652 = vld [vmem:[%s5141 + $0x64] sm:$0x7]
      %v5653 = vadd.f32 %v5649, %v5651
      %v5654 = vadd.f32 %v5650, %v5652
      %v5655 = vadd.f32 %v5653, %v5233
      %v5656 = vadd.f32 %v5654, %v5233
      %v5657 = vmax.f32 %v5655, 0.0
      %v5658 = vmax.f32 %v5656, 0.0
      %5659 = vst [vmem:[#allocation4 + $0x42] sm:$0xff] %v5657
      %5660 = vst [vmem:[#allocation4 + $0x4a] sm:$0x7] %v5658
      %v5661 = vld [vmem:[#allocation3 + $0x5b] sm:$0xff]
      %v5662 = vld [vmem:[#allocation3 + $0x63] sm:$0x7]
      %v5663 = vadd.f32 %v5661, 0.0
      %v5664 = vadd.f32 %v5662, 0.0
      %v5665 = vld [vmem:[%s1823 + $0x5b] sm:$0xff]
      %v5666 = vld [vmem:[%s1823 + $0x63] sm:$0x7]
      %v5667 = vadd.f32 %v5663, %v5665
      %v5668 = vadd.f32 %v5664, %v5666
      %v5669 = vld [vmem:[%s2060 + $0x5c] sm:$0xff]
      %v5670 = vld [vmem:[%s2060 + $0x64] sm:$0x7]
      %v5671 = vadd.f32 %v5667, %v5669
      %v5672 = vadd.f32 %v5668, %v5670
      %v5673 = vld [vmem:[%s2297 + $0x5c] sm:$0xff]
      %v5674 = vld [vmem:[%s2297 + $0x64] sm:$0x7]
      %v5675 = vadd.f32 %v5671, %v5673
      %v5676 = vadd.f32 %v5672, %v5674
      %v5677 = vld [vmem:[%s2534 + $0x5b] sm:$0xff]
      %v5678 = vld [vmem:[%s2534 + $0x63] sm:$0x7]
      %v5679 = vadd.f32 %v5675, %v5677
      %v5680 = vadd.f32 %v5676, %v5678
      %v5681 = vld [vmem:[%s2771 + $0x5b] sm:$0xff]
      %v5682 = vld [vmem:[%s2771 + $0x63] sm:$0x7]
      %v5683 = vadd.f32 %v5679, %v5681
      %v5684 = vadd.f32 %v5680, %v5682
      %v5685 = vld [vmem:[%s3008 + $0x5c] sm:$0xff]
      %v5686 = vld [vmem:[%s3008 + $0x64] sm:$0x7]
      %v5687 = vadd.f32 %v5683, %v5685
      %v5688 = vadd.f32 %v5684, %v5686
      %v5689 = vld [vmem:[%s3245 + $0x5c] sm:$0xff]
      %v5690 = vld [vmem:[%s3245 + $0x64] sm:$0x7]
      %v5691 = vadd.f32 %v5687, %v5689
      %v5692 = vadd.f32 %v5688, %v5690
      %v5693 = vld [vmem:[%s3482 + $0x68] sm:$0xff]
      %v5694 = vld [vmem:[%s3482 + $0x70] sm:$0x7]
      %v5695 = vadd.f32 %v5691, %v5693
      %v5696 = vadd.f32 %v5692, %v5694
      %v5697 = vld [vmem:[%s3719 + $0x68] sm:$0xff]
      %v5698 = vld [vmem:[%s3719 + $0x70] sm:$0x7]
      %v5699 = vadd.f32 %v5695, %v5697
      %v5700 = vadd.f32 %v5696, %v5698
      %v5701 = vld [vmem:[%s3956 + $0x69] sm:$0xff]
      %v5702 = vld [vmem:[%s3956 + $0x71] sm:$0x7]
      %v5703 = vadd.f32 %v5699, %v5701
      %v5704 = vadd.f32 %v5700, %v5702
      %v5705 = vld [vmem:[%s4193 + $0x69] sm:$0xff]
      %v5706 = vld [vmem:[%s4193 + $0x71] sm:$0x7]
      %v5707 = vadd.f32 %v5703, %v5705
      %v5708 = vadd.f32 %v5704, %v5706
      %v5709 = vld [vmem:[%s4430 + $0x68] sm:$0xff]
      %v5710 = vld [vmem:[%s4430 + $0x70] sm:$0x7]
      %v5711 = vadd.f32 %v5707, %v5709
      %v5712 = vadd.f32 %v5708, %v5710
      %v5713 = vld [vmem:[%s4667 + $0x68] sm:$0xff]
      %v5714 = vld [vmem:[%s4667 + $0x70] sm:$0x7]
      %v5715 = vadd.f32 %v5711, %v5713
      %v5716 = vadd.f32 %v5712, %v5714
      %v5717 = vld [vmem:[%s4904 + $0x69] sm:$0xff]
      %v5718 = vld [vmem:[%s4904 + $0x71] sm:$0x7]
      %v5719 = vadd.f32 %v5715, %v5717
      %v5720 = vadd.f32 %v5716, %v5718
      %v5721 = vld [vmem:[%s5141 + $0x69] sm:$0xff]
      %v5722 = vld [vmem:[%s5141 + $0x71] sm:$0x7]
      %v5723 = vadd.f32 %v5719, %v5721
      %v5724 = vadd.f32 %v5720, %v5722
      %v5725 = vadd.f32 %v5723, %v5233
      %v5726 = vadd.f32 %v5724, %v5233
      %v5727 = vmax.f32 %v5725, 0.0
      %v5728 = vmax.f32 %v5726, 0.0
      %5729 = vst [vmem:[#allocation4 + $0x4d] sm:$0xff] %v5727
      %5730 = vst [vmem:[#allocation4 + $0x55] sm:$0x7] %v5728
      %v5731 = vld [vmem:[#allocation3 + $0x68] sm:$0xff]
      %v5732 = vld [vmem:[#allocation3 + $0x70] sm:$0x7]
      %v5733 = vadd.f32 %v5731, 0.0
      %v5734 = vadd.f32 %v5732, 0.0
      %v5735 = vld [vmem:[%s1823 + $0x68] sm:$0xff]
      %v5736 = vld [vmem:[%s1823 + $0x70] sm:$0x7]
      %v5737 = vadd.f32 %v5733, %v5735
      %v5738 = vadd.f32 %v5734, %v5736
      %v5739 = vld [vmem:[%s2060 + $0x69] sm:$0xff]
      %v5740 = vld [vmem:[%s2060 + $0x71] sm:$0x7]
      %v5741 = vadd.f32 %v5737, %v5739
      %v5742 = vadd.f32 %v5738, %v5740
      %v5743 = vld [vmem:[%s2297 + $0x69] sm:$0xff]
      %v5744 = vld [vmem:[%s2297 + $0x71] sm:$0x7]
      %v5745 = vadd.f32 %v5741, %v5743
      %v5746 = vadd.f32 %v5742, %v5744
      %v5747 = vld [vmem:[%s2534 + $0x68] sm:$0xff]
      %v5748 = vld [vmem:[%s2534 + $0x70] sm:$0x7]
      %v5749 = vadd.f32 %v5745, %v5747
      %v5750 = vadd.f32 %v5746, %v5748
      %v5751 = vld [vmem:[%s2771 + $0x68] sm:$0xff]
      %v5752 = vld [vmem:[%s2771 + $0x70] sm:$0x7]
      %v5753 = vadd.f32 %v5749, %v5751
      %v5754 = vadd.f32 %v5750, %v5752
      %v5755 = vld [vmem:[%s3008 + $0x69] sm:$0xff]
      %v5756 = vld [vmem:[%s3008 + $0x71] sm:$0x7]
      %v5757 = vadd.f32 %v5753, %v5755
      %v5758 = vadd.f32 %v5754, %v5756
      %v5759 = vld [vmem:[%s3245 + $0x69] sm:$0xff]
      %v5760 = vld [vmem:[%s3245 + $0x71] sm:$0x7]
      %v5761 = vadd.f32 %v5757, %v5759
      %v5762 = vadd.f32 %v5758, %v5760
      %v5763 = vld [vmem:[%s3482 + $0x75] sm:$0xff]
      %v5764 = vld [vmem:[%s3482 + $0x7d] sm:$0x7]
      %v5765 = vadd.f32 %v5761, %v5763
      %v5766 = vadd.f32 %v5762, %v5764
      %v5767 = vld [vmem:[%s3719 + $0x75] sm:$0xff]
      %v5768 = vld [vmem:[%s3719 + $0x7d] sm:$0x7]
      %v5769 = vadd.f32 %v5765, %v5767
      %v5770 = vadd.f32 %v5766, %v5768
      %v5771 = vld [vmem:[%s3956 + $0x76] sm:$0xff]
      %v5772 = vld [vmem:[%s3956 + $0x7e] sm:$0x7]
      %v5773 = vadd.f32 %v5769, %v5771
      %v5774 = vadd.f32 %v5770, %v5772
      %v5775 = vld [vmem:[%s4193 + $0x76] sm:$0xff]
      %v5776 = vld [vmem:[%s4193 + $0x7e] sm:$0x7]
      %v5777 = vadd.f32 %v5773, %v5775
      %v5778 = vadd.f32 %v5774, %v5776
      %v5779 = vld [vmem:[%s4430 + $0x75] sm:$0xff]
      %v5780 = vld [vmem:[%s4430 + $0x7d] sm:$0x7]
      %v5781 = vadd.f32 %v5777, %v5779
      %v5782 = vadd.f32 %v5778, %v5780
      %v5783 = vld [vmem:[%s4667 + $0x75] sm:$0xff]
      %v5784 = vld [vmem:[%s4667 + $0x7d] sm:$0x7]
      %v5785 = vadd.f32 %v5781, %v5783
      %v5786 = vadd.f32 %v5782, %v5784
      %v5787 = vld [vmem:[%s4904 + $0x76] sm:$0xff]
      %v5788 = vld [vmem:[%s4904 + $0x7e] sm:$0x7]
      %v5789 = vadd.f32 %v5785, %v5787
      %v5790 = vadd.f32 %v5786, %v5788
      %v5791 = vld [vmem:[%s5141 + $0x76] sm:$0xff]
      %v5792 = vld [vmem:[%s5141 + $0x7e] sm:$0x7]
      %v5793 = vadd.f32 %v5789, %v5791
      %v5794 = vadd.f32 %v5790, %v5792
      %v5795 = vadd.f32 %v5793, %v5233
      %v5796 = vadd.f32 %v5794, %v5233
      %v5797 = vmax.f32 %v5795, 0.0
      %v5798 = vmax.f32 %v5796, 0.0
      %5799 = vst [vmem:[#allocation4 + $0x58] sm:$0xff] %v5797
      %5800 = vst [vmem:[#allocation4 + $0x60] sm:$0x7] %v5798
      %v5801 = vld [vmem:[#allocation3 + $0x75] sm:$0xff]
      %v5802 = vld [vmem:[#allocation3 + $0x7d] sm:$0x7]
      %v5803 = vadd.f32 %v5801, 0.0
      %v5804 = vadd.f32 %v5802, 0.0
      %v5805 = vld [vmem:[%s1823 + $0x75] sm:$0xff]
      %v5806 = vld [vmem:[%s1823 + $0x7d] sm:$0x7]
      %v5807 = vadd.f32 %v5803, %v5805
      %v5808 = vadd.f32 %v5804, %v5806
      %v5809 = vld [vmem:[%s2060 + $0x76] sm:$0xff]
      %v5810 = vld [vmem:[%s2060 + $0x7e] sm:$0x7]
      %v5811 = vadd.f32 %v5807, %v5809
      %v5812 = vadd.f32 %v5808, %v5810
      %v5813 = vld [vmem:[%s2297 + $0x76] sm:$0xff]
      %v5814 = vld [vmem:[%s2297 + $0x7e] sm:$0x7]
      %v5815 = vadd.f32 %v5811, %v5813
      %v5816 = vadd.f32 %v5812, %v5814
      %v5817 = vld [vmem:[%s2534 + $0x75] sm:$0xff]
      %v5818 = vld [vmem:[%s2534 + $0x7d] sm:$0x7]
      %v5819 = vadd.f32 %v5815, %v5817
      %v5820 = vadd.f32 %v5816, %v5818
      %v5821 = vld [vmem:[%s2771 + $0x75] sm:$0xff]
      %v5822 = vld [vmem:[%s2771 + $0x7d] sm:$0x7]
      %v5823 = vadd.f32 %v5819, %v5821
      %v5824 = vadd.f32 %v5820, %v5822
      %v5825 = vld [vmem:[%s3008 + $0x76] sm:$0xff]
      %v5826 = vld [vmem:[%s3008 + $0x7e] sm:$0x7]
      %v5827 = vadd.f32 %v5823, %v5825
      %v5828 = vadd.f32 %v5824, %v5826
      %v5829 = vld [vmem:[%s3245 + $0x76] sm:$0xff]
      %v5830 = vld [vmem:[%s3245 + $0x7e] sm:$0x7]
      %v5831 = vadd.f32 %v5827, %v5829
      %v5832 = vadd.f32 %v5828, %v5830
      %v5833 = vld [vmem:[%s3482 + $0x82] sm:$0xff]
      %v5834 = vld [vmem:[%s3482 + $0x8a] sm:$0x7]
      %v5835 = vadd.f32 %v5831, %v5833
      %v5836 = vadd.f32 %v5832, %v5834
      %v5837 = vld [vmem:[%s3719 + $0x82] sm:$0xff]
      %v5838 = vld [vmem:[%s3719 + $0x8a] sm:$0x7]
      %v5839 = vadd.f32 %v5835, %v5837
      %v5840 = vadd.f32 %v5836, %v5838
      %v5841 = vld [vmem:[%s3956 + $0x83] sm:$0xff]
      %v5842 = vld [vmem:[%s3956 + $0x8b] sm:$0x7]
      %v5843 = vadd.f32 %v5839, %v5841
      %v5844 = vadd.f32 %v5840, %v5842
      %v5845 = vld [vmem:[%s4193 + $0x83] sm:$0xff]
      %v5846 = vld [vmem:[%s4193 + $0x8b] sm:$0x7]
      %v5847 = vadd.f32 %v5843, %v5845
      %v5848 = vadd.f32 %v5844, %v5846
      %v5849 = vld [vmem:[%s4430 + $0x82] sm:$0xff]
      %v5850 = vld [vmem:[%s4430 + $0x8a] sm:$0x7]
      %v5851 = vadd.f32 %v5847, %v5849
      %v5852 = vadd.f32 %v5848, %v5850
      %v5853 = vld [vmem:[%s4667 + $0x82] sm:$0xff]
      %v5854 = vld [vmem:[%s4667 + $0x8a] sm:$0x7]
      %v5855 = vadd.f32 %v5851, %v5853
      %v5856 = vadd.f32 %v5852, %v5854
      %v5857 = vld [vmem:[%s4904 + $0x83] sm:$0xff]
      %v5858 = vld [vmem:[%s4904 + $0x8b] sm:$0x7]
      %v5859 = vadd.f32 %v5855, %v5857
      %v5860 = vadd.f32 %v5856, %v5858
      %v5861 = vld [vmem:[%s5141 + $0x83] sm:$0xff]
      %v5862 = vld [vmem:[%s5141 + $0x8b] sm:$0x7]
      %v5863 = vadd.f32 %v5859, %v5861
      %v5864 = vadd.f32 %v5860, %v5862
      %v5865 = vadd.f32 %v5863, %v5233
      %v5866 = vadd.f32 %v5864, %v5233
      %v5867 = vmax.f32 %v5865, 0.0
      %v5868 = vmax.f32 %v5866, 0.0
      %5869 = vst [vmem:[#allocation4 + $0x63] sm:$0xff] %v5867
      %5870 = vst [vmem:[#allocation4 + $0x6b] sm:$0x7] %v5868
      %v5871 = vld [vmem:[#allocation4] sm:$0x1]
      %v5872 = vld [vmem:[#allocation4 + $0x1] sm:$0x1]
      %v5873 = vld [vmem:[#allocation4 + $0xb] sm:$0x1]
      %v5874 = vld [vmem:[#allocation4 + $0xc] sm:$0x1]
      %v5875 = vmax.f32 %v5871, %v5872
      %v5876 = vmax.f32 %v5873, %v5874
      %v5877 = vmax.f32 %v5875, %v5876
      %v5878 = vlaneseq
      %vm5879 = vcmp.ge.s32.totalorder %v5878, 0
      %vm5880 = vcmp.lt.s32.totalorder %v5878, 128
      %vm5881 = vmand %vm5879, %vm5880
      %5882 = vst.msk [vmem:[#allocation5] sm:$0x1] %vm5881, %v5877
      %v5883 = vld [vmem:[#allocation4 + $0x2] sm:$0x1]
      %v5884 = vld [vmem:[#allocation4 + $0x3] sm:$0x1]
      %v5885 = vld [vmem:[#allocation4 + $0xd] sm:$0x1]
      %v5886 = vld [vmem:[#allocation4 + $0xe] sm:$0x1]
      %v5887 = vmax.f32 %v5883, %v5884
      %v5888 = vmax.f32 %v5885, %v5886
      %v5889 = vmax.f32 %v5887, %v5888
      %5890 = vst.msk [vmem:[#allocation5 + $0x1] sm:$0x1] %vm5881, %v5889
      %v5891 = vld [vmem:[#allocation4 + $0x4] sm:$0x1]
      %v5892 = vld [vmem:[#allocation4 + $0x5] sm:$0x1]
      %v5893 = vld [vmem:[#allocation4 + $0xf] sm:$0x1]
      %v5894 = vld [vmem:[#allocation4 + $0x10] sm:$0x1]
      %v5895 = vmax.f32 %v5891, %v5892
      %v5896 = vmax.f32 %v5893, %v5894
      %v5897 = vmax.f32 %v5895, %v5896
      %5898 = vst.msk [vmem:[#allocation5 + $0x2] sm:$0x1] %vm5881, %v5897
      %v5899 = vld [vmem:[#allocation4 + $0x6] sm:$0x1]
      %v5900 = vld [vmem:[#allocation4 + $0x7] sm:$0x1]
      %v5901 = vld [vmem:[#allocation4 + $0x11] sm:$0x1]
      %v5902 = vld [vmem:[#allocation4 + $0x12] sm:$0x1]
      %v5903 = vmax.f32 %v5899, %v5900
      %v5904 = vmax.f32 %v5901, %v5902
      %v5905 = vmax.f32 %v5903, %v5904
      %5906 = vst.msk [vmem:[#allocation5 + $0x3] sm:$0x1] %vm5881, %v5905
      %v5907 = vld [vmem:[#allocation4 + $0x8] sm:$0x1]
      %v5908 = vld [vmem:[#allocation4 + $0x9] sm:$0x1]
      %v5909 = vld [vmem:[#allocation4 + $0x13] sm:$0x1]
      %v5910 = vld [vmem:[#allocation4 + $0x14] sm:$0x1]
      %v5911 = vmax.f32 %v5907, %v5908
      %v5912 = vmax.f32 %v5909, %v5910
      %v5913 = vmax.f32 %v5911, %v5912
      %5914 = vst.msk [vmem:[#allocation5 + $0x4] sm:$0x1] %vm5881, %v5913
      %v5915 = vld [vmem:[#allocation4 + $0x16] sm:$0x1]
      %v5916 = vld [vmem:[#allocation4 + $0x17] sm:$0x1]
      %v5917 = vld [vmem:[#allocation4 + $0x21] sm:$0x1]
      %v5918 = vld [vmem:[#allocation4 + $0x22] sm:$0x1]
      %v5919 = vmax.f32 %v5915, %v5916
      %v5920 = vmax.f32 %v5917, %v5918
      %v5921 = vmax.f32 %v5919, %v5920
      %5922 = vst.msk [vmem:[#allocation5 + $0x5] sm:$0x1] %vm5881, %v5921
      %v5923 = vld [vmem:[#allocation4 + $0x18] sm:$0x1]
      %v5924 = vld [vmem:[#allocation4 + $0x19] sm:$0x1]
      %v5925 = vld [vmem:[#allocation4 + $0x23] sm:$0x1]
      %v5926 = vld [vmem:[#allocation4 + $0x24] sm:$0x1]
      %v5927 = vmax.f32 %v5923, %v5924
      %v5928 = vmax.f32 %v5925, %v5926
      %v5929 = vmax.f32 %v5927, %v5928
      %5930 = vst.msk [vmem:[#allocation5 + $0x6] sm:$0x1] %vm5881, %v5929
      %v5931 = vld [vmem:[#allocation4 + $0x1a] sm:$0x1]
      %v5932 = vld [vmem:[#allocation4 + $0x1b] sm:$0x1]
      %v5933 = vld [vmem:[#allocation4 + $0x25] sm:$0x1]
      %v5934 = vld [vmem:[#allocation4 + $0x26] sm:$0x1]
      %v5935 = vmax.f32 %v5931, %v5932
      %v5936 = vmax.f32 %v5933, %v5934
      %v5937 = vmax.f32 %v5935, %v5936
      %5938 = vst.msk [vmem:[#allocation5 + $0x7] sm:$0x1] %vm5881, %v5937
      %v5939 = vld [vmem:[#allocation4 + $0x1c] sm:$0x1]
      %v5940 = vld [vmem:[#allocation4 + $0x1d] sm:$0x1]
      %v5941 = vld [vmem:[#allocation4 + $0x27] sm:$0x1]
      %v5942 = vld [vmem:[#allocation4 + $0x28] sm:$0x1]
      %v5943 = vmax.f32 %v5939, %v5940
      %v5944 = vmax.f32 %v5941, %v5942
      %v5945 = vmax.f32 %v5943, %v5944
      %5946 = vst.msk [vmem:[#allocation5 + $0x8] sm:$0x1] %vm5881, %v5945
      %v5947 = vld [vmem:[#allocation4 + $0x1e] sm:$0x1]
      %v5948 = vld [vmem:[#allocation4 + $0x1f] sm:$0x1]
      %v5949 = vld [vmem:[#allocation4 + $0x29] sm:$0x1]
      %v5950 = vld [vmem:[#allocation4 + $0x2a] sm:$0x1]
      %v5951 = vmax.f32 %v5947, %v5948
      %v5952 = vmax.f32 %v5949, %v5950
      %v5953 = vmax.f32 %v5951, %v5952
      %5954 = vst.msk [vmem:[#allocation5 + $0x9] sm:$0x1] %vm5881, %v5953
      %v5955 = vld [vmem:[#allocation4 + $0x2c] sm:$0x1]
      %v5956 = vld [vmem:[#allocation4 + $0x2d] sm:$0x1]
      %v5957 = vld [vmem:[#allocation4 + $0x37] sm:$0x1]
      %v5958 = vld [vmem:[#allocation4 + $0x38] sm:$0x1]
      %v5959 = vmax.f32 %v5955, %v5956
      %v5960 = vmax.f32 %v5957, %v5958
      %v5961 = vmax.f32 %v5959, %v5960
      %5962 = vst.msk [vmem:[#allocation5 + $0xa] sm:$0x1] %vm5881, %v5961
      %v5963 = vld [vmem:[#allocation4 + $0x2e] sm:$0x1]
      %v5964 = vld [vmem:[#allocation4 + $0x2f] sm:$0x1]
      %v5965 = vld [vmem:[#allocation4 + $0x39] sm:$0x1]
      %v5966 = vld [vmem:[#allocation4 + $0x3a] sm:$0x1]
      %v5967 = vmax.f32 %v5963, %v5964
      %v5968 = vmax.f32 %v5965, %v5966
      %v5969 = vmax.f32 %v5967, %v5968
      %5970 = vst.msk [vmem:[#allocation5 + $0xb] sm:$0x1] %vm5881, %v5969
      %v5971 = vld [vmem:[#allocation4 + $0x30] sm:$0x1]
      %v5972 = vld [vmem:[#allocation4 + $0x31] sm:$0x1]
      %v5973 = vld [vmem:[#allocation4 + $0x3b] sm:$0x1]
      %v5974 = vld [vmem:[#allocation4 + $0x3c] sm:$0x1]
      %v5975 = vmax.f32 %v5971, %v5972
      %v5976 = vmax.f32 %v5973, %v5974
      %v5977 = vmax.f32 %v5975, %v5976
      %5978 = vst.msk [vmem:[#allocation5 + $0xc] sm:$0x1] %vm5881, %v5977
      %v5979 = vld [vmem:[#allocation4 + $0x32] sm:$0x1]
      %v5980 = vld [vmem:[#allocation4 + $0x33] sm:$0x1]
      %v5981 = vld [vmem:[#allocation4 + $0x3d] sm:$0x1]
      %v5982 = vld [vmem:[#allocation4 + $0x3e] sm:$0x1]
      %v5983 = vmax.f32 %v5979, %v5980
      %v5984 = vmax.f32 %v5981, %v5982
      %v5985 = vmax.f32 %v5983, %v5984
      %5986 = vst.msk [vmem:[#allocation5 + $0xd] sm:$0x1] %vm5881, %v5985
      %v5987 = vld [vmem:[#allocation4 + $0x34] sm:$0x1]
      %v5988 = vld [vmem:[#allocation4 + $0x35] sm:$0x1]
      %v5989 = vld [vmem:[#allocation4 + $0x3f] sm:$0x1]
      %v5990 = vld [vmem:[#allocation4 + $0x40] sm:$0x1]
      %v5991 = vmax.f32 %v5987, %v5988
      %v5992 = vmax.f32 %v5989, %v5990
      %v5993 = vmax.f32 %v5991, %v5992
      %5994 = vst.msk [vmem:[#allocation5 + $0xe] sm:$0x1] %vm5881, %v5993
      %v5995 = vld [vmem:[#allocation4 + $0x42] sm:$0x1]
      %v5996 = vld [vmem:[#allocation4 + $0x43] sm:$0x1]
      %v5997 = vld [vmem:[#allocation4 + $0x4d] sm:$0x1]
      %v5998 = vld [vmem:[#allocation4 + $0x4e] sm:$0x1]
      %v5999 = vmax.f32 %v5995, %v5996
      %v6000 = vmax.f32 %v5997, %v5998
      %v6001 = vmax.f32 %v5999, %v6000
      %6002 = vst.msk [vmem:[#allocation5 + $0xf] sm:$0x1] %vm5881, %v6001
      %v6003 = vld [vmem:[#allocation4 + $0x44] sm:$0x1]
      %v6004 = vld [vmem:[#allocation4 + $0x45] sm:$0x1]
      %v6005 = vld [vmem:[#allocation4 + $0x4f] sm:$0x1]
      %v6006 = vld [vmem:[#allocation4 + $0x50] sm:$0x1]
      %v6007 = vmax.f32 %v6003, %v6004
      %v6008 = vmax.f32 %v6005, %v6006
      %v6009 = vmax.f32 %v6007, %v6008
      %6010 = vst.msk [vmem:[#allocation5 + $0x10] sm:$0x1] %vm5881, %v6009
      %v6011 = vld [vmem:[#allocation4 + $0x46] sm:$0x1]
      %v6012 = vld [vmem:[#allocation4 + $0x47] sm:$0x1]
      %v6013 = vld [vmem:[#allocation4 + $0x51] sm:$0x1]
      %v6014 = vld [vmem:[#allocation4 + $0x52] sm:$0x1]
      %v6015 = vmax.f32 %v6011, %v6012
      %v6016 = vmax.f32 %v6013, %v6014
      %v6017 = vmax.f32 %v6015, %v6016
      %6018 = vst.msk [vmem:[#allocation5 + $0x11] sm:$0x1] %vm5881, %v6017
      %v6019 = vld [vmem:[#allocation4 + $0x48] sm:$0x1]
      %v6020 = vld [vmem:[#allocation4 + $0x49] sm:$0x1]
      %v6021 = vld [vmem:[#allocation4 + $0x53] sm:$0x1]
      %v6022 = vld [vmem:[#allocation4 + $0x54] sm:$0x1]
      %v6023 = vmax.f32 %v6019, %v6020
      %v6024 = vmax.f32 %v6021, %v6022
      %v6025 = vmax.f32 %v6023, %v6024
      %6026 = vst.msk [vmem:[#allocation5 + $0x12] sm:$0x1] %vm5881, %v6025
      %v6027 = vld [vmem:[#allocation4 + $0x4a] sm:$0x1]
      %v6028 = vld [vmem:[#allocation4 + $0x4b] sm:$0x1]
      %v6029 = vld [vmem:[#allocation4 + $0x55] sm:$0x1]
      %v6030 = vld [vmem:[#allocation4 + $0x56] sm:$0x1]
      %v6031 = vmax.f32 %v6027, %v6028
      %v6032 = vmax.f32 %v6029, %v6030
      %v6033 = vmax.f32 %v6031, %v6032
      %6034 = vst.msk [vmem:[#allocation5 + $0x13] sm:$0x1] %vm5881, %v6033
      %v6035 = vld [vmem:[#allocation4 + $0x58] sm:$0x1]
      %v6036 = vld [vmem:[#allocation4 + $0x59] sm:$0x1]
      %v6037 = vld [vmem:[#allocation4 + $0x63] sm:$0x1]
      %v6038 = vld [vmem:[#allocation4 + $0x64] sm:$0x1]
      %v6039 = vmax.f32 %v6035, %v6036
      %v6040 = vmax.f32 %v6037, %v6038
      %v6041 = vmax.f32 %v6039, %v6040
      %6042 = vst.msk [vmem:[#allocation5 + $0x14] sm:$0x1] %vm5881, %v6041
      %v6043 = vld [vmem:[#allocation4 + $0x5a] sm:$0x1]
      %v6044 = vld [vmem:[#allocation4 + $0x5b] sm:$0x1]
      %v6045 = vld [vmem:[#allocation4 + $0x65] sm:$0x1]
      %v6046 = vld [vmem:[#allocation4 + $0x66] sm:$0x1]
      %v6047 = vmax.f32 %v6043, %v6044
      %v6048 = vmax.f32 %v6045, %v6046
      %v6049 = vmax.f32 %v6047, %v6048
      %6050 = vst.msk [vmem:[#allocation5 + $0x15] sm:$0x1] %vm5881, %v6049
      %v6051 = vld [vmem:[#allocation4 + $0x5c] sm:$0x1]
      %v6052 = vld [vmem:[#allocation4 + $0x5d] sm:$0x1]
      %v6053 = vld [vmem:[#allocation4 + $0x67] sm:$0x1]
      %v6054 = vld [vmem:[#allocation4 + $0x68] sm:$0x1]
      %v6055 = vmax.f32 %v6051, %v6052
      %v6056 = vmax.f32 %v6053, %v6054
      %v6057 = vmax.f32 %v6055, %v6056
      %6058 = vst.msk [vmem:[#allocation5 + $0x16] sm:$0x1] %vm5881, %v6057
      %v6059 = vld [vmem:[#allocation4 + $0x5e] sm:$0x1]
      %v6060 = vld [vmem:[#allocation4 + $0x5f] sm:$0x1]
      %v6061 = vld [vmem:[#allocation4 + $0x69] sm:$0x1]
      %v6062 = vld [vmem:[#allocation4 + $0x6a] sm:$0x1]
      %v6063 = vmax.f32 %v6059, %v6060
      %v6064 = vmax.f32 %v6061, %v6062
      %v6065 = vmax.f32 %v6063, %v6064
      %6066 = vst.msk [vmem:[#allocation5 + $0x17] sm:$0x1] %vm5881, %v6065
      %v6067 = vld [vmem:[#allocation4 + $0x60] sm:$0x1]
      %v6068 = vld [vmem:[#allocation4 + $0x61] sm:$0x1]
      %v6069 = vld [vmem:[#allocation4 + $0x6b] sm:$0x1]
      %v6070 = vld [vmem:[#allocation4 + $0x6c] sm:$0x1]
      %v6071 = vmax.f32 %v6067, %v6068
      %v6072 = vmax.f32 %v6069, %v6070
      %v6073 = vmax.f32 %v6071, %v6072
      %6074 = vst.msk [vmem:[#allocation5 + $0x18] sm:$0x1] %vm5881, %v6073
      %v6075 = vld [vmem:[#allocation5] sm:$0xff]
      %v6076 = vld [vmem:[#allocation5 + $0x8] sm:$0xff]
      %v6077 = vld [vmem:[#allocation5 + $0x10] sm:$0xff]
      %v6078 = vld [vmem:[#allocation5 + $0x18] sm:$0x1]
      %v6079 = vld [vmem:[%s5] sm:$0xff]
      %v6080 = vld [vmem:[%s5 + $0x8] sm:$0xff]
      %v6081 = vld [vmem:[%s5 + $0x10] sm:$0xff]
      %v6082 = vld [vmem:[%s5 + $0x18] sm:$0xff]
      %v6083 = vld [vmem:[%s5 + $0x20] sm:$0xff]
      %v6084 = vld [vmem:[%s5 + $0x28] sm:$0xff]
      %v6085 = vld [vmem:[%s5 + $0x30] sm:$0xff]
      %v6086 = vld [vmem:[%s5 + $0x38] sm:$0xff]
      %v6087 = vld [vmem:[%s5 + $0x40] sm:$0xff]
      %v6088 = vld [vmem:[%s5 + $0x48] sm:$0xff]
      %v6089 = vld [vmem:[%s5 + $0x50] sm:$0xff]
      %v6090 = vld [vmem:[%s5 + $0x58] sm:$0xff]
      %v6091 = vld [vmem:[%s5 + $0x60] sm:$0xff]
      %v6092 = vld [vmem:[%s5 + $0x68] sm:$0xff]
      %v6093 = vld [vmem:[%s5 + $0x70] sm:$0xff]
      %v6094 = vld [vmem:[%s5 + $0x78] sm:$0xff]
      %v6095 = vld [vmem:[%s5 + $0x80] sm:$0xff]
      %v6096 = vld [vmem:[%s5 + $0x88] sm:$0xff]
      %v6097 = vld [vmem:[%s5 + $0x90] sm:$0xff]
      %v6098 = vld [vmem:[%s5 + $0x98] sm:$0xff]
      %v6099 = vld [vmem:[%s5 + $0xa0] sm:$0xff]
      %v6100 = vld [vmem:[%s5 + $0xa8] sm:$0xff]
      %v6101 = vld [vmem:[%s5 + $0xb0] sm:$0xff]
      %v6102 = vld [vmem:[%s5 + $0xb8] sm:$0xff]
      %v6103 = vld [vmem:[%s5 + $0xc0] sm:$0xff]
      %v6104 = vld [vmem:[%s5 + $0xc8] sm:$0xff]
      %v6105 = vld [vmem:[%s5 + $0xd0] sm:$0xff]
      %v6106 = vld [vmem:[%s5 + $0xd8] sm:$0xff]
      %v6107 = vld [vmem:[%s5 + $0xe0] sm:$0xff]
      %v6108 = vld [vmem:[%s5 + $0xe8] sm:$0xff]
      %v6109 = vld [vmem:[%s5 + $0xf0] sm:$0xff]
      %v6110 = vld [vmem:[%s5 + $0xf8] sm:$0xff]
      %v6111 = vld [vmem:[%s5 + $0x100] sm:$0xff]
      %v6112 = vld [vmem:[%s5 + $0x108] sm:$0xff]
      %v6113 = vld [vmem:[%s5 + $0x110] sm:$0xff]
      %v6114 = vld [vmem:[%s5 + $0x118] sm:$0xff]
      %v6115 = vld [vmem:[%s5 + $0x120] sm:$0xff]
      %v6116 = vld [vmem:[%s5 + $0x128] sm:$0xff]
      %v6117 = vld [vmem:[%s5 + $0x130] sm:$0xff]
      %v6118 = vld [vmem:[%s5 + $0x138] sm:$0xff]
      %v6119 = vld [vmem:[%s5 + $0x140] sm:$0xff]
      %v6120 = vld [vmem:[%s5 + $0x148] sm:$0xff]
      %v6121 = vld [vmem:[%s5 + $0x150] sm:$0xff]
      %v6122 = vld [vmem:[%s5 + $0x158] sm:$0xff]
      %v6123 = vld [vmem:[%s5 + $0x160] sm:$0xff]
      %v6124 = vld [vmem:[%s5 + $0x168] sm:$0xff]
      %v6125 = vld [vmem:[%s5 + $0x170] sm:$0xff]
      %v6126 = vld [vmem:[%s5 + $0x178] sm:$0xff]
      %v6127 = vld [vmem:[%s5 + $0x180] sm:$0xff]
      %v6128 = vld [vmem:[%s5 + $0x188] sm:$0xff]
      %v6129 = vld [vmem:[%s5 + $0x190] sm:$0xff]
      %v6130 = vld [vmem:[%s5 + $0x198] sm:$0xff]
      %v6131 = vld [vmem:[%s5 + $0x1a0] sm:$0xff]
      %v6132 = vld [vmem:[%s5 + $0x1a8] sm:$0xff]
      %v6133 = vld [vmem:[%s5 + $0x1b0] sm:$0xff]
      %v6134 = vld [vmem:[%s5 + $0x1b8] sm:$0xff]
      %v6135 = vld [vmem:[%s5 + $0x1c0] sm:$0xff]
      %v6136 = vld [vmem:[%s5 + $0x1c8] sm:$0xff]
      %v6137 = vld [vmem:[%s5 + $0x1d0] sm:$0xff]
      %v6138 = vld [vmem:[%s5 + $0x1d8] sm:$0xff]
      %v6139 = vld [vmem:[%s5 + $0x1e0] sm:$0xff]
      %v6140 = vld [vmem:[%s5 + $0x1e8] sm:$0xff]
      %v6141 = vld [vmem:[%s5 + $0x1f0] sm:$0xff]
      %v6142 = vld [vmem:[%s5 + $0x1f8] sm:$0xff]
      %v6143 = vld [vmem:[%s5 + $0x200] sm:$0xff]
      %v6144 = vld [vmem:[%s5 + $0x208] sm:$0xff]
      %v6145 = vld [vmem:[%s5 + $0x210] sm:$0xff]
      %v6146 = vld [vmem:[%s5 + $0x218] sm:$0xff]
      %v6147 = vld [vmem:[%s5 + $0x220] sm:$0xff]
      %v6148 = vld [vmem:[%s5 + $0x228] sm:$0xff]
      %v6149 = vld [vmem:[%s5 + $0x230] sm:$0xff]
      %v6150 = vld [vmem:[%s5 + $0x238] sm:$0xff]
      %v6151 = vld [vmem:[%s5 + $0x240] sm:$0xff]
      %v6152 = vld [vmem:[%s5 + $0x248] sm:$0xff]
      %v6153 = vld [vmem:[%s5 + $0x250] sm:$0xff]
      %v6154 = vld [vmem:[%s5 + $0x258] sm:$0xff]
      %v6155 = vld [vmem:[%s5 + $0x260] sm:$0xff]
      %v6156 = vld [vmem:[%s5 + $0x268] sm:$0xff]
      %v6157 = vld [vmem:[%s5 + $0x270] sm:$0xff]
      %v6158 = vld [vmem:[%s5 + $0x278] sm:$0xff]
      %v6159 = vld [vmem:[%s5 + $0x280] sm:$0xff]
      %v6160 = vld [vmem:[%s5 + $0x288] sm:$0xff]
      %v6161 = vld [vmem:[%s5 + $0x290] sm:$0xff]
      %v6162 = vld [vmem:[%s5 + $0x298] sm:$0xff]
      %v6163 = vld [vmem:[%s5 + $0x2a0] sm:$0xff]
      %v6164 = vld [vmem:[%s5 + $0x2a8] sm:$0xff]
      %v6165 = vld [vmem:[%s5 + $0x2b0] sm:$0xff]
      %v6166 = vld [vmem:[%s5 + $0x2b8] sm:$0xff]
      %v6167 = vld [vmem:[%s5 + $0x2c0] sm:$0xff]
      %v6168 = vld [vmem:[%s5 + $0x2c8] sm:$0xff]
      %v6169 = vld [vmem:[%s5 + $0x2d0] sm:$0xff]
      %v6170 = vld [vmem:[%s5 + $0x2d8] sm:$0xff]
      %v6171 = vld [vmem:[%s5 + $0x2e0] sm:$0xff]
      %v6172 = vld [vmem:[%s5 + $0x2e8] sm:$0xff]
      %v6173 = vld [vmem:[%s5 + $0x2f0] sm:$0xff]
      %v6174 = vld [vmem:[%s5 + $0x2f8] sm:$0xff]
      %v6175 = vld [vmem:[%s5 + $0x300] sm:$0xff]
      %v6176 = vld [vmem:[%s5 + $0x308] sm:$0xff]
      %v6177 = vld [vmem:[%s5 + $0x310] sm:$0xff]
      %v6178 = vld [vmem:[%s5 + $0x318] sm:$0xff]
      %v6179 = vld [vmem:[%s5 + $0x320] sm:$0xff]
      %v6180 = vld [vmem:[%s5 + $0x328] sm:$0xff]
      %v6181 = vld [vmem:[%s5 + $0x330] sm:$0xff]
      %v6182 = vld [vmem:[%s5 + $0x338] sm:$0xff]
      %v6183 = vld [vmem:[%s5 + $0x340] sm:$0xff]
      %v6184 = vld [vmem:[%s5 + $0x348] sm:$0xff]
      %v6185 = vld [vmem:[%s5 + $0x350] sm:$0xff]
      %v6186 = vld [vmem:[%s5 + $0x358] sm:$0xff]
      %v6187 = vld [vmem:[%s5 + $0x360] sm:$0xff]
      %v6188 = vld [vmem:[%s5 + $0x368] sm:$0xff]
      %v6189 = vld [vmem:[%s5 + $0x370] sm:$0xff]
      %v6190 = vld [vmem:[%s5 + $0x378] sm:$0xff]
      %v6191 = vld [vmem:[%s5 + $0x380] sm:$0xff]
      %v6192 = vld [vmem:[%s5 + $0x388] sm:$0xff]
      %v6193 = vld [vmem:[%s5 + $0x390] sm:$0xff]
      %v6194 = vld [vmem:[%s5 + $0x398] sm:$0xff]
      %v6195 = vld [vmem:[%s5 + $0x3a0] sm:$0xff]
      %v6196 = vld [vmem:[%s5 + $0x3a8] sm:$0xff]
      %v6197 = vld [vmem:[%s5 + $0x3b0] sm:$0xff]
      %v6198 = vld [vmem:[%s5 + $0x3b8] sm:$0xff]
      %v6199 = vld [vmem:[%s5 + $0x3c0] sm:$0xff]
      %v6200 = vld [vmem:[%s5 + $0x3c8] sm:$0xff]
      %v6201 = vld [vmem:[%s5 + $0x3d0] sm:$0xff]
      %v6202 = vld [vmem:[%s5 + $0x3d8] sm:$0xff]
      %v6203 = vld [vmem:[%s5 + $0x3e0] sm:$0xff]
      %v6204 = vld [vmem:[%s5 + $0x3e8] sm:$0xff]
      %v6205 = vld [vmem:[%s5 + $0x3f0] sm:$0xff]
      %v6206 = vld [vmem:[%s5 + $0x3f8] sm:$0xff]
      %v6207 = vld [vmem:[%s5 + $0x400] sm:$0xff]
      %v6208 = vld [vmem:[%s5 + $0x408] sm:$0xff]
      %v6209 = vld [vmem:[%s5 + $0x410] sm:$0xff]
      %v6210 = vld [vmem:[%s5 + $0x418] sm:$0xff]
      %v6211 = vld [vmem:[%s5 + $0x420] sm:$0xff]
      %v6212 = vld [vmem:[%s5 + $0x428] sm:$0xff]
      %v6213 = vld [vmem:[%s5 + $0x430] sm:$0xff]
      %v6214 = vld [vmem:[%s5 + $0x438] sm:$0xff]
      %v6215 = vld [vmem:[%s5 + $0x440] sm:$0xff]
      %v6216 = vld [vmem:[%s5 + $0x448] sm:$0xff]
      %v6217 = vld [vmem:[%s5 + $0x450] sm:$0xff]
      %v6218 = vld [vmem:[%s5 + $0x458] sm:$0xff]
      %v6219 = vld [vmem:[%s5 + $0x460] sm:$0xff]
      %v6220 = vld [vmem:[%s5 + $0x468] sm:$0xff]
      %v6221 = vld [vmem:[%s5 + $0x470] sm:$0xff]
      %v6222 = vld [vmem:[%s5 + $0x478] sm:$0xff]
      %v6223 = vld [vmem:[%s5 + $0x480] sm:$0xff]
      %v6224 = vld [vmem:[%s5 + $0x488] sm:$0xff]
      %v6225 = vld [vmem:[%s5 + $0x490] sm:$0xff]
      %v6226 = vld [vmem:[%s5 + $0x498] sm:$0xff]
      %v6227 = vld [vmem:[%s5 + $0x4a0] sm:$0xff]
      %v6228 = vld [vmem:[%s5 + $0x4a8] sm:$0xff]
      %v6229 = vld [vmem:[%s5 + $0x4b0] sm:$0xff]
      %v6230 = vld [vmem:[%s5 + $0x4b8] sm:$0xff]
      %v6231 = vld [vmem:[%s5 + $0x4c0] sm:$0xff]
      %v6232 = vld [vmem:[%s5 + $0x4c8] sm:$0xff]
      %v6233 = vld [vmem:[%s5 + $0x4d0] sm:$0xff]
      %v6234 = vld [vmem:[%s5 + $0x4d8] sm:$0xff]
      %v6235 = vld [vmem:[%s5 + $0x4e0] sm:$0xff]
      %v6236 = vld [vmem:[%s5 + $0x4e8] sm:$0xff]
      %v6237 = vld [vmem:[%s5 + $0x4f0] sm:$0xff]
      %v6238 = vld [vmem:[%s5 + $0x4f8] sm:$0xff]
      %v6239 = vld [vmem:[%s5 + $0x500] sm:$0xff]
      %v6240 = vld [vmem:[%s5 + $0x508] sm:$0xff]
      %v6241 = vld [vmem:[%s5 + $0x510] sm:$0xff]
      %v6242 = vld [vmem:[%s5 + $0x518] sm:$0xff]
      %v6243 = vld [vmem:[%s5 + $0x520] sm:$0xff]
      %v6244 = vld [vmem:[%s5 + $0x528] sm:$0xff]
      %v6245 = vld [vmem:[%s5 + $0x530] sm:$0xff]
      %v6246 = vld [vmem:[%s5 + $0x538] sm:$0xff]
      %v6247 = vld [vmem:[%s5 + $0x540] sm:$0xff]
      %v6248 = vld [vmem:[%s5 + $0x548] sm:$0xff]
      %v6249 = vld [vmem:[%s5 + $0x550] sm:$0xff]
      %v6250 = vld [vmem:[%s5 + $0x558] sm:$0xff]
      %v6251 = vld [vmem:[%s5 + $0x560] sm:$0xff]
      %v6252 = vld [vmem:[%s5 + $0x568] sm:$0xff]
      %v6253 = vld [vmem:[%s5 + $0x570] sm:$0xff]
      %v6254 = vld [vmem:[%s5 + $0x578] sm:$0xff]
      %v6255 = vld [vmem:[%s5 + $0x580] sm:$0xff]
      %v6256 = vld [vmem:[%s5 + $0x588] sm:$0xff]
      %v6257 = vld [vmem:[%s5 + $0x590] sm:$0xff]
      %v6258 = vld [vmem:[%s5 + $0x598] sm:$0xff]
      %v6259 = vld [vmem:[%s5 + $0x5a0] sm:$0xff]
      %v6260 = vld [vmem:[%s5 + $0x5a8] sm:$0xff]
      %v6261 = vld [vmem:[%s5 + $0x5b0] sm:$0xff]
      %v6262 = vld [vmem:[%s5 + $0x5b8] sm:$0xff]
      %v6263 = vld [vmem:[%s5 + $0x5c0] sm:$0xff]
      %v6264 = vld [vmem:[%s5 + $0x5c8] sm:$0xff]
      %v6265 = vld [vmem:[%s5 + $0x5d0] sm:$0xff]
      %v6266 = vld [vmem:[%s5 + $0x5d8] sm:$0xff]
      %v6267 = vld [vmem:[%s5 + $0x5e0] sm:$0xff]
      %v6268 = vld [vmem:[%s5 + $0x5e8] sm:$0xff]
      %v6269 = vld [vmem:[%s5 + $0x5f0] sm:$0xff]
      %v6270 = vld [vmem:[%s5 + $0x5f8] sm:$0xff]
      %v6271 = vld [vmem:[%s5 + $0x600] sm:$0xff]
      %v6272 = vld [vmem:[%s5 + $0x608] sm:$0xff]
      %v6273 = vld [vmem:[%s5 + $0x610] sm:$0xff]
      %v6274 = vld [vmem:[%s5 + $0x618] sm:$0xff]
      %v6275 = vld [vmem:[%s5 + $0x620] sm:$0xff]
      %v6276 = vld [vmem:[%s5 + $0x628] sm:$0xff]
      %v6277 = vld [vmem:[%s5 + $0x630] sm:$0xff]
      %v6278 = vld [vmem:[%s5 + $0x638] sm:$0xff]
      %v6279 = vld [vmem:[%s5 + $0x640] sm:$0xff]
      %v6280 = vld [vmem:[%s5 + $0x648] sm:$0xff]
      %v6281 = vld [vmem:[%s5 + $0x650] sm:$0xff]
      %v6282 = vld [vmem:[%s5 + $0x658] sm:$0xff]
      %v6283 = vld [vmem:[%s5 + $0x660] sm:$0xff]
      %v6284 = vld [vmem:[%s5 + $0x668] sm:$0xff]
      %v6285 = vld [vmem:[%s5 + $0x670] sm:$0xff]
      %v6286 = vld [vmem:[%s5 + $0x678] sm:$0xff]
      %v6287 = vld [vmem:[%s5 + $0x680] sm:$0xff]
      %v6288 = vld [vmem:[%s5 + $0x688] sm:$0xff]
      %v6289 = vld [vmem:[%s5 + $0x690] sm:$0xff]
      %v6290 = vld [vmem:[%s5 + $0x698] sm:$0xff]
      %v6291 = vld [vmem:[%s5 + $0x6a0] sm:$0xff]
      %v6292 = vld [vmem:[%s5 + $0x6a8] sm:$0xff]
      %v6293 = vld [vmem:[%s5 + $0x6b0] sm:$0xff]
      %v6294 = vld [vmem:[%s5 + $0x6b8] sm:$0xff]
      %v6295 = vld [vmem:[%s5 + $0x6c0] sm:$0xff]
      %v6296 = vld [vmem:[%s5 + $0x6c8] sm:$0xff]
      %v6297 = vld [vmem:[%s5 + $0x6d0] sm:$0xff]
      %v6298 = vld [vmem:[%s5 + $0x6d8] sm:$0xff]
      %v6299 = vld [vmem:[%s5 + $0x6e0] sm:$0xff]
      %v6300 = vld [vmem:[%s5 + $0x6e8] sm:$0xff]
      %v6301 = vld [vmem:[%s5 + $0x6f0] sm:$0xff]
      %v6302 = vld [vmem:[%s5 + $0x6f8] sm:$0xff]
      %v6303 = vld [vmem:[%s5 + $0x700] sm:$0xff]
      %v6304 = vld [vmem:[%s5 + $0x708] sm:$0xff]
      %v6305 = vld [vmem:[%s5 + $0x710] sm:$0xff]
      %v6306 = vld [vmem:[%s5 + $0x718] sm:$0xff]
      %v6307 = vld [vmem:[%s5 + $0x720] sm:$0xff]
      %v6308 = vld [vmem:[%s5 + $0x728] sm:$0xff]
      %v6309 = vld [vmem:[%s5 + $0x730] sm:$0xff]
      %v6310 = vld [vmem:[%s5 + $0x738] sm:$0xff]
      %v6311 = vld [vmem:[%s5 + $0x740] sm:$0xff]
      %v6312 = vld [vmem:[%s5 + $0x748] sm:$0xff]
      %v6313 = vld [vmem:[%s5 + $0x750] sm:$0xff]
      %v6314 = vld [vmem:[%s5 + $0x758] sm:$0xff]
      %v6315 = vld [vmem:[%s5 + $0x760] sm:$0xff]
      %v6316 = vld [vmem:[%s5 + $0x768] sm:$0xff]
      %v6317 = vld [vmem:[%s5 + $0x770] sm:$0xff]
      %v6318 = vld [vmem:[%s5 + $0x778] sm:$0xff]
      %v6319 = vld [vmem:[%s5 + $0x780] sm:$0xff]
      %v6320 = vld [vmem:[%s5 + $0x788] sm:$0xff]
      %v6321 = vld [vmem:[%s5 + $0x790] sm:$0xff]
      %v6322 = vld [vmem:[%s5 + $0x798] sm:$0xff]
      %v6323 = vld [vmem:[%s5 + $0x7a0] sm:$0xff]
      %v6324 = vld [vmem:[%s5 + $0x7a8] sm:$0xff]
      %v6325 = vld [vmem:[%s5 + $0x7b0] sm:$0xff]
      %v6326 = vld [vmem:[%s5 + $0x7b8] sm:$0xff]
      %v6327 = vld [vmem:[%s5 + $0x7c0] sm:$0xff]
      %v6328 = vld [vmem:[%s5 + $0x7c8] sm:$0xff]
      %v6329 = vld [vmem:[%s5 + $0x7d0] sm:$0xff]
      %v6330 = vld [vmem:[%s5 + $0x7d8] sm:$0xff]
      %v6331 = vld [vmem:[%s5 + $0x7e0] sm:$0xff]
      %v6332 = vld [vmem:[%s5 + $0x7e8] sm:$0xff]
      %v6333 = vld [vmem:[%s5 + $0x7f0] sm:$0xff]
      %v6334 = vld [vmem:[%s5 + $0x7f8] sm:$0xff]
      %v6335 = vld [vmem:[%s5 + $0x800] sm:$0xff]
      %v6336 = vld [vmem:[%s5 + $0x808] sm:$0xff]
      %v6337 = vld [vmem:[%s5 + $0x810] sm:$0xff]
      %v6338 = vld [vmem:[%s5 + $0x818] sm:$0xff]
      %v6339 = vld [vmem:[%s5 + $0x820] sm:$0xff]
      %v6340 = vld [vmem:[%s5 + $0x828] sm:$0xff]
      %v6341 = vld [vmem:[%s5 + $0x830] sm:$0xff]
      %v6342 = vld [vmem:[%s5 + $0x838] sm:$0xff]
      %v6343 = vld [vmem:[%s5 + $0x840] sm:$0xff]
      %v6344 = vld [vmem:[%s5 + $0x848] sm:$0xff]
      %v6345 = vld [vmem:[%s5 + $0x850] sm:$0xff]
      %v6346 = vld [vmem:[%s5 + $0x858] sm:$0xff]
      %v6347 = vld [vmem:[%s5 + $0x860] sm:$0xff]
      %v6348 = vld [vmem:[%s5 + $0x868] sm:$0xff]
      %v6349 = vld [vmem:[%s5 + $0x870] sm:$0xff]
      %v6350 = vld [vmem:[%s5 + $0x878] sm:$0xff]
      %v6351 = vld [vmem:[%s5 + $0x880] sm:$0xff]
      %v6352 = vld [vmem:[%s5 + $0x888] sm:$0xff]
      %v6353 = vld [vmem:[%s5 + $0x890] sm:$0xff]
      %v6354 = vld [vmem:[%s5 + $0x898] sm:$0xff]
      %v6355 = vld [vmem:[%s5 + $0x8a0] sm:$0xff]
      %v6356 = vld [vmem:[%s5 + $0x8a8] sm:$0xff]
      %v6357 = vld [vmem:[%s5 + $0x8b0] sm:$0xff]
      %v6358 = vld [vmem:[%s5 + $0x8b8] sm:$0xff]
      %v6359 = vld [vmem:[%s5 + $0x8c0] sm:$0xff]
      %v6360 = vld [vmem:[%s5 + $0x8c8] sm:$0xff]
      %v6361 = vld [vmem:[%s5 + $0x8d0] sm:$0xff]
      %v6362 = vld [vmem:[%s5 + $0x8d8] sm:$0xff]
      %v6363 = vld [vmem:[%s5 + $0x8e0] sm:$0xff]
      %v6364 = vld [vmem:[%s5 + $0x8e8] sm:$0xff]
      %v6365 = vld [vmem:[%s5 + $0x8f0] sm:$0xff]
      %v6366 = vld [vmem:[%s5 + $0x8f8] sm:$0xff]
      %v6367 = vld [vmem:[%s5 + $0x900] sm:$0xff]
      %v6368 = vld [vmem:[%s5 + $0x908] sm:$0xff]
      %v6369 = vld [vmem:[%s5 + $0x910] sm:$0xff]
      %v6370 = vld [vmem:[%s5 + $0x918] sm:$0xff]
      %v6371 = vld [vmem:[%s5 + $0x920] sm:$0xff]
      %v6372 = vld [vmem:[%s5 + $0x928] sm:$0xff]
      %v6373 = vld [vmem:[%s5 + $0x930] sm:$0xff]
      %v6374 = vld [vmem:[%s5 + $0x938] sm:$0xff]
      %v6375 = vld [vmem:[%s5 + $0x940] sm:$0xff]
      %v6376 = vld [vmem:[%s5 + $0x948] sm:$0xff]
      %v6377 = vld [vmem:[%s5 + $0x950] sm:$0xff]
      %v6378 = vld [vmem:[%s5 + $0x958] sm:$0xff]
      %v6379 = vld [vmem:[%s5 + $0x960] sm:$0xff]
      %v6380 = vld [vmem:[%s5 + $0x968] sm:$0xff]
      %v6381 = vld [vmem:[%s5 + $0x970] sm:$0xff]
      %v6382 = vld [vmem:[%s5 + $0x978] sm:$0xff]
      %v6383 = vld [vmem:[%s5 + $0x980] sm:$0xff]
      %v6384 = vld [vmem:[%s5 + $0x988] sm:$0xff]
      %v6385 = vld [vmem:[%s5 + $0x990] sm:$0xff]
      %v6386 = vld [vmem:[%s5 + $0x998] sm:$0xff]
      %v6387 = vld [vmem:[%s5 + $0x9a0] sm:$0xff]
      %v6388 = vld [vmem:[%s5 + $0x9a8] sm:$0xff]
      %v6389 = vld [vmem:[%s5 + $0x9b0] sm:$0xff]
      %v6390 = vld [vmem:[%s5 + $0x9b8] sm:$0xff]
      %v6391 = vld [vmem:[%s5 + $0x9c0] sm:$0xff]
      %v6392 = vld [vmem:[%s5 + $0x9c8] sm:$0xff]
      %v6393 = vld [vmem:[%s5 + $0x9d0] sm:$0xff]
      %v6394 = vld [vmem:[%s5 + $0x9d8] sm:$0xff]
      %v6395 = vld [vmem:[%s5 + $0x9e0] sm:$0xff]
      %v6396 = vld [vmem:[%s5 + $0x9e8] sm:$0xff]
      %v6397 = vld [vmem:[%s5 + $0x9f0] sm:$0xff]
      %v6398 = vld [vmem:[%s5 + $0x9f8] sm:$0xff]
      %v6399 = vld [vmem:[%s5 + $0xa00] sm:$0xff]
      %v6400 = vld [vmem:[%s5 + $0xa08] sm:$0xff]
      %v6401 = vld [vmem:[%s5 + $0xa10] sm:$0xff]
      %v6402 = vld [vmem:[%s5 + $0xa18] sm:$0xff]
      %v6403 = vld [vmem:[%s5 + $0xa20] sm:$0xff]
      %v6404 = vld [vmem:[%s5 + $0xa28] sm:$0xff]
      %v6405 = vld [vmem:[%s5 + $0xa30] sm:$0xff]
      %v6406 = vld [vmem:[%s5 + $0xa38] sm:$0xff]
      %v6407 = vld [vmem:[%s5 + $0xa40] sm:$0xff]
      %v6408 = vld [vmem:[%s5 + $0xa48] sm:$0xff]
      %v6409 = vld [vmem:[%s5 + $0xa50] sm:$0xff]
      %v6410 = vld [vmem:[%s5 + $0xa58] sm:$0xff]
      %v6411 = vld [vmem:[%s5 + $0xa60] sm:$0xff]
      %v6412 = vld [vmem:[%s5 + $0xa68] sm:$0xff]
      %v6413 = vld [vmem:[%s5 + $0xa70] sm:$0xff]
      %v6414 = vld [vmem:[%s5 + $0xa78] sm:$0xff]
      %v6415 = vld [vmem:[%s5 + $0xa80] sm:$0xff]
      %v6416 = vld [vmem:[%s5 + $0xa88] sm:$0xff]
      %v6417 = vld [vmem:[%s5 + $0xa90] sm:$0xff]
      %v6418 = vld [vmem:[%s5 + $0xa98] sm:$0xff]
      %v6419 = vld [vmem:[%s5 + $0xaa0] sm:$0xff]
      %v6420 = vld [vmem:[%s5 + $0xaa8] sm:$0xff]
      %v6421 = vld [vmem:[%s5 + $0xab0] sm:$0xff]
      %v6422 = vld [vmem:[%s5 + $0xab8] sm:$0xff]
      %v6423 = vld [vmem:[%s5 + $0xac0] sm:$0xff]
      %v6424 = vld [vmem:[%s5 + $0xac8] sm:$0xff]
      %v6425 = vld [vmem:[%s5 + $0xad0] sm:$0xff]
      %v6426 = vld [vmem:[%s5 + $0xad8] sm:$0xff]
      %v6427 = vld [vmem:[%s5 + $0xae0] sm:$0xff]
      %v6428 = vld [vmem:[%s5 + $0xae8] sm:$0xff]
      %v6429 = vld [vmem:[%s5 + $0xaf0] sm:$0xff]
      %v6430 = vld [vmem:[%s5 + $0xaf8] sm:$0xff]
      %v6431 = vld [vmem:[%s5 + $0xb00] sm:$0xff]
      %v6432 = vld [vmem:[%s5 + $0xb08] sm:$0xff]
      %v6433 = vld [vmem:[%s5 + $0xb10] sm:$0xff]
      %v6434 = vld [vmem:[%s5 + $0xb18] sm:$0xff]
      %v6435 = vld [vmem:[%s5 + $0xb20] sm:$0xff]
      %v6436 = vld [vmem:[%s5 + $0xb28] sm:$0xff]
      %v6437 = vld [vmem:[%s5 + $0xb30] sm:$0xff]
      %v6438 = vld [vmem:[%s5 + $0xb38] sm:$0xff]
      %v6439 = vld [vmem:[%s5 + $0xb40] sm:$0xff]
      %v6440 = vld [vmem:[%s5 + $0xb48] sm:$0xff]
      %v6441 = vld [vmem:[%s5 + $0xb50] sm:$0xff]
      %v6442 = vld [vmem:[%s5 + $0xb58] sm:$0xff]
      %v6443 = vld [vmem:[%s5 + $0xb60] sm:$0xff]
      %v6444 = vld [vmem:[%s5 + $0xb68] sm:$0xff]
      %v6445 = vld [vmem:[%s5 + $0xb70] sm:$0xff]
      %v6446 = vld [vmem:[%s5 + $0xb78] sm:$0xff]
      %v6447 = vld [vmem:[%s5 + $0xb80] sm:$0xff]
      %v6448 = vld [vmem:[%s5 + $0xb88] sm:$0xff]
      %v6449 = vld [vmem:[%s5 + $0xb90] sm:$0xff]
      %v6450 = vld [vmem:[%s5 + $0xb98] sm:$0xff]
      %v6451 = vld [vmem:[%s5 + $0xba0] sm:$0xff]
      %v6452 = vld [vmem:[%s5 + $0xba8] sm:$0xff]
      %v6453 = vld [vmem:[%s5 + $0xbb0] sm:$0xff]
      %v6454 = vld [vmem:[%s5 + $0xbb8] sm:$0xff]
      %v6455 = vld [vmem:[%s5 + $0xbc0] sm:$0xff]
      %v6456 = vld [vmem:[%s5 + $0xbc8] sm:$0xff]
      %v6457 = vld [vmem:[%s5 + $0xbd0] sm:$0xff]
      %v6458 = vld [vmem:[%s5 + $0xbd8] sm:$0xff]
      %v6459 = vld [vmem:[%s5 + $0xbe0] sm:$0xff]
      %v6460 = vld [vmem:[%s5 + $0xbe8] sm:$0xff]
      %v6461 = vld [vmem:[%s5 + $0xbf0] sm:$0xff]
      %v6462 = vld [vmem:[%s5 + $0xbf8] sm:$0xff]
      %v6463 = vld [vmem:[%s5 + $0xc00] sm:$0xff]
      %v6464 = vld [vmem:[%s5 + $0xc08] sm:$0xff]
      %v6465 = vld [vmem:[%s5 + $0xc10] sm:$0xff]
      %v6466 = vld [vmem:[%s5 + $0xc18] sm:$0xff]
      %v6467 = vld [vmem:[%s5 + $0xc20] sm:$0xff]
      %v6468 = vld [vmem:[%s5 + $0xc28] sm:$0xff]
      %v6469 = vld [vmem:[%s5 + $0xc30] sm:$0xff]
      %v6470 = vld [vmem:[%s5 + $0xc38] sm:$0xff]
      %v6471 = vld [vmem:[%s5 + $0xc40] sm:$0xff]
      %v6472 = vld [vmem:[%s5 + $0xc48] sm:$0xff]
      %v6473 = vld [vmem:[%s5 + $0xc50] sm:$0xff]
      %v6474 = vld [vmem:[%s5 + $0xc58] sm:$0xff]
      %v6475 = vld [vmem:[%s5 + $0xc60] sm:$0xff]
      %v6476 = vld [vmem:[%s5 + $0xc68] sm:$0xff]
      %v6477 = vld [vmem:[%s5 + $0xc70] sm:$0xff]
      %v6478 = vld [vmem:[%s5 + $0xc78] sm:$0xff]
      %v6479 = vld [vmem:[%s5 + $0xc80] sm:$0xff]
      %v6480 = vld [vmem:[%s5 + $0xc88] sm:$0xff]
      %v6481 = vld [vmem:[%s5 + $0xc90] sm:$0xff]
      %v6482 = vld [vmem:[%s5 + $0xc98] sm:$0xff]
      %v6483 = vld [vmem:[%s5 + $0xca0] sm:$0xff]
      %v6484 = vld [vmem:[%s5 + $0xca8] sm:$0xff]
      %v6485 = vld [vmem:[%s5 + $0xcb0] sm:$0xff]
      %v6486 = vld [vmem:[%s5 + $0xcb8] sm:$0xff]
      %v6487 = vld [vmem:[%s5 + $0xcc0] sm:$0xff]
      %v6488 = vld [vmem:[%s5 + $0xcc8] sm:$0xff]
      %v6489 = vld [vmem:[%s5 + $0xcd0] sm:$0xff]
      %v6490 = vld [vmem:[%s5 + $0xcd8] sm:$0xff]
      %v6491 = vld [vmem:[%s5 + $0xce0] sm:$0xff]
      %v6492 = vld [vmem:[%s5 + $0xce8] sm:$0xff]
      %v6493 = vld [vmem:[%s5 + $0xcf0] sm:$0xff]
      %v6494 = vld [vmem:[%s5 + $0xcf8] sm:$0xff]
      %v6495 = vld [vmem:[%s5 + $0xd00] sm:$0xff]
      %v6496 = vld [vmem:[%s5 + $0xd08] sm:$0xff]
      %v6497 = vld [vmem:[%s5 + $0xd10] sm:$0xff]
      %v6498 = vld [vmem:[%s5 + $0xd18] sm:$0xff]
      %v6499 = vld [vmem:[%s5 + $0xd20] sm:$0xff]
      %v6500 = vld [vmem:[%s5 + $0xd28] sm:$0xff]
      %v6501 = vld [vmem:[%s5 + $0xd30] sm:$0xff]
      %v6502 = vld [vmem:[%s5 + $0xd38] sm:$0xff]
      %v6503 = vld [vmem:[%s5 + $0xd40] sm:$0xff]
      %v6504 = vld [vmem:[%s5 + $0xd48] sm:$0xff]
      %v6505 = vld [vmem:[%s5 + $0xd50] sm:$0xff]
      %v6506 = vld [vmem:[%s5 + $0xd58] sm:$0xff]
      %v6507 = vld [vmem:[%s5 + $0xd60] sm:$0xff]
      %v6508 = vld [vmem:[%s5 + $0xd68] sm:$0xff]
      %v6509 = vld [vmem:[%s5 + $0xd70] sm:$0xff]
      %v6510 = vld [vmem:[%s5 + $0xd78] sm:$0xff]
      %v6511 = vld [vmem:[%s5 + $0xd80] sm:$0xff]
      %v6512 = vld [vmem:[%s5 + $0xd88] sm:$0xff]
      %v6513 = vld [vmem:[%s5 + $0xd90] sm:$0xff]
      %v6514 = vld [vmem:[%s5 + $0xd98] sm:$0xff]
      %v6515 = vld [vmem:[%s5 + $0xda0] sm:$0xff]
      %v6516 = vld [vmem:[%s5 + $0xda8] sm:$0xff]
      %v6517 = vld [vmem:[%s5 + $0xdb0] sm:$0xff]
      %v6518 = vld [vmem:[%s5 + $0xdb8] sm:$0xff]
      %v6519 = vld [vmem:[%s5 + $0xdc0] sm:$0xff]
      %v6520 = vld [vmem:[%s5 + $0xdc8] sm:$0xff]
      %v6521 = vld [vmem:[%s5 + $0xdd0] sm:$0xff]
      %v6522 = vld [vmem:[%s5 + $0xdd8] sm:$0xff]
      %v6523 = vld [vmem:[%s5 + $0xde0] sm:$0xff]
      %v6524 = vld [vmem:[%s5 + $0xde8] sm:$0xff]
      %v6525 = vld [vmem:[%s5 + $0xdf0] sm:$0xff]
      %v6526 = vld [vmem:[%s5 + $0xdf8] sm:$0xff]
      %v6527 = vld [vmem:[%s5 + $0xe00] sm:$0xff]
      %v6528 = vld [vmem:[%s5 + $0xe08] sm:$0xff]
      %v6529 = vld [vmem:[%s5 + $0xe10] sm:$0xff]
      %v6530 = vld [vmem:[%s5 + $0xe18] sm:$0xff]
      %v6531 = vld [vmem:[%s5 + $0xe20] sm:$0xff]
      %v6532 = vld [vmem:[%s5 + $0xe28] sm:$0xff]
      %v6533 = vld [vmem:[%s5 + $0xe30] sm:$0xff]
      %v6534 = vld [vmem:[%s5 + $0xe38] sm:$0xff]
      %v6535 = vld [vmem:[%s5 + $0xe40] sm:$0xff]
      %v6536 = vld [vmem:[%s5 + $0xe48] sm:$0xff]
      %v6537 = vld [vmem:[%s5 + $0xe50] sm:$0xff]
      %v6538 = vld [vmem:[%s5 + $0xe58] sm:$0xff]
      %v6539 = vld [vmem:[%s5 + $0xe60] sm:$0xff]
      %v6540 = vld [vmem:[%s5 + $0xe68] sm:$0xff]
      %v6541 = vld [vmem:[%s5 + $0xe70] sm:$0xff]
      %v6542 = vld [vmem:[%s5 + $0xe78] sm:$0xff]
      %v6543 = vld [vmem:[%s5 + $0xe80] sm:$0xff]
      %v6544 = vld [vmem:[%s5 + $0xe88] sm:$0xff]
      %v6545 = vld [vmem:[%s5 + $0xe90] sm:$0xff]
      %v6546 = vld [vmem:[%s5 + $0xe98] sm:$0xff]
      %v6547 = vld [vmem:[%s5 + $0xea0] sm:$0xff]
      %v6548 = vld [vmem:[%s5 + $0xea8] sm:$0xff]
      %v6549 = vld [vmem:[%s5 + $0xeb0] sm:$0xff]
      %v6550 = vld [vmem:[%s5 + $0xeb8] sm:$0xff]
      %v6551 = vld [vmem:[%s5 + $0xec0] sm:$0xff]
      %v6552 = vld [vmem:[%s5 + $0xec8] sm:$0xff]
      %v6553 = vld [vmem:[%s5 + $0xed0] sm:$0xff]
      %v6554 = vld [vmem:[%s5 + $0xed8] sm:$0xff]
      %v6555 = vld [vmem:[%s5 + $0xee0] sm:$0xff]
      %v6556 = vld [vmem:[%s5 + $0xee8] sm:$0xff]
      %v6557 = vld [vmem:[%s5 + $0xef0] sm:$0xff]
      %v6558 = vld [vmem:[%s5 + $0xef8] sm:$0xff]
      %v6559 = vld [vmem:[%s5 + $0xf00] sm:$0xff]
      %v6560 = vld [vmem:[%s5 + $0xf08] sm:$0xff]
      %v6561 = vld [vmem:[%s5 + $0xf10] sm:$0xff]
      %v6562 = vld [vmem:[%s5 + $0xf18] sm:$0xff]
      %v6563 = vld [vmem:[%s5 + $0xf20] sm:$0xff]
      %v6564 = vld [vmem:[%s5 + $0xf28] sm:$0xff]
      %v6565 = vld [vmem:[%s5 + $0xf30] sm:$0xff]
      %v6566 = vld [vmem:[%s5 + $0xf38] sm:$0xff]
      %v6567 = vld [vmem:[%s5 + $0xf40] sm:$0xff]
      %v6568 = vld [vmem:[%s5 + $0xf48] sm:$0xff]
      %v6569 = vld [vmem:[%s5 + $0xf50] sm:$0xff]
      %v6570 = vld [vmem:[%s5 + $0xf58] sm:$0xff]
      %v6571 = vld [vmem:[%s5 + $0xf60] sm:$0xff]
      %v6572 = vld [vmem:[%s5 + $0xf68] sm:$0xff]
      %v6573 = vld [vmem:[%s5 + $0xf70] sm:$0xff]
      %v6574 = vld [vmem:[%s5 + $0xf78] sm:$0xff]
      %v6575 = vld [vmem:[%s5 + $0xf80] sm:$0xff]
      %v6576 = vld [vmem:[%s5 + $0xf88] sm:$0xff]
      %v6577 = vld [vmem:[%s5 + $0xf90] sm:$0xff]
      %v6578 = vld [vmem:[%s5 + $0xf98] sm:$0xff]
      %v6579 = vld [vmem:[%s5 + $0xfa0] sm:$0xff]
      %v6580 = vld [vmem:[%s5 + $0xfa8] sm:$0xff]
      %v6581 = vld [vmem:[%s5 + $0xfb0] sm:$0xff]
      %v6582 = vld [vmem:[%s5 + $0xfb8] sm:$0xff]
      %v6583 = vld [vmem:[%s5 + $0xfc0] sm:$0xff]
      %v6584 = vld [vmem:[%s5 + $0xfc8] sm:$0xff]
      %v6585 = vld [vmem:[%s5 + $0xfd0] sm:$0xff]
      %v6586 = vld [vmem:[%s5 + $0xfd8] sm:$0xff]
      %v6587 = vld [vmem:[%s5 + $0xfe0] sm:$0xff]
      %v6588 = vld [vmem:[%s5 + $0xfe8] sm:$0xff]
      %v6589 = vld [vmem:[%s5 + $0xff0] sm:$0xff]
      %v6590 = vld [vmem:[%s5 + $0xff8] sm:$0xff]
      %v6591 = vld [vmem:[%s5 + $0x1000] sm:$0xff]
      %v6592 = vld [vmem:[%s5 + $0x1008] sm:$0xff]
      %v6593 = vld [vmem:[%s5 + $0x1010] sm:$0xff]
      %v6594 = vld [vmem:[%s5 + $0x1018] sm:$0xff]
      %v6595 = vld [vmem:[%s5 + $0x1020] sm:$0xff]
      %v6596 = vld [vmem:[%s5 + $0x1028] sm:$0xff]
      %v6597 = vld [vmem:[%s5 + $0x1030] sm:$0xff]
      %v6598 = vld [vmem:[%s5 + $0x1038] sm:$0xff]
      %v6599 = vld [vmem:[%s5 + $0x1040] sm:$0xff]
      %v6600 = vld [vmem:[%s5 + $0x1048] sm:$0xff]
      %v6601 = vld [vmem:[%s5 + $0x1050] sm:$0xff]
      %v6602 = vld [vmem:[%s5 + $0x1058] sm:$0xff]
      %v6603 = vld [vmem:[%s5 + $0x1060] sm:$0xff]
      %v6604 = vld [vmem:[%s5 + $0x1068] sm:$0xff]
      %v6605 = vld [vmem:[%s5 + $0x1070] sm:$0xff]
      %v6606 = vld [vmem:[%s5 + $0x1078] sm:$0xff]
      %v6607 = vld [vmem:[%s5 + $0x1080] sm:$0xff]
      %v6608 = vld [vmem:[%s5 + $0x1088] sm:$0xff]
      %v6609 = vld [vmem:[%s5 + $0x1090] sm:$0xff]
      %v6610 = vld [vmem:[%s5 + $0x1098] sm:$0xff]
      %v6611 = vld [vmem:[%s5 + $0x10a0] sm:$0xff]
      %v6612 = vld [vmem:[%s5 + $0x10a8] sm:$0xff]
      %v6613 = vld [vmem:[%s5 + $0x10b0] sm:$0xff]
      %v6614 = vld [vmem:[%s5 + $0x10b8] sm:$0xff]
      %v6615 = vld [vmem:[%s5 + $0x10c0] sm:$0xff]
      %v6616 = vld [vmem:[%s5 + $0x10c8] sm:$0xff]
      %v6617 = vld [vmem:[%s5 + $0x10d0] sm:$0xff]
      %v6618 = vld [vmem:[%s5 + $0x10d8] sm:$0xff]
      %v6619 = vld [vmem:[%s5 + $0x10e0] sm:$0xff]
      %v6620 = vld [vmem:[%s5 + $0x10e8] sm:$0xff]
      %v6621 = vld [vmem:[%s5 + $0x10f0] sm:$0xff]
      %v6622 = vld [vmem:[%s5 + $0x10f8] sm:$0xff]
      %v6623 = vld [vmem:[%s5 + $0x1100] sm:$0xff]
      %v6624 = vld [vmem:[%s5 + $0x1108] sm:$0xff]
      %v6625 = vld [vmem:[%s5 + $0x1110] sm:$0xff]
      %v6626 = vld [vmem:[%s5 + $0x1118] sm:$0xff]
      %v6627 = vld [vmem:[%s5 + $0x1120] sm:$0xff]
      %v6628 = vld [vmem:[%s5 + $0x1128] sm:$0xff]
      %v6629 = vld [vmem:[%s5 + $0x1130] sm:$0xff]
      %v6630 = vld [vmem:[%s5 + $0x1138] sm:$0xff]
      %v6631 = vld [vmem:[%s5 + $0x1140] sm:$0xff]
      %v6632 = vld [vmem:[%s5 + $0x1148] sm:$0xff]
      %v6633 = vld [vmem:[%s5 + $0x1150] sm:$0xff]
      %v6634 = vld [vmem:[%s5 + $0x1158] sm:$0xff]
      %v6635 = vld [vmem:[%s5 + $0x1160] sm:$0xff]
      %v6636 = vld [vmem:[%s5 + $0x1168] sm:$0xff]
      %v6637 = vld [vmem:[%s5 + $0x1170] sm:$0xff]
      %v6638 = vld [vmem:[%s5 + $0x1178] sm:$0xff]
      %v6639 = vld [vmem:[%s5 + $0x1180] sm:$0xff]
      %v6640 = vld [vmem:[%s5 + $0x1188] sm:$0xff]
      %v6641 = vld [vmem:[%s5 + $0x1190] sm:$0xff]
      %v6642 = vld [vmem:[%s5 + $0x1198] sm:$0xff]
      %v6643 = vld [vmem:[%s5 + $0x11a0] sm:$0xff]
      %v6644 = vld [vmem:[%s5 + $0x11a8] sm:$0xff]
      %v6645 = vld [vmem:[%s5 + $0x11b0] sm:$0xff]
      %v6646 = vld [vmem:[%s5 + $0x11b8] sm:$0xff]
      %v6647 = vld [vmem:[%s5 + $0x11c0] sm:$0xff]
      %v6648 = vld [vmem:[%s5 + $0x11c8] sm:$0xff]
      %v6649 = vld [vmem:[%s5 + $0x11d0] sm:$0xff]
      %v6650 = vld [vmem:[%s5 + $0x11d8] sm:$0xff]
      %v6651 = vld [vmem:[%s5 + $0x11e0] sm:$0xff]
      %v6652 = vld [vmem:[%s5 + $0x11e8] sm:$0xff]
      %v6653 = vld [vmem:[%s5 + $0x11f0] sm:$0xff]
      %v6654 = vld [vmem:[%s5 + $0x11f8] sm:$0xff]
      %v6655 = vld [vmem:[%s5 + $0x1200] sm:$0xff]
      %v6656 = vld [vmem:[%s5 + $0x1208] sm:$0xff]
      %v6657 = vld [vmem:[%s5 + $0x1210] sm:$0xff]
      %v6658 = vld [vmem:[%s5 + $0x1218] sm:$0xff]
      %v6659 = vld [vmem:[%s5 + $0x1220] sm:$0xff]
      %v6660 = vld [vmem:[%s5 + $0x1228] sm:$0xff]
      %v6661 = vld [vmem:[%s5 + $0x1230] sm:$0xff]
      %v6662 = vld [vmem:[%s5 + $0x1238] sm:$0xff]
      %v6663 = vld [vmem:[%s5 + $0x1240] sm:$0xff]
      %v6664 = vld [vmem:[%s5 + $0x1248] sm:$0xff]
      %v6665 = vld [vmem:[%s5 + $0x1250] sm:$0xff]
      %v6666 = vld [vmem:[%s5 + $0x1258] sm:$0xff]
      %v6667 = vld [vmem:[%s5 + $0x1260] sm:$0xff]
      %v6668 = vld [vmem:[%s5 + $0x1268] sm:$0xff]
      %v6669 = vld [vmem:[%s5 + $0x1270] sm:$0xff]
      %v6670 = vld [vmem:[%s5 + $0x1278] sm:$0xff]
      %v6671 = vld [vmem:[%s5 + $0x1280] sm:$0xff]
      %v6672 = vld [vmem:[%s5 + $0x1288] sm:$0xff]
      %v6673 = vld [vmem:[%s5 + $0x1290] sm:$0xff]
      %v6674 = vld [vmem:[%s5 + $0x1298] sm:$0xff]
      %v6675 = vld [vmem:[%s5 + $0x12a0] sm:$0xff]
      %v6676 = vld [vmem:[%s5 + $0x12a8] sm:$0xff]
      %v6677 = vld [vmem:[%s5 + $0x12b0] sm:$0xff]
      %v6678 = vld [vmem:[%s5 + $0x12b8] sm:$0xff]
      %v6679 = vld [vmem:[%s5 + $0x12c0] sm:$0xff]
      %v6680 = vld [vmem:[%s5 + $0x12c8] sm:$0xff]
      %v6681 = vld [vmem:[%s5 + $0x12d0] sm:$0xff]
      %v6682 = vld [vmem:[%s5 + $0x12d8] sm:$0xff]
      %v6683 = vld [vmem:[%s5 + $0x12e0] sm:$0xff]
      %v6684 = vld [vmem:[%s5 + $0x12e8] sm:$0xff]
      %v6685 = vld [vmem:[%s5 + $0x12f0] sm:$0xff]
      %v6686 = vld [vmem:[%s5 + $0x12f8] sm:$0xff]
      %v6687 = vld [vmem:[%s5 + $0x1300] sm:$0xff]
      %v6688 = vld [vmem:[%s5 + $0x1308] sm:$0xff]
      %v6689 = vld [vmem:[%s5 + $0x1310] sm:$0xff]
      %v6690 = vld [vmem:[%s5 + $0x1318] sm:$0xff]
      %v6691 = vld [vmem:[%s5 + $0x1320] sm:$0xff]
      %v6692 = vld [vmem:[%s5 + $0x1328] sm:$0xff]
      %v6693 = vld [vmem:[%s5 + $0x1330] sm:$0xff]
      %v6694 = vld [vmem:[%s5 + $0x1338] sm:$0xff]
      %v6695 = vld [vmem:[%s5 + $0x1340] sm:$0xff]
      %v6696 = vld [vmem:[%s5 + $0x1348] sm:$0xff]
      %v6697 = vld [vmem:[%s5 + $0x1350] sm:$0xff]
      %v6698 = vld [vmem:[%s5 + $0x1358] sm:$0xff]
      %v6699 = vld [vmem:[%s5 + $0x1360] sm:$0xff]
      %v6700 = vld [vmem:[%s5 + $0x1368] sm:$0xff]
      %v6701 = vld [vmem:[%s5 + $0x1370] sm:$0xff]
      %v6702 = vld [vmem:[%s5 + $0x1378] sm:$0xff]
      %v6703 = vld [vmem:[%s5 + $0x1380] sm:$0xff]
      %v6704 = vld [vmem:[%s5 + $0x1388] sm:$0xff]
      %v6705 = vld [vmem:[%s5 + $0x1390] sm:$0xff]
      %v6706 = vld [vmem:[%s5 + $0x1398] sm:$0xff]
      %v6707 = vld [vmem:[%s5 + $0x13a0] sm:$0xff]
      %v6708 = vld [vmem:[%s5 + $0x13a8] sm:$0xff]
      %v6709 = vld [vmem:[%s5 + $0x13b0] sm:$0xff]
      %v6710 = vld [vmem:[%s5 + $0x13b8] sm:$0xff]
      %v6711 = vld [vmem:[%s5 + $0x13c0] sm:$0xff]
      %v6712 = vld [vmem:[%s5 + $0x13c8] sm:$0xff]
      %v6713 = vld [vmem:[%s5 + $0x13d0] sm:$0xff]
      %v6714 = vld [vmem:[%s5 + $0x13d8] sm:$0xff]
      %v6715 = vld [vmem:[%s5 + $0x13e0] sm:$0xff]
      %v6716 = vld [vmem:[%s5 + $0x13e8] sm:$0xff]
      %v6717 = vld [vmem:[%s5 + $0x13f0] sm:$0xff]
      %v6718 = vld [vmem:[%s5 + $0x13f8] sm:$0xff]
      %v6719 = vld [vmem:[%s5 + $0x1400] sm:$0xff]
      %v6720 = vld [vmem:[%s5 + $0x1408] sm:$0xff]
      %v6721 = vld [vmem:[%s5 + $0x1410] sm:$0xff]
      %v6722 = vld [vmem:[%s5 + $0x1418] sm:$0xff]
      %v6723 = vld [vmem:[%s5 + $0x1420] sm:$0xff]
      %v6724 = vld [vmem:[%s5 + $0x1428] sm:$0xff]
      %v6725 = vld [vmem:[%s5 + $0x1430] sm:$0xff]
      %v6726 = vld [vmem:[%s5 + $0x1438] sm:$0xff]
      %v6727 = vld [vmem:[%s5 + $0x1440] sm:$0xff]
      %v6728 = vld [vmem:[%s5 + $0x1448] sm:$0xff]
      %v6729 = vld [vmem:[%s5 + $0x1450] sm:$0xff]
      %v6730 = vld [vmem:[%s5 + $0x1458] sm:$0xff]
      %v6731 = vld [vmem:[%s5 + $0x1460] sm:$0xff]
      %v6732 = vld [vmem:[%s5 + $0x1468] sm:$0xff]
      %v6733 = vld [vmem:[%s5 + $0x1470] sm:$0xff]
      %v6734 = vld [vmem:[%s5 + $0x1478] sm:$0xff]
      %v6735 = vld [vmem:[%s5 + $0x1480] sm:$0xff]
      %v6736 = vld [vmem:[%s5 + $0x1488] sm:$0xff]
      %v6737 = vld [vmem:[%s5 + $0x1490] sm:$0xff]
      %v6738 = vld [vmem:[%s5 + $0x1498] sm:$0xff]
      %v6739 = vld [vmem:[%s5 + $0x14a0] sm:$0xff]
      %v6740 = vld [vmem:[%s5 + $0x14a8] sm:$0xff]
      %v6741 = vld [vmem:[%s5 + $0x14b0] sm:$0xff]
      %v6742 = vld [vmem:[%s5 + $0x14b8] sm:$0xff]
      %v6743 = vld [vmem:[%s5 + $0x14c0] sm:$0xff]
      %v6744 = vld [vmem:[%s5 + $0x14c8] sm:$0xff]
      %v6745 = vld [vmem:[%s5 + $0x14d0] sm:$0xff]
      %v6746 = vld [vmem:[%s5 + $0x14d8] sm:$0xff]
      %v6747 = vld [vmem:[%s5 + $0x14e0] sm:$0xff]
      %v6748 = vld [vmem:[%s5 + $0x14e8] sm:$0xff]
      %v6749 = vld [vmem:[%s5 + $0x14f0] sm:$0xff]
      %v6750 = vld [vmem:[%s5 + $0x14f8] sm:$0xff]
      %v6751 = vld [vmem:[%s5 + $0x1500] sm:$0xff]
      %v6752 = vld [vmem:[%s5 + $0x1508] sm:$0xff]
      %v6753 = vld [vmem:[%s5 + $0x1510] sm:$0xff]
      %v6754 = vld [vmem:[%s5 + $0x1518] sm:$0xff]
      %v6755 = vld [vmem:[%s5 + $0x1520] sm:$0xff]
      %v6756 = vld [vmem:[%s5 + $0x1528] sm:$0xff]
      %v6757 = vld [vmem:[%s5 + $0x1530] sm:$0xff]
      %v6758 = vld [vmem:[%s5 + $0x1538] sm:$0xff]
      %v6759 = vld [vmem:[%s5 + $0x1540] sm:$0xff]
      %v6760 = vld [vmem:[%s5 + $0x1548] sm:$0xff]
      %v6761 = vld [vmem:[%s5 + $0x1550] sm:$0xff]
      %v6762 = vld [vmem:[%s5 + $0x1558] sm:$0xff]
      %v6763 = vld [vmem:[%s5 + $0x1560] sm:$0xff]
      %v6764 = vld [vmem:[%s5 + $0x1568] sm:$0xff]
      %v6765 = vld [vmem:[%s5 + $0x1570] sm:$0xff]
      %v6766 = vld [vmem:[%s5 + $0x1578] sm:$0xff]
      %v6767 = vld [vmem:[%s5 + $0x1580] sm:$0xff]
      %v6768 = vld [vmem:[%s5 + $0x1588] sm:$0xff]
      %v6769 = vld [vmem:[%s5 + $0x1590] sm:$0xff]
      %v6770 = vld [vmem:[%s5 + $0x1598] sm:$0xff]
      %v6771 = vld [vmem:[%s5 + $0x15a0] sm:$0xff]
      %v6772 = vld [vmem:[%s5 + $0x15a8] sm:$0xff]
      %v6773 = vld [vmem:[%s5 + $0x15b0] sm:$0xff]
      %v6774 = vld [vmem:[%s5 + $0x15b8] sm:$0xff]
      %v6775 = vld [vmem:[%s5 + $0x15c0] sm:$0xff]
      %v6776 = vld [vmem:[%s5 + $0x15c8] sm:$0xff]
      %v6777 = vld [vmem:[%s5 + $0x15d0] sm:$0xff]
      %v6778 = vld [vmem:[%s5 + $0x15d8] sm:$0xff]
      %v6779 = vld [vmem:[%s5 + $0x15e0] sm:$0xff]
      %v6780 = vld [vmem:[%s5 + $0x15e8] sm:$0xff]
      %v6781 = vld [vmem:[%s5 + $0x15f0] sm:$0xff]
      %v6782 = vld [vmem:[%s5 + $0x15f8] sm:$0xff]
      %v6783 = vld [vmem:[%s5 + $0x1600] sm:$0xff]
      %v6784 = vld [vmem:[%s5 + $0x1608] sm:$0xff]
      %v6785 = vld [vmem:[%s5 + $0x1610] sm:$0xff]
      %v6786 = vld [vmem:[%s5 + $0x1618] sm:$0xff]
      %v6787 = vld [vmem:[%s5 + $0x1620] sm:$0xff]
      %v6788 = vld [vmem:[%s5 + $0x1628] sm:$0xff]
      %v6789 = vld [vmem:[%s5 + $0x1630] sm:$0xff]
      %v6790 = vld [vmem:[%s5 + $0x1638] sm:$0xff]
      %v6791 = vld [vmem:[%s5 + $0x1640] sm:$0xff]
      %v6792 = vld [vmem:[%s5 + $0x1648] sm:$0xff]
      %v6793 = vld [vmem:[%s5 + $0x1650] sm:$0xff]
      %v6794 = vld [vmem:[%s5 + $0x1658] sm:$0xff]
      %v6795 = vld [vmem:[%s5 + $0x1660] sm:$0xff]
      %v6796 = vld [vmem:[%s5 + $0x1668] sm:$0xff]
      %v6797 = vld [vmem:[%s5 + $0x1670] sm:$0xff]
      %v6798 = vld [vmem:[%s5 + $0x1678] sm:$0xff]
      %v6799 = vld [vmem:[%s5 + $0x1680] sm:$0xff]
      %v6800 = vld [vmem:[%s5 + $0x1688] sm:$0xff]
      %v6801 = vld [vmem:[%s5 + $0x1690] sm:$0xff]
      %v6802 = vld [vmem:[%s5 + $0x1698] sm:$0xff]
      %v6803 = vld [vmem:[%s5 + $0x16a0] sm:$0xff]
      %v6804 = vld [vmem:[%s5 + $0x16a8] sm:$0xff]
      %v6805 = vld [vmem:[%s5 + $0x16b0] sm:$0xff]
      %v6806 = vld [vmem:[%s5 + $0x16b8] sm:$0xff]
      %v6807 = vld [vmem:[%s5 + $0x16c0] sm:$0xff]
      %v6808 = vld [vmem:[%s5 + $0x16c8] sm:$0xff]
      %v6809 = vld [vmem:[%s5 + $0x16d0] sm:$0xff]
      %v6810 = vld [vmem:[%s5 + $0x16d8] sm:$0xff]
      %v6811 = vld [vmem:[%s5 + $0x16e0] sm:$0xff]
      %v6812 = vld [vmem:[%s5 + $0x16e8] sm:$0xff]
      %v6813 = vld [vmem:[%s5 + $0x16f0] sm:$0xff]
      %v6814 = vld [vmem:[%s5 + $0x16f8] sm:$0xff]
      %v6815 = vld [vmem:[%s5 + $0x1700] sm:$0xff]
      %v6816 = vld [vmem:[%s5 + $0x1708] sm:$0xff]
      %v6817 = vld [vmem:[%s5 + $0x1710] sm:$0xff]
      %v6818 = vld [vmem:[%s5 + $0x1718] sm:$0xff]
      %v6819 = vld [vmem:[%s5 + $0x1720] sm:$0xff]
      %v6820 = vld [vmem:[%s5 + $0x1728] sm:$0xff]
      %v6821 = vld [vmem:[%s5 + $0x1730] sm:$0xff]
      %v6822 = vld [vmem:[%s5 + $0x1738] sm:$0xff]
      %v6823 = vld [vmem:[%s5 + $0x1740] sm:$0xff]
      %v6824 = vld [vmem:[%s5 + $0x1748] sm:$0xff]
      %v6825 = vld [vmem:[%s5 + $0x1750] sm:$0xff]
      %v6826 = vld [vmem:[%s5 + $0x1758] sm:$0xff]
      %v6827 = vld [vmem:[%s5 + $0x1760] sm:$0xff]
      %v6828 = vld [vmem:[%s5 + $0x1768] sm:$0xff]
      %v6829 = vld [vmem:[%s5 + $0x1770] sm:$0xff]
      %v6830 = vld [vmem:[%s5 + $0x1778] sm:$0xff]
      %v6831 = vld [vmem:[%s5 + $0x1780] sm:$0xff]
      %v6832 = vld [vmem:[%s5 + $0x1788] sm:$0xff]
      %v6833 = vld [vmem:[%s5 + $0x1790] sm:$0xff]
      %v6834 = vld [vmem:[%s5 + $0x1798] sm:$0xff]
      %v6835 = vld [vmem:[%s5 + $0x17a0] sm:$0xff]
      %v6836 = vld [vmem:[%s5 + $0x17a8] sm:$0xff]
      %v6837 = vld [vmem:[%s5 + $0x17b0] sm:$0xff]
      %v6838 = vld [vmem:[%s5 + $0x17b8] sm:$0xff]
      %v6839 = vld [vmem:[%s5 + $0x17c0] sm:$0xff]
      %v6840 = vld [vmem:[%s5 + $0x17c8] sm:$0xff]
      %v6841 = vld [vmem:[%s5 + $0x17d0] sm:$0xff]
      %v6842 = vld [vmem:[%s5 + $0x17d8] sm:$0xff]
      %v6843 = vld [vmem:[%s5 + $0x17e0] sm:$0xff]
      %v6844 = vld [vmem:[%s5 + $0x17e8] sm:$0xff]
      %v6845 = vld [vmem:[%s5 + $0x17f0] sm:$0xff]
      %v6846 = vld [vmem:[%s5 + $0x17f8] sm:$0xff]
      %v6847 = vld [vmem:[%s5 + $0x1800] sm:$0xff]
      %v6848 = vld [vmem:[%s5 + $0x1808] sm:$0xff]
      %v6849 = vld [vmem:[%s5 + $0x1810] sm:$0xff]
      %v6850 = vld [vmem:[%s5 + $0x1818] sm:$0xff]
      %v6851 = vld [vmem:[%s5 + $0x1820] sm:$0xff]
      %v6852 = vld [vmem:[%s5 + $0x1828] sm:$0xff]
      %v6853 = vld [vmem:[%s5 + $0x1830] sm:$0xff]
      %v6854 = vld [vmem:[%s5 + $0x1838] sm:$0xff]
      %v6855 = vld [vmem:[%s5 + $0x1840] sm:$0xff]
      %v6856 = vld [vmem:[%s5 + $0x1848] sm:$0xff]
      %v6857 = vld [vmem:[%s5 + $0x1850] sm:$0xff]
      %v6858 = vld [vmem:[%s5 + $0x1858] sm:$0xff]
      %v6859 = vld [vmem:[%s5 + $0x1860] sm:$0xff]
      %v6860 = vld [vmem:[%s5 + $0x1868] sm:$0xff]
      %v6861 = vld [vmem:[%s5 + $0x1870] sm:$0xff]
      %v6862 = vld [vmem:[%s5 + $0x1878] sm:$0xff]
      %v6863 = vld [vmem:[%s5 + $0x1880] sm:$0xff]
      %v6864 = vld [vmem:[%s5 + $0x1888] sm:$0xff]
      %v6865 = vld [vmem:[%s5 + $0x1890] sm:$0xff]
      %v6866 = vld [vmem:[%s5 + $0x1898] sm:$0xff]
      %v6867 = vld [vmem:[%s5 + $0x18a0] sm:$0xff]
      %v6868 = vld [vmem:[%s5 + $0x18a8] sm:$0xff]
      %v6869 = vld [vmem:[%s5 + $0x18b0] sm:$0xff]
      %v6870 = vld [vmem:[%s5 + $0x18b8] sm:$0xff]
      %v6871 = vld [vmem:[%s5 + $0x18c0] sm:$0xff]
      %v6872 = vld [vmem:[%s5 + $0x18c8] sm:$0xff]
      %v6873 = vld [vmem:[%s5 + $0x18d0] sm:$0xff]
      %v6874 = vld [vmem:[%s5 + $0x18d8] sm:$0xff]
      %v6875 = vld [vmem:[%s5 + $0x18e0] sm:$0xff]
      %v6876 = vld [vmem:[%s5 + $0x18e8] sm:$0xff]
      %v6877 = vld [vmem:[%s5 + $0x18f0] sm:$0xff]
      %v6878 = vld [vmem:[%s5 + $0x18f8] sm:$0xff]
      %v6879 = vld [vmem:[%s6] sm:$0x3]
      %v6884 = vlaneseq
      %v6885 = vshrl.u32 %v6884, 7
      %v6886 = vsub.s32 0, %v6885
      %v6887 = vrot.slane %v6075, %v6886
      %v6888 = vlaneseq
      %v6889 = vshrl.u32 %v6888, 7
      %v6890 = vsub.s32 1, %v6889
      %v6891 = vrot.slane %v6075, %v6890
      %v6892 = vlaneseq
      %v6893 = vshrl.u32 %v6892, 7
      %v6894 = vsub.s32 2, %v6893
      %v6895 = vrot.slane %v6075, %v6894
      %v6896 = vlaneseq
      %v6897 = vshrl.u32 %v6896, 7
      %v6898 = vsub.s32 3, %v6897
      %v6899 = vrot.slane %v6075, %v6898
      %v6900 = vlaneseq
      %v6901 = vshrl.u32 %v6900, 7
      %v6902 = vsub.s32 4, %v6901
      %v6903 = vrot.slane %v6075, %v6902
      %v6904 = vlaneseq
      %v6905 = vshrl.u32 %v6904, 7
      %v6906 = vsub.s32 5, %v6905
      %v6907 = vrot.slane %v6075, %v6906
      %v6908 = vlaneseq
      %v6909 = vshrl.u32 %v6908, 7
      %v6910 = vsub.s32 6, %v6909
      %v6911 = vrot.slane %v6075, %v6910
      %v6912 = vlaneseq
      %v6913 = vshrl.u32 %v6912, 7
      %v6914 = vsub.s32 7, %v6913
      %v6915 = vrot.slane %v6075, %v6914
      %v6916 = vlaneseq
      %v6917 = vshrl.u32 %v6916, 7
      %v6918 = vsub.s32 0, %v6917
      %v6919 = vrot.slane %v6076, %v6918
      %v6920 = vlaneseq
      %v6921 = vshrl.u32 %v6920, 7
      %v6922 = vsub.s32 1, %v6921
      %v6923 = vrot.slane %v6076, %v6922
      %v6924 = vlaneseq
      %v6925 = vshrl.u32 %v6924, 7
      %v6926 = vsub.s32 2, %v6925
      %v6927 = vrot.slane %v6076, %v6926
      %v6928 = vlaneseq
      %v6929 = vshrl.u32 %v6928, 7
      %v6930 = vsub.s32 3, %v6929
      %v6931 = vrot.slane %v6076, %v6930
      %v6932 = vlaneseq
      %v6933 = vshrl.u32 %v6932, 7
      %v6934 = vsub.s32 4, %v6933
      %v6935 = vrot.slane %v6076, %v6934
      %v6936 = vlaneseq
      %v6937 = vshrl.u32 %v6936, 7
      %v6938 = vsub.s32 5, %v6937
      %v6939 = vrot.slane %v6076, %v6938
      %v6940 = vlaneseq
      %v6941 = vshrl.u32 %v6940, 7
      %v6942 = vsub.s32 6, %v6941
      %v6943 = vrot.slane %v6076, %v6942
      %v6944 = vlaneseq
      %v6945 = vshrl.u32 %v6944, 7
      %v6946 = vsub.s32 7, %v6945
      %v6947 = vrot.slane %v6076, %v6946
      %v6948 = vlaneseq
      %v6949 = vshrl.u32 %v6948, 7
      %v6950 = vsub.s32 0, %v6949
      %v6951 = vrot.slane %v6077, %v6950
      %v6952 = vlaneseq
      %v6953 = vshrl.u32 %v6952, 7
      %v6954 = vsub.s32 1, %v6953
      %v6955 = vrot.slane %v6077, %v6954
      %v6956 = vlaneseq
      %v6957 = vshrl.u32 %v6956, 7
      %v6958 = vsub.s32 2, %v6957
      %v6959 = vrot.slane %v6077, %v6958
      %v6960 = vlaneseq
      %v6961 = vshrl.u32 %v6960, 7
      %v6962 = vsub.s32 3, %v6961
      %v6963 = vrot.slane %v6077, %v6962
      %v6964 = vlaneseq
      %v6965 = vshrl.u32 %v6964, 7
      %v6966 = vsub.s32 4, %v6965
      %v6967 = vrot.slane %v6077, %v6966
      %v6968 = vlaneseq
      %v6969 = vshrl.u32 %v6968, 7
      %v6970 = vsub.s32 5, %v6969
      %v6971 = vrot.slane %v6077, %v6970
      %v6972 = vlaneseq
      %v6973 = vshrl.u32 %v6972, 7
      %v6974 = vsub.s32 6, %v6973
      %v6975 = vrot.slane %v6077, %v6974
      %v6976 = vlaneseq
      %v6977 = vshrl.u32 %v6976, 7
      %v6978 = vsub.s32 7, %v6977
      %v6979 = vrot.slane %v6077, %v6978
      %v6980 = vlaneseq
      %v6981 = vshrl.u32 %v6980, 7
      %v6982 = vsub.s32 0, %v6981
      %v6983 = vrot.slane %v6078, %v6982
      %v7010 = vlaneseq
      %v7011 = vshrl.u32 %v7010, 7
      %v7012 = vsub.s32 0, %v7011
      %v7013 = vrot.slane %v6879, %v7012
      %v7014 = vlaneseq
      %v7015 = vshrl.u32 %v7014, 7
      %v7016 = vsub.s32 1, %v7015
      %v7017 = vrot.slane %v6879, %v7016
      %7020 = vmatprep.subr.mxu0 %v6080
      %7021 = vmatpush1.msra.mxu0 %v6079
      %7022 = vmatprep.subr.mxu0 %v6082
      %7023 = vmatpush1.msra.mxu0 %v6081
      %7024 = vmatprep.subr.mxu0 %v6084
      %7025 = vmatpush1.msra.mxu0 %v6083
      %7026 = vmatprep.subr.mxu0 %v6086
      %7027 = vmatpush1.msra.mxu0 %v6085
      %7028 = vmatprep.subr.mxu0 %v6088
      %7029 = vmatpush1.msra.mxu0 %v6087
      %7030 = vmatprep.subr.mxu0 %v6090
      %7031 = vmatpush1.msra.mxu0 %v6089
      %7032 = vmatprep.subr.mxu0 %v6092
      %7033 = vmatpush1.msra.mxu0 %v6091
      %7034 = vmatprep.subr.mxu0 %v6094
      %7035 = vmatpush1.msra.mxu0 %v6093
      %7036 = vmatprep.subr.mxu0 %v6096
      %7037 = vmatpush1.msra.mxu0 %v6095
      %7038 = vmatprep.subr.mxu0 %v6098
      %7039 = vmatpush1.msra.mxu0 %v6097
      %7040 = vmatprep.subr.mxu0 %v6100
      %7041 = vmatpush1.msra.mxu0 %v6099
      %7042 = vmatprep.subr.mxu0 %v6102
      %7043 = vmatpush1.msra.mxu0 %v6101
      %7044 = vmatprep.subr.mxu0 %v6104
      %7045 = vmatpush1.msra.mxu0 %v6103
      %7046 = vmatprep.subr.mxu0 %v6106
      %7047 = vmatpush1.msra.mxu0 %v6105
      %7048 = vmatprep.subr.mxu0 %v6108
      %7049 = vmatpush1.msra.mxu0 %v6107
      %7050 = vmatprep.subr.mxu0 %v6110
      %7051 = vmatpush1.msra.mxu0 %v6109
      %7052 = vmatprep.subr.mxu0 %v6112
      %7053 = vmatpush1.msra.mxu0 %v6111
      %7054 = vmatprep.subr.mxu0 %v6114
      %7055 = vmatpush1.msra.mxu0 %v6113
      %7056 = vmatprep.subr.mxu0 %v6116
      %7057 = vmatpush1.msra.mxu0 %v6115
      %7058 = vmatprep.subr.mxu0 %v6118
      %7059 = vmatpush1.msra.mxu0 %v6117
      %7060 = vmatprep.subr.mxu0 %v6120
      %7061 = vmatpush1.msra.mxu0 %v6119
      %7062 = vmatprep.subr.mxu0 %v6122
      %7063 = vmatpush1.msra.mxu0 %v6121
      %7064 = vmatprep.subr.mxu0 %v6124
      %7065 = vmatpush1.msra.mxu0 %v6123
      %7066 = vmatprep.subr.mxu0 %v6126
      %7067 = vmatpush1.msra.mxu0 %v6125
      %7068 = vmatprep.subr.mxu0 %v6128
      %7069 = vmatpush1.msra.mxu0 %v6127
      %7070 = vmatprep.subr.mxu0 %v6130
      %7071 = vmatpush1.msra.mxu0 %v6129
      %7072 = vmatprep.subr.mxu0 %v6132
      %7073 = vmatpush1.msra.mxu0 %v6131
      %7074 = vmatprep.subr.mxu0 %v6134
      %7075 = vmatpush1.msra.mxu0 %v6133
      %7076 = vmatprep.subr.mxu0 %v6136
      %7077 = vmatpush1.msra.mxu0 %v6135
      %7078 = vmatprep.subr.mxu0 %v6138
      %7079 = vmatpush1.msra.mxu0 %v6137
      %7080 = vmatprep.subr.mxu0 %v6140
      %7081 = vmatpush1.msra.mxu0 %v6139
      %7082 = vmatprep.subr.mxu0 %v6142
      %7083 = vmatpush1.msra.mxu0 %v6141
      %7084 = vmatprep.mubr.f32.mxu0 %v6891
      %7085 = vmatmul.mubr.f32.gmra.mrb[0].mxu0 %v6887
      %v7086 = vpop.f32.mrb[0].mxu0
      %v7087 = vadd.f32 %v7013, %v7086
      %v7088 = vpop.f32.mrb[0].mxu0
      %v7089 = vadd.f32 %v7017, %v7088
      %7090 = vdwg.mxu0
      %7091 = vmatprep.subr.mxu0 %v6144
      %7092 = vmatpush1.msra.mxu0 %v6143
      %7093 = vmatprep.subr.mxu0 %v6146
      %7094 = vmatpush1.msra.mxu0 %v6145
      %7095 = vmatprep.subr.mxu0 %v6148
      %7096 = vmatpush1.msra.mxu0 %v6147
      %7097 = vmatprep.subr.mxu0 %v6150
      %7098 = vmatpush1.msra.mxu0 %v6149
      %7099 = vmatprep.subr.mxu0 %v6152
      %7100 = vmatpush1.msra.mxu0 %v6151
      %7101 = vmatprep.subr.mxu0 %v6154
      %7102 = vmatpush1.msra.mxu0 %v6153
      %7103 = vmatprep.subr.mxu0 %v6156
      %7104 = vmatpush1.msra.mxu0 %v6155
      %7105 = vmatprep.subr.mxu0 %v6158
      %7106 = vmatpush1.msra.mxu0 %v6157
      %7107 = vmatprep.subr.mxu0 %v6160
      %7108 = vmatpush1.msra.mxu0 %v6159
      %7109 = vmatprep.subr.mxu0 %v6162
      %7110 = vmatpush1.msra.mxu0 %v6161
      %7111 = vmatprep.subr.mxu0 %v6164
      %7112 = vmatpush1.msra.mxu0 %v6163
      %7113 = vmatprep.subr.mxu0 %v6166
      %7114 = vmatpush1.msra.mxu0 %v6165
      %7115 = vmatprep.subr.mxu0 %v6168
      %7116 = vmatpush1.msra.mxu0 %v6167
      %7117 = vmatprep.subr.mxu0 %v6170
      %7118 = vmatpush1.msra.mxu0 %v6169
      %7119 = vmatprep.subr.mxu0 %v6172
      %7120 = vmatpush1.msra.mxu0 %v6171
      %7121 = vmatprep.subr.mxu0 %v6174
      %7122 = vmatpush1.msra.mxu0 %v6173
      %7123 = vmatprep.subr.mxu0 %v6176
      %7124 = vmatpush1.msra.mxu0 %v6175
      %7125 = vmatprep.subr.mxu0 %v6178
      %7126 = vmatpush1.msra.mxu0 %v6177
      %7127 = vmatprep.subr.mxu0 %v6180
      %7128 = vmatpush1.msra.mxu0 %v6179
      %7129 = vmatprep.subr.mxu0 %v6182
      %7130 = vmatpush1.msra.mxu0 %v6181
      %7131 = vmatprep.subr.mxu0 %v6184
      %7132 = vmatpush1.msra.mxu0 %v6183
      %7133 = vmatprep.subr.mxu0 %v6186
      %7134 = vmatpush1.msra.mxu0 %v6185
      %7135 = vmatprep.subr.mxu0 %v6188
      %7136 = vmatpush1.msra.mxu0 %v6187
      %7137 = vmatprep.subr.mxu0 %v6190
      %7138 = vmatpush1.msra.mxu0 %v6189
      %7139 = vmatprep.subr.mxu0 %v6192
      %7140 = vmatpush1.msra.mxu0 %v6191
      %7141 = vmatprep.subr.mxu0 %v6194
      %7142 = vmatpush1.msra.mxu0 %v6193
      %7143 = vmatprep.subr.mxu0 %v6196
      %7144 = vmatpush1.msra.mxu0 %v6195
      %7145 = vmatprep.subr.mxu0 %v6198
      %7146 = vmatpush1.msra.mxu0 %v6197
      %7147 = vmatprep.subr.mxu0 %v6200
      %7148 = vmatpush1.msra.mxu0 %v6199
      %7149 = vmatprep.subr.mxu0 %v6202
      %7150 = vmatpush1.msra.mxu0 %v6201
      %7151 = vmatprep.subr.mxu0 %v6204
      %7152 = vmatpush1.msra.mxu0 %v6203
      %7153 = vmatprep.subr.mxu0 %v6206
      %7154 = vmatpush1.msra.mxu0 %v6205
      %7155 = vmatprep.mubr.f32.mxu0 %v6899
      %7156 = vmatmul.mubr.f32.gmra.mrb[0].mxu0 %v6895
      %v7157 = vpop.f32.mrb[0].mxu0
      %v7158 = vadd.f32 %v7087, %v7157
      %v7159 = vpop.f32.mrb[0].mxu0
      %v7160 = vadd.f32 %v7089, %v7159
      %7161 = vdwg.mxu0
      %7162 = vmatprep.subr.mxu0 %v6208
      %7163 = vmatpush1.msra.mxu0 %v6207
      %7164 = vmatprep.subr.mxu0 %v6210
      %7165 = vmatpush1.msra.mxu0 %v6209
      %7166 = vmatprep.subr.mxu0 %v6212
      %7167 = vmatpush1.msra.mxu0 %v6211
      %7168 = vmatprep.subr.mxu0 %v6214
      %7169 = vmatpush1.msra.mxu0 %v6213
      %7170 = vmatprep.subr.mxu0 %v6216
      %7171 = vmatpush1.msra.mxu0 %v6215
      %7172 = vmatprep.subr.mxu0 %v6218
      %7173 = vmatpush1.msra.mxu0 %v6217
      %7174 = vmatprep.subr.mxu0 %v6220
      %7175 = vmatpush1.msra.mxu0 %v6219
      %7176 = vmatprep.subr.mxu0 %v6222
      %7177 = vmatpush1.msra.mxu0 %v6221
      %7178 = vmatprep.subr.mxu0 %v6224
      %7179 = vmatpush1.msra.mxu0 %v6223
      %7180 = vmatprep.subr.mxu0 %v6226
      %7181 = vmatpush1.msra.mxu0 %v6225
      %7182 = vmatprep.subr.mxu0 %v6228
      %7183 = vmatpush1.msra.mxu0 %v6227
      %7184 = vmatprep.subr.mxu0 %v6230
      %7185 = vmatpush1.msra.mxu0 %v6229
      %7186 = vmatprep.subr.mxu0 %v6232
      %7187 = vmatpush1.msra.mxu0 %v6231
      %7188 = vmatprep.subr.mxu0 %v6234
      %7189 = vmatpush1.msra.mxu0 %v6233
      %7190 = vmatprep.subr.mxu0 %v6236
      %7191 = vmatpush1.msra.mxu0 %v6235
      %7192 = vmatprep.subr.mxu0 %v6238
      %7193 = vmatpush1.msra.mxu0 %v6237
      %7194 = vmatprep.subr.mxu0 %v6240
      %7195 = vmatpush1.msra.mxu0 %v6239
      %7196 = vmatprep.subr.mxu0 %v6242
      %7197 = vmatpush1.msra.mxu0 %v6241
      %7198 = vmatprep.subr.mxu0 %v6244
      %7199 = vmatpush1.msra.mxu0 %v6243
      %7200 = vmatprep.subr.mxu0 %v6246
      %7201 = vmatpush1.msra.mxu0 %v6245
      %7202 = vmatprep.subr.mxu0 %v6248
      %7203 = vmatpush1.msra.mxu0 %v6247
      %7204 = vmatprep.subr.mxu0 %v6250
      %7205 = vmatpush1.msra.mxu0 %v6249
      %7206 = vmatprep.subr.mxu0 %v6252
      %7207 = vmatpush1.msra.mxu0 %v6251
      %7208 = vmatprep.subr.mxu0 %v6254
      %7209 = vmatpush1.msra.mxu0 %v6253
      %7210 = vmatprep.subr.mxu0 %v6256
      %7211 = vmatpush1.msra.mxu0 %v6255
      %7212 = vmatprep.subr.mxu0 %v6258
      %7213 = vmatpush1.msra.mxu0 %v6257
      %7214 = vmatprep.subr.mxu0 %v6260
      %7215 = vmatpush1.msra.mxu0 %v6259
      %7216 = vmatprep.subr.mxu0 %v6262
      %7217 = vmatpush1.msra.mxu0 %v6261
      %7218 = vmatprep.subr.mxu0 %v6264
      %7219 = vmatpush1.msra.mxu0 %v6263
      %7220 = vmatprep.subr.mxu0 %v6266
      %7221 = vmatpush1.msra.mxu0 %v6265
      %7222 = vmatprep.subr.mxu0 %v6268
      %7223 = vmatpush1.msra.mxu0 %v6267
      %7224 = vmatprep.subr.mxu0 %v6270
      %7225 = vmatpush1.msra.mxu0 %v6269
      %7226 = vmatprep.mubr.f32.mxu0 %v6907
      %7227 = vmatmul.mubr.f32.gmra.mrb[0].mxu0 %v6903
      %v7228 = vpop.f32.mrb[0].mxu0
      %v7229 = vadd.f32 %v7158, %v7228
      %v7230 = vpop.f32.mrb[0].mxu0
      %v7231 = vadd.f32 %v7160, %v7230
      %7232 = vdwg.mxu0
      %7233 = vmatprep.subr.mxu0 %v6272
      %7234 = vmatpush1.msra.mxu0 %v6271
      %7235 = vmatprep.subr.mxu0 %v6274
      %7236 = vmatpush1.msra.mxu0 %v6273
      %7237 = vmatprep.subr.mxu0 %v6276
      %7238 = vmatpush1.msra.mxu0 %v6275
      %7239 = vmatprep.subr.mxu0 %v6278
      %7240 = vmatpush1.msra.mxu0 %v6277
      %7241 = vmatprep.subr.mxu0 %v6280
      %7242 = vmatpush1.msra.mxu0 %v6279
      %7243 = vmatprep.subr.mxu0 %v6282
      %7244 = vmatpush1.msra.mxu0 %v6281
      %7245 = vmatprep.subr.mxu0 %v6284
      %7246 = vmatpush1.msra.mxu0 %v6283
      %7247 = vmatprep.subr.mxu0 %v6286
      %7248 = vmatpush1.msra.mxu0 %v6285
      %7249 = vmatprep.subr.mxu0 %v6288
      %7250 = vmatpush1.msra.mxu0 %v6287
      %7251 = vmatprep.subr.mxu0 %v6290
      %7252 = vmatpush1.msra.mxu0 %v6289
      %7253 = vmatprep.subr.mxu0 %v6292
      %7254 = vmatpush1.msra.mxu0 %v6291
      %7255 = vmatprep.subr.mxu0 %v6294
      %7256 = vmatpush1.msra.mxu0 %v6293
      %7257 = vmatprep.subr.mxu0 %v6296
      %7258 = vmatpush1.msra.mxu0 %v6295
      %7259 = vmatprep.subr.mxu0 %v6298
      %7260 = vmatpush1.msra.mxu0 %v6297
      %7261 = vmatprep.subr.mxu0 %v6300
      %7262 = vmatpush1.msra.mxu0 %v6299
      %7263 = vmatprep.subr.mxu0 %v6302
      %7264 = vmatpush1.msra.mxu0 %v6301
      %7265 = vmatprep.subr.mxu0 %v6304
      %7266 = vmatpush1.msra.mxu0 %v6303
      %7267 = vmatprep.subr.mxu0 %v6306
      %7268 = vmatpush1.msra.mxu0 %v6305
      %7269 = vmatprep.subr.mxu0 %v6308
      %7270 = vmatpush1.msra.mxu0 %v6307
      %7271 = vmatprep.subr.mxu0 %v6310
      %7272 = vmatpush1.msra.mxu0 %v6309
      %7273 = vmatprep.subr.mxu0 %v6312
      %7274 = vmatpush1.msra.mxu0 %v6311
      %7275 = vmatprep.subr.mxu0 %v6314
      %7276 = vmatpush1.msra.mxu0 %v6313
      %7277 = vmatprep.subr.mxu0 %v6316
      %7278 = vmatpush1.msra.mxu0 %v6315
      %7279 = vmatprep.subr.mxu0 %v6318
      %7280 = vmatpush1.msra.mxu0 %v6317
      %7281 = vmatprep.subr.mxu0 %v6320
      %7282 = vmatpush1.msra.mxu0 %v6319
      %7283 = vmatprep.subr.mxu0 %v6322
      %7284 = vmatpush1.msra.mxu0 %v6321
      %7285 = vmatprep.subr.mxu0 %v6324
      %7286 = vmatpush1.msra.mxu0 %v6323
      %7287 = vmatprep.subr.mxu0 %v6326
      %7288 = vmatpush1.msra.mxu0 %v6325
      %7289 = vmatprep.subr.mxu0 %v6328
      %7290 = vmatpush1.msra.mxu0 %v6327
      %7291 = vmatprep.subr.mxu0 %v6330
      %7292 = vmatpush1.msra.mxu0 %v6329
      %7293 = vmatprep.subr.mxu0 %v6332
      %7294 = vmatpush1.msra.mxu0 %v6331
      %7295 = vmatprep.subr.mxu0 %v6334
      %7296 = vmatpush1.msra.mxu0 %v6333
      %7297 = vmatprep.mubr.f32.mxu0 %v6915
      %7298 = vmatmul.mubr.f32.gmra.mrb[0].mxu0 %v6911
      %v7299 = vpop.f32.mrb[0].mxu0
      %v7300 = vadd.f32 %v7229, %v7299
      %v7301 = vpop.f32.mrb[0].mxu0
      %v7302 = vadd.f32 %v7231, %v7301
      %7303 = vdwg.mxu0
      %7304 = vmatprep.subr.mxu0 %v6336
      %7305 = vmatpush1.msra.mxu0 %v6335
      %7306 = vmatprep.subr.mxu0 %v6338
      %7307 = vmatpush1.msra.mxu0 %v6337
      %7308 = vmatprep.subr.mxu0 %v6340
      %7309 = vmatpush1.msra.mxu0 %v6339
      %7310 = vmatprep.subr.mxu0 %v6342
      %7311 = vmatpush1.msra.mxu0 %v6341
      %7312 = vmatprep.subr.mxu0 %v6344
      %7313 = vmatpush1.msra.mxu0 %v6343
      %7314 = vmatprep.subr.mxu0 %v6346
      %7315 = vmatpush1.msra.mxu0 %v6345
      %7316 = vmatprep.subr.mxu0 %v6348
      %7317 = vmatpush1.msra.mxu0 %v6347
      %7318 = vmatprep.subr.mxu0 %v6350
      %7319 = vmatpush1.msra.mxu0 %v6349
      %7320 = vmatprep.subr.mxu0 %v6352
      %7321 = vmatpush1.msra.mxu0 %v6351
      %7322 = vmatprep.subr.mxu0 %v6354
      %7323 = vmatpush1.msra.mxu0 %v6353
      %7324 = vmatprep.subr.mxu0 %v6356
      %7325 = vmatpush1.msra.mxu0 %v6355
      %7326 = vmatprep.subr.mxu0 %v6358
      %7327 = vmatpush1.msra.mxu0 %v6357
      %7328 = vmatprep.subr.mxu0 %v6360
      %7329 = vmatpush1.msra.mxu0 %v6359
      %7330 = vmatprep.subr.mxu0 %v6362
      %7331 = vmatpush1.msra.mxu0 %v6361
      %7332 = vmatprep.subr.mxu0 %v6364
      %7333 = vmatpush1.msra.mxu0 %v6363
      %7334 = vmatprep.subr.mxu0 %v6366
      %7335 = vmatpush1.msra.mxu0 %v6365
      %7336 = vmatprep.subr.mxu0 %v6368
      %7337 = vmatpush1.msra.mxu0 %v6367
      %7338 = vmatprep.subr.mxu0 %v6370
      %7339 = vmatpush1.msra.mxu0 %v6369
      %7340 = vmatprep.subr.mxu0 %v6372
      %7341 = vmatpush1.msra.mxu0 %v6371
      %7342 = vmatprep.subr.mxu0 %v6374
      %7343 = vmatpush1.msra.mxu0 %v6373
      %7344 = vmatprep.subr.mxu0 %v6376
      %7345 = vmatpush1.msra.mxu0 %v6375
      %7346 = vmatprep.subr.mxu0 %v6378
      %7347 = vmatpush1.msra.mxu0 %v6377
      %7348 = vmatprep.subr.mxu0 %v6380
      %7349 = vmatpush1.msra.mxu0 %v6379
      %7350 = vmatprep.subr.mxu0 %v6382
      %7351 = vmatpush1.msra.mxu0 %v6381
      %7352 = vmatprep.subr.mxu0 %v6384
      %7353 = vmatpush1.msra.mxu0 %v6383
      %7354 = vmatprep.subr.mxu0 %v6386
      %7355 = vmatpush1.msra.mxu0 %v6385
      %7356 = vmatprep.subr.mxu0 %v6388
      %7357 = vmatpush1.msra.mxu0 %v6387
      %7358 = vmatprep.subr.mxu0 %v6390
      %7359 = vmatpush1.msra.mxu0 %v6389
      %7360 = vmatprep.subr.mxu0 %v6392
      %7361 = vmatpush1.msra.mxu0 %v6391
      %7362 = vmatprep.subr.mxu0 %v6394
      %7363 = vmatpush1.msra.mxu0 %v6393
      %7364 = vmatprep.subr.mxu0 %v6396
      %7365 = vmatpush1.msra.mxu0 %v6395
      %7366 = vmatprep.subr.mxu0 %v6398
      %7367 = vmatpush1.msra.mxu0 %v6397
      %7368 = vmatprep.mubr.f32.mxu0 %v6923
      %7369 = vmatmul.mubr.f32.gmra.mrb[0].mxu0 %v6919
      %v7370 = vpop.f32.mrb[0].mxu0
      %v7371 = vadd.f32 %v7300, %v7370
      %v7372 = vpop.f32.mrb[0].mxu0
      %v7373 = vadd.f32 %v7302, %v7372
      %7374 = vdwg.mxu0
      %7375 = vmatprep.subr.mxu0 %v6400
      %7376 = vmatpush1.msra.mxu0 %v6399
      %7377 = vmatprep.subr.mxu0 %v6402
      %7378 = vmatpush1.msra.mxu0 %v6401
      %7379 = vmatprep.subr.mxu0 %v6404
      %7380 = vmatpush1.msra.mxu0 %v6403
      %7381 = vmatprep.subr.mxu0 %v6406
      %7382 = vmatpush1.msra.mxu0 %v6405
      %7383 = vmatprep.subr.mxu0 %v6408
      %7384 = vmatpush1.msra.mxu0 %v6407
      %7385 = vmatprep.subr.mxu0 %v6410
      %7386 = vmatpush1.msra.mxu0 %v6409
      %7387 = vmatprep.subr.mxu0 %v6412
      %7388 = vmatpush1.msra.mxu0 %v6411
      %7389 = vmatprep.subr.mxu0 %v6414
      %7390 = vmatpush1.msra.mxu0 %v6413
      %7391 = vmatprep.subr.mxu0 %v6416
      %7392 = vmatpush1.msra.mxu0 %v6415
      %7393 = vmatprep.subr.mxu0 %v6418
      %7394 = vmatpush1.msra.mxu0 %v6417
      %7395 = vmatprep.subr.mxu0 %v6420
      %7396 = vmatpush1.msra.mxu0 %v6419
      %7397 = vmatprep.subr.mxu0 %v6422
      %7398 = vmatpush1.msra.mxu0 %v6421
      %7399 = vmatprep.subr.mxu0 %v6424
      %7400 = vmatpush1.msra.mxu0 %v6423
      %7401 = vmatprep.subr.mxu0 %v6426
      %7402 = vmatpush1.msra.mxu0 %v6425
      %7403 = vmatprep.subr.mxu0 %v6428
      %7404 = vmatpush1.msra.mxu0 %v6427
      %7405 = vmatprep.subr.mxu0 %v6430
      %7406 = vmatpush1.msra.mxu0 %v6429
      %7407 = vmatprep.subr.mxu0 %v6432
      %7408 = vmatpush1.msra.mxu0 %v6431
      %7409 = vmatprep.subr.mxu0 %v6434
      %7410 = vmatpush1.msra.mxu0 %v6433
      %7411 = vmatprep.subr.mxu0 %v6436
      %7412 = vmatpush1.msra.mxu0 %v6435
      %7413 = vmatprep.subr.mxu0 %v6438
      %7414 = vmatpush1.msra.mxu0 %v6437
      %7415 = vmatprep.subr.mxu0 %v6440
      %7416 = vmatpush1.msra.mxu0 %v6439
      %7417 = vmatprep.subr.mxu0 %v6442
      %7418 = vmatpush1.msra.mxu0 %v6441
      %7419 = vmatprep.subr.mxu0 %v6444
      %7420 = vmatpush1.msra.mxu0 %v6443
      %7421 = vmatprep.subr.mxu0 %v6446
      %7422 = vmatpush1.msra.mxu0 %v6445
      %7423 = vmatprep.subr.mxu0 %v6448
      %7424 = vmatpush1.msra.mxu0 %v6447
      %7425 = vmatprep.subr.mxu0 %v6450
      %7426 = vmatpush1.msra.mxu0 %v6449
      %7427 = vmatprep.subr.mxu0 %v6452
      %7428 = vmatpush1.msra.mxu0 %v6451
      %7429 = vmatprep.subr.mxu0 %v6454
      %7430 = vmatpush1.msra.mxu0 %v6453
      %7431 = vmatprep.subr.mxu0 %v6456
      %7432 = vmatpush1.msra.mxu0 %v6455
      %7433 = vmatprep.subr.mxu0 %v6458
      %7434 = vmatpush1.msra.mxu0 %v6457
      %7435 = vmatprep.subr.mxu0 %v6460
      %7436 = vmatpush1.msra.mxu0 %v6459
      %7437 = vmatprep.subr.mxu0 %v6462
      %7438 = vmatpush1.msra.mxu0 %v6461
      %7439 = vmatprep.mubr.f32.mxu0 %v6931
      %7440 = vmatmul.mubr.f32.gmra.mrb[0].mxu0 %v6927
      %v7441 = vpop.f32.mrb[0].mxu0
      %v7442 = vadd.f32 %v7371, %v7441
      %v7443 = vpop.f32.mrb[0].mxu0
      %v7444 = vadd.f32 %v7373, %v7443
      %7445 = vdwg.mxu0
      %7446 = vmatprep.subr.mxu0 %v6464
      %7447 = vmatpush1.msra.mxu0 %v6463
      %7448 = vmatprep.subr.mxu0 %v6466
      %7449 = vmatpush1.msra.mxu0 %v6465
      %7450 = vmatprep.subr.mxu0 %v6468
      %7451 = vmatpush1.msra.mxu0 %v6467
      %7452 = vmatprep.subr.mxu0 %v6470
      %7453 = vmatpush1.msra.mxu0 %v6469
      %7454 = vmatprep.subr.mxu0 %v6472
      %7455 = vmatpush1.msra.mxu0 %v6471
      %7456 = vmatprep.subr.mxu0 %v6474
      %7457 = vmatpush1.msra.mxu0 %v6473
      %7458 = vmatprep.subr.mxu0 %v6476
      %7459 = vmatpush1.msra.mxu0 %v6475
      %7460 = vmatprep.subr.mxu0 %v6478
      %7461 = vmatpush1.msra.mxu0 %v6477
      %7462 = vmatprep.subr.mxu0 %v6480
      %7463 = vmatpush1.msra.mxu0 %v6479
      %7464 = vmatprep.subr.mxu0 %v6482
      %7465 = vmatpush1.msra.mxu0 %v6481
      %7466 = vmatprep.subr.mxu0 %v6484
      %7467 = vmatpush1.msra.mxu0 %v6483
      %7468 = vmatprep.subr.mxu0 %v6486
      %7469 = vmatpush1.msra.mxu0 %v6485
      %7470 = vmatprep.subr.mxu0 %v6488
      %7471 = vmatpush1.msra.mxu0 %v6487
      %7472 = vmatprep.subr.mxu0 %v6490
      %7473 = vmatpush1.msra.mxu0 %v6489
      %7474 = vmatprep.subr.mxu0 %v6492
      %7475 = vmatpush1.msra.mxu0 %v6491
      %7476 = vmatprep.subr.mxu0 %v6494
      %7477 = vmatpush1.msra.mxu0 %v6493
      %7478 = vmatprep.subr.mxu0 %v6496
      %7479 = vmatpush1.msra.mxu0 %v6495
      %7480 = vmatprep.subr.mxu0 %v6498
      %7481 = vmatpush1.msra.mxu0 %v6497
      %7482 = vmatprep.subr.mxu0 %v6500
      %7483 = vmatpush1.msra.mxu0 %v6499
      %7484 = vmatprep.subr.mxu0 %v6502
      %7485 = vmatpush1.msra.mxu0 %v6501
      %7486 = vmatprep.subr.mxu0 %v6504
      %7487 = vmatpush1.msra.mxu0 %v6503
      %7488 = vmatprep.subr.mxu0 %v6506
      %7489 = vmatpush1.msra.mxu0 %v6505
      %7490 = vmatprep.subr.mxu0 %v6508
      %7491 = vmatpush1.msra.mxu0 %v6507
      %7492 = vmatprep.subr.mxu0 %v6510
      %7493 = vmatpush1.msra.mxu0 %v6509
      %7494 = vmatprep.subr.mxu0 %v6512
      %7495 = vmatpush1.msra.mxu0 %v6511
      %7496 = vmatprep.subr.mxu0 %v6514
      %7497 = vmatpush1.msra.mxu0 %v6513
      %7498 = vmatprep.subr.mxu0 %v6516
      %7499 = vmatpush1.msra.mxu0 %v6515
      %7500 = vmatprep.subr.mxu0 %v6518
      %7501 = vmatpush1.msra.mxu0 %v6517
      %7502 = vmatprep.subr.mxu0 %v6520
      %7503 = vmatpush1.msra.mxu0 %v6519
      %7504 = vmatprep.subr.mxu0 %v6522
      %7505 = vmatpush1.msra.mxu0 %v6521
      %7506 = vmatprep.subr.mxu0 %v6524
      %7507 = vmatpush1.msra.mxu0 %v6523
      %7508 = vmatprep.subr.mxu0 %v6526
      %7509 = vmatpush1.msra.mxu0 %v6525
      %7510 = vmatprep.mubr.f32.mxu0 %v6939
      %7511 = vmatmul.mubr.f32.gmra.mrb[0].mxu0 %v6935
      %v7512 = vpop.f32.mrb[0].mxu0
      %v7513 = vadd.f32 %v7442, %v7512
      %v7514 = vpop.f32.mrb[0].mxu0
      %v7515 = vadd.f32 %v7444, %v7514
      %7516 = vdwg.mxu0
      %7517 = vmatprep.subr.mxu0 %v6528
      %7518 = vmatpush1.msra.mxu0 %v6527
      %7519 = vmatprep.subr.mxu0 %v6530
      %7520 = vmatpush1.msra.mxu0 %v6529
      %7521 = vmatprep.subr.mxu0 %v6532
      %7522 = vmatpush1.msra.mxu0 %v6531
      %7523 = vmatprep.subr.mxu0 %v6534
      %7524 = vmatpush1.msra.mxu0 %v6533
      %7525 = vmatprep.subr.mxu0 %v6536
      %7526 = vmatpush1.msra.mxu0 %v6535
      %7527 = vmatprep.subr.mxu0 %v6538
      %7528 = vmatpush1.msra.mxu0 %v6537
      %7529 = vmatprep.subr.mxu0 %v6540
      %7530 = vmatpush1.msra.mxu0 %v6539
      %7531 = vmatprep.subr.mxu0 %v6542
      %7532 = vmatpush1.msra.mxu0 %v6541
      %7533 = vmatprep.subr.mxu0 %v6544
      %7534 = vmatpush1.msra.mxu0 %v6543
      %7535 = vmatprep.subr.mxu0 %v6546
      %7536 = vmatpush1.msra.mxu0 %v6545
      %7537 = vmatprep.subr.mxu0 %v6548
      %7538 = vmatpush1.msra.mxu0 %v6547
      %7539 = vmatprep.subr.mxu0 %v6550
      %7540 = vmatpush1.msra.mxu0 %v6549
      %7541 = vmatprep.subr.mxu0 %v6552
      %7542 = vmatpush1.msra.mxu0 %v6551
      %7543 = vmatprep.subr.mxu0 %v6554
      %7544 = vmatpush1.msra.mxu0 %v6553
      %7545 = vmatprep.subr.mxu0 %v6556
      %7546 = vmatpush1.msra.mxu0 %v6555
      %7547 = vmatprep.subr.mxu0 %v6558
      %7548 = vmatpush1.msra.mxu0 %v6557
      %7549 = vmatprep.subr.mxu0 %v6560
      %7550 = vmatpush1.msra.mxu0 %v6559
      %7551 = vmatprep.subr.mxu0 %v6562
      %7552 = vmatpush1.msra.mxu0 %v6561
      %7553 = vmatprep.subr.mxu0 %v6564
      %7554 = vmatpush1.msra.mxu0 %v6563
      %7555 = vmatprep.subr.mxu0 %v6566
      %7556 = vmatpush1.msra.mxu0 %v6565
      %7557 = vmatprep.subr.mxu0 %v6568
      %7558 = vmatpush1.msra.mxu0 %v6567
      %7559 = vmatprep.subr.mxu0 %v6570
      %7560 = vmatpush1.msra.mxu0 %v6569
      %7561 = vmatprep.subr.mxu0 %v6572
      %7562 = vmatpush1.msra.mxu0 %v6571
      %7563 = vmatprep.subr.mxu0 %v6574
      %7564 = vmatpush1.msra.mxu0 %v6573
      %7565 = vmatprep.subr.mxu0 %v6576
      %7566 = vmatpush1.msra.mxu0 %v6575
      %7567 = vmatprep.subr.mxu0 %v6578
      %7568 = vmatpush1.msra.mxu0 %v6577
      %7569 = vmatprep.subr.mxu0 %v6580
      %7570 = vmatpush1.msra.mxu0 %v6579
      %7571 = vmatprep.subr.mxu0 %v6582
      %7572 = vmatpush1.msra.mxu0 %v6581
      %7573 = vmatprep.subr.mxu0 %v6584
      %7574 = vmatpush1.msra.mxu0 %v6583
      %7575 = vmatprep.subr.mxu0 %v6586
      %7576 = vmatpush1.msra.mxu0 %v6585
      %7577 = vmatprep.subr.mxu0 %v6588
      %7578 = vmatpush1.msra.mxu0 %v6587
      %7579 = vmatprep.subr.mxu0 %v6590
      %7580 = vmatpush1.msra.mxu0 %v6589
      %7581 = vmatprep.mubr.f32.mxu0 %v6947
      %7582 = vmatmul.mubr.f32.gmra.mrb[0].mxu0 %v6943
      %v7583 = vpop.f32.mrb[0].mxu0
      %v7584 = vadd.f32 %v7513, %v7583
      %v7585 = vpop.f32.mrb[0].mxu0
      %v7586 = vadd.f32 %v7515, %v7585
      %7587 = vdwg.mxu0
      %7588 = vmatprep.subr.mxu0 %v6592
      %7589 = vmatpush1.msra.mxu0 %v6591
      %7590 = vmatprep.subr.mxu0 %v6594
      %7591 = vmatpush1.msra.mxu0 %v6593
      %7592 = vmatprep.subr.mxu0 %v6596
      %7593 = vmatpush1.msra.mxu0 %v6595
      %7594 = vmatprep.subr.mxu0 %v6598
      %7595 = vmatpush1.msra.mxu0 %v6597
      %7596 = vmatprep.subr.mxu0 %v6600
      %7597 = vmatpush1.msra.mxu0 %v6599
      %7598 = vmatprep.subr.mxu0 %v6602
      %7599 = vmatpush1.msra.mxu0 %v6601
      %7600 = vmatprep.subr.mxu0 %v6604
      %7601 = vmatpush1.msra.mxu0 %v6603
      %7602 = vmatprep.subr.mxu0 %v6606
      %7603 = vmatpush1.msra.mxu0 %v6605
      %7604 = vmatprep.subr.mxu0 %v6608
      %7605 = vmatpush1.msra.mxu0 %v6607
      %7606 = vmatprep.subr.mxu0 %v6610
      %7607 = vmatpush1.msra.mxu0 %v6609
      %7608 = vmatprep.subr.mxu0 %v6612
      %7609 = vmatpush1.msra.mxu0 %v6611
      %7610 = vmatprep.subr.mxu0 %v6614
      %7611 = vmatpush1.msra.mxu0 %v6613
      %7612 = vmatprep.subr.mxu0 %v6616
      %7613 = vmatpush1.msra.mxu0 %v6615
      %7614 = vmatprep.subr.mxu0 %v6618
      %7615 = vmatpush1.msra.mxu0 %v6617
      %7616 = vmatprep.subr.mxu0 %v6620
      %7617 = vmatpush1.msra.mxu0 %v6619
      %7618 = vmatprep.subr.mxu0 %v6622
      %7619 = vmatpush1.msra.mxu0 %v6621
      %7620 = vmatprep.subr.mxu0 %v6624
      %7621 = vmatpush1.msra.mxu0 %v6623
      %7622 = vmatprep.subr.mxu0 %v6626
      %7623 = vmatpush1.msra.mxu0 %v6625
      %7624 = vmatprep.subr.mxu0 %v6628
      %7625 = vmatpush1.msra.mxu0 %v6627
      %7626 = vmatprep.subr.mxu0 %v6630
      %7627 = vmatpush1.msra.mxu0 %v6629
      %7628 = vmatprep.subr.mxu0 %v6632
      %7629 = vmatpush1.msra.mxu0 %v6631
      %7630 = vmatprep.subr.mxu0 %v6634
      %7631 = vmatpush1.msra.mxu0 %v6633
      %7632 = vmatprep.subr.mxu0 %v6636
      %7633 = vmatpush1.msra.mxu0 %v6635
      %7634 = vmatprep.subr.mxu0 %v6638
      %7635 = vmatpush1.msra.mxu0 %v6637
      %7636 = vmatprep.subr.mxu0 %v6640
      %7637 = vmatpush1.msra.mxu0 %v6639
      %7638 = vmatprep.subr.mxu0 %v6642
      %7639 = vmatpush1.msra.mxu0 %v6641
      %7640 = vmatprep.subr.mxu0 %v6644
      %7641 = vmatpush1.msra.mxu0 %v6643
      %7642 = vmatprep.subr.mxu0 %v6646
      %7643 = vmatpush1.msra.mxu0 %v6645
      %7644 = vmatprep.subr.mxu0 %v6648
      %7645 = vmatpush1.msra.mxu0 %v6647
      %7646 = vmatprep.subr.mxu0 %v6650
      %7647 = vmatpush1.msra.mxu0 %v6649
      %7648 = vmatprep.subr.mxu0 %v6652
      %7649 = vmatpush1.msra.mxu0 %v6651
      %7650 = vmatprep.subr.mxu0 %v6654
      %7651 = vmatpush1.msra.mxu0 %v6653
      %7652 = vmatprep.mubr.f32.mxu0 %v6955
      %7653 = vmatmul.mubr.f32.gmra.mrb[0].mxu0 %v6951
      %v7654 = vpop.f32.mrb[0].mxu0
      %v7655 = vadd.f32 %v7584, %v7654
      %v7656 = vpop.f32.mrb[0].mxu0
      %v7657 = vadd.f32 %v7586, %v7656
      %7658 = vdwg.mxu0
      %7659 = vmatprep.subr.mxu0 %v6656
      %7660 = vmatpush1.msra.mxu0 %v6655
      %7661 = vmatprep.subr.mxu0 %v6658
      %7662 = vmatpush1.msra.mxu0 %v6657
      %7663 = vmatprep.subr.mxu0 %v6660
      %7664 = vmatpush1.msra.mxu0 %v6659
      %7665 = vmatprep.subr.mxu0 %v6662
      %7666 = vmatpush1.msra.mxu0 %v6661
      %7667 = vmatprep.subr.mxu0 %v6664
      %7668 = vmatpush1.msra.mxu0 %v6663
      %7669 = vmatprep.subr.mxu0 %v6666
      %7670 = vmatpush1.msra.mxu0 %v6665
      %7671 = vmatprep.subr.mxu0 %v6668
      %7672 = vmatpush1.msra.mxu0 %v6667
      %7673 = vmatprep.subr.mxu0 %v6670
      %7674 = vmatpush1.msra.mxu0 %v6669
      %7675 = vmatprep.subr.mxu0 %v6672
      %7676 = vmatpush1.msra.mxu0 %v6671
      %7677 = vmatprep.subr.mxu0 %v6674
      %7678 = vmatpush1.msra.mxu0 %v6673
      %7679 = vmatprep.subr.mxu0 %v6676
      %7680 = vmatpush1.msra.mxu0 %v6675
      %7681 = vmatprep.subr.mxu0 %v6678
      %7682 = vmatpush1.msra.mxu0 %v6677
      %7683 = vmatprep.subr.mxu0 %v6680
      %7684 = vmatpush1.msra.mxu0 %v6679
      %7685 = vmatprep.subr.mxu0 %v6682
      %7686 = vmatpush1.msra.mxu0 %v6681
      %7687 = vmatprep.subr.mxu0 %v6684
      %7688 = vmatpush1.msra.mxu0 %v6683
      %7689 = vmatprep.subr.mxu0 %v6686
      %7690 = vmatpush1.msra.mxu0 %v6685
      %7691 = vmatprep.subr.mxu0 %v6688
      %7692 = vmatpush1.msra.mxu0 %v6687
      %7693 = vmatprep.subr.mxu0 %v6690
      %7694 = vmatpush1.msra.mxu0 %v6689
      %7695 = vmatprep.subr.mxu0 %v6692
      %7696 = vmatpush1.msra.mxu0 %v6691
      %7697 = vmatprep.subr.mxu0 %v6694
      %7698 = vmatpush1.msra.mxu0 %v6693
      %7699 = vmatprep.subr.mxu0 %v6696
      %7700 = vmatpush1.msra.mxu0 %v6695
      %7701 = vmatprep.subr.mxu0 %v6698
      %7702 = vmatpush1.msra.mxu0 %v6697
      %7703 = vmatprep.subr.mxu0 %v6700
      %7704 = vmatpush1.msra.mxu0 %v6699
      %7705 = vmatprep.subr.mxu0 %v6702
      %7706 = vmatpush1.msra.mxu0 %v6701
      %7707 = vmatprep.subr.mxu0 %v6704
      %7708 = vmatpush1.msra.mxu0 %v6703
      %7709 = vmatprep.subr.mxu0 %v6706
      %7710 = vmatpush1.msra.mxu0 %v6705
      %7711 = vmatprep.subr.mxu0 %v6708
      %7712 = vmatpush1.msra.mxu0 %v6707
      %7713 = vmatprep.subr.mxu0 %v6710
      %7714 = vmatpush1.msra.mxu0 %v6709
      %7715 = vmatprep.subr.mxu0 %v6712
      %7716 = vmatpush1.msra.mxu0 %v6711
      %7717 = vmatprep.subr.mxu0 %v6714
      %7718 = vmatpush1.msra.mxu0 %v6713
      %7719 = vmatprep.subr.mxu0 %v6716
      %7720 = vmatpush1.msra.mxu0 %v6715
      %7721 = vmatprep.subr.mxu0 %v6718
      %7722 = vmatpush1.msra.mxu0 %v6717
      %7723 = vmatprep.mubr.f32.mxu0 %v6963
      %7724 = vmatmul.mubr.f32.gmra.mrb[0].mxu0 %v6959
      %v7725 = vpop.f32.mrb[0].mxu0
      %v7726 = vadd.f32 %v7655, %v7725
      %v7727 = vpop.f32.mrb[0].mxu0
      %v7728 = vadd.f32 %v7657, %v7727
      %7729 = vdwg.mxu0
      %7730 = vmatprep.subr.mxu0 %v6720
      %7731 = vmatpush1.msra.mxu0 %v6719
      %7732 = vmatprep.subr.mxu0 %v6722
      %7733 = vmatpush1.msra.mxu0 %v6721
      %7734 = vmatprep.subr.mxu0 %v6724
      %7735 = vmatpush1.msra.mxu0 %v6723
      %7736 = vmatprep.subr.mxu0 %v6726
      %7737 = vmatpush1.msra.mxu0 %v6725
      %7738 = vmatprep.subr.mxu0 %v6728
      %7739 = vmatpush1.msra.mxu0 %v6727
      %7740 = vmatprep.subr.mxu0 %v6730
      %7741 = vmatpush1.msra.mxu0 %v6729
      %7742 = vmatprep.subr.mxu0 %v6732
      %7743 = vmatpush1.msra.mxu0 %v6731
      %7744 = vmatprep.subr.mxu0 %v6734
      %7745 = vmatpush1.msra.mxu0 %v6733
      %7746 = vmatprep.subr.mxu0 %v6736
      %7747 = vmatpush1.msra.mxu0 %v6735
      %7748 = vmatprep.subr.mxu0 %v6738
      %7749 = vmatpush1.msra.mxu0 %v6737
      %7750 = vmatprep.subr.mxu0 %v6740
      %7751 = vmatpush1.msra.mxu0 %v6739
      %7752 = vmatprep.subr.mxu0 %v6742
      %7753 = vmatpush1.msra.mxu0 %v6741
      %7754 = vmatprep.subr.mxu0 %v6744
      %7755 = vmatpush1.msra.mxu0 %v6743
      %7756 = vmatprep.subr.mxu0 %v6746
      %7757 = vmatpush1.msra.mxu0 %v6745
      %7758 = vmatprep.subr.mxu0 %v6748
      %7759 = vmatpush1.msra.mxu0 %v6747
      %7760 = vmatprep.subr.mxu0 %v6750
      %7761 = vmatpush1.msra.mxu0 %v6749
      %7762 = vmatprep.subr.mxu0 %v6752
      %7763 = vmatpush1.msra.mxu0 %v6751
      %7764 = vmatprep.subr.mxu0 %v6754
      %7765 = vmatpush1.msra.mxu0 %v6753
      %7766 = vmatprep.subr.mxu0 %v6756
      %7767 = vmatpush1.msra.mxu0 %v6755
      %7768 = vmatprep.subr.mxu0 %v6758
      %7769 = vmatpush1.msra.mxu0 %v6757
      %7770 = vmatprep.subr.mxu0 %v6760
      %7771 = vmatpush1.msra.mxu0 %v6759
      %7772 = vmatprep.subr.mxu0 %v6762
      %7773 = vmatpush1.msra.mxu0 %v6761
      %7774 = vmatprep.subr.mxu0 %v6764
      %7775 = vmatpush1.msra.mxu0 %v6763
      %7776 = vmatprep.subr.mxu0 %v6766
      %7777 = vmatpush1.msra.mxu0 %v6765
      %7778 = vmatprep.subr.mxu0 %v6768
      %7779 = vmatpush1.msra.mxu0 %v6767
      %7780 = vmatprep.subr.mxu0 %v6770
      %7781 = vmatpush1.msra.mxu0 %v6769
      %7782 = vmatprep.subr.mxu0 %v6772
      %7783 = vmatpush1.msra.mxu0 %v6771
      %7784 = vmatprep.subr.mxu0 %v6774
      %7785 = vmatpush1.msra.mxu0 %v6773
      %7786 = vmatprep.subr.mxu0 %v6776
      %7787 = vmatpush1.msra.mxu0 %v6775
      %7788 = vmatprep.subr.mxu0 %v6778
      %7789 = vmatpush1.msra.mxu0 %v6777
      %7790 = vmatprep.subr.mxu0 %v6780
      %7791 = vmatpush1.msra.mxu0 %v6779
      %7792 = vmatprep.subr.mxu0 %v6782
      %7793 = vmatpush1.msra.mxu0 %v6781
      %7794 = vmatprep.mubr.f32.mxu0 %v6971
      %7795 = vmatmul.mubr.f32.gmra.mrb[0].mxu0 %v6967
      %v7796 = vpop.f32.mrb[0].mxu0
      %v7797 = vadd.f32 %v7726, %v7796
      %v7798 = vpop.f32.mrb[0].mxu0
      %v7799 = vadd.f32 %v7728, %v7798
      %7800 = vdwg.mxu0
      %7801 = vmatprep.subr.mxu0 %v6784
      %7802 = vmatpush1.msra.mxu0 %v6783
      %7803 = vmatprep.subr.mxu0 %v6786
      %7804 = vmatpush1.msra.mxu0 %v6785
      %7805 = vmatprep.subr.mxu0 %v6788
      %7806 = vmatpush1.msra.mxu0 %v6787
      %7807 = vmatprep.subr.mxu0 %v6790
      %7808 = vmatpush1.msra.mxu0 %v6789
      %7809 = vmatprep.subr.mxu0 %v6792
      %7810 = vmatpush1.msra.mxu0 %v6791
      %7811 = vmatprep.subr.mxu0 %v6794
      %7812 = vmatpush1.msra.mxu0 %v6793
      %7813 = vmatprep.subr.mxu0 %v6796
      %7814 = vmatpush1.msra.mxu0 %v6795
      %7815 = vmatprep.subr.mxu0 %v6798
      %7816 = vmatpush1.msra.mxu0 %v6797
      %7817 = vmatprep.subr.mxu0 %v6800
      %7818 = vmatpush1.msra.mxu0 %v6799
      %7819 = vmatprep.subr.mxu0 %v6802
      %7820 = vmatpush1.msra.mxu0 %v6801
      %7821 = vmatprep.subr.mxu0 %v6804
      %7822 = vmatpush1.msra.mxu0 %v6803
      %7823 = vmatprep.subr.mxu0 %v6806
      %7824 = vmatpush1.msra.mxu0 %v6805
      %7825 = vmatprep.subr.mxu0 %v6808
      %7826 = vmatpush1.msra.mxu0 %v6807
      %7827 = vmatprep.subr.mxu0 %v6810
      %7828 = vmatpush1.msra.mxu0 %v6809
      %7829 = vmatprep.subr.mxu0 %v6812
      %7830 = vmatpush1.msra.mxu0 %v6811
      %7831 = vmatprep.subr.mxu0 %v6814
      %7832 = vmatpush1.msra.mxu0 %v6813
      %7833 = vmatprep.subr.mxu0 %v6816
      %7834 = vmatpush1.msra.mxu0 %v6815
      %7835 = vmatprep.subr.mxu0 %v6818
      %7836 = vmatpush1.msra.mxu0 %v6817
      %7837 = vmatprep.subr.mxu0 %v6820
      %7838 = vmatpush1.msra.mxu0 %v6819
      %7839 = vmatprep.subr.mxu0 %v6822
      %7840 = vmatpush1.msra.mxu0 %v6821
      %7841 = vmatprep.subr.mxu0 %v6824
      %7842 = vmatpush1.msra.mxu0 %v6823
      %7843 = vmatprep.subr.mxu0 %v6826
      %7844 = vmatpush1.msra.mxu0 %v6825
      %7845 = vmatprep.subr.mxu0 %v6828
      %7846 = vmatpush1.msra.mxu0 %v6827
      %7847 = vmatprep.subr.mxu0 %v6830
      %7848 = vmatpush1.msra.mxu0 %v6829
      %7849 = vmatprep.subr.mxu0 %v6832
      %7850 = vmatpush1.msra.mxu0 %v6831
      %7851 = vmatprep.subr.mxu0 %v6834
      %7852 = vmatpush1.msra.mxu0 %v6833
      %7853 = vmatprep.subr.mxu0 %v6836
      %7854 = vmatpush1.msra.mxu0 %v6835
      %7855 = vmatprep.subr.mxu0 %v6838
      %7856 = vmatpush1.msra.mxu0 %v6837
      %7857 = vmatprep.subr.mxu0 %v6840
      %7858 = vmatpush1.msra.mxu0 %v6839
      %7859 = vmatprep.subr.mxu0 %v6842
      %7860 = vmatpush1.msra.mxu0 %v6841
      %7861 = vmatprep.subr.mxu0 %v6844
      %7862 = vmatpush1.msra.mxu0 %v6843
      %7863 = vmatprep.subr.mxu0 %v6846
      %7864 = vmatpush1.msra.mxu0 %v6845
      %7865 = vmatprep.mubr.f32.mxu0 %v6979
      %7866 = vmatmul.mubr.f32.gmra.mrb[0].mxu0 %v6975
      %v7867 = vpop.f32.mrb[0].mxu0
      %v7868 = vadd.f32 %v7797, %v7867
      %v7869 = vpop.f32.mrb[0].mxu0
      %v7870 = vadd.f32 %v7799, %v7869
      %7871 = vdwg.mxu0
      %7872 = vmatprep.subr.mxu0 %v6848
      %7873 = vmatpush1.msra.mxu0 %v6847
      %7874 = vmatprep.subr.mxu0 %v6850
      %7875 = vmatpush1.msra.mxu0 %v6849
      %7876 = vmatprep.subr.mxu0 %v6852
      %7877 = vmatpush1.msra.mxu0 %v6851
      %7878 = vmatprep.subr.mxu0 %v6854
      %7879 = vmatpush1.msra.mxu0 %v6853
      %7880 = vmatprep.subr.mxu0 %v6856
      %7881 = vmatpush1.msra.mxu0 %v6855
      %7882 = vmatprep.subr.mxu0 %v6858
      %7883 = vmatpush1.msra.mxu0 %v6857
      %7884 = vmatprep.subr.mxu0 %v6860
      %7885 = vmatpush1.msra.mxu0 %v6859
      %7886 = vmatprep.subr.mxu0 %v6862
      %7887 = vmatpush1.msra.mxu0 %v6861
      %7888 = vmatprep.subr.mxu0 %v6864
      %7889 = vmatpush1.msra.mxu0 %v6863
      %7890 = vmatprep.subr.mxu0 %v6866
      %7891 = vmatpush1.msra.mxu0 %v6865
      %7892 = vmatprep.subr.mxu0 %v6868
      %7893 = vmatpush1.msra.mxu0 %v6867
      %7894 = vmatprep.subr.mxu0 %v6870
      %7895 = vmatpush1.msra.mxu0 %v6869
      %7896 = vmatprep.subr.mxu0 %v6872
      %7897 = vmatpush1.msra.mxu0 %v6871
      %7898 = vmatprep.subr.mxu0 %v6874
      %7899 = vmatpush1.msra.mxu0 %v6873
      %7900 = vmatprep.subr.mxu0 %v6876
      %7901 = vmatpush1.msra.mxu0 %v6875
      %7902 = vmatprep.subr.mxu0 %v6878
      %7903 = vmatpush1.msra.mxu0 %v6877
      %7904 = vmatprep.subr.mxu0 0.0
      %7905 = vmatpush1.msra.mxu0 0.0
      %7906 = vmatprep.subr.mxu0 0.0
      %7907 = vmatpush1.msra.mxu0 0.0
      %7908 = vmatprep.subr.mxu0 0.0
      %7909 = vmatpush1.msra.mxu0 0.0
      %7910 = vmatprep.subr.mxu0 0.0
      %7911 = vmatpush1.msra.mxu0 0.0
      %7912 = vmatprep.subr.mxu0 0.0
      %7913 = vmatpush1.msra.mxu0 0.0
      %7914 = vmatprep.subr.mxu0 0.0
      %7915 = vmatpush1.msra.mxu0 0.0
      %7916 = vmatprep.subr.mxu0 0.0
      %7917 = vmatpush1.msra.mxu0 0.0
      %7918 = vmatprep.subr.mxu0 0.0
      %7919 = vmatpush1.msra.mxu0 0.0
      %7920 = vmatprep.subr.mxu0 0.0
      %7921 = vmatpush1.msra.mxu0 0.0
      %7922 = vmatprep.subr.mxu0 0.0
      %7923 = vmatpush1.msra.mxu0 0.0
      %7924 = vmatprep.subr.mxu0 0.0
      %7925 = vmatpush1.msra.mxu0 0.0
      %7926 = vmatprep.subr.mxu0 0.0
      %7927 = vmatpush1.msra.mxu0 0.0
      %7928 = vmatprep.subr.mxu0 0.0
      %7929 = vmatpush1.msra.mxu0 0.0
      %7930 = vmatprep.subr.mxu0 0.0
      %7931 = vmatpush1.msra.mxu0 0.0
      %7932 = vmatprep.subr.mxu0 0.0
      %7933 = vmatpush1.msra.mxu0 0.0
      %7934 = vmatprep.subr.mxu0 0.0
      %7935 = vmatpush1.msra.mxu0 0.0
      %7936 = vmatprep.mubr.f32.mxu0 0.0
      %7937 = vmatmul.mubr.f32.gmra.mrb[0].mxu0 %v6983
      %v7938 = vpop.f32.mrb[0].mxu0
      %v7939 = vadd.f32 %v7868, %v7938
      %v7940 = vpop.f32.mrb[0].mxu0
      %v7941 = vadd.f32 %v7870, %v7940
      %7942 = vdwg.mxu0
      %v7943 = vmax.f32 %v7939, 0.0
      %v7944 = vmax.f32 %v7941, 0.0
      %v7945 = vld [vmem:[%s7] sm:$0xff]
      %v7946 = vld [vmem:[%s7 + $0x8] sm:$0xff]
      %v7947 = vld [vmem:[%s7 + $0x10] sm:$0xff]
      %v7948 = vld [vmem:[%s7 + $0x18] sm:$0xff]
      %v7949 = vld [vmem:[%s7 + $0x20] sm:$0xff]
      %v7950 = vld [vmem:[%s7 + $0x28] sm:$0xff]
      %v7951 = vld [vmem:[%s7 + $0x30] sm:$0xff]
      %v7952 = vld [vmem:[%s7 + $0x38] sm:$0xff]
      %v7953 = vld [vmem:[%s7 + $0x40] sm:$0xff]
      %v7954 = vld [vmem:[%s7 + $0x48] sm:$0xff]
      %v7955 = vld [vmem:[%s7 + $0x50] sm:$0xff]
      %v7956 = vld [vmem:[%s7 + $0x58] sm:$0xff]
      %v7957 = vld [vmem:[%s7 + $0x60] sm:$0xff]
      %v7958 = vld [vmem:[%s7 + $0x68] sm:$0xff]
      %v7959 = vld [vmem:[%s7 + $0x70] sm:$0xff]
      %v7960 = vld [vmem:[%s7 + $0x78] sm:$0xff]
      %v7961 = vld [vmem:[%s7 + $0x80] sm:$0xff]
      %v7962 = vld [vmem:[%s7 + $0x88] sm:$0xff]
      %v7963 = vld [vmem:[%s7 + $0x90] sm:$0xff]
      %v7964 = vld [vmem:[%s7 + $0x98] sm:$0xff]
      %v7965 = vld [vmem:[%s7 + $0xa0] sm:$0xff]
      %v7966 = vld [vmem:[%s7 + $0xa8] sm:$0xff]
      %v7967 = vld [vmem:[%s7 + $0xb0] sm:$0xff]
      %v7968 = vld [vmem:[%s7 + $0xb8] sm:$0xff]
      %v7969 = vld [vmem:[%s7 + $0xc0] sm:$0xff]
      %v7970 = vld [vmem:[%s7 + $0xc8] sm:$0xff]
      %v7971 = vld [vmem:[%s7 + $0xd0] sm:$0xff]
      %v7972 = vld [vmem:[%s7 + $0xd8] sm:$0xff]
      %v7973 = vld [vmem:[%s7 + $0xe0] sm:$0xff]
      %v7974 = vld [vmem:[%s7 + $0xe8] sm:$0xff]
      %v7975 = vld [vmem:[%s7 + $0xf0] sm:$0xff]
      %v7976 = vld [vmem:[%s7 + $0xf8] sm:$0xff]
      %v7977 = vld [vmem:[%s8] sm:$0x1]
      %7978 = vmatprep.subr.mxu0 0.0
      %7979 = vmatpush1.msra.mxu0 %v7945
      %7980 = vmatprep.subr.mxu0 0.0
      %7981 = vmatpush1.msra.mxu0 %v7946
      %7982 = vmatprep.subr.mxu0 0.0
      %7983 = vmatpush1.msra.mxu0 %v7947
      %7984 = vmatprep.subr.mxu0 0.0
      %7985 = vmatpush1.msra.mxu0 %v7948
      %7986 = vmatprep.subr.mxu0 0.0
      %7987 = vmatpush1.msra.mxu0 %v7949
      %7988 = vmatprep.subr.mxu0 0.0
      %7989 = vmatpush1.msra.mxu0 %v7950
      %7990 = vmatprep.subr.mxu0 0.0
      %7991 = vmatpush1.msra.mxu0 %v7951
      %7992 = vmatprep.subr.mxu0 0.0
      %7993 = vmatpush1.msra.mxu0 %v7952
      %7994 = vmatprep.subr.mxu0 0.0
      %7995 = vmatpush1.msra.mxu0 %v7953
      %7996 = vmatprep.subr.mxu0 0.0
      %7997 = vmatpush1.msra.mxu0 %v7954
      %7998 = vmatprep.subr.mxu0 0.0
      %7999 = vmatpush1.msra.mxu0 %v7955
      %8000 = vmatprep.subr.mxu0 0.0
      %8001 = vmatpush1.msra.mxu0 %v7956
      %8002 = vmatprep.subr.mxu0 0.0
      %8003 = vmatpush1.msra.mxu0 %v7957
      %8004 = vmatprep.subr.mxu0 0.0
      %8005 = vmatpush1.msra.mxu0 %v7958
      %8006 = vmatprep.subr.mxu0 0.0
      %8007 = vmatpush1.msra.mxu0 %v7959
      %8008 = vmatprep.subr.mxu0 0.0
      %8009 = vmatpush1.msra.mxu0 %v7960
      %8010 = vmatprep.subr.mxu0 0.0
      %8011 = vmatpush1.msra.mxu0 %v7961
      %8012 = vmatprep.subr.mxu0 0.0
      %8013 = vmatpush1.msra.mxu0 %v7962
      %8014 = vmatprep.subr.mxu0 0.0
      %8015 = vmatpush1.msra.mxu0 %v7963
      %8016 = vmatprep.subr.mxu0 0.0
      %8017 = vmatpush1.msra.mxu0 %v7964
      %8018 = vmatprep.subr.mxu0 0.0
      %8019 = vmatpush1.msra.mxu0 %v7965
      %8020 = vmatprep.subr.mxu0 0.0
      %8021 = vmatpush1.msra.mxu0 %v7966
      %8022 = vmatprep.subr.mxu0 0.0
      %8023 = vmatpush1.msra.mxu0 %v7967
      %8024 = vmatprep.subr.mxu0 0.0
      %8025 = vmatpush1.msra.mxu0 %v7968
      %8026 = vmatprep.subr.mxu0 0.0
      %8027 = vmatpush1.msra.mxu0 %v7969
      %8028 = vmatprep.subr.mxu0 0.0
      %8029 = vmatpush1.msra.mxu0 %v7970
      %8030 = vmatprep.subr.mxu0 0.0
      %8031 = vmatpush1.msra.mxu0 %v7971
      %8032 = vmatprep.subr.mxu0 0.0
      %8033 = vmatpush1.msra.mxu0 %v7972
      %8034 = vmatprep.subr.mxu0 0.0
      %8035 = vmatpush1.msra.mxu0 %v7973
      %8036 = vmatprep.subr.mxu0 0.0
      %8037 = vmatpush1.msra.mxu0 %v7974
      %8038 = vmatprep.subr.mxu0 0.0
      %8039 = vmatpush1.msra.mxu0 %v7975
      %8040 = vmatprep.subr.mxu0 0.0
      %8041 = vmatpush1.msra.mxu0 %v7976
      %8042 = vmatprep.mubr.f32.mxu0 %v7944
      %8043 = vmatmul.mubr.f32.gmra.mrb[0].mxu0 %v7943
      %v8044 = vpop.f32.mrb[0].mxu0
      %v8045 = vadd.f32 %v7977, %v8044
      %v8046 = vpop.f32.mrb[0].mxu0
      %8047 = vdwg.mxu0
      %v8048 = vlaneseq
      %v8049 = vshrl.u32 %v8048, 7
      %v8050 = vsub.s32 0, %v8049
      %v8051 = vrot.slane %v8045, %v8050
      %8052 = vst [vmem:[%s330] sm:$0xff] %v8051
      %p8053 = scmp.lt.s32.totalorder %s20, 1
      %s8054 = scalar_select %p8053, %s20, 1
      %s8055 = smul.addr %s8054, 8
      %s8056 = scalar_lea.vmem %s9, %s8055
      // Predicated region
      $region57: #{cnn1_forward.1} parent=55 // pred_check
        %p8057 = pneg %p232
      $region58: #{cnn1_forward.1} parent=55 // pred_check_branch
        %8059 = sbr.rel (%p8057) target = $region60
      $region59: #{cnn1_forward.1} parent=55 // pred_region
        _
      $region60: #{cnn1_forward.1} parent=55 // pred_fallthru
        _
    $region56: #{cnn1_forward.1} parent=5 // pred_fallthru
      _
    %p8060 = scmp.le.s32.totalorder 2, %s15
    // Predicated region
    $region61: #{cnn1_forward.1} parent=5 // pred_check
      %p8061 = pneg %p8060
    $region62: #{cnn1_forward.1} parent=5 // pred_check_branch
      %8063 = sbr.rel (%p8061) target = $region64
    $region63: #{cnn1_forward.1} parent=5 // pred_region
      %s8064 = ssub.s32 %s15, 2
      // Predicated region
      $region65: #{cnn1_forward.1} parent=63 // pred_check
        %p8065 = pneg %p238
      $region66: #{cnn1_forward.1} parent=63 // pred_check_branch
        %8067 = sbr.rel (%p8065) target = $region68
      $region67: #{cnn1_forward.1} parent=63 // pred_region
        %p8068 = scmp.lt.s32.totalorder %s21, 1
        %s8069 = scalar_select %p8068, %s21, 1
        %s8070 = smul.addr %s8069, 8
        %s8071 = scalar_lea.vmem %s9, %s8070
      $region68: #{cnn1_forward.1} parent=63 // pred_fallthru
        _
    $region64: #{cnn1_forward.1} parent=5 // pred_fallthru
      _
  $region6: #{cnn1_forward.1} parent=0 // loop_footer
    %s19 = sadd.s32 1, %s15
  $region7: #{cnn1_forward.1} parent=0 // loop_footer_branch
    %14 = sbr.rel target = $region3
  $region8: #{cnn1_forward.1} parent=0 // loop_exit
    _

</llo_original>
